<compile_context>
chip_gen: v5e
topology: v5e:2x2
jax: 0.10.0
libtpu: 0.0.40
codegen_flags: <defaults>
</compile_context>

<pallas_src>
import math

import jax
import jax.numpy as jnp
from jax.experimental import pallas as pl
from jax.experimental.pallas import tpu as pltpu

# ------------------------- model hyper-parameters ---------------------------
EMBED_DIM = 32
NUM_HEADS = 4
FF_DIM = 128          # module default is 1024/512; kept small for the demo
HEAD_DIM = EMBED_DIM // NUM_HEADS
LN_EPS = 1e-5


# ------------------------------- kernel -------------------------------------
def _transformer_block_kernel(
    x_ref,                       # (TB, S, E)  input slab
    ln1w_ref, ln1b_ref,          # (1, E)      attention pre-LN
    wqkv_ref, bqkv_ref,          # (E, 3E), (1, 3E)  fused QKV (Q cols pre-scaled)
    wo_ref, bo_ref,              # (E, E) [= W_o^T], (1, E)
    ln2w_ref, ln2b_ref,          # (1, E)      FFN pre-LN
    w1_ref, b1_ref,              # (E, F) [= W_1^T], (1, F)
    w2_ref, b2_ref,              # (F, E) [= W_2^T], (1, E)
    mask_ref,                    # (H*S, E)    block-diagonal head mask
    o_ref,                       # (TB, S, E)  output slab
):
    TB, S, E = x_ref.shape
    H, Dh = NUM_HEADS, HEAD_DIM
    HS = H * S
    R = TB * S                                           # flattened rows

    x = x_ref[...].astype(jnp.float32).reshape(R, E)     # (R, E)

    def layer_norm(v, w, b):
        mu = jnp.mean(v, axis=-1, keepdims=True)
        d = v - mu
        var = jnp.mean(d * d, axis=-1, keepdims=True)
        return d * jax.lax.rsqrt(var + LN_EPS) * w + b

    # ---------------- self-attention (pre-LN, residual) ----------------
    xn = layer_norm(x, ln1w_ref[...], ln1b_ref[...])      # (R, E)

    # one fused QKV matmul (Q columns already carry the 1/sqrt(Dh) scale)
    qkv = jnp.dot(xn, wqkv_ref[...],
                  preferred_element_type=jnp.float32) + bqkv_ref[...]    # (R, 3E)
    q3 = qkv[:, :E].reshape(TB, S, E)                     # (TB, S, E)
    k3 = qkv[:, E:2 * E].reshape(TB, S, E)
    v3 = qkv[:, 2 * E:].reshape(TB, S, E)

    # Block-diagonal head merge: replicate K / V rows per head and zero out the
    # columns belonging to other heads.  All heads then reduce to ONE batched
    # score matmul, ONE softmax over a lane-dense (TB, S, H*S) tensor, ONE
    # context matmul, and ONE out-projection matmul (no 4D transposes needed).
    mask = mask_ref[...]                                  # (HS, E)
    mask4 = mask.reshape(H, S, E)                         # (H, S, E)  trivial split
    kb = (k3[:, None, :, :] * mask4).reshape(TB, HS, E)   # (TB, HS, E)
    vb = (v3[:, None, :, :] * mask4).reshape(TB, HS, E)

    # scores for all heads: s[b, q, h*S + k] = <q_h[b,q], k_h[b,k]> * scale
    s_all = jnp.einsum("bqe,bke->bqk", q3, kb,
                       preferred_element_type=jnp.float32)   # (TB, S, HS)
    # Row-global max (over all heads) is a valid softmax shift per head and
    # keeps exp args <= 0; head-to-head score spread here is << 80, so the
    # per-head denominators cannot underflow.
    s_all = s_all - jnp.max(s_all, axis=-1, keepdims=True)
    p = jnp.exp(s_all)                                       # 64-lane dense EUP

    # unnormalized context + per-head denominators (same mask matmul), then one
    # EUP reciprocal-multiply instead of a VALU divide.
    ctx = jnp.einsum("bqk,bke->bqe", p, vb,
                     preferred_element_type=jnp.float32).reshape(R, E)
    denom = jnp.dot(p.reshape(R, HS), mask,
                    preferred_element_type=jnp.float32)       # (R, E)
    ctx = ctx * pl.reciprocal(denom, approx=False)

    attn = jnp.dot(ctx, wo_ref[...],
                   preferred_element_type=jnp.float32) + bo_ref[...]
    attn = jnp.clip(attn, -5.0, 5.0)                      # torch.clamp
    x1 = x + attn                                         # residual

    # ---------------- feed-forward (pre-LN, residual) ----------------
    x1n = layer_norm(x1, ln2w_ref[...], ln2b_ref[...])
    h1 = jnp.dot(x1n, w1_ref[...],
                 preferred_element_type=jnp.float32) + b1_ref[...]       # (R, F)
    # exact (erf-based) GELU, matching F.gelu default
    g = 0.5 * h1 * (1.0 + jax.lax.erf(h1 * (1.0 / math.sqrt(2.0))))
    h2 = jnp.dot(g, w2_ref[...],
                 preferred_element_type=jnp.float32) + b2_ref[...]       # (R, E)

    o_ref[...] = (x1 + h2).reshape(TB, S, E).astype(o_ref.dtype)


# -------------------- per-generation tile / VMEM selection -------------------
def _detect_cores_and_vmem():
    """Best-effort TensorCore-count / VMEM-capacity probe (never raises)."""
    num_cores, vmem_bytes = 0, 0
    try:
        info = pltpu.get_tpu_info()
        for attr in ("vmem_capacity_bytes", "vmem_size_bytes", "vmem_bytes"):
            v = getattr(info, attr, None)
            if v:
                vmem_bytes = int(v)
                break
        for attr in ("num_cores", "tensorcore_count", "num_tensorcores",
                     "cores_per_chip", "core_count"):
            v = getattr(info, attr, None)
            if v:
                num_cores = int(v)
                break
    except Exception:
        pass
    if num_cores <= 0:
        try:
            kind = jax.devices()[0].device_kind.lower()
            two_core = ("v4" in kind or "v5p" in kind or "7x" in kind
                        or "v7" in kind
                        or ("v5" in kind and "lite" not in kind and "5e" not in kind))
            num_cores = 2 if two_core else 1
        except Exception:
            num_cores = 1
    if vmem_bytes <= 0:
        vmem_bytes = 64 * 1024 * 1024        # conservative (v7x per-core VMEM)
    return num_cores, vmem_bytes


def _step_vmem_bytes(tb, S, E, F, H):
    """Rough f32 live-set estimate for one grid step (double-buffered I/O)."""
    rows = tb * S
    hs = H * S
    io = 4 * rows * E                                  # 2x double-buffered slabs
    acts = rows * (3 * E + 2 * hs + 6 * E + 2 * F)     # qkv, scores/p, misc, ffn
    blocks = 2 * tb * hs * E                           # kb, vb
    weights = 3 * E * E + E * E + 2 * E * F + hs * E + 4 * (E + F)
    return 4 * (io + acts + blocks + weights)


def _choose_block_batch(B, S, E, F, H, num_cores, vmem_budget):
    want_steps = min(num_cores, B)
    for tb in range(B, 0, -1):
        if B % tb:
            continue
        if B // tb < want_steps:
            continue
        if _step_vmem_bytes(tb, S, E, F, H) > vmem_budget:
            continue
        return tb
    return 1


# ------------------------------- wrapper -------------------------------------
def transformer_block(x, params, *, block_batch=None):
    """x: (B, S, E) float32.  params: dict of weights in PyTorch layout."""
    B, S, E = x.shape
    assert E == EMBED_DIM
    F = FF_DIM
    H, Dh = NUM_HEADS, HEAD_DIM

    num_cores, vmem_cap = _detect_cores_and_vmem()
    vmem_limit = int(min(vmem_cap * 3 // 4, 100 * 1024 * 1024))
    vmem_limit = max(vmem_limit, 32 * 1024 * 1024)

    if block_batch is None:
        # single grid step on 1-TC chips (v5e/v6e); 2 steps on 2-TC chips
        block_batch = _choose_block_batch(B, S, E, F, H, num_cores,
                                          vmem_budget=vmem_limit // 2)
    TB = block_batch
    assert B % TB == 0, "batch must be divisible by block_batch"

    # ---- one-time XLA-side weight repacking (no in-kernel transposes) ----
    scale = 1.0 / math.sqrt(Dh)
    col_scale = jnp.concatenate([jnp.full((E,), scale, jnp.float32),
                                 jnp.ones((2 * E,), jnp.float32)])
    wqkv = params["in_proj_w"].T * col_scale    # (E, 3E), Q columns pre-scaled
    bqkv = params["in_proj_b"] * col_scale      # (1, 3E)
    wo = params["out_proj_w"].T                 # (E, E)   = W_o^T
    bo = params["out_proj_b"]                   # (1, E)
    w1 = params["w1"].T                         # (E, F)
    b1 = params["b1"]                           # (1, F)
    w2 = params["w2"].T                         # (F, E)
    b2 = params["b2"]                           # (1, E)

    # block-diagonal head mask: mask[(h, k), (h', d)] = (h == h')
    row_h = jnp.arange(H * S) // S
    col_h = jnp.arange(E) // Dh
    head_mask = (row_h[:, None] == col_h[None, :]).astype(jnp.float32)   # (H*S, E)

    param_list = [
        params["ln1_w"], params["ln1_b"],
        wqkv, bqkv, wo, bo,
        params["ln2_w"], params["ln2_b"],
        w1, b1, w2, b2, head_mask,
    ]

    def resident_spec(arr):
        nd = arr.ndim
        return pl.BlockSpec(arr.shape, lambda b, _nd=nd: (0,) * _nd)

    in_specs = [pl.BlockSpec((TB, S, E), lambda b: (b, 0, 0))]
    in_specs += [resident_spec(p) for p in param_list]
    out_spec = pl.BlockSpec((TB, S, E), lambda b: (b, 0, 0))

    # advisory cost hint so XLA schedules this custom call sensibly
    HS = H * S
    flops = (2 * B * S * E * 3 * E          # fused QKV
             + 2 * B * S * HS * E * 3       # scores + context + denominators
             + 2 * B * S * E * E            # out proj
             + 4 * B * S * E * F)           # FFN
    transcendentals = B * S * HS + B * S * F
    bytes_accessed = int(4 * (2 * x.size + sum(int(p.size) for p in param_list)))
    cost = pl.CostEstimate(flops=int(flops),
                           transcendentals=int(transcendentals),
                           bytes_accessed=bytes_accessed)

    return pl.pallas_call(
        _transformer_block_kernel,
        out_shape=jax.ShapeDtypeStruct((B, S, E), x.dtype),
        grid_spec=pltpu.PrefetchScalarGridSpec(
            num_scalar_prefetch=0,
            grid=(B // TB,),
            in_specs=in_specs,
            out_specs=out_spec,
        ),
        compiler_params=pltpu.CompilerParams(
            dimension_semantics=("parallel",),
            vmem_limit_bytes=vmem_limit),
        cost_estimate=cost,
    )(x, *param_list)


# --------------------------- parameter init ----------------------------------
def init_params(key):
    ks = jax.random.split(key, 8)
    E, F = EMBED_DIM, FF_DIM
    s_e = 1.0 / math.sqrt(E)
    s_f = 1.0 / math.sqrt(F)
    return {
        # attention pre-LN (PyTorch LayerNorm init: w=1, b=0)
        "ln1_w": jnp.ones((1, E), jnp.float32),
        "ln1_b": jnp.zeros((1, E), jnp.float32),
        # MultiheadAttention in_proj / out_proj (PyTorch (out, in) layout)
        "in_proj_w": jax.random.uniform(ks[0], (3 * E, E), jnp.float32, -s_e, s_e),
        "in_proj_b": jax.random.uniform(ks[1], (1, 3 * E), jnp.float32, -s_e, s_e),
        "out_proj_w": jax.random.uniform(ks[2], (E, E), jnp.float32, -s_e, s_e),
        "out_proj_b": jax.random.uniform(ks[3], (1, E), jnp.float32, -s_e, s_e),
        # FFN pre-LN
        "ln2_w": jnp.ones((1, E), jnp.float32),
        "ln2_b": jnp.zeros((1, E), jnp.float32),
        # FFN linears (PyTorch Linear stores W as (out, in))
        "w1": jax.random.uniform(ks[4], (F, E), jnp.float32, -s_e, s_e),
        "b1": jax.random.uniform(ks[5], (1, F), jnp.float32, -s_e, s_e),
        "w2": jax.random.uniform(ks[6], (E, F), jnp.float32, -s_f, s_f),
        "b2": jax.random.uniform(ks[7], (1, E), jnp.float32, -s_f, s_f),
    }


# ---------------------------- pure-JAX reference -----------------------------
def _reference(x, p):
    def ln(v, w, b):
        mu = jnp.mean(v, -1, keepdims=True)
        var = jnp.mean((v - mu) ** 2, -1, keepdims=True)
        return (v - mu) / jnp.sqrt(var + LN_EPS) * w + b

    B, S, E = x.shape
    xn = ln(x, p["ln1_w"][0], p["ln1_b"][0])
    qkv = jnp.einsum("bse,fe->bsf", xn, p["in_proj_w"]) + p["in_proj_b"][0]
    q, k, v = jnp.split(qkv, 3, axis=-1)
    q = q.reshape(B, S, NUM_HEADS, HEAD_DIM).transpose(0, 2, 1, 3)
    k = k.reshape(B, S, NUM_HEADS, HEAD_DIM).transpose(0, 2, 1, 3)
    v = v.reshape(B, S, NUM_HEADS, HEAD_DIM).transpose(0, 2, 1, 3)
    s = jnp.einsum("bhqd,bhkd->bhqk", q, k) / math.sqrt(HEAD_DIM)
    pattn = jax.nn.softmax(s, axis=-1)
    ctx = jnp.einsum("bhqk,bhkd->bhqd", pattn, v).transpose(0, 2, 1, 3)
    ctx = ctx.reshape(B, S, E)
    attn = jnp.einsum("bse,fe->bsf", ctx, p["out_proj_w"]) + p["out_proj_b"][0]
    x1 = x + jnp.clip(attn, -5.0, 5.0)
    x1n = ln(x1, p["ln2_w"][0], p["ln2_b"][0])
    h1 = jnp.einsum("bse,fe->bsf", x1n, p["w1"]) + p["b1"][0]
    g = 0.5 * h1 * (1.0 + jax.lax.erf(h1 / math.sqrt(2.0)))
    h2 = jnp.einsum("bsf,ef->bse", g, p["w2"]) + p["b2"][0]
    return x1 + h2


# --------------------------------- main ---------------------------------------
if __name__ == "__main__":
    key = jax.random.PRNGKey(0)
    k_x, k_p = jax.random.split(key)

    # S = board_size * board_size = 16 positions.
    B, S = 16, 16
    x = jax.random.normal(k_x, (B, S, EMBED_DIM), jnp.float32)
    params = init_params(k_p)

    out = transformer_block(x, params)   # grid=(1,) on v5e/v6e, (2,) on 2-TC chips
    out = jax.block_until_ready(out)

    ref = _reference(x, params)
    assert out.shape == (B, S, EMBED_DIM)
    assert jnp.allclose(out, ref, atol=1e-4, rtol=1e-4), "mismatch vs reference"

    # TODO(synk): BoardEmbedding conv, positional encoding, global attention
    # pooling and the policy/value heads of TransformerPPONetwork remain in
    # plain JAX; this kernel covers the repeated TransformerBlock core.
    print("KERNEL_OK")
</pallas_src>

<mosaic_0001>
module attributes {stable_mosaic.version = 11 : i64} {
  func.func @_transformer_block_kernel(%arg0: i32, %arg1: memref<16x16x32xf32, #tpu.memory_space<vmem>>, %arg2: memref<1x32xf32, #tpu.memory_space<vmem>>, %arg3: memref<1x32xf32, #tpu.memory_space<vmem>>, %arg4: memref<32x96xf32, #tpu.memory_space<vmem>>, %arg5: memref<1x96xf32, #tpu.memory_space<vmem>>, %arg6: memref<32x32xf32, #tpu.memory_space<vmem>>, %arg7: memref<1x32xf32, #tpu.memory_space<vmem>>, %arg8: memref<1x32xf32, #tpu.memory_space<vmem>>, %arg9: memref<1x32xf32, #tpu.memory_space<vmem>>, %arg10: memref<32x128xf32, #tpu.memory_space<vmem>>, %arg11: memref<1x128xf32, #tpu.memory_space<vmem>>, %arg12: memref<128x32xf32, #tpu.memory_space<vmem>>, %arg13: memref<1x32xf32, #tpu.memory_space<vmem>>, %arg14: memref<64x32xf32, #tpu.memory_space<vmem>>, %arg15: memref<16x16x32xf32, #tpu.memory_space<vmem>>) attributes {dimension_semantics = [#tpu.dimension_semantics<parallel>], iteration_bounds = array<i64: 1>, scalar_prefetch = 0 : i64, scratch_operands = 0 : i64, tpu.core_type = #tpu.core_type<tc>, window_params = [{transform_indices = @transform_0, window_bounds = array<i64: 16, 16, 32>}, {pipeline_mode = #tpu.pipeline_mode<synchronous>, transform_indices = @transform_1, window_bounds = array<i64: 1, 32>}, {pipeline_mode = #tpu.pipeline_mode<synchronous>, transform_indices = @transform_2, window_bounds = array<i64: 1, 32>}, {pipeline_mode = #tpu.pipeline_mode<synchronous>, transform_indices = @transform_3, window_bounds = array<i64: 32, 96>}, {pipeline_mode = #tpu.pipeline_mode<synchronous>, transform_indices = @transform_4, window_bounds = array<i64: 1, 96>}, {pipeline_mode = #tpu.pipeline_mode<synchronous>, transform_indices = @transform_5, window_bounds = array<i64: 32, 32>}, {pipeline_mode = #tpu.pipeline_mode<synchronous>, transform_indices = @transform_6, window_bounds = array<i64: 1, 32>}, {pipeline_mode = #tpu.pipeline_mode<synchronous>, transform_indices = @transform_7, window_bounds = array<i64: 1, 32>}, {pipeline_mode = #tpu.pipeline_mode<synchronous>, transform_indices = @transform_8, window_bounds = array<i64: 1, 32>}, {pipeline_mode = #tpu.pipeline_mode<synchronous>, transform_indices = @transform_9, window_bounds = array<i64: 32, 128>}, {pipeline_mode = #tpu.pipeline_mode<synchronous>, transform_indices = @transform_10, window_bounds = array<i64: 1, 128>}, {pipeline_mode = #tpu.pipeline_mode<synchronous>, transform_indices = @transform_11, window_bounds = array<i64: 128, 32>}, {pipeline_mode = #tpu.pipeline_mode<synchronous>, transform_indices = @transform_12, window_bounds = array<i64: 1, 32>}, {pipeline_mode = #tpu.pipeline_mode<synchronous>, transform_indices = @transform_13, window_bounds = array<i64: 64, 32>}, {transform_indices = @transform_14, window_bounds = array<i64: 16, 16, 32>}]} {
    %c0 = arith.constant 0 : index
    %c0_0 = arith.constant 0 : index
    %c0_1 = arith.constant 0 : index
    %0 = vector.load %arg1[%c0, %c0_0, %c0_1] : memref<16x16x32xf32, #tpu.memory_space<vmem>>, vector<16x16x32xf32>
    %1 = vector.shape_cast %0 : vector<16x16x32xf32> to vector<256x32xf32>
    %c0_2 = arith.constant 0 : index
    %c0_3 = arith.constant 0 : index
    %2 = vector.load %arg2[%c0_2, %c0_3] : memref<1x32xf32, #tpu.memory_space<vmem>>, vector<1x32xf32>
    %c0_4 = arith.constant 0 : index
    %c0_5 = arith.constant 0 : index
    %3 = vector.load %arg3[%c0_4, %c0_5] : memref<1x32xf32, #tpu.memory_space<vmem>>, vector<1x32xf32>
    %cst = arith.constant dense<0.000000e+00> : vector<256xf32>
    %4 = vector.multi_reduction <add>, %1, %cst [1] : vector<256x32xf32> to vector<256xf32>
    %5 = vector.shape_cast %4 : vector<256xf32> to vector<256x1xf32>
    %cst_6 = arith.constant 3.200000e+01 : f32
    %6 = vector.broadcast %cst_6 : f32 to vector<256x1xf32>
    %7 = arith.divf %5, %6 : vector<256x1xf32>
    %8 = vector.broadcast %7 : vector<256x1xf32> to vector<256x32xf32>
    %9 = arith.subf %1, %8 : vector<256x32xf32>
    %10 = arith.mulf %9, %9 : vector<256x32xf32>
    %cst_7 = arith.constant dense<0.000000e+00> : vector<256xf32>
    %11 = vector.multi_reduction <add>, %10, %cst_7 [1] : vector<256x32xf32> to vector<256xf32>
    %12 = vector.shape_cast %11 : vector<256xf32> to vector<256x1xf32>
    %cst_8 = arith.constant 3.200000e+01 : f32
    %13 = vector.broadcast %cst_8 : f32 to vector<256x1xf32>
    %14 = arith.divf %12, %13 : vector<256x1xf32>
    %cst_9 = arith.constant 9.99999974E-6 : f32
    %15 = vector.broadcast %cst_9 : f32 to vector<256x1xf32>
    %16 = arith.addf %14, %15 : vector<256x1xf32>
    %17 = math.rsqrt %16 : vector<256x1xf32>
    %18 = vector.broadcast %17 : vector<256x1xf32> to vector<256x32xf32>
    %19 = arith.mulf %9, %18 : vector<256x32xf32>
    %20 = vector.broadcast %2 : vector<1x32xf32> to vector<256x32xf32>
    %21 = arith.mulf %19, %20 : vector<256x32xf32>
    %22 = vector.broadcast %3 : vector<1x32xf32> to vector<256x32xf32>
    %23 = arith.addf %21, %22 : vector<256x32xf32>
    %c0_10 = arith.constant 0 : index
    %c0_11 = arith.constant 0 : index
    %24 = vector.load %arg4[%c0_10, %c0_11] : memref<32x96xf32, #tpu.memory_space<vmem>>, vector<32x96xf32>
    %cst_12 = arith.constant dense<0.000000e+00> : vector<256x96xf32>
    %25 = tpu.matmul %23, %24, %cst_12 {dimension_numbers = #tpu.dot_dimension_numbers<[1], [0], [0], [1], [0, 0, 1, 1], [], []>} : vector<256x32xf32>, vector<32x96xf32>, vector<256x96xf32> -> vector<256x96xf32>
    %c0_13 = arith.constant 0 : index
    %c0_14 = arith.constant 0 : index
    %26 = vector.load %arg5[%c0_13, %c0_14] : memref<1x96xf32, #tpu.memory_space<vmem>>, vector<1x96xf32>
    %27 = vector.broadcast %26 : vector<1x96xf32> to vector<256x96xf32>
    %28 = arith.addf %25, %27 : vector<256x96xf32>
    %29 = vector.extract_strided_slice %28 {offsets = [0, 0], sizes = [256, 32], strides = [1, 1]} : vector<256x96xf32> to vector<256x32xf32>
    %30 = vector.shape_cast %29 : vector<256x32xf32> to vector<16x16x32xf32>
    %31 = vector.extract_strided_slice %28 {offsets = [0, 32], sizes = [256, 32], strides = [1, 1]} : vector<256x96xf32> to vector<256x32xf32>
    %32 = vector.shape_cast %31 : vector<256x32xf32> to vector<16x16x32xf32>
    %33 = vector.extract_strided_slice %28 {offsets = [0, 64], sizes = [256, 32], strides = [1, 1]} : vector<256x96xf32> to vector<256x32xf32>
    %34 = vector.shape_cast %33 : vector<256x32xf32> to vector<16x16x32xf32>
    %c0_15 = arith.constant 0 : index
    %c0_16 = arith.constant 0 : index
    %35 = vector.load %arg14[%c0_15, %c0_16] : memref<64x32xf32, #tpu.memory_space<vmem>>, vector<64x32xf32>
    %36 = vector.shape_cast %35 : vector<64x32xf32> to vector<4x16x32xf32>
    %37 = vector.shape_cast %32 : vector<16x16x32xf32> to vector<16x1x16x32xf32>
    %38 = vector.shape_cast %36 : vector<4x16x32xf32> to vector<1x4x16x32xf32>
    %39 = vector.broadcast %37 : vector<16x1x16x32xf32> to vector<16x4x16x32xf32>
    %40 = vector.broadcast %38 : vector<1x4x16x32xf32> to vector<16x4x16x32xf32>
    %41 = arith.mulf %39, %40 : vector<16x4x16x32xf32>
    %42 = vector.shape_cast %41 : vector<16x4x16x32xf32> to vector<16x64x32xf32>
    %43 = vector.shape_cast %34 : vector<16x16x32xf32> to vector<16x1x16x32xf32>
    %44 = vector.shape_cast %36 : vector<4x16x32xf32> to vector<1x4x16x32xf32>
    %45 = vector.broadcast %43 : vector<16x1x16x32xf32> to vector<16x4x16x32xf32>
    %46 = vector.broadcast %44 : vector<1x4x16x32xf32> to vector<16x4x16x32xf32>
    %47 = arith.mulf %45, %46 : vector<16x4x16x32xf32>
    %48 = vector.shape_cast %47 : vector<16x4x16x32xf32> to vector<16x64x32xf32>
    "tpu.trace_start"() <{level = 10 : i32, message = "bqe,bke->bqk"}> : () -> ()
    %cst_17 = arith.constant dense<0.000000e+00> : vector<16x16x64xf32>
    %49 = tpu.matmul %30, %42, %cst_17 {dimension_numbers = #tpu.dot_dimension_numbers<[2], [2], [1], [1], [0, 0, 0, 1, 1, 1], [0], [0]>} : vector<16x16x32xf32>, vector<16x64x32xf32>, vector<16x16x64xf32> -> vector<16x16x64xf32>
    "tpu.trace_stop"() : () -> ()
    %cst_18 = arith.constant dense<0xFF800000> : vector<16x16xf32>
    %50 = vector.multi_reduction <maximumf>, %49, %cst_18 [2] : vector<16x16x64xf32> to vector<16x16xf32>
    %51 = vector.shape_cast %50 : vector<16x16xf32> to vector<16x16x1xf32>
    %52 = vector.broadcast %51 : vector<16x16x1xf32> to vector<16x16x64xf32>
    %53 = arith.subf %49, %52 : vector<16x16x64xf32>
    %54 = math.exp %53 : vector<16x16x64xf32>
    "tpu.trace_start"() <{level = 10 : i32, message = "bqk,bke->bqe"}> : () -> ()
    %cst_19 = arith.constant dense<0.000000e+00> : vector<16x16x32xf32>
    %55 = tpu.matmul %54, %48, %cst_19 {dimension_numbers = #tpu.dot_dimension_numbers<[2], [1], [1], [2], [0, 0, 0, 1, 1, 2], [0], [0]>} : vector<16x16x64xf32>, vector<16x64x32xf32>, vector<16x16x32xf32> -> vector<16x16x32xf32>
    "tpu.trace_stop"() : () -> ()
    %56 = vector.shape_cast %55 : vector<16x16x32xf32> to vector<256x32xf32>
    %57 = vector.shape_cast %54 : vector<16x16x64xf32> to vector<256x64xf32>
    %cst_20 = arith.constant dense<0.000000e+00> : vector<256x32xf32>
    %58 = tpu.matmul %57, %35, %cst_20 {dimension_numbers = #tpu.dot_dimension_numbers<[1], [0], [0], [1], [0, 0, 1, 1], [], []>} : vector<256x64xf32>, vector<64x32xf32>, vector<256x32xf32> -> vector<256x32xf32>
    %59 = tpu.reciprocal %58 : vector<256x32xf32> -> vector<256x32xf32>
    %60 = arith.mulf %56, %59 : vector<256x32xf32>
    %c0_21 = arith.constant 0 : index
    %c0_22 = arith.constant 0 : index
    %61 = vector.load %arg6[%c0_21, %c0_22] : memref<32x32xf32, #tpu.memory_space<vmem>>, vector<32x32xf32>
    %cst_23 = arith.constant dense<0.000000e+00> : vector<256x32xf32>
    %62 = tpu.matmul %60, %61, %cst_23 {dimension_numbers = #tpu.dot_dimension_numbers<[1], [0], [0], [1], [0, 0, 1, 1], [], []>} : vector<256x32xf32>, vector<32x32xf32>, vector<256x32xf32> -> vector<256x32xf32>
    %c0_24 = arith.constant 0 : index
    %c0_25 = arith.constant 0 : index
    %63 = vector.load %arg7[%c0_24, %c0_25] : memref<1x32xf32, #tpu.memory_space<vmem>>, vector<1x32xf32>
    %64 = vector.broadcast %63 : vector<1x32xf32> to vector<256x32xf32>
    %65 = arith.addf %62, %64 : vector<256x32xf32>
    %cst_26 = arith.constant -5.000000e+00 : f32
    %cst_27 = arith.constant 5.000000e+00 : f32
    %66 = vector.broadcast %cst_26 : f32 to vector<256x32xf32>
    %67 = arith.maximumf %66, %65 : vector<256x32xf32>
    %68 = vector.broadcast %cst_27 : f32 to vector<256x32xf32>
    %69 = arith.minimumf %68, %67 : vector<256x32xf32>
    %70 = arith.addf %1, %69 : vector<256x32xf32>
    %c0_28 = arith.constant 0 : index
    %c0_29 = arith.constant 0 : index
    %71 = vector.load %arg8[%c0_28, %c0_29] : memref<1x32xf32, #tpu.memory_space<vmem>>, vector<1x32xf32>
    %c0_30 = arith.constant 0 : index
    %c0_31 = arith.constant 0 : index
    %72 = vector.load %arg9[%c0_30, %c0_31] : memref<1x32xf32, #tpu.memory_space<vmem>>, vector<1x32xf32>
    %cst_32 = arith.constant dense<0.000000e+00> : vector<256xf32>
    %73 = vector.multi_reduction <add>, %70, %cst_32 [1] : vector<256x32xf32> to vector<256xf32>
    %74 = vector.shape_cast %73 : vector<256xf32> to vector<256x1xf32>
    %cst_33 = arith.constant 3.200000e+01 : f32
    %75 = vector.broadcast %cst_33 : f32 to vector<256x1xf32>
    %76 = arith.divf %74, %75 : vector<256x1xf32>
    %77 = vector.broadcast %76 : vector<256x1xf32> to vector<256x32xf32>
    %78 = arith.subf %70, %77 : vector<256x32xf32>
    %79 = arith.mulf %78, %78 : vector<256x32xf32>
    %cst_34 = arith.constant dense<0.000000e+00> : vector<256xf32>
    %80 = vector.multi_reduction <add>, %79, %cst_34 [1] : vector<256x32xf32> to vector<256xf32>
    %81 = vector.shape_cast %80 : vector<256xf32> to vector<256x1xf32>
    %cst_35 = arith.constant 3.200000e+01 : f32
    %82 = vector.broadcast %cst_35 : f32 to vector<256x1xf32>
    %83 = arith.divf %81, %82 : vector<256x1xf32>
    %cst_36 = arith.constant 9.99999974E-6 : f32
    %84 = vector.broadcast %cst_36 : f32 to vector<256x1xf32>
    %85 = arith.addf %83, %84 : vector<256x1xf32>
    %86 = math.rsqrt %85 : vector<256x1xf32>
    %87 = vector.broadcast %86 : vector<256x1xf32> to vector<256x32xf32>
    %88 = arith.mulf %78, %87 : vector<256x32xf32>
    %89 = vector.broadcast %71 : vector<1x32xf32> to vector<256x32xf32>
    %90 = arith.mulf %88, %89 : vector<256x32xf32>
    %91 = vector.broadcast %72 : vector<1x32xf32> to vector<256x32xf32>
    %92 = arith.addf %90, %91 : vector<256x32xf32>
    %c0_37 = arith.constant 0 : index
    %c0_38 = arith.constant 0 : index
    %93 = vector.load %arg10[%c0_37, %c0_38] : memref<32x128xf32, #tpu.memory_space<vmem>>, vector<32x128xf32>
    %cst_39 = arith.constant dense<0.000000e+00> : vector<256x128xf32>
    %94 = tpu.matmul %92, %93, %cst_39 {dimension_numbers = #tpu.dot_dimension_numbers<[1], [0], [0], [1], [0, 0, 1, 1], [], []>} : vector<256x32xf32>, vector<32x128xf32>, vector<256x128xf32> -> vector<256x128xf32>
    %c0_40 = arith.constant 0 : index
    %c0_41 = arith.constant 0 : index
    %95 = vector.load %arg11[%c0_40, %c0_41] : memref<1x128xf32, #tpu.memory_space<vmem>>, vector<1x128xf32>
    %96 = vector.broadcast %95 : vector<1x128xf32> to vector<256x128xf32>
    %97 = arith.addf %94, %96 : vector<256x128xf32>
    %cst_42 = arith.constant 5.000000e-01 : f32
    %98 = vector.broadcast %cst_42 : f32 to vector<256x128xf32>
    %99 = arith.mulf %98, %97 : vector<256x128xf32>
    %cst_43 = arith.constant 0.707106769 : f32
    %100 = vector.broadcast %cst_43 : f32 to vector<256x128xf32>
    %101 = arith.mulf %97, %100 : vector<256x128xf32>
    %102 = math.erf %101 : vector<256x128xf32>
    %cst_44 = arith.constant 1.000000e+00 : f32
    %103 = vector.broadcast %cst_44 : f32 to vector<256x128xf32>
    %104 = arith.addf %103, %102 : vector<256x128xf32>
    %105 = arith.mulf %99, %104 : vector<256x128xf32>
    %c0_45 = arith.constant 0 : index
    %c0_46 = arith.constant 0 : index
    %106 = vector.load %arg12[%c0_45, %c0_46] : memref<128x32xf32, #tpu.memory_space<vmem>>, vector<128x32xf32>
    %cst_47 = arith.constant dense<0.000000e+00> : vector<256x32xf32>
    %107 = tpu.matmul %105, %106, %cst_47 {dimension_numbers = #tpu.dot_dimension_numbers<[1], [0], [0], [1], [0, 0, 1, 1], [], []>} : vector<256x128xf32>, vector<128x32xf32>, vector<256x32xf32> -> vector<256x32xf32>
    %c0_48 = arith.constant 0 : index
    %c0_49 = arith.constant 0 : index
    %108 = vector.load %arg13[%c0_48, %c0_49] : memref<1x32xf32, #tpu.memory_space<vmem>>, vector<1x32xf32>
    %109 = vector.broadcast %108 : vector<1x32xf32> to vector<256x32xf32>
    %110 = arith.addf %107, %109 : vector<256x32xf32>
    %111 = arith.addf %70, %110 : vector<256x32xf32>
    %112 = vector.shape_cast %111 : vector<256x32xf32> to vector<16x16x32xf32>
    %c0_50 = arith.constant 0 : index
    %c0_51 = arith.constant 0 : index
    %c0_52 = arith.constant 0 : index
    %113 = vector.load %arg15[%c0_50, %c0_51, %c0_52] : memref<16x16x32xf32, #tpu.memory_space<vmem>>, vector<16x16x32xf32>
    tpu.vector_store %arg15[%c0_50, %c0_51, %c0_52], %112 {strides = array<i32>} : memref<16x16x32xf32, #tpu.memory_space<vmem>>, vector<16x16x32xf32>,
    return
  }
  func.func @transform_0(%arg0: i32) -> (i32, i32, i32) {
    %c0_i32 = arith.constant 0 : i32
    %c0_i32_0 = arith.constant 0 : i32
    %c0_i32_1 = arith.constant 0 : i32
    return %arg0, %c0_i32, %c0_i32_0 : i32, i32, i32
  }
  func.func @transform_1(%arg0: i32) -> (i32, i32) {
    %c0_i32 = arith.constant 0 : i32
    %c0_i32_0 = arith.constant 0 : i32
    %c0_i32_1 = arith.constant 0 : i32
    return %c0_i32, %c0_i32_0 : i32, i32
  }
  func.func @transform_2(%arg0: i32) -> (i32, i32) {
    %c0_i32 = arith.constant 0 : i32
    %c0_i32_0 = arith.constant 0 : i32
    %c0_i32_1 = arith.constant 0 : i32
    return %c0_i32, %c0_i32_0 : i32, i32
  }
  func.func @transform_3(%arg0: i32) -> (i32, i32) {
    %c0_i32 = arith.constant 0 : i32
    %c0_i32_0 = arith.constant 0 : i32
    %c0_i32_1 = arith.constant 0 : i32
    return %c0_i32, %c0_i32_0 : i32, i32
  }
  func.func @transform_4(%arg0: i32) -> (i32, i32) {
    %c0_i32 = arith.constant 0 : i32
    %c0_i32_0 = arith.constant 0 : i32
    %c0_i32_1 = arith.constant 0 : i32
    return %c0_i32, %c0_i32_0 : i32, i32
  }
  func.func @transform_5(%arg0: i32) -> (i32, i32) {
    %c0_i32 = arith.constant 0 : i32
    %c0_i32_0 = arith.constant 0 : i32
    %c0_i32_1 = arith.constant 0 : i32
    return %c0_i32, %c0_i32_0 : i32, i32
  }
  func.func @transform_6(%arg0: i32) -> (i32, i32) {
    %c0_i32 = arith.constant 0 : i32
    %c0_i32_0 = arith.constant 0 : i32
    %c0_i32_1 = arith.constant 0 : i32
    return %c0_i32, %c0_i32_0 : i32, i32
  }
  func.func @transform_7(%arg0: i32) -> (i32, i32) {
    %c0_i32 = arith.constant 0 : i32
    %c0_i32_0 = arith.constant 0 : i32
    %c0_i32_1 = arith.constant 0 : i32
    return %c0_i32, %c0_i32_0 : i32, i32
  }
  func.func @transform_8(%arg0: i32) -> (i32, i32) {
    %c0_i32 = arith.constant 0 : i32
    %c0_i32_0 = arith.constant 0 : i32
    %c0_i32_1 = arith.constant 0 : i32
    return %c0_i32, %c0_i32_0 : i32, i32
  }
  func.func @transform_9(%arg0: i32) -> (i32, i32) {
    %c0_i32 = arith.constant 0 : i32
    %c0_i32_0 = arith.constant 0 : i32
    %c0_i32_1 = arith.constant 0 : i32
    return %c0_i32, %c0_i32_0 : i32, i32
  }
  func.func @transform_10(%arg0: i32) -> (i32, i32) {
    %c0_i32 = arith.constant 0 : i32
    %c0_i32_0 = arith.constant 0 : i32
    %c0_i32_1 = arith.constant 0 : i32
    return %c0_i32, %c0_i32_0 : i32, i32
  }
  func.func @transform_11(%arg0: i32) -> (i32, i32) {
    %c0_i32 = arith.constant 0 : i32
    %c0_i32_0 = arith.constant 0 : i32
    %c0_i32_1 = arith.constant 0 : i32
    return %c0_i32, %c0_i32_0 : i32, i32
  }
  func.func @transform_12(%arg0: i32) -> (i32, i32) {
    %c0_i32 = arith.constant 0 : i32
    %c0_i32_0 = arith.constant 0 : i32
    %c0_i32_1 = arith.constant 0 : i32
    return %c0_i32, %c0_i32_0 : i32, i32
  }
  func.func @transform_13(%arg0: i32) -> (i32, i32) {
    %c0_i32 = arith.constant 0 : i32
    %c0_i32_0 = arith.constant 0 : i32
    %c0_i32_1 = arith.constant 0 : i32
    return %c0_i32, %c0_i32_0 : i32, i32
  }
  func.func @transform_14(%arg0: i32) -> (i32, i32, i32) {
    %c0_i32 = arith.constant 0 : i32
    %c0_i32_0 = arith.constant 0 : i32
    %c0_i32_1 = arith.constant 0 : i32
    return %arg0, %c0_i32, %c0_i32_0 : i32, i32, i32
  }
}

</mosaic_0001>

<llo_original>
// kernel: tpu_custom_call.1
$region0: #{tpu_custom_call.1}
  #allocation0 [shape = 'u32[]', space=smem, size = 0x4, offset = 0x4, fixed_abs, tag = 'smem constant byte address 0x4 - core index']
  #allocation1 [shape = 'u32[72,128]{1,0:T(1,128)}', space=vmem, size = 0x9000, scoped, tag = 'internal scratch']
  %s0 = inlined_call_operand.hbm [shape: f32[16,16,32], index: 0, kind: input, shape index: {}]
  %s1 = inlined_call_operand.vmem [shape: f32[1,32], index: 1, kind: input, shape index: {}]
  %s2 = inlined_call_operand.vmem [shape: f32[1,32], index: 2, kind: input, shape index: {}]
  %s3 = inlined_call_operand.vmem [shape: f32[32,96], index: 3, kind: input, shape index: {}]
  %s4 = inlined_call_operand.vmem [shape: f32[1,96], index: 4, kind: input, shape index: {}]
  %s5 = inlined_call_operand.vmem [shape: f32[32,32], index: 5, kind: input, shape index: {}]
  %s6 = inlined_call_operand.vmem [shape: f32[1,32], index: 6, kind: input, shape index: {}]
  %s7 = inlined_call_operand.vmem [shape: f32[1,32], index: 7, kind: input, shape index: {}]
  %s8 = inlined_call_operand.vmem [shape: f32[1,32], index: 8, kind: input, shape index: {}]
  %s9 = inlined_call_operand.vmem [shape: f32[32,128], index: 9, kind: input, shape index: {}]
  %s10 = inlined_call_operand.vmem [shape: f32[1,128], index: 10, kind: input, shape index: {}]
  %s11 = inlined_call_operand.vmem [shape: f32[128,32], index: 11, kind: input, shape index: {}]
  %s12 = inlined_call_operand.vmem [shape: f32[1,32], index: 12, kind: input, shape index: {}]
  %s13 = inlined_call_operand.vmem [shape: f32[64,32], index: 13, kind: input, shape index: {}]
  %s14 = inlined_call_operand.hbm [shape: f32[16,16,32], index: 14, kind: output, shape index: {}]
  %s15 = sld [smem:[#allocation0]]
  $region70: #{tpu_custom_call.1} parent=0
    _
  %s17 = ssub.s32 1, %s15
  %s18 = scalar_select 0, %s17, %s15
  $region1: #{tpu_custom_call.1} parent=0
    #allocation2 [shape = 'u8[131072]{0}', space=vmem, size = 0x20000, scoped, tag = 'input window, operand 0, single buffered']
    #allocation3 [shape = 's32[1]{0}', space=sflag, size = 0x4, scoped, tag = 'scoped memory for tpu_custom_call.1']
    #allocation4 [shape = 's32[1]{0}', space=sflag, size = 0x4, scoped, tag = 'scoped memory for tpu_custom_call.1']
    #allocation5 [shape = 'u8[131072]{0}', space=vmem, size = 0x20000, scoped, tag = 'output window, operand 0, single buffered']
    %19 = vsyncpa [#allocation3], 0
    %20 = vsyncpa [#allocation4], 0
    // Predicated region
    $region2: #{tpu_custom_call.1} parent=1 // pred_check
      _
    $region3: #{tpu_custom_call.1} parent=1 // pred_check_branch
      %22 = sbr.rel (0) target = $region5
    $region4: #{tpu_custom_call.1} parent=1 // pred_region
      %24 = vsyncadd [#allocation3], 0
      %s25 = sshll.u32 %s0, 4
      %s26 = int_to_ptr.hbm [resolvable:$true] %s25
      %s27 = sshll.u32 [#allocation2], 4
      %s28 = int_to_ptr.vmem [resolvable:$true] %s27
      %33 = dma.hbm_to_vmem [thread:$0]  %s26, 4096, %s28, [#allocation3], 128, 128, 8
    $region5: #{tpu_custom_call.1} parent=1 // pred_fallthru
      _
    // Predicated region
    $region6: #{tpu_custom_call.1} parent=1 // pred_check
      _
    $region7: #{tpu_custom_call.1} parent=1 // pred_check_branch
      %35 = sbr.rel (0) target = $region9
    $region8: #{tpu_custom_call.1} parent=1 // pred_region
      _
    $region9: #{tpu_custom_call.1} parent=1 // pred_fallthru
      _
    // Predicated region
    $region10: #{tpu_custom_call.1} parent=1 // pred_check
      _
    $region11: #{tpu_custom_call.1} parent=1 // pred_check_branch
      %37 = sbr.rel (0) target = $region13
    $region12: #{tpu_custom_call.1} parent=1 // pred_region
      _
    $region13: #{tpu_custom_call.1} parent=1 // pred_fallthru
      _
    // Predicated region
    $region14: #{tpu_custom_call.1} parent=1 // pred_check
      _
    $region15: #{tpu_custom_call.1} parent=1 // pred_check_branch
      %39 = sbr.rel (0) target = $region17
    $region16: #{tpu_custom_call.1} parent=1 // pred_region
      _
    $region17: #{tpu_custom_call.1} parent=1 // pred_fallthru
      _
    // Predicated region
    $region18: #{tpu_custom_call.1} parent=1 // pred_check
      _
    $region19: #{tpu_custom_call.1} parent=1 // pred_check_branch
      %41 = sbr.rel (0) target = $region21
    $region20: #{tpu_custom_call.1} parent=1 // pred_region
      _
    $region21: #{tpu_custom_call.1} parent=1 // pred_fallthru
      _
    // Predicated region
    $region22: #{tpu_custom_call.1} parent=1 // pred_check
      _
    $region23: #{tpu_custom_call.1} parent=1 // pred_check_branch
      %43 = sbr.rel (0) target = $region25
    $region24: #{tpu_custom_call.1} parent=1 // pred_region
      _
    $region25: #{tpu_custom_call.1} parent=1 // pred_fallthru
      _
    // Predicated region
    $region26: #{tpu_custom_call.1} parent=1 // pred_check
      _
    $region27: #{tpu_custom_call.1} parent=1 // pred_check_branch
      %45 = sbr.rel (0) target = $region29
    $region28: #{tpu_custom_call.1} parent=1 // pred_region
      _
    $region29: #{tpu_custom_call.1} parent=1 // pred_fallthru
      _
    // Predicated region
    $region30: #{tpu_custom_call.1} parent=1 // pred_check
      _
    $region31: #{tpu_custom_call.1} parent=1 // pred_check_branch
      %47 = sbr.rel (0) target = $region33
    $region32: #{tpu_custom_call.1} parent=1 // pred_region
      _
    $region33: #{tpu_custom_call.1} parent=1 // pred_fallthru
      _
    // Predicated region
    $region34: #{tpu_custom_call.1} parent=1 // pred_check
      _
    $region35: #{tpu_custom_call.1} parent=1 // pred_check_branch
      %49 = sbr.rel (0) target = $region37
    $region36: #{tpu_custom_call.1} parent=1 // pred_region
      _
    $region37: #{tpu_custom_call.1} parent=1 // pred_fallthru
      _
    // Predicated region
    $region38: #{tpu_custom_call.1} parent=1 // pred_check
      _
    $region39: #{tpu_custom_call.1} parent=1 // pred_check_branch
      %51 = sbr.rel (0) target = $region41
    $region40: #{tpu_custom_call.1} parent=1 // pred_region
      _
    $region41: #{tpu_custom_call.1} parent=1 // pred_fallthru
      _
    // Predicated region
    $region42: #{tpu_custom_call.1} parent=1 // pred_check
      _
    $region43: #{tpu_custom_call.1} parent=1 // pred_check_branch
      %53 = sbr.rel (0) target = $region45
    $region44: #{tpu_custom_call.1} parent=1 // pred_region
      _
    $region45: #{tpu_custom_call.1} parent=1 // pred_fallthru
      _
    // Predicated region
    $region46: #{tpu_custom_call.1} parent=1 // pred_check
      _
    $region47: #{tpu_custom_call.1} parent=1 // pred_check_branch
      %55 = sbr.rel (0) target = $region49
    $region48: #{tpu_custom_call.1} parent=1 // pred_region
      _
    $region49: #{tpu_custom_call.1} parent=1 // pred_fallthru
      _
    // Predicated region
    $region50: #{tpu_custom_call.1} parent=1 // pred_check
      _
    $region51: #{tpu_custom_call.1} parent=1 // pred_check_branch
      %57 = sbr.rel (0) target = $region53
    $region52: #{tpu_custom_call.1} parent=1 // pred_region
      _
    $region53: #{tpu_custom_call.1} parent=1 // pred_fallthru
      _
    // Predicated region
    $region54: #{tpu_custom_call.1} parent=1 // pred_check
      _
    $region55: #{tpu_custom_call.1} parent=1 // pred_check_branch
      %59 = sbr.rel (0) target = $region57
    $region56: #{tpu_custom_call.1} parent=1 // pred_region
      _
    $region57: #{tpu_custom_call.1} parent=1 // pred_fallthru
      _
    // Predicated region
    $region58: #{tpu_custom_call.1} parent=1 // pred_check
      _
    $region59: #{tpu_custom_call.1} parent=1 // pred_check_branch
      %61 = sbr.rel (0) target = $region61
    $region60: #{tpu_custom_call.1} parent=1 // pred_region
      %63 = dma.done [#allocation3], 4096
    $region61: #{tpu_custom_call.1} parent=1 // pred_fallthru
      _
    %v64 = vld [vmem:[#allocation2] sm:$0xff]
    %v65 = vld [vmem:[#allocation2 + $0x8] sm:$0xff]
    %v66 = vld [vmem:[#allocation2 + $0x10] sm:$0xff]
    %v67 = vld [vmem:[#allocation2 + $0x18] sm:$0xff]
    %v68 = vld [vmem:[#allocation2 + $0x20] sm:$0xff]
    %v69 = vld [vmem:[#allocation2 + $0x28] sm:$0xff]
    %v70 = vld [vmem:[#allocation2 + $0x30] sm:$0xff]
    %v71 = vld [vmem:[#allocation2 + $0x38] sm:$0xff]
    %v72 = vld [vmem:[#allocation2 + $0x40] sm:$0xff]
    %v73 = vld [vmem:[#allocation2 + $0x48] sm:$0xff]
    %v74 = vld [vmem:[#allocation2 + $0x50] sm:$0xff]
    %v75 = vld [vmem:[#allocation2 + $0x58] sm:$0xff]
    %v76 = vld [vmem:[#allocation2 + $0x60] sm:$0xff]
    %v77 = vld [vmem:[#allocation2 + $0x68] sm:$0xff]
    %v78 = vld [vmem:[#allocation2 + $0x70] sm:$0xff]
    %v79 = vld [vmem:[#allocation2 + $0x78] sm:$0xff]
    %v80 = vld [vmem:[#allocation2 + $0x80] sm:$0xff]
    %v81 = vld [vmem:[#allocation2 + $0x88] sm:$0xff]
    %v82 = vld [vmem:[#allocation2 + $0x90] sm:$0xff]
    %v83 = vld [vmem:[#allocation2 + $0x98] sm:$0xff]
    %v84 = vld [vmem:[#allocation2 + $0xa0] sm:$0xff]
    %v85 = vld [vmem:[#allocation2 + $0xa8] sm:$0xff]
    %v86 = vld [vmem:[#allocation2 + $0xb0] sm:$0xff]
    %v87 = vld [vmem:[#allocation2 + $0xb8] sm:$0xff]
    %v88 = vld [vmem:[#allocation2 + $0xc0] sm:$0xff]
    %v89 = vld [vmem:[#allocation2 + $0xc8] sm:$0xff]
    %v90 = vld [vmem:[#allocation2 + $0xd0] sm:$0xff]
    %v91 = vld [vmem:[#allocation2 + $0xd8] sm:$0xff]
    %v92 = vld [vmem:[#allocation2 + $0xe0] sm:$0xff]
    %v93 = vld [vmem:[#allocation2 + $0xe8] sm:$0xff]
    %v94 = vld [vmem:[#allocation2 + $0xf0] sm:$0xff]
    %v95 = vld [vmem:[#allocation2 + $0xf8] sm:$0xff]
    %v96 = vld [vmem:[%s1] sm:$0x1]
    %v97 = vld [vmem:[%s2] sm:$0x1]
    %vm98 = vcmask 261120
    %v99 = vsel %vm98, %v64, 0.0
    %100 = vadd.xlane.f32.xlu0 %v99
    %v101 = vpop.xlane.xlu0 %100
    %v102 = vsel %vm98, %v65, 0.0
    %103 = vadd.xlane.f32.xlu0 %v102
    %v104 = vpop.xlane.xlu0 %103
    %v105 = vsel %vm98, %v66, 0.0
    %106 = vadd.xlane.f32.xlu0 %v105
    %v107 = vpop.xlane.xlu0 %106
    %v108 = vsel %vm98, %v67, 0.0
    %109 = vadd.xlane.f32.xlu0 %v108
    %v110 = vpop.xlane.xlu0 %109
    %v111 = vsel %vm98, %v68, 0.0
    %112 = vadd.xlane.f32.xlu0 %v111
    %v113 = vpop.xlane.xlu0 %112
    %v114 = vsel %vm98, %v69, 0.0
    %115 = vadd.xlane.f32.xlu0 %v114
    %v116 = vpop.xlane.xlu0 %115
    %v117 = vsel %vm98, %v70, 0.0
    %118 = vadd.xlane.f32.xlu0 %v117
    %v119 = vpop.xlane.xlu0 %118
    %v120 = vsel %vm98, %v71, 0.0
    %121 = vadd.xlane.f32.xlu0 %v120
    %v122 = vpop.xlane.xlu0 %121
    %v123 = vsel %vm98, %v72, 0.0
    %124 = vadd.xlane.f32.xlu0 %v123
    %v125 = vpop.xlane.xlu0 %124
    %v126 = vsel %vm98, %v73, 0.0
    %127 = vadd.xlane.f32.xlu0 %v126
    %v128 = vpop.xlane.xlu0 %127
    %v129 = vsel %vm98, %v74, 0.0
    %130 = vadd.xlane.f32.xlu0 %v129
    %v131 = vpop.xlane.xlu0 %130
    %v132 = vsel %vm98, %v75, 0.0
    %133 = vadd.xlane.f32.xlu0 %v132
    %v134 = vpop.xlane.xlu0 %133
    %v135 = vsel %vm98, %v76, 0.0
    %136 = vadd.xlane.f32.xlu0 %v135
    %v137 = vpop.xlane.xlu0 %136
    %v138 = vsel %vm98, %v77, 0.0
    %139 = vadd.xlane.f32.xlu0 %v138
    %v140 = vpop.xlane.xlu0 %139
    %v141 = vsel %vm98, %v78, 0.0
    %142 = vadd.xlane.f32.xlu0 %v141
    %v143 = vpop.xlane.xlu0 %142
    %v144 = vsel %vm98, %v79, 0.0
    %145 = vadd.xlane.f32.xlu0 %v144
    %v146 = vpop.xlane.xlu0 %145
    %v147 = vsel %vm98, %v80, 0.0
    %148 = vadd.xlane.f32.xlu0 %v147
    %v149 = vpop.xlane.xlu0 %148
    %v150 = vsel %vm98, %v81, 0.0
    %151 = vadd.xlane.f32.xlu0 %v150
    %v152 = vpop.xlane.xlu0 %151
    %v153 = vsel %vm98, %v82, 0.0
    %154 = vadd.xlane.f32.xlu0 %v153
    %v155 = vpop.xlane.xlu0 %154
    %v156 = vsel %vm98, %v83, 0.0
    %157 = vadd.xlane.f32.xlu0 %v156
    %v158 = vpop.xlane.xlu0 %157
    %v159 = vsel %vm98, %v84, 0.0
    %160 = vadd.xlane.f32.xlu0 %v159
    %v161 = vpop.xlane.xlu0 %160
    %v162 = vsel %vm98, %v85, 0.0
    %163 = vadd.xlane.f32.xlu0 %v162
    %v164 = vpop.xlane.xlu0 %163
    %v165 = vsel %vm98, %v86, 0.0
    %166 = vadd.xlane.f32.xlu0 %v165
    %v167 = vpop.xlane.xlu0 %166
    %v168 = vsel %vm98, %v87, 0.0
    %169 = vadd.xlane.f32.xlu0 %v168
    %v170 = vpop.xlane.xlu0 %169
    %v171 = vsel %vm98, %v88, 0.0
    %172 = vadd.xlane.f32.xlu0 %v171
    %v173 = vpop.xlane.xlu0 %172
    %v174 = vsel %vm98, %v89, 0.0
    %175 = vadd.xlane.f32.xlu0 %v174
    %v176 = vpop.xlane.xlu0 %175
    %v177 = vsel %vm98, %v90, 0.0
    %178 = vadd.xlane.f32.xlu0 %v177
    %v179 = vpop.xlane.xlu0 %178
    %v180 = vsel %vm98, %v91, 0.0
    %181 = vadd.xlane.f32.xlu0 %v180
    %v182 = vpop.xlane.xlu0 %181
    %v183 = vsel %vm98, %v92, 0.0
    %184 = vadd.xlane.f32.xlu0 %v183
    %v185 = vpop.xlane.xlu0 %184
    %v186 = vsel %vm98, %v93, 0.0
    %187 = vadd.xlane.f32.xlu0 %v186
    %v188 = vpop.xlane.xlu0 %187
    %v189 = vsel %vm98, %v94, 0.0
    %190 = vadd.xlane.f32.xlu0 %v189
    %v191 = vpop.xlane.xlu0 %190
    %v192 = vsel %vm98, %v95, 0.0
    %193 = vadd.xlane.f32.xlu0 %v192
    %v194 = vpop.xlane.xlu0 %193
    %v195 = vrcp.pop 32.0
    %v196 = vmul.f32 32.0, %v195
    %v197 = vsub.f32 1.0, %v196
    %v198 = vmul.f32 %v195, %v197
    %v199 = vadd.f32 %v195, %v198
    %vm200 = vweird.f32 %v195
    %v201 = vsel %vm200, %v195, %v199
    %v202 = vmul.f32 %v101, %v201
    %v203 = vmul.f32 %v104, %v201
    %v204 = vmul.f32 %v107, %v201
    %v205 = vmul.f32 %v110, %v201
    %v206 = vmul.f32 %v113, %v201
    %v207 = vmul.f32 %v116, %v201
    %v208 = vmul.f32 %v119, %v201
    %v209 = vmul.f32 %v122, %v201
    %v210 = vmul.f32 %v125, %v201
    %v211 = vmul.f32 %v128, %v201
    %v212 = vmul.f32 %v131, %v201
    %v213 = vmul.f32 %v134, %v201
    %v214 = vmul.f32 %v137, %v201
    %v215 = vmul.f32 %v140, %v201
    %v216 = vmul.f32 %v143, %v201
    %v217 = vmul.f32 %v146, %v201
    %v218 = vmul.f32 %v149, %v201
    %v219 = vmul.f32 %v152, %v201
    %v220 = vmul.f32 %v155, %v201
    %v221 = vmul.f32 %v158, %v201
    %v222 = vmul.f32 %v161, %v201
    %v223 = vmul.f32 %v164, %v201
    %v224 = vmul.f32 %v167, %v201
    %v225 = vmul.f32 %v170, %v201
    %v226 = vmul.f32 %v173, %v201
    %v227 = vmul.f32 %v176, %v201
    %v228 = vmul.f32 %v179, %v201
    %v229 = vmul.f32 %v182, %v201
    %v230 = vmul.f32 %v185, %v201
    %v231 = vmul.f32 %v188, %v201
    %v232 = vmul.f32 %v191, %v201
    %v233 = vmul.f32 %v194, %v201
    %v234 = vsub.f32 %v64, %v202
    %v235 = vsub.f32 %v65, %v203
    %v236 = vsub.f32 %v66, %v204
    %v237 = vsub.f32 %v67, %v205
    %v238 = vsub.f32 %v68, %v206
    %v239 = vsub.f32 %v69, %v207
    %v240 = vsub.f32 %v70, %v208
    %v241 = vsub.f32 %v71, %v209
    %v242 = vsub.f32 %v72, %v210
    %v243 = vsub.f32 %v73, %v211
    %v244 = vsub.f32 %v74, %v212
    %v245 = vsub.f32 %v75, %v213
    %v246 = vsub.f32 %v76, %v214
    %v247 = vsub.f32 %v77, %v215
    %v248 = vsub.f32 %v78, %v216
    %v249 = vsub.f32 %v79, %v217
    %v250 = vsub.f32 %v80, %v218
    %v251 = vsub.f32 %v81, %v219
    %v252 = vsub.f32 %v82, %v220
    %v253 = vsub.f32 %v83, %v221
    %v254 = vsub.f32 %v84, %v222
    %v255 = vsub.f32 %v85, %v223
    %v256 = vsub.f32 %v86, %v224
    %v257 = vsub.f32 %v87, %v225
    %v258 = vsub.f32 %v88, %v226
    %v259 = vsub.f32 %v89, %v227
    %v260 = vsub.f32 %v90, %v228
    %v261 = vsub.f32 %v91, %v229
    %v262 = vsub.f32 %v92, %v230
    %v263 = vsub.f32 %v93, %v231
    %v264 = vsub.f32 %v94, %v232
    %v265 = vsub.f32 %v95, %v233
    %v266 = vmul.f32 %v234, %v234
    %v267 = vmul.f32 %v235, %v235
    %v268 = vmul.f32 %v236, %v236
    %v269 = vmul.f32 %v237, %v237
    %v270 = vmul.f32 %v238, %v238
    %v271 = vmul.f32 %v239, %v239
    %v272 = vmul.f32 %v240, %v240
    %v273 = vmul.f32 %v241, %v241
    %v274 = vmul.f32 %v242, %v242
    %v275 = vmul.f32 %v243, %v243
    %v276 = vmul.f32 %v244, %v244
    %v277 = vmul.f32 %v245, %v245
    %v278 = vmul.f32 %v246, %v246
    %v279 = vmul.f32 %v247, %v247
    %v280 = vmul.f32 %v248, %v248
    %v281 = vmul.f32 %v249, %v249
    %v282 = vmul.f32 %v250, %v250
    %v283 = vmul.f32 %v251, %v251
    %v284 = vmul.f32 %v252, %v252
    %v285 = vmul.f32 %v253, %v253
    %v286 = vmul.f32 %v254, %v254
    %v287 = vmul.f32 %v255, %v255
    %v288 = vmul.f32 %v256, %v256
    %v289 = vmul.f32 %v257, %v257
    %v290 = vmul.f32 %v258, %v258
    %v291 = vmul.f32 %v259, %v259
    %v292 = vmul.f32 %v260, %v260
    %v293 = vmul.f32 %v261, %v261
    %v294 = vmul.f32 %v262, %v262
    %v295 = vmul.f32 %v263, %v263
    %v296 = vmul.f32 %v264, %v264
    %v297 = vmul.f32 %v265, %v265
    %v298 = vsel %vm98, %v266, 0.0
    %299 = vadd.xlane.f32.xlu0 %v298
    %v300 = vpop.xlane.xlu0 %299
    %v301 = vsel %vm98, %v267, 0.0
    %302 = vadd.xlane.f32.xlu0 %v301
    %v303 = vpop.xlane.xlu0 %302
    %v304 = vsel %vm98, %v268, 0.0
    %305 = vadd.xlane.f32.xlu0 %v304
    %v306 = vpop.xlane.xlu0 %305
    %v307 = vsel %vm98, %v269, 0.0
    %308 = vadd.xlane.f32.xlu0 %v307
    %v309 = vpop.xlane.xlu0 %308
    %v310 = vsel %vm98, %v270, 0.0
    %311 = vadd.xlane.f32.xlu0 %v310
    %v312 = vpop.xlane.xlu0 %311
    %v313 = vsel %vm98, %v271, 0.0
    %314 = vadd.xlane.f32.xlu0 %v313
    %v315 = vpop.xlane.xlu0 %314
    %v316 = vsel %vm98, %v272, 0.0
    %317 = vadd.xlane.f32.xlu0 %v316
    %v318 = vpop.xlane.xlu0 %317
    %v319 = vsel %vm98, %v273, 0.0
    %320 = vadd.xlane.f32.xlu0 %v319
    %v321 = vpop.xlane.xlu0 %320
    %v322 = vsel %vm98, %v274, 0.0
    %323 = vadd.xlane.f32.xlu0 %v322
    %v324 = vpop.xlane.xlu0 %323
    %v325 = vsel %vm98, %v275, 0.0
    %326 = vadd.xlane.f32.xlu0 %v325
    %v327 = vpop.xlane.xlu0 %326
    %v328 = vsel %vm98, %v276, 0.0
    %329 = vadd.xlane.f32.xlu0 %v328
    %v330 = vpop.xlane.xlu0 %329
    %v331 = vsel %vm98, %v277, 0.0
    %332 = vadd.xlane.f32.xlu0 %v331
    %v333 = vpop.xlane.xlu0 %332
    %v334 = vsel %vm98, %v278, 0.0
    %335 = vadd.xlane.f32.xlu0 %v334
    %v336 = vpop.xlane.xlu0 %335
    %v337 = vsel %vm98, %v279, 0.0
    %338 = vadd.xlane.f32.xlu0 %v337
    %v339 = vpop.xlane.xlu0 %338
    %v340 = vsel %vm98, %v280, 0.0
    %341 = vadd.xlane.f32.xlu0 %v340
    %v342 = vpop.xlane.xlu0 %341
    %v343 = vsel %vm98, %v281, 0.0
    %344 = vadd.xlane.f32.xlu0 %v343
    %v345 = vpop.xlane.xlu0 %344
    %v346 = vsel %vm98, %v282, 0.0
    %347 = vadd.xlane.f32.xlu0 %v346
    %v348 = vpop.xlane.xlu0 %347
    %v349 = vsel %vm98, %v283, 0.0
    %350 = vadd.xlane.f32.xlu0 %v349
    %v351 = vpop.xlane.xlu0 %350
    %v352 = vsel %vm98, %v284, 0.0
    %353 = vadd.xlane.f32.xlu0 %v352
    %v354 = vpop.xlane.xlu0 %353
    %v355 = vsel %vm98, %v285, 0.0
    %356 = vadd.xlane.f32.xlu0 %v355
    %v357 = vpop.xlane.xlu0 %356
    %v358 = vsel %vm98, %v286, 0.0
    %359 = vadd.xlane.f32.xlu0 %v358
    %v360 = vpop.xlane.xlu0 %359
    %v361 = vsel %vm98, %v287, 0.0
    %362 = vadd.xlane.f32.xlu0 %v361
    %v363 = vpop.xlane.xlu0 %362
    %v364 = vsel %vm98, %v288, 0.0
    %365 = vadd.xlane.f32.xlu0 %v364
    %v366 = vpop.xlane.xlu0 %365
    %v367 = vsel %vm98, %v289, 0.0
    %368 = vadd.xlane.f32.xlu0 %v367
    %v369 = vpop.xlane.xlu0 %368
    %v370 = vsel %vm98, %v290, 0.0
    %371 = vadd.xlane.f32.xlu0 %v370
    %v372 = vpop.xlane.xlu0 %371
    %v373 = vsel %vm98, %v291, 0.0
    %374 = vadd.xlane.f32.xlu0 %v373
    %v375 = vpop.xlane.xlu0 %374
    %v376 = vsel %vm98, %v292, 0.0
    %377 = vadd.xlane.f32.xlu0 %v376
    %v378 = vpop.xlane.xlu0 %377
    %v379 = vsel %vm98, %v293, 0.0
    %380 = vadd.xlane.f32.xlu0 %v379
    %v381 = vpop.xlane.xlu0 %380
    %v382 = vsel %vm98, %v294, 0.0
    %383 = vadd.xlane.f32.xlu0 %v382
    %v384 = vpop.xlane.xlu0 %383
    %v385 = vsel %vm98, %v295, 0.0
    %386 = vadd.xlane.f32.xlu0 %v385
    %v387 = vpop.xlane.xlu0 %386
    %v388 = vsel %vm98, %v296, 0.0
    %389 = vadd.xlane.f32.xlu0 %v388
    %v390 = vpop.xlane.xlu0 %389
    %v391 = vsel %vm98, %v297, 0.0
    %392 = vadd.xlane.f32.xlu0 %v391
    %v393 = vpop.xlane.xlu0 %392
    %v394 = vmul.f32 %v300, %v201
    %v395 = vmul.f32 %v303, %v201
    %v396 = vmul.f32 %v306, %v201
    %v397 = vmul.f32 %v309, %v201
    %v398 = vmul.f32 %v312, %v201
    %v399 = vmul.f32 %v315, %v201
    %v400 = vmul.f32 %v318, %v201
    %v401 = vmul.f32 %v321, %v201
    %v402 = vmul.f32 %v324, %v201
    %v403 = vmul.f32 %v327, %v201
    %v404 = vmul.f32 %v330, %v201
    %v405 = vmul.f32 %v333, %v201
    %v406 = vmul.f32 %v336, %v201
    %v407 = vmul.f32 %v339, %v201
    %v408 = vmul.f32 %v342, %v201
    %v409 = vmul.f32 %v345, %v201
    %v410 = vmul.f32 %v348, %v201
    %v411 = vmul.f32 %v351, %v201
    %v412 = vmul.f32 %v354, %v201
    %v413 = vmul.f32 %v357, %v201
    %v414 = vmul.f32 %v360, %v201
    %v415 = vmul.f32 %v363, %v201
    %v416 = vmul.f32 %v366, %v201
    %v417 = vmul.f32 %v369, %v201
    %v418 = vmul.f32 %v372, %v201
    %v419 = vmul.f32 %v375, %v201
    %v420 = vmul.f32 %v378, %v201
    %v421 = vmul.f32 %v381, %v201
    %v422 = vmul.f32 %v384, %v201
    %v423 = vmul.f32 %v387, %v201
    %v424 = vmul.f32 %v390, %v201
    %v425 = vmul.f32 %v393, %v201
    %v426 = vadd.f32 %v394, 1e-05
    %v427 = vadd.f32 %v395, 1e-05
    %v428 = vadd.f32 %v396, 1e-05
    %v429 = vadd.f32 %v397, 1e-05
    %v430 = vadd.f32 %v398, 1e-05
    %v431 = vadd.f32 %v399, 1e-05
    %v432 = vadd.f32 %v400, 1e-05
    %v433 = vadd.f32 %v401, 1e-05
    %v434 = vadd.f32 %v402, 1e-05
    %v435 = vadd.f32 %v403, 1e-05
    %v436 = vadd.f32 %v404, 1e-05
    %v437 = vadd.f32 %v405, 1e-05
    %v438 = vadd.f32 %v406, 1e-05
    %v439 = vadd.f32 %v407, 1e-05
    %v440 = vadd.f32 %v408, 1e-05
    %v441 = vadd.f32 %v409, 1e-05
    %v442 = vadd.f32 %v410, 1e-05
    %v443 = vadd.f32 %v411, 1e-05
    %v444 = vadd.f32 %v412, 1e-05
    %v445 = vadd.f32 %v413, 1e-05
    %v446 = vadd.f32 %v414, 1e-05
    %v447 = vadd.f32 %v415, 1e-05
    %v448 = vadd.f32 %v416, 1e-05
    %v449 = vadd.f32 %v417, 1e-05
    %v450 = vadd.f32 %v418, 1e-05
    %v451 = vadd.f32 %v419, 1e-05
    %v452 = vadd.f32 %v420, 1e-05
    %v453 = vadd.f32 %v421, 1e-05
    %v454 = vadd.f32 %v422, 1e-05
    %v455 = vadd.f32 %v423, 1e-05
    %v456 = vadd.f32 %v424, 1e-05
    %v457 = vadd.f32 %v425, 1e-05
    %v458 = vrsqrt.pop %v426
    %v459 = vmul.f32 %v458, %v426
    %v460 = vmul.f32 %v459, %v458
    %v461 = vmul.f32 0.5, %v460
    %v462 = vsub.f32 1.5, %v461
    %v463 = vmul.f32 %v458, %v462
    %vm464 = vweird.f32 %v426
    %vm465 = vweird.f32 %v458
    %vm466 = vmor %vm464, %vm465
    %v467 = vsel %vm466, %v458, %v463
    %v468 = vrsqrt.pop %v427
    %v469 = vmul.f32 %v468, %v427
    %v470 = vmul.f32 %v469, %v468
    %v471 = vmul.f32 0.5, %v470
    %v472 = vsub.f32 1.5, %v471
    %v473 = vmul.f32 %v468, %v472
    %vm474 = vweird.f32 %v427
    %vm475 = vweird.f32 %v468
    %vm476 = vmor %vm474, %vm475
    %v477 = vsel %vm476, %v468, %v473
    %v478 = vrsqrt.pop %v428
    %v479 = vmul.f32 %v478, %v428
    %v480 = vmul.f32 %v479, %v478
    %v481 = vmul.f32 0.5, %v480
    %v482 = vsub.f32 1.5, %v481
    %v483 = vmul.f32 %v478, %v482
    %vm484 = vweird.f32 %v428
    %vm485 = vweird.f32 %v478
    %vm486 = vmor %vm484, %vm485
    %v487 = vsel %vm486, %v478, %v483
    %v488 = vrsqrt.pop %v429
    %v489 = vmul.f32 %v488, %v429
    %v490 = vmul.f32 %v489, %v488
    %v491 = vmul.f32 0.5, %v490
    %v492 = vsub.f32 1.5, %v491
    %v493 = vmul.f32 %v488, %v492
    %vm494 = vweird.f32 %v429
    %vm495 = vweird.f32 %v488
    %vm496 = vmor %vm494, %vm495
    %v497 = vsel %vm496, %v488, %v493
    %v498 = vrsqrt.pop %v430
    %v499 = vmul.f32 %v498, %v430
    %v500 = vmul.f32 %v499, %v498
    %v501 = vmul.f32 0.5, %v500
    %v502 = vsub.f32 1.5, %v501
    %v503 = vmul.f32 %v498, %v502
    %vm504 = vweird.f32 %v430
    %vm505 = vweird.f32 %v498
    %vm506 = vmor %vm504, %vm505
    %v507 = vsel %vm506, %v498, %v503
    %v508 = vrsqrt.pop %v431
    %v509 = vmul.f32 %v508, %v431
    %v510 = vmul.f32 %v509, %v508
    %v511 = vmul.f32 0.5, %v510
    %v512 = vsub.f32 1.5, %v511
    %v513 = vmul.f32 %v508, %v512
    %vm514 = vweird.f32 %v431
    %vm515 = vweird.f32 %v508
    %vm516 = vmor %vm514, %vm515
    %v517 = vsel %vm516, %v508, %v513
    %v518 = vrsqrt.pop %v432
    %v519 = vmul.f32 %v518, %v432
    %v520 = vmul.f32 %v519, %v518
    %v521 = vmul.f32 0.5, %v520
    %v522 = vsub.f32 1.5, %v521
    %v523 = vmul.f32 %v518, %v522
    %vm524 = vweird.f32 %v432
    %vm525 = vweird.f32 %v518
    %vm526 = vmor %vm524, %vm525
    %v527 = vsel %vm526, %v518, %v523
    %v528 = vrsqrt.pop %v433
    %v529 = vmul.f32 %v528, %v433
    %v530 = vmul.f32 %v529, %v528
    %v531 = vmul.f32 0.5, %v530
    %v532 = vsub.f32 1.5, %v531
    %v533 = vmul.f32 %v528, %v532
    %vm534 = vweird.f32 %v433
    %vm535 = vweird.f32 %v528
    %vm536 = vmor %vm534, %vm535
    %v537 = vsel %vm536, %v528, %v533
    %v538 = vrsqrt.pop %v434
    %v539 = vmul.f32 %v538, %v434
    %v540 = vmul.f32 %v539, %v538
    %v541 = vmul.f32 0.5, %v540
    %v542 = vsub.f32 1.5, %v541
    %v543 = vmul.f32 %v538, %v542
    %vm544 = vweird.f32 %v434
    %vm545 = vweird.f32 %v538
    %vm546 = vmor %vm544, %vm545
    %v547 = vsel %vm546, %v538, %v543
    %v548 = vrsqrt.pop %v435
    %v549 = vmul.f32 %v548, %v435
    %v550 = vmul.f32 %v549, %v548
    %v551 = vmul.f32 0.5, %v550
    %v552 = vsub.f32 1.5, %v551
    %v553 = vmul.f32 %v548, %v552
    %vm554 = vweird.f32 %v435
    %vm555 = vweird.f32 %v548
    %vm556 = vmor %vm554, %vm555
    %v557 = vsel %vm556, %v548, %v553
    %v558 = vrsqrt.pop %v436
    %v559 = vmul.f32 %v558, %v436
    %v560 = vmul.f32 %v559, %v558
    %v561 = vmul.f32 0.5, %v560
    %v562 = vsub.f32 1.5, %v561
    %v563 = vmul.f32 %v558, %v562
    %vm564 = vweird.f32 %v436
    %vm565 = vweird.f32 %v558
    %vm566 = vmor %vm564, %vm565
    %v567 = vsel %vm566, %v558, %v563
    %v568 = vrsqrt.pop %v437
    %v569 = vmul.f32 %v568, %v437
    %v570 = vmul.f32 %v569, %v568
    %v571 = vmul.f32 0.5, %v570
    %v572 = vsub.f32 1.5, %v571
    %v573 = vmul.f32 %v568, %v572
    %vm574 = vweird.f32 %v437
    %vm575 = vweird.f32 %v568
    %vm576 = vmor %vm574, %vm575
    %v577 = vsel %vm576, %v568, %v573
    %v578 = vrsqrt.pop %v438
    %v579 = vmul.f32 %v578, %v438
    %v580 = vmul.f32 %v579, %v578
    %v581 = vmul.f32 0.5, %v580
    %v582 = vsub.f32 1.5, %v581
    %v583 = vmul.f32 %v578, %v582
    %vm584 = vweird.f32 %v438
    %vm585 = vweird.f32 %v578
    %vm586 = vmor %vm584, %vm585
    %v587 = vsel %vm586, %v578, %v583
    %v588 = vrsqrt.pop %v439
    %v589 = vmul.f32 %v588, %v439
    %v590 = vmul.f32 %v589, %v588
    %v591 = vmul.f32 0.5, %v590
    %v592 = vsub.f32 1.5, %v591
    %v593 = vmul.f32 %v588, %v592
    %vm594 = vweird.f32 %v439
    %vm595 = vweird.f32 %v588
    %vm596 = vmor %vm594, %vm595
    %v597 = vsel %vm596, %v588, %v593
    %v598 = vrsqrt.pop %v440
    %v599 = vmul.f32 %v598, %v440
    %v600 = vmul.f32 %v599, %v598
    %v601 = vmul.f32 0.5, %v600
    %v602 = vsub.f32 1.5, %v601
    %v603 = vmul.f32 %v598, %v602
    %vm604 = vweird.f32 %v440
    %vm605 = vweird.f32 %v598
    %vm606 = vmor %vm604, %vm605
    %v607 = vsel %vm606, %v598, %v603
    %v608 = vrsqrt.pop %v441
    %v609 = vmul.f32 %v608, %v441
    %v610 = vmul.f32 %v609, %v608
    %v611 = vmul.f32 0.5, %v610
    %v612 = vsub.f32 1.5, %v611
    %v613 = vmul.f32 %v608, %v612
    %vm614 = vweird.f32 %v441
    %vm615 = vweird.f32 %v608
    %vm616 = vmor %vm614, %vm615
    %v617 = vsel %vm616, %v608, %v613
    %v618 = vrsqrt.pop %v442
    %v619 = vmul.f32 %v618, %v442
    %v620 = vmul.f32 %v619, %v618
    %v621 = vmul.f32 0.5, %v620
    %v622 = vsub.f32 1.5, %v621
    %v623 = vmul.f32 %v618, %v622
    %vm624 = vweird.f32 %v442
    %vm625 = vweird.f32 %v618
    %vm626 = vmor %vm624, %vm625
    %v627 = vsel %vm626, %v618, %v623
    %v628 = vrsqrt.pop %v443
    %v629 = vmul.f32 %v628, %v443
    %v630 = vmul.f32 %v629, %v628
    %v631 = vmul.f32 0.5, %v630
    %v632 = vsub.f32 1.5, %v631
    %v633 = vmul.f32 %v628, %v632
    %vm634 = vweird.f32 %v443
    %vm635 = vweird.f32 %v628
    %vm636 = vmor %vm634, %vm635
    %v637 = vsel %vm636, %v628, %v633
    %v638 = vrsqrt.pop %v444
    %v639 = vmul.f32 %v638, %v444
    %v640 = vmul.f32 %v639, %v638
    %v641 = vmul.f32 0.5, %v640
    %v642 = vsub.f32 1.5, %v641
    %v643 = vmul.f32 %v638, %v642
    %vm644 = vweird.f32 %v444
    %vm645 = vweird.f32 %v638
    %vm646 = vmor %vm644, %vm645
    %v647 = vsel %vm646, %v638, %v643
    %v648 = vrsqrt.pop %v445
    %v649 = vmul.f32 %v648, %v445
    %v650 = vmul.f32 %v649, %v648
    %v651 = vmul.f32 0.5, %v650
    %v652 = vsub.f32 1.5, %v651
    %v653 = vmul.f32 %v648, %v652
    %vm654 = vweird.f32 %v445
    %vm655 = vweird.f32 %v648
    %vm656 = vmor %vm654, %vm655
    %v657 = vsel %vm656, %v648, %v653
    %v658 = vrsqrt.pop %v446
    %v659 = vmul.f32 %v658, %v446
    %v660 = vmul.f32 %v659, %v658
    %v661 = vmul.f32 0.5, %v660
    %v662 = vsub.f32 1.5, %v661
    %v663 = vmul.f32 %v658, %v662
    %vm664 = vweird.f32 %v446
    %vm665 = vweird.f32 %v658
    %vm666 = vmor %vm664, %vm665
    %v667 = vsel %vm666, %v658, %v663
    %v668 = vrsqrt.pop %v447
    %v669 = vmul.f32 %v668, %v447
    %v670 = vmul.f32 %v669, %v668
    %v671 = vmul.f32 0.5, %v670
    %v672 = vsub.f32 1.5, %v671
    %v673 = vmul.f32 %v668, %v672
    %vm674 = vweird.f32 %v447
    %vm675 = vweird.f32 %v668
    %vm676 = vmor %vm674, %vm675
    %v677 = vsel %vm676, %v668, %v673
    %v678 = vrsqrt.pop %v448
    %v679 = vmul.f32 %v678, %v448
    %v680 = vmul.f32 %v679, %v678
    %v681 = vmul.f32 0.5, %v680
    %v682 = vsub.f32 1.5, %v681
    %v683 = vmul.f32 %v678, %v682
    %vm684 = vweird.f32 %v448
    %vm685 = vweird.f32 %v678
    %vm686 = vmor %vm684, %vm685
    %v687 = vsel %vm686, %v678, %v683
    %v688 = vrsqrt.pop %v449
    %v689 = vmul.f32 %v688, %v449
    %v690 = vmul.f32 %v689, %v688
    %v691 = vmul.f32 0.5, %v690
    %v692 = vsub.f32 1.5, %v691
    %v693 = vmul.f32 %v688, %v692
    %vm694 = vweird.f32 %v449
    %vm695 = vweird.f32 %v688
    %vm696 = vmor %vm694, %vm695
    %v697 = vsel %vm696, %v688, %v693
    %v698 = vrsqrt.pop %v450
    %v699 = vmul.f32 %v698, %v450
    %v700 = vmul.f32 %v699, %v698
    %v701 = vmul.f32 0.5, %v700
    %v702 = vsub.f32 1.5, %v701
    %v703 = vmul.f32 %v698, %v702
    %vm704 = vweird.f32 %v450
    %vm705 = vweird.f32 %v698
    %vm706 = vmor %vm704, %vm705
    %v707 = vsel %vm706, %v698, %v703
    %v708 = vrsqrt.pop %v451
    %v709 = vmul.f32 %v708, %v451
    %v710 = vmul.f32 %v709, %v708
    %v711 = vmul.f32 0.5, %v710
    %v712 = vsub.f32 1.5, %v711
    %v713 = vmul.f32 %v708, %v712
    %vm714 = vweird.f32 %v451
    %vm715 = vweird.f32 %v708
    %vm716 = vmor %vm714, %vm715
    %v717 = vsel %vm716, %v708, %v713
    %v718 = vrsqrt.pop %v452
    %v719 = vmul.f32 %v718, %v452
    %v720 = vmul.f32 %v719, %v718
    %v721 = vmul.f32 0.5, %v720
    %v722 = vsub.f32 1.5, %v721
    %v723 = vmul.f32 %v718, %v722
    %vm724 = vweird.f32 %v452
    %vm725 = vweird.f32 %v718
    %vm726 = vmor %vm724, %vm725
    %v727 = vsel %vm726, %v718, %v723
    %v728 = vrsqrt.pop %v453
    %v729 = vmul.f32 %v728, %v453
    %v730 = vmul.f32 %v729, %v728
    %v731 = vmul.f32 0.5, %v730
    %v732 = vsub.f32 1.5, %v731
    %v733 = vmul.f32 %v728, %v732
    %vm734 = vweird.f32 %v453
    %vm735 = vweird.f32 %v728
    %vm736 = vmor %vm734, %vm735
    %v737 = vsel %vm736, %v728, %v733
    %v738 = vrsqrt.pop %v454
    %v739 = vmul.f32 %v738, %v454
    %v740 = vmul.f32 %v739, %v738
    %v741 = vmul.f32 0.5, %v740
    %v742 = vsub.f32 1.5, %v741
    %v743 = vmul.f32 %v738, %v742
    %vm744 = vweird.f32 %v454
    %vm745 = vweird.f32 %v738
    %vm746 = vmor %vm744, %vm745
    %v747 = vsel %vm746, %v738, %v743
    %v748 = vrsqrt.pop %v455
    %v749 = vmul.f32 %v748, %v455
    %v750 = vmul.f32 %v749, %v748
    %v751 = vmul.f32 0.5, %v750
    %v752 = vsub.f32 1.5, %v751
    %v753 = vmul.f32 %v748, %v752
    %vm754 = vweird.f32 %v455
    %vm755 = vweird.f32 %v748
    %vm756 = vmor %vm754, %vm755
    %v757 = vsel %vm756, %v748, %v753
    %v758 = vrsqrt.pop %v456
    %v759 = vmul.f32 %v758, %v456
    %v760 = vmul.f32 %v759, %v758
    %v761 = vmul.f32 0.5, %v760
    %v762 = vsub.f32 1.5, %v761
    %v763 = vmul.f32 %v758, %v762
    %vm764 = vweird.f32 %v456
    %vm765 = vweird.f32 %v758
    %vm766 = vmor %vm764, %vm765
    %v767 = vsel %vm766, %v758, %v763
    %v768 = vrsqrt.pop %v457
    %v769 = vmul.f32 %v768, %v457
    %v770 = vmul.f32 %v769, %v768
    %v771 = vmul.f32 0.5, %v770
    %v772 = vsub.f32 1.5, %v771
    %v773 = vmul.f32 %v768, %v772
    %vm774 = vweird.f32 %v457
    %vm775 = vweird.f32 %v768
    %vm776 = vmor %vm774, %vm775
    %v777 = vsel %vm776, %v768, %v773
    %v778 = vmul.f32 %v234, %v467
    %v779 = vmul.f32 %v235, %v477
    %v780 = vmul.f32 %v236, %v487
    %v781 = vmul.f32 %v237, %v497
    %v782 = vmul.f32 %v238, %v507
    %v783 = vmul.f32 %v239, %v517
    %v784 = vmul.f32 %v240, %v527
    %v785 = vmul.f32 %v241, %v537
    %v786 = vmul.f32 %v242, %v547
    %v787 = vmul.f32 %v243, %v557
    %v788 = vmul.f32 %v244, %v567
    %v789 = vmul.f32 %v245, %v577
    %v790 = vmul.f32 %v246, %v587
    %v791 = vmul.f32 %v247, %v597
    %v792 = vmul.f32 %v248, %v607
    %v793 = vmul.f32 %v249, %v617
    %v794 = vmul.f32 %v250, %v627
    %v795 = vmul.f32 %v251, %v637
    %v796 = vmul.f32 %v252, %v647
    %v797 = vmul.f32 %v253, %v657
    %v798 = vmul.f32 %v254, %v667
    %v799 = vmul.f32 %v255, %v677
    %v800 = vmul.f32 %v256, %v687
    %v801 = vmul.f32 %v257, %v697
    %v802 = vmul.f32 %v258, %v707
    %v803 = vmul.f32 %v259, %v717
    %v804 = vmul.f32 %v260, %v727
    %v805 = vmul.f32 %v261, %v737
    %v806 = vmul.f32 %v262, %v747
    %v807 = vmul.f32 %v263, %v757
    %v808 = vmul.f32 %v264, %v767
    %v809 = vmul.f32 %v265, %v777
    %v811 = vperm.slane %v96, 0
    %v813 = vmul.f32 %v778, %v811
    %v814 = vmul.f32 %v779, %v811
    %v815 = vmul.f32 %v780, %v811
    %v816 = vmul.f32 %v781, %v811
    %v817 = vmul.f32 %v782, %v811
    %v818 = vmul.f32 %v783, %v811
    %v819 = vmul.f32 %v784, %v811
    %v820 = vmul.f32 %v785, %v811
    %v821 = vmul.f32 %v786, %v811
    %v822 = vmul.f32 %v787, %v811
    %v823 = vmul.f32 %v788, %v811
    %v824 = vmul.f32 %v789, %v811
    %v825 = vmul.f32 %v790, %v811
    %v826 = vmul.f32 %v791, %v811
    %v827 = vmul.f32 %v792, %v811
    %v828 = vmul.f32 %v793, %v811
    %v829 = vmul.f32 %v794, %v811
    %v830 = vmul.f32 %v795, %v811
    %v831 = vmul.f32 %v796, %v811
    %v832 = vmul.f32 %v797, %v811
    %v833 = vmul.f32 %v798, %v811
    %v834 = vmul.f32 %v799, %v811
    %v835 = vmul.f32 %v800, %v811
    %v836 = vmul.f32 %v801, %v811
    %v837 = vmul.f32 %v802, %v811
    %v838 = vmul.f32 %v803, %v811
    %v839 = vmul.f32 %v804, %v811
    %v840 = vmul.f32 %v805, %v811
    %v841 = vmul.f32 %v806, %v811
    %v842 = vmul.f32 %v807, %v811
    %v843 = vmul.f32 %v808, %v811
    %v844 = vmul.f32 %v809, %v811
    %v846 = vperm.slane %v97, 0
    %v848 = vadd.f32 %v813, %v846
    %v849 = vadd.f32 %v814, %v846
    %v850 = vadd.f32 %v815, %v846
    %v851 = vadd.f32 %v816, %v846
    %v852 = vadd.f32 %v817, %v846
    %v853 = vadd.f32 %v818, %v846
    %v854 = vadd.f32 %v819, %v846
    %v855 = vadd.f32 %v820, %v846
    %v856 = vadd.f32 %v821, %v846
    %v857 = vadd.f32 %v822, %v846
    %v858 = vadd.f32 %v823, %v846
    %v859 = vadd.f32 %v824, %v846
    %v860 = vadd.f32 %v825, %v846
    %v861 = vadd.f32 %v826, %v846
    %v862 = vadd.f32 %v827, %v846
    %v863 = vadd.f32 %v828, %v846
    %v864 = vadd.f32 %v829, %v846
    %v865 = vadd.f32 %v830, %v846
    %v866 = vadd.f32 %v831, %v846
    %v867 = vadd.f32 %v832, %v846
    %v868 = vadd.f32 %v833, %v846
    %v869 = vadd.f32 %v834, %v846
    %v870 = vadd.f32 %v835, %v846
    %v871 = vadd.f32 %v836, %v846
    %v872 = vadd.f32 %v837, %v846
    %v873 = vadd.f32 %v838, %v846
    %v874 = vadd.f32 %v839, %v846
    %v875 = vadd.f32 %v840, %v846
    %v876 = vadd.f32 %v841, %v846
    %v877 = vadd.f32 %v842, %v846
    %v878 = vadd.f32 %v843, %v846
    %v879 = vadd.f32 %v844, %v846
    %v880 = vld [vmem:[%s3] sm:$0xff]
    %v881 = vld [vmem:[%s3 + $0x8] sm:$0xff]
    %v882 = vld [vmem:[%s3 + $0x10] sm:$0xff]
    %v883 = vld [vmem:[%s3 + $0x18] sm:$0xff]
    %v884 = vld [vmem:[%s4] sm:$0x1]
    %v886 = vperm.slane %v884, 0
    %v889 = vsel %vm98, %v848, 0
    %v892 = vsel %vm98, %v849, 0
    %v895 = vsel %vm98, %v850, 0
    %v898 = vsel %vm98, %v851, 0
    %v901 = vsel %vm98, %v852, 0
    %v904 = vsel %vm98, %v853, 0
    %v907 = vsel %vm98, %v854, 0
    %v910 = vsel %vm98, %v855, 0
    %v913 = vsel %vm98, %v856, 0
    %v916 = vsel %vm98, %v857, 0
    %v919 = vsel %vm98, %v858, 0
    %v922 = vsel %vm98, %v859, 0
    %v925 = vsel %vm98, %v860, 0
    %v928 = vsel %vm98, %v861, 0
    %v931 = vsel %vm98, %v862, 0
    %v934 = vsel %vm98, %v863, 0
    %v937 = vsel %vm98, %v864, 0
    %v940 = vsel %vm98, %v865, 0
    %v943 = vsel %vm98, %v866, 0
    %v946 = vsel %vm98, %v867, 0
    %v949 = vsel %vm98, %v868, 0
    %v952 = vsel %vm98, %v869, 0
    %v955 = vsel %vm98, %v870, 0
    %v958 = vsel %vm98, %v871, 0
    %v961 = vsel %vm98, %v872, 0
    %v964 = vsel %vm98, %v873, 0
    %v967 = vsel %vm98, %v874, 0
    %v970 = vsel %vm98, %v875, 0
    %v973 = vsel %vm98, %v876, 0
    %v976 = vsel %vm98, %v877, 0
    %v979 = vsel %vm98, %v878, 0
    %v982 = vsel %vm98, %v879, 0
    %984 = vmatpush.msra.mxu0 0.0
    %985 = vmatpush.msra.mxu0 0.0
    %986 = vmatpush.msra.mxu0 0.0
    %987 = vmatpush.msra.mxu0 0.0
    %988 = vmatpush.msra.mxu0 0.0
    %989 = vmatpush.msra.mxu0 0.0
    %990 = vmatpush.msra.mxu0 0.0
    %991 = vmatpush.msra.mxu0 0.0
    %992 = vmatpush.msra.mxu0 0.0
    %993 = vmatpush.msra.mxu0 0.0
    %994 = vmatpush.msra.mxu0 0.0
    %995 = vmatpush.msra.mxu0 0.0
    %996 = vmatpush.msra.mxu0 %v883
    %997 = vmatpush.msra.mxu0 %v882
    %998 = vmatpush.msra.mxu0 %v881
    %999 = vmatpush.msra.mxu0 %v880
    %1000 = vmatmul.f32.gmra.mxu0 %v889
    %v1001 = vpop.f32.mrf.mxu0
    %v1002 = vadd.f32 %v886, %v1001
    %1003 = vmatmul.f32.gmra.mxu0 %v892
    %v1004 = vpop.f32.mrf.mxu0
    %v1005 = vadd.f32 %v886, %v1004
    %1006 = vmatmul.f32.gmra.mxu0 %v895
    %v1007 = vpop.f32.mrf.mxu0
    %v1008 = vadd.f32 %v886, %v1007
    %1009 = vmatmul.f32.gmra.mxu0 %v898
    %v1010 = vpop.f32.mrf.mxu0
    %v1011 = vadd.f32 %v886, %v1010
    %1012 = vmatmul.f32.gmra.mxu0 %v901
    %v1013 = vpop.f32.mrf.mxu0
    %v1014 = vadd.f32 %v886, %v1013
    %1015 = vmatmul.f32.gmra.mxu0 %v904
    %v1016 = vpop.f32.mrf.mxu0
    %v1017 = vadd.f32 %v886, %v1016
    %1018 = vmatmul.f32.gmra.mxu0 %v907
    %v1019 = vpop.f32.mrf.mxu0
    %v1020 = vadd.f32 %v886, %v1019
    %1021 = vmatmul.f32.gmra.mxu0 %v910
    %v1022 = vpop.f32.mrf.mxu0
    %v1023 = vadd.f32 %v886, %v1022
    %1024 = vmatmul.f32.gmra.mxu0 %v913
    %v1025 = vpop.f32.mrf.mxu0
    %v1026 = vadd.f32 %v886, %v1025
    %1027 = vmatmul.f32.gmra.mxu0 %v916
    %v1028 = vpop.f32.mrf.mxu0
    %v1029 = vadd.f32 %v886, %v1028
    %1030 = vmatmul.f32.gmra.mxu0 %v919
    %v1031 = vpop.f32.mrf.mxu0
    %v1032 = vadd.f32 %v886, %v1031
    %1033 = vmatmul.f32.gmra.mxu0 %v922
    %v1034 = vpop.f32.mrf.mxu0
    %v1035 = vadd.f32 %v886, %v1034
    %1036 = vmatmul.f32.gmra.mxu0 %v925
    %v1037 = vpop.f32.mrf.mxu0
    %v1038 = vadd.f32 %v886, %v1037
    %1039 = vmatmul.f32.gmra.mxu0 %v928
    %v1040 = vpop.f32.mrf.mxu0
    %v1041 = vadd.f32 %v886, %v1040
    %1042 = vmatmul.f32.gmra.mxu0 %v931
    %v1043 = vpop.f32.mrf.mxu0
    %v1044 = vadd.f32 %v886, %v1043
    %1045 = vmatmul.f32.gmra.mxu0 %v934
    %v1046 = vpop.f32.mrf.mxu0
    %v1047 = vadd.f32 %v886, %v1046
    %1048 = vmatmul.f32.gmra.mxu0 %v937
    %v1049 = vpop.f32.mrf.mxu0
    %v1050 = vadd.f32 %v886, %v1049
    %1051 = vmatmul.f32.gmra.mxu0 %v940
    %v1052 = vpop.f32.mrf.mxu0
    %v1053 = vadd.f32 %v886, %v1052
    %1054 = vmatmul.f32.gmra.mxu0 %v943
    %v1055 = vpop.f32.mrf.mxu0
    %v1056 = vadd.f32 %v886, %v1055
    %1057 = vmatmul.f32.gmra.mxu0 %v946
    %v1058 = vpop.f32.mrf.mxu0
    %v1059 = vadd.f32 %v886, %v1058
    %1060 = vmatmul.f32.gmra.mxu0 %v949
    %v1061 = vpop.f32.mrf.mxu0
    %v1062 = vadd.f32 %v886, %v1061
    %1063 = vmatmul.f32.gmra.mxu0 %v952
    %v1064 = vpop.f32.mrf.mxu0
    %v1065 = vadd.f32 %v886, %v1064
    %1066 = vmatmul.f32.gmra.mxu0 %v955
    %v1067 = vpop.f32.mrf.mxu0
    %v1068 = vadd.f32 %v886, %v1067
    %1069 = vmatmul.f32.gmra.mxu0 %v958
    %v1070 = vpop.f32.mrf.mxu0
    %v1071 = vadd.f32 %v886, %v1070
    %1072 = vmatmul.f32.gmra.mxu0 %v961
    %v1073 = vpop.f32.mrf.mxu0
    %v1074 = vadd.f32 %v886, %v1073
    %1075 = vmatmul.f32.gmra.mxu0 %v964
    %v1076 = vpop.f32.mrf.mxu0
    %v1077 = vadd.f32 %v886, %v1076
    %1078 = vmatmul.f32.gmra.mxu0 %v967
    %v1079 = vpop.f32.mrf.mxu0
    %v1080 = vadd.f32 %v886, %v1079
    %1081 = vmatmul.f32.gmra.mxu0 %v970
    %v1082 = vpop.f32.mrf.mxu0
    %v1083 = vadd.f32 %v886, %v1082
    %1084 = vmatmul.f32.gmra.mxu0 %v973
    %v1085 = vpop.f32.mrf.mxu0
    %v1086 = vadd.f32 %v886, %v1085
    %1087 = vmatmul.f32.gmra.mxu0 %v976
    %v1088 = vpop.f32.mrf.mxu0
    %v1089 = vadd.f32 %v886, %v1088
    %1090 = vmatmul.f32.gmra.mxu0 %v979
    %v1091 = vpop.f32.mrf.mxu0
    %v1092 = vadd.f32 %v886, %v1091
    %1093 = vmatmul.f32.gmra.mxu0 %v982
    %v1094 = vpop.f32.mrf.mxu0
    %v1095 = vadd.f32 %v886, %v1094
    %1096 = vdwg.mxu0
    %v1097 = vld [vmem:[%s13] sm:$0xff]
    %v1098 = vld [vmem:[%s13 + $0x8] sm:$0xff]
    %v1099 = vld [vmem:[%s13 + $0x10] sm:$0xff]
    %v1100 = vld [vmem:[%s13 + $0x18] sm:$0xff]
    %v1101 = vld [vmem:[%s13 + $0x20] sm:$0xff]
    %v1102 = vld [vmem:[%s13 + $0x28] sm:$0xff]
    %v1103 = vld [vmem:[%s13 + $0x30] sm:$0xff]
    %v1104 = vld [vmem:[%s13 + $0x38] sm:$0xff]
    %1113 = vrot.lane.b32.xlu0 %v1097, 32
    %v1114 = vpop.permute.xlu0 %1113
    %1115 = vrot.lane.b32.xlu0 %v1098, 32
    %v1116 = vpop.permute.xlu0 %1115
    %1117 = vrot.lane.b32.xlu0 %v1099, 32
    %v1118 = vpop.permute.xlu0 %1117
    %1119 = vrot.lane.b32.xlu0 %v1100, 32
    %v1120 = vpop.permute.xlu0 %1119
    %1121 = vrot.lane.b32.xlu0 %v1101, 32
    %v1122 = vpop.permute.xlu0 %1121
    %1123 = vrot.lane.b32.xlu0 %v1102, 32
    %v1124 = vpop.permute.xlu0 %1123
    %1125 = vrot.lane.b32.xlu0 %v1103, 32
    %v1126 = vpop.permute.xlu0 %1125
    %1127 = vrot.lane.b32.xlu0 %v1104, 32
    %v1128 = vpop.permute.xlu0 %1127
    %v1137 = vmul.f32 %v1002, %v1114
    %v1138 = vmul.f32 %v1005, %v1116
    %v1139 = vmul.f32 %v1002, %v1118
    %v1140 = vmul.f32 %v1005, %v1120
    %v1141 = vmul.f32 %v1002, %v1122
    %v1142 = vmul.f32 %v1005, %v1124
    %v1143 = vmul.f32 %v1002, %v1126
    %v1144 = vmul.f32 %v1005, %v1128
    %v1145 = vmul.f32 %v1008, %v1114
    %v1146 = vmul.f32 %v1011, %v1116
    %v1147 = vmul.f32 %v1008, %v1118
    %v1148 = vmul.f32 %v1011, %v1120
    %v1149 = vmul.f32 %v1008, %v1122
    %v1150 = vmul.f32 %v1011, %v1124
    %v1151 = vmul.f32 %v1008, %v1126
    %v1152 = vmul.f32 %v1011, %v1128
    %v1153 = vmul.f32 %v1014, %v1114
    %v1154 = vmul.f32 %v1017, %v1116
    %v1155 = vmul.f32 %v1014, %v1118
    %v1156 = vmul.f32 %v1017, %v1120
    %v1157 = vmul.f32 %v1014, %v1122
    %v1158 = vmul.f32 %v1017, %v1124
    %v1159 = vmul.f32 %v1014, %v1126
    %v1160 = vmul.f32 %v1017, %v1128
    %v1161 = vmul.f32 %v1020, %v1114
    %v1162 = vmul.f32 %v1023, %v1116
    %v1163 = vmul.f32 %v1020, %v1118
    %v1164 = vmul.f32 %v1023, %v1120
    %v1165 = vmul.f32 %v1020, %v1122
    %v1166 = vmul.f32 %v1023, %v1124
    %v1167 = vmul.f32 %v1020, %v1126
    %v1168 = vmul.f32 %v1023, %v1128
    %v1169 = vmul.f32 %v1026, %v1114
    %v1170 = vmul.f32 %v1029, %v1116
    %v1171 = vmul.f32 %v1026, %v1118
    %v1172 = vmul.f32 %v1029, %v1120
    %v1173 = vmul.f32 %v1026, %v1122
    %v1174 = vmul.f32 %v1029, %v1124
    %v1175 = vmul.f32 %v1026, %v1126
    %v1176 = vmul.f32 %v1029, %v1128
    %v1177 = vmul.f32 %v1032, %v1114
    %v1178 = vmul.f32 %v1035, %v1116
    %v1179 = vmul.f32 %v1032, %v1118
    %v1180 = vmul.f32 %v1035, %v1120
    %v1181 = vmul.f32 %v1032, %v1122
    %v1182 = vmul.f32 %v1035, %v1124
    %v1183 = vmul.f32 %v1032, %v1126
    %v1184 = vmul.f32 %v1035, %v1128
    %v1185 = vmul.f32 %v1038, %v1114
    %v1186 = vmul.f32 %v1041, %v1116
    %v1187 = vmul.f32 %v1038, %v1118
    %v1188 = vmul.f32 %v1041, %v1120
    %v1189 = vmul.f32 %v1038, %v1122
    %v1190 = vmul.f32 %v1041, %v1124
    %v1191 = vmul.f32 %v1038, %v1126
    %v1192 = vmul.f32 %v1041, %v1128
    %v1193 = vmul.f32 %v1044, %v1114
    %v1194 = vmul.f32 %v1047, %v1116
    %v1195 = vmul.f32 %v1044, %v1118
    %v1196 = vmul.f32 %v1047, %v1120
    %v1197 = vmul.f32 %v1044, %v1122
    %v1198 = vmul.f32 %v1047, %v1124
    %v1199 = vmul.f32 %v1044, %v1126
    %v1200 = vmul.f32 %v1047, %v1128
    %v1201 = vmul.f32 %v1050, %v1114
    %v1202 = vmul.f32 %v1053, %v1116
    %v1203 = vmul.f32 %v1050, %v1118
    %v1204 = vmul.f32 %v1053, %v1120
    %v1205 = vmul.f32 %v1050, %v1122
    %v1206 = vmul.f32 %v1053, %v1124
    %v1207 = vmul.f32 %v1050, %v1126
    %v1208 = vmul.f32 %v1053, %v1128
    %v1209 = vmul.f32 %v1056, %v1114
    %v1210 = vmul.f32 %v1059, %v1116
    %v1211 = vmul.f32 %v1056, %v1118
    %v1212 = vmul.f32 %v1059, %v1120
    %v1213 = vmul.f32 %v1056, %v1122
    %v1214 = vmul.f32 %v1059, %v1124
    %v1215 = vmul.f32 %v1056, %v1126
    %v1216 = vmul.f32 %v1059, %v1128
    %v1217 = vmul.f32 %v1062, %v1114
    %v1218 = vmul.f32 %v1065, %v1116
    %v1219 = vmul.f32 %v1062, %v1118
    %v1220 = vmul.f32 %v1065, %v1120
    %v1221 = vmul.f32 %v1062, %v1122
    %v1222 = vmul.f32 %v1065, %v1124
    %v1223 = vmul.f32 %v1062, %v1126
    %v1224 = vmul.f32 %v1065, %v1128
    %v1225 = vmul.f32 %v1068, %v1114
    %v1226 = vmul.f32 %v1071, %v1116
    %v1227 = vmul.f32 %v1068, %v1118
    %v1228 = vmul.f32 %v1071, %v1120
    %v1229 = vmul.f32 %v1068, %v1122
    %v1230 = vmul.f32 %v1071, %v1124
    %v1231 = vmul.f32 %v1068, %v1126
    %v1232 = vmul.f32 %v1071, %v1128
    %v1233 = vmul.f32 %v1074, %v1114
    %v1234 = vmul.f32 %v1077, %v1116
    %v1235 = vmul.f32 %v1074, %v1118
    %v1236 = vmul.f32 %v1077, %v1120
    %v1237 = vmul.f32 %v1074, %v1122
    %v1238 = vmul.f32 %v1077, %v1124
    %v1239 = vmul.f32 %v1074, %v1126
    %v1240 = vmul.f32 %v1077, %v1128
    %v1241 = vmul.f32 %v1080, %v1114
    %v1242 = vmul.f32 %v1083, %v1116
    %v1243 = vmul.f32 %v1080, %v1118
    %v1244 = vmul.f32 %v1083, %v1120
    %v1245 = vmul.f32 %v1080, %v1122
    %v1246 = vmul.f32 %v1083, %v1124
    %v1247 = vmul.f32 %v1080, %v1126
    %v1248 = vmul.f32 %v1083, %v1128
    %v1249 = vmul.f32 %v1086, %v1114
    %v1250 = vmul.f32 %v1089, %v1116
    %v1251 = vmul.f32 %v1086, %v1118
    %v1252 = vmul.f32 %v1089, %v1120
    %v1253 = vmul.f32 %v1086, %v1122
    %v1254 = vmul.f32 %v1089, %v1124
    %v1255 = vmul.f32 %v1086, %v1126
    %v1256 = vmul.f32 %v1089, %v1128
    %v1257 = vmul.f32 %v1092, %v1114
    %v1258 = vmul.f32 %v1095, %v1116
    %v1259 = vmul.f32 %v1092, %v1118
    %v1260 = vmul.f32 %v1095, %v1120
    %v1261 = vmul.f32 %v1092, %v1122
    %v1262 = vmul.f32 %v1095, %v1124
    %v1263 = vmul.f32 %v1092, %v1126
    %v1264 = vmul.f32 %v1095, %v1128
    %1265 = vrot.lane.b32.xlu0 %v1097, 64
    %v1266 = vpop.permute.xlu0 %1265
    %1267 = vrot.lane.b32.xlu0 %v1098, 64
    %v1268 = vpop.permute.xlu0 %1267
    %1269 = vrot.lane.b32.xlu0 %v1099, 64
    %v1270 = vpop.permute.xlu0 %1269
    %1271 = vrot.lane.b32.xlu0 %v1100, 64
    %v1272 = vpop.permute.xlu0 %1271
    %1273 = vrot.lane.b32.xlu0 %v1101, 64
    %v1274 = vpop.permute.xlu0 %1273
    %1275 = vrot.lane.b32.xlu0 %v1102, 64
    %v1276 = vpop.permute.xlu0 %1275
    %1277 = vrot.lane.b32.xlu0 %v1103, 64
    %v1278 = vpop.permute.xlu0 %1277
    %1279 = vrot.lane.b32.xlu0 %v1104, 64
    %v1280 = vpop.permute.xlu0 %1279
    %v1289 = vmul.f32 %v1002, %v1266
    %v1290 = vmul.f32 %v1005, %v1268
    %v1291 = vmul.f32 %v1002, %v1270
    %v1292 = vmul.f32 %v1005, %v1272
    %v1293 = vmul.f32 %v1002, %v1274
    %v1294 = vmul.f32 %v1005, %v1276
    %v1295 = vmul.f32 %v1002, %v1278
    %v1296 = vmul.f32 %v1005, %v1280
    %v1297 = vmul.f32 %v1008, %v1266
    %v1298 = vmul.f32 %v1011, %v1268
    %v1299 = vmul.f32 %v1008, %v1270
    %v1300 = vmul.f32 %v1011, %v1272
    %v1301 = vmul.f32 %v1008, %v1274
    %v1302 = vmul.f32 %v1011, %v1276
    %v1303 = vmul.f32 %v1008, %v1278
    %v1304 = vmul.f32 %v1011, %v1280
    %v1305 = vmul.f32 %v1014, %v1266
    %v1306 = vmul.f32 %v1017, %v1268
    %v1307 = vmul.f32 %v1014, %v1270
    %v1308 = vmul.f32 %v1017, %v1272
    %v1309 = vmul.f32 %v1014, %v1274
    %v1310 = vmul.f32 %v1017, %v1276
    %v1311 = vmul.f32 %v1014, %v1278
    %v1312 = vmul.f32 %v1017, %v1280
    %v1313 = vmul.f32 %v1020, %v1266
    %v1314 = vmul.f32 %v1023, %v1268
    %v1315 = vmul.f32 %v1020, %v1270
    %v1316 = vmul.f32 %v1023, %v1272
    %v1317 = vmul.f32 %v1020, %v1274
    %v1318 = vmul.f32 %v1023, %v1276
    %v1319 = vmul.f32 %v1020, %v1278
    %v1320 = vmul.f32 %v1023, %v1280
    %v1321 = vmul.f32 %v1026, %v1266
    %v1322 = vmul.f32 %v1029, %v1268
    %v1323 = vmul.f32 %v1026, %v1270
    %v1324 = vmul.f32 %v1029, %v1272
    %v1325 = vmul.f32 %v1026, %v1274
    %v1326 = vmul.f32 %v1029, %v1276
    %v1327 = vmul.f32 %v1026, %v1278
    %v1328 = vmul.f32 %v1029, %v1280
    %v1329 = vmul.f32 %v1032, %v1266
    %v1330 = vmul.f32 %v1035, %v1268
    %v1331 = vmul.f32 %v1032, %v1270
    %v1332 = vmul.f32 %v1035, %v1272
    %v1333 = vmul.f32 %v1032, %v1274
    %v1334 = vmul.f32 %v1035, %v1276
    %v1335 = vmul.f32 %v1032, %v1278
    %v1336 = vmul.f32 %v1035, %v1280
    %v1337 = vmul.f32 %v1038, %v1266
    %v1338 = vmul.f32 %v1041, %v1268
    %v1339 = vmul.f32 %v1038, %v1270
    %v1340 = vmul.f32 %v1041, %v1272
    %v1341 = vmul.f32 %v1038, %v1274
    %v1342 = vmul.f32 %v1041, %v1276
    %v1343 = vmul.f32 %v1038, %v1278
    %v1344 = vmul.f32 %v1041, %v1280
    %v1345 = vmul.f32 %v1044, %v1266
    %v1346 = vmul.f32 %v1047, %v1268
    %v1347 = vmul.f32 %v1044, %v1270
    %v1348 = vmul.f32 %v1047, %v1272
    %v1349 = vmul.f32 %v1044, %v1274
    %v1350 = vmul.f32 %v1047, %v1276
    %v1351 = vmul.f32 %v1044, %v1278
    %v1352 = vmul.f32 %v1047, %v1280
    %v1353 = vmul.f32 %v1050, %v1266
    %v1354 = vmul.f32 %v1053, %v1268
    %v1355 = vmul.f32 %v1050, %v1270
    %v1356 = vmul.f32 %v1053, %v1272
    %v1357 = vmul.f32 %v1050, %v1274
    %v1358 = vmul.f32 %v1053, %v1276
    %v1359 = vmul.f32 %v1050, %v1278
    %v1360 = vmul.f32 %v1053, %v1280
    %v1361 = vmul.f32 %v1056, %v1266
    %v1362 = vmul.f32 %v1059, %v1268
    %v1363 = vmul.f32 %v1056, %v1270
    %v1364 = vmul.f32 %v1059, %v1272
    %v1365 = vmul.f32 %v1056, %v1274
    %v1366 = vmul.f32 %v1059, %v1276
    %v1367 = vmul.f32 %v1056, %v1278
    %v1368 = vmul.f32 %v1059, %v1280
    %v1369 = vmul.f32 %v1062, %v1266
    %v1370 = vmul.f32 %v1065, %v1268
    %v1371 = vmul.f32 %v1062, %v1270
    %v1372 = vmul.f32 %v1065, %v1272
    %v1373 = vmul.f32 %v1062, %v1274
    %v1374 = vmul.f32 %v1065, %v1276
    %v1375 = vmul.f32 %v1062, %v1278
    %v1376 = vmul.f32 %v1065, %v1280
    %v1377 = vmul.f32 %v1068, %v1266
    %v1378 = vmul.f32 %v1071, %v1268
    %v1379 = vmul.f32 %v1068, %v1270
    %v1380 = vmul.f32 %v1071, %v1272
    %v1381 = vmul.f32 %v1068, %v1274
    %v1382 = vmul.f32 %v1071, %v1276
    %v1383 = vmul.f32 %v1068, %v1278
    %v1384 = vmul.f32 %v1071, %v1280
    %v1385 = vmul.f32 %v1074, %v1266
    %v1386 = vmul.f32 %v1077, %v1268
    %v1387 = vmul.f32 %v1074, %v1270
    %v1388 = vmul.f32 %v1077, %v1272
    %v1389 = vmul.f32 %v1074, %v1274
    %v1390 = vmul.f32 %v1077, %v1276
    %v1391 = vmul.f32 %v1074, %v1278
    %v1392 = vmul.f32 %v1077, %v1280
    %v1393 = vmul.f32 %v1080, %v1266
    %v1394 = vmul.f32 %v1083, %v1268
    %v1395 = vmul.f32 %v1080, %v1270
    %v1396 = vmul.f32 %v1083, %v1272
    %v1397 = vmul.f32 %v1080, %v1274
    %v1398 = vmul.f32 %v1083, %v1276
    %v1399 = vmul.f32 %v1080, %v1278
    %v1400 = vmul.f32 %v1083, %v1280
    %v1401 = vmul.f32 %v1086, %v1266
    %v1402 = vmul.f32 %v1089, %v1268
    %v1403 = vmul.f32 %v1086, %v1270
    %v1404 = vmul.f32 %v1089, %v1272
    %v1405 = vmul.f32 %v1086, %v1274
    %v1406 = vmul.f32 %v1089, %v1276
    %v1407 = vmul.f32 %v1086, %v1278
    %v1408 = vmul.f32 %v1089, %v1280
    %v1409 = vmul.f32 %v1092, %v1266
    %v1410 = vmul.f32 %v1095, %v1268
    %v1411 = vmul.f32 %v1092, %v1270
    %v1412 = vmul.f32 %v1095, %v1272
    %v1413 = vmul.f32 %v1092, %v1274
    %v1414 = vmul.f32 %v1095, %v1276
    %v1415 = vmul.f32 %v1092, %v1278
    %v1416 = vmul.f32 %v1095, %v1280
    %1425 = vrot.lane.b32.xlu0 %v1137, 96
    %v1426 = vpop.permute.xlu0 %1425
    %1427 = vrot.lane.b32.xlu0 %v1138, 96
    %v1428 = vpop.permute.xlu0 %1427
    %1429 = vrot.lane.b32.xlu0 %v1139, 96
    %v1430 = vpop.permute.xlu0 %1429
    %1431 = vrot.lane.b32.xlu0 %v1140, 96
    %v1432 = vpop.permute.xlu0 %1431
    %1433 = vrot.lane.b32.xlu0 %v1141, 96
    %v1434 = vpop.permute.xlu0 %1433
    %1435 = vrot.lane.b32.xlu0 %v1142, 96
    %v1436 = vpop.permute.xlu0 %1435
    %1437 = vrot.lane.b32.xlu0 %v1143, 96
    %v1438 = vpop.permute.xlu0 %1437
    %1439 = vrot.lane.b32.xlu0 %v1144, 96
    %v1440 = vpop.permute.xlu0 %1439
    %v1442 = vsel %vm98, %v1002, 0
    %v1445 = vsel %vm98, %v1005, 0
    %v1447 = vsel %vm98, %v1426, 0
    %v1449 = vsel %vm98, %v1428, 0
    %v1451 = vsel %vm98, %v1430, 0
    %v1453 = vsel %vm98, %v1432, 0
    %v1455 = vsel %vm98, %v1434, 0
    %v1457 = vsel %vm98, %v1436, 0
    %v1459 = vsel %vm98, %v1438, 0
    %v1461 = vsel %vm98, %v1440, 0
    %1463 = vmatpush.xpose.msra.mxu0 0.0
    %1464 = vmatpush.xpose.msra.mxu0 0.0
    %1465 = vmatpush.xpose.msra.mxu0 0.0
    %1466 = vmatpush.xpose.msra.mxu0 0.0
    %1467 = vmatpush.xpose.msra.mxu0 0.0
    %1468 = vmatpush.xpose.msra.mxu0 0.0
    %1469 = vmatpush.xpose.msra.mxu0 0.0
    %1470 = vmatpush.xpose.msra.mxu0 0.0
    %1471 = vmatpush.xpose.msra.mxu0 %v1461
    %1472 = vmatpush.xpose.msra.mxu0 %v1459
    %1473 = vmatpush.xpose.msra.mxu0 %v1457
    %1474 = vmatpush.xpose.msra.mxu0 %v1455
    %1475 = vmatpush.xpose.msra.mxu0 %v1453
    %1476 = vmatpush.xpose.msra.mxu0 %v1451
    %1477 = vmatpush.xpose.msra.mxu0 %v1449
    %1478 = vmatpush.xpose.msra.mxu0 %v1447
    %1479 = vmatmul.f32.gmra.mxu0 %v1442
    %v1480 = vpop.f32.mrf.mxu0
    %v1481 = vadd.f32 0.0, %v1480
    %1482 = vmatmul.f32.gmra.mxu0 %v1445
    %v1483 = vpop.f32.mrf.mxu0
    %v1484 = vadd.f32 0.0, %v1483
    %1485 = vdwg.mxu0
    %1494 = vrot.lane.b32.xlu0 %v1145, 96
    %v1495 = vpop.permute.xlu0 %1494
    %1496 = vrot.lane.b32.xlu0 %v1146, 96
    %v1497 = vpop.permute.xlu0 %1496
    %1498 = vrot.lane.b32.xlu0 %v1147, 96
    %v1499 = vpop.permute.xlu0 %1498
    %1500 = vrot.lane.b32.xlu0 %v1148, 96
    %v1501 = vpop.permute.xlu0 %1500
    %1502 = vrot.lane.b32.xlu0 %v1149, 96
    %v1503 = vpop.permute.xlu0 %1502
    %1504 = vrot.lane.b32.xlu0 %v1150, 96
    %v1505 = vpop.permute.xlu0 %1504
    %1506 = vrot.lane.b32.xlu0 %v1151, 96
    %v1507 = vpop.permute.xlu0 %1506
    %1508 = vrot.lane.b32.xlu0 %v1152, 96
    %v1509 = vpop.permute.xlu0 %1508
    %v1511 = vsel %vm98, %v1008, 0
    %v1514 = vsel %vm98, %v1011, 0
    %v1516 = vsel %vm98, %v1495, 0
    %v1518 = vsel %vm98, %v1497, 0
    %v1520 = vsel %vm98, %v1499, 0
    %v1522 = vsel %vm98, %v1501, 0
    %v1524 = vsel %vm98, %v1503, 0
    %v1526 = vsel %vm98, %v1505, 0
    %v1528 = vsel %vm98, %v1507, 0
    %v1530 = vsel %vm98, %v1509, 0
    %1532 = vmatpush.xpose.msra.mxu0 0.0
    %1533 = vmatpush.xpose.msra.mxu0 0.0
    %1534 = vmatpush.xpose.msra.mxu0 0.0
    %1535 = vmatpush.xpose.msra.mxu0 0.0
    %1536 = vmatpush.xpose.msra.mxu0 0.0
    %1537 = vmatpush.xpose.msra.mxu0 0.0
    %1538 = vmatpush.xpose.msra.mxu0 0.0
    %1539 = vmatpush.xpose.msra.mxu0 0.0
    %1540 = vmatpush.xpose.msra.mxu0 %v1530
    %1541 = vmatpush.xpose.msra.mxu0 %v1528
    %1542 = vmatpush.xpose.msra.mxu0 %v1526
    %1543 = vmatpush.xpose.msra.mxu0 %v1524
    %1544 = vmatpush.xpose.msra.mxu0 %v1522
    %1545 = vmatpush.xpose.msra.mxu0 %v1520
    %1546 = vmatpush.xpose.msra.mxu0 %v1518
    %1547 = vmatpush.xpose.msra.mxu0 %v1516
    %1548 = vmatmul.f32.gmra.mxu0 %v1511
    %v1549 = vpop.f32.mrf.mxu0
    %v1550 = vadd.f32 0.0, %v1549
    %1551 = vmatmul.f32.gmra.mxu0 %v1514
    %v1552 = vpop.f32.mrf.mxu0
    %v1553 = vadd.f32 0.0, %v1552
    %1554 = vdwg.mxu0
    %1563 = vrot.lane.b32.xlu0 %v1153, 96
    %v1564 = vpop.permute.xlu0 %1563
    %1565 = vrot.lane.b32.xlu0 %v1154, 96
    %v1566 = vpop.permute.xlu0 %1565
    %1567 = vrot.lane.b32.xlu0 %v1155, 96
    %v1568 = vpop.permute.xlu0 %1567
    %1569 = vrot.lane.b32.xlu0 %v1156, 96
    %v1570 = vpop.permute.xlu0 %1569
    %1571 = vrot.lane.b32.xlu0 %v1157, 96
    %v1572 = vpop.permute.xlu0 %1571
    %1573 = vrot.lane.b32.xlu0 %v1158, 96
    %v1574 = vpop.permute.xlu0 %1573
    %1575 = vrot.lane.b32.xlu0 %v1159, 96
    %v1576 = vpop.permute.xlu0 %1575
    %1577 = vrot.lane.b32.xlu0 %v1160, 96
    %v1578 = vpop.permute.xlu0 %1577
    %v1580 = vsel %vm98, %v1014, 0
    %v1583 = vsel %vm98, %v1017, 0
    %v1585 = vsel %vm98, %v1564, 0
    %v1587 = vsel %vm98, %v1566, 0
    %v1589 = vsel %vm98, %v1568, 0
    %v1591 = vsel %vm98, %v1570, 0
    %v1593 = vsel %vm98, %v1572, 0
    %v1595 = vsel %vm98, %v1574, 0
    %v1597 = vsel %vm98, %v1576, 0
    %v1599 = vsel %vm98, %v1578, 0
    %1601 = vmatpush.xpose.msra.mxu0 0.0
    %1602 = vmatpush.xpose.msra.mxu0 0.0
    %1603 = vmatpush.xpose.msra.mxu0 0.0
    %1604 = vmatpush.xpose.msra.mxu0 0.0
    %1605 = vmatpush.xpose.msra.mxu0 0.0
    %1606 = vmatpush.xpose.msra.mxu0 0.0
    %1607 = vmatpush.xpose.msra.mxu0 0.0
    %1608 = vmatpush.xpose.msra.mxu0 0.0
    %1609 = vmatpush.xpose.msra.mxu0 %v1599
    %1610 = vmatpush.xpose.msra.mxu0 %v1597
    %1611 = vmatpush.xpose.msra.mxu0 %v1595
    %1612 = vmatpush.xpose.msra.mxu0 %v1593
    %1613 = vmatpush.xpose.msra.mxu0 %v1591
    %1614 = vmatpush.xpose.msra.mxu0 %v1589
    %1615 = vmatpush.xpose.msra.mxu0 %v1587
    %1616 = vmatpush.xpose.msra.mxu0 %v1585
    %1617 = vmatmul.f32.gmra.mxu0 %v1580
    %v1618 = vpop.f32.mrf.mxu0
    %v1619 = vadd.f32 0.0, %v1618
    %1620 = vmatmul.f32.gmra.mxu0 %v1583
    %v1621 = vpop.f32.mrf.mxu0
    %v1622 = vadd.f32 0.0, %v1621
    %1623 = vdwg.mxu0
    %1632 = vrot.lane.b32.xlu0 %v1161, 96
    %v1633 = vpop.permute.xlu0 %1632
    %1634 = vrot.lane.b32.xlu0 %v1162, 96
    %v1635 = vpop.permute.xlu0 %1634
    %1636 = vrot.lane.b32.xlu0 %v1163, 96
    %v1637 = vpop.permute.xlu0 %1636
    %1638 = vrot.lane.b32.xlu0 %v1164, 96
    %v1639 = vpop.permute.xlu0 %1638
    %1640 = vrot.lane.b32.xlu0 %v1165, 96
    %v1641 = vpop.permute.xlu0 %1640
    %1642 = vrot.lane.b32.xlu0 %v1166, 96
    %v1643 = vpop.permute.xlu0 %1642
    %1644 = vrot.lane.b32.xlu0 %v1167, 96
    %v1645 = vpop.permute.xlu0 %1644
    %1646 = vrot.lane.b32.xlu0 %v1168, 96
    %v1647 = vpop.permute.xlu0 %1646
    %v1649 = vsel %vm98, %v1020, 0
    %v1652 = vsel %vm98, %v1023, 0
    %v1654 = vsel %vm98, %v1633, 0
    %v1656 = vsel %vm98, %v1635, 0
    %v1658 = vsel %vm98, %v1637, 0
    %v1660 = vsel %vm98, %v1639, 0
    %v1662 = vsel %vm98, %v1641, 0
    %v1664 = vsel %vm98, %v1643, 0
    %v1666 = vsel %vm98, %v1645, 0
    %v1668 = vsel %vm98, %v1647, 0
    %1670 = vmatpush.xpose.msra.mxu0 0.0
    %1671 = vmatpush.xpose.msra.mxu0 0.0
    %1672 = vmatpush.xpose.msra.mxu0 0.0
    %1673 = vmatpush.xpose.msra.mxu0 0.0
    %1674 = vmatpush.xpose.msra.mxu0 0.0
    %1675 = vmatpush.xpose.msra.mxu0 0.0
    %1676 = vmatpush.xpose.msra.mxu0 0.0
    %1677 = vmatpush.xpose.msra.mxu0 0.0
    %1678 = vmatpush.xpose.msra.mxu0 %v1668
    %1679 = vmatpush.xpose.msra.mxu0 %v1666
    %1680 = vmatpush.xpose.msra.mxu0 %v1664
    %1681 = vmatpush.xpose.msra.mxu0 %v1662
    %1682 = vmatpush.xpose.msra.mxu0 %v1660
    %1683 = vmatpush.xpose.msra.mxu0 %v1658
    %1684 = vmatpush.xpose.msra.mxu0 %v1656
    %1685 = vmatpush.xpose.msra.mxu0 %v1654
    %1686 = vmatmul.f32.gmra.mxu0 %v1649
    %v1687 = vpop.f32.mrf.mxu0
    %v1688 = vadd.f32 0.0, %v1687
    %1689 = vmatmul.f32.gmra.mxu0 %v1652
    %v1690 = vpop.f32.mrf.mxu0
    %v1691 = vadd.f32 0.0, %v1690
    %1692 = vdwg.mxu0
    %1701 = vrot.lane.b32.xlu0 %v1169, 96
    %v1702 = vpop.permute.xlu0 %1701
    %1703 = vrot.lane.b32.xlu0 %v1170, 96
    %v1704 = vpop.permute.xlu0 %1703
    %1705 = vrot.lane.b32.xlu0 %v1171, 96
    %v1706 = vpop.permute.xlu0 %1705
    %1707 = vrot.lane.b32.xlu0 %v1172, 96
    %v1708 = vpop.permute.xlu0 %1707
    %1709 = vrot.lane.b32.xlu0 %v1173, 96
    %v1710 = vpop.permute.xlu0 %1709
    %1711 = vrot.lane.b32.xlu0 %v1174, 96
    %v1712 = vpop.permute.xlu0 %1711
    %1713 = vrot.lane.b32.xlu0 %v1175, 96
    %v1714 = vpop.permute.xlu0 %1713
    %1715 = vrot.lane.b32.xlu0 %v1176, 96
    %v1716 = vpop.permute.xlu0 %1715
    %v1718 = vsel %vm98, %v1026, 0
    %v1721 = vsel %vm98, %v1029, 0
    %v1723 = vsel %vm98, %v1702, 0
    %v1725 = vsel %vm98, %v1704, 0
    %v1727 = vsel %vm98, %v1706, 0
    %v1729 = vsel %vm98, %v1708, 0
    %v1731 = vsel %vm98, %v1710, 0
    %v1733 = vsel %vm98, %v1712, 0
    %v1735 = vsel %vm98, %v1714, 0
    %v1737 = vsel %vm98, %v1716, 0
    %1739 = vmatpush.xpose.msra.mxu0 0.0
    %1740 = vmatpush.xpose.msra.mxu0 0.0
    %1741 = vmatpush.xpose.msra.mxu0 0.0
    %1742 = vmatpush.xpose.msra.mxu0 0.0
    %1743 = vmatpush.xpose.msra.mxu0 0.0
    %1744 = vmatpush.xpose.msra.mxu0 0.0
    %1745 = vmatpush.xpose.msra.mxu0 0.0
    %1746 = vmatpush.xpose.msra.mxu0 0.0
    %1747 = vmatpush.xpose.msra.mxu0 %v1737
    %1748 = vmatpush.xpose.msra.mxu0 %v1735
    %1749 = vmatpush.xpose.msra.mxu0 %v1733
    %1750 = vmatpush.xpose.msra.mxu0 %v1731
    %1751 = vmatpush.xpose.msra.mxu0 %v1729
    %1752 = vmatpush.xpose.msra.mxu0 %v1727
    %1753 = vmatpush.xpose.msra.mxu0 %v1725
    %1754 = vmatpush.xpose.msra.mxu0 %v1723
    %1755 = vmatmul.f32.gmra.mxu0 %v1718
    %v1756 = vpop.f32.mrf.mxu0
    %v1757 = vadd.f32 0.0, %v1756
    %1758 = vmatmul.f32.gmra.mxu0 %v1721
    %v1759 = vpop.f32.mrf.mxu0
    %v1760 = vadd.f32 0.0, %v1759
    %1761 = vdwg.mxu0
    %1770 = vrot.lane.b32.xlu0 %v1177, 96
    %v1771 = vpop.permute.xlu0 %1770
    %1772 = vrot.lane.b32.xlu0 %v1178, 96
    %v1773 = vpop.permute.xlu0 %1772
    %1774 = vrot.lane.b32.xlu0 %v1179, 96
    %v1775 = vpop.permute.xlu0 %1774
    %1776 = vrot.lane.b32.xlu0 %v1180, 96
    %v1777 = vpop.permute.xlu0 %1776
    %1778 = vrot.lane.b32.xlu0 %v1181, 96
    %v1779 = vpop.permute.xlu0 %1778
    %1780 = vrot.lane.b32.xlu0 %v1182, 96
    %v1781 = vpop.permute.xlu0 %1780
    %1782 = vrot.lane.b32.xlu0 %v1183, 96
    %v1783 = vpop.permute.xlu0 %1782
    %1784 = vrot.lane.b32.xlu0 %v1184, 96
    %v1785 = vpop.permute.xlu0 %1784
    %v1787 = vsel %vm98, %v1032, 0
    %v1790 = vsel %vm98, %v1035, 0
    %v1792 = vsel %vm98, %v1771, 0
    %v1794 = vsel %vm98, %v1773, 0
    %v1796 = vsel %vm98, %v1775, 0
    %v1798 = vsel %vm98, %v1777, 0
    %v1800 = vsel %vm98, %v1779, 0
    %v1802 = vsel %vm98, %v1781, 0
    %v1804 = vsel %vm98, %v1783, 0
    %v1806 = vsel %vm98, %v1785, 0
    %1808 = vmatpush.xpose.msra.mxu0 0.0
    %1809 = vmatpush.xpose.msra.mxu0 0.0
    %1810 = vmatpush.xpose.msra.mxu0 0.0
    %1811 = vmatpush.xpose.msra.mxu0 0.0
    %1812 = vmatpush.xpose.msra.mxu0 0.0
    %1813 = vmatpush.xpose.msra.mxu0 0.0
    %1814 = vmatpush.xpose.msra.mxu0 0.0
    %1815 = vmatpush.xpose.msra.mxu0 0.0
    %1816 = vmatpush.xpose.msra.mxu0 %v1806
    %1817 = vmatpush.xpose.msra.mxu0 %v1804
    %1818 = vmatpush.xpose.msra.mxu0 %v1802
    %1819 = vmatpush.xpose.msra.mxu0 %v1800
    %1820 = vmatpush.xpose.msra.mxu0 %v1798
    %1821 = vmatpush.xpose.msra.mxu0 %v1796
    %1822 = vmatpush.xpose.msra.mxu0 %v1794
    %1823 = vmatpush.xpose.msra.mxu0 %v1792
    %1824 = vmatmul.f32.gmra.mxu0 %v1787
    %v1825 = vpop.f32.mrf.mxu0
    %v1826 = vadd.f32 0.0, %v1825
    %1827 = vmatmul.f32.gmra.mxu0 %v1790
    %v1828 = vpop.f32.mrf.mxu0
    %v1829 = vadd.f32 0.0, %v1828
    %1830 = vdwg.mxu0
    %1839 = vrot.lane.b32.xlu0 %v1185, 96
    %v1840 = vpop.permute.xlu0 %1839
    %1841 = vrot.lane.b32.xlu0 %v1186, 96
    %v1842 = vpop.permute.xlu0 %1841
    %1843 = vrot.lane.b32.xlu0 %v1187, 96
    %v1844 = vpop.permute.xlu0 %1843
    %1845 = vrot.lane.b32.xlu0 %v1188, 96
    %v1846 = vpop.permute.xlu0 %1845
    %1847 = vrot.lane.b32.xlu0 %v1189, 96
    %v1848 = vpop.permute.xlu0 %1847
    %1849 = vrot.lane.b32.xlu0 %v1190, 96
    %v1850 = vpop.permute.xlu0 %1849
    %1851 = vrot.lane.b32.xlu0 %v1191, 96
    %v1852 = vpop.permute.xlu0 %1851
    %1853 = vrot.lane.b32.xlu0 %v1192, 96
    %v1854 = vpop.permute.xlu0 %1853
    %v1856 = vsel %vm98, %v1038, 0
    %v1859 = vsel %vm98, %v1041, 0
    %v1861 = vsel %vm98, %v1840, 0
    %v1863 = vsel %vm98, %v1842, 0
    %v1865 = vsel %vm98, %v1844, 0
    %v1867 = vsel %vm98, %v1846, 0
    %v1869 = vsel %vm98, %v1848, 0
    %v1871 = vsel %vm98, %v1850, 0
    %v1873 = vsel %vm98, %v1852, 0
    %v1875 = vsel %vm98, %v1854, 0
    %1877 = vmatpush.xpose.msra.mxu0 0.0
    %1878 = vmatpush.xpose.msra.mxu0 0.0
    %1879 = vmatpush.xpose.msra.mxu0 0.0
    %1880 = vmatpush.xpose.msra.mxu0 0.0
    %1881 = vmatpush.xpose.msra.mxu0 0.0
    %1882 = vmatpush.xpose.msra.mxu0 0.0
    %1883 = vmatpush.xpose.msra.mxu0 0.0
    %1884 = vmatpush.xpose.msra.mxu0 0.0
    %1885 = vmatpush.xpose.msra.mxu0 %v1875
    %1886 = vmatpush.xpose.msra.mxu0 %v1873
    %1887 = vmatpush.xpose.msra.mxu0 %v1871
    %1888 = vmatpush.xpose.msra.mxu0 %v1869
    %1889 = vmatpush.xpose.msra.mxu0 %v1867
    %1890 = vmatpush.xpose.msra.mxu0 %v1865
    %1891 = vmatpush.xpose.msra.mxu0 %v1863
    %1892 = vmatpush.xpose.msra.mxu0 %v1861
    %1893 = vmatmul.f32.gmra.mxu0 %v1856
    %v1894 = vpop.f32.mrf.mxu0
    %v1895 = vadd.f32 0.0, %v1894
    %1896 = vmatmul.f32.gmra.mxu0 %v1859
    %v1897 = vpop.f32.mrf.mxu0
    %v1898 = vadd.f32 0.0, %v1897
    %1899 = vdwg.mxu0
    %1908 = vrot.lane.b32.xlu0 %v1193, 96
    %v1909 = vpop.permute.xlu0 %1908
    %1910 = vrot.lane.b32.xlu0 %v1194, 96
    %v1911 = vpop.permute.xlu0 %1910
    %1912 = vrot.lane.b32.xlu0 %v1195, 96
    %v1913 = vpop.permute.xlu0 %1912
    %1914 = vrot.lane.b32.xlu0 %v1196, 96
    %v1915 = vpop.permute.xlu0 %1914
    %1916 = vrot.lane.b32.xlu0 %v1197, 96
    %v1917 = vpop.permute.xlu0 %1916
    %1918 = vrot.lane.b32.xlu0 %v1198, 96
    %v1919 = vpop.permute.xlu0 %1918
    %1920 = vrot.lane.b32.xlu0 %v1199, 96
    %v1921 = vpop.permute.xlu0 %1920
    %1922 = vrot.lane.b32.xlu0 %v1200, 96
    %v1923 = vpop.permute.xlu0 %1922
    %v1925 = vsel %vm98, %v1044, 0
    %v1928 = vsel %vm98, %v1047, 0
    %v1930 = vsel %vm98, %v1909, 0
    %v1932 = vsel %vm98, %v1911, 0
    %v1934 = vsel %vm98, %v1913, 0
    %v1936 = vsel %vm98, %v1915, 0
    %v1938 = vsel %vm98, %v1917, 0
    %v1940 = vsel %vm98, %v1919, 0
    %v1942 = vsel %vm98, %v1921, 0
    %v1944 = vsel %vm98, %v1923, 0
    %1946 = vmatpush.xpose.msra.mxu0 0.0
    %1947 = vmatpush.xpose.msra.mxu0 0.0
    %1948 = vmatpush.xpose.msra.mxu0 0.0
    %1949 = vmatpush.xpose.msra.mxu0 0.0
    %1950 = vmatpush.xpose.msra.mxu0 0.0
    %1951 = vmatpush.xpose.msra.mxu0 0.0
    %1952 = vmatpush.xpose.msra.mxu0 0.0
    %1953 = vmatpush.xpose.msra.mxu0 0.0
    %1954 = vmatpush.xpose.msra.mxu0 %v1944
    %1955 = vmatpush.xpose.msra.mxu0 %v1942
    %1956 = vmatpush.xpose.msra.mxu0 %v1940
    %1957 = vmatpush.xpose.msra.mxu0 %v1938
    %1958 = vmatpush.xpose.msra.mxu0 %v1936
    %1959 = vmatpush.xpose.msra.mxu0 %v1934
    %1960 = vmatpush.xpose.msra.mxu0 %v1932
    %1961 = vmatpush.xpose.msra.mxu0 %v1930
    %1962 = vmatmul.f32.gmra.mxu0 %v1925
    %v1963 = vpop.f32.mrf.mxu0
    %v1964 = vadd.f32 0.0, %v1963
    %1965 = vmatmul.f32.gmra.mxu0 %v1928
    %v1966 = vpop.f32.mrf.mxu0
    %v1967 = vadd.f32 0.0, %v1966
    %1968 = vdwg.mxu0
    %1977 = vrot.lane.b32.xlu0 %v1201, 96
    %v1978 = vpop.permute.xlu0 %1977
    %1979 = vrot.lane.b32.xlu0 %v1202, 96
    %v1980 = vpop.permute.xlu0 %1979
    %1981 = vrot.lane.b32.xlu0 %v1203, 96
    %v1982 = vpop.permute.xlu0 %1981
    %1983 = vrot.lane.b32.xlu0 %v1204, 96
    %v1984 = vpop.permute.xlu0 %1983
    %1985 = vrot.lane.b32.xlu0 %v1205, 96
    %v1986 = vpop.permute.xlu0 %1985
    %1987 = vrot.lane.b32.xlu0 %v1206, 96
    %v1988 = vpop.permute.xlu0 %1987
    %1989 = vrot.lane.b32.xlu0 %v1207, 96
    %v1990 = vpop.permute.xlu0 %1989
    %1991 = vrot.lane.b32.xlu0 %v1208, 96
    %v1992 = vpop.permute.xlu0 %1991
    %v1994 = vsel %vm98, %v1050, 0
    %v1997 = vsel %vm98, %v1053, 0
    %v1999 = vsel %vm98, %v1978, 0
    %v2001 = vsel %vm98, %v1980, 0
    %v2003 = vsel %vm98, %v1982, 0
    %v2005 = vsel %vm98, %v1984, 0
    %v2007 = vsel %vm98, %v1986, 0
    %v2009 = vsel %vm98, %v1988, 0
    %v2011 = vsel %vm98, %v1990, 0
    %v2013 = vsel %vm98, %v1992, 0
    %2015 = vmatpush.xpose.msra.mxu0 0.0
    %2016 = vmatpush.xpose.msra.mxu0 0.0
    %2017 = vmatpush.xpose.msra.mxu0 0.0
    %2018 = vmatpush.xpose.msra.mxu0 0.0
    %2019 = vmatpush.xpose.msra.mxu0 0.0
    %2020 = vmatpush.xpose.msra.mxu0 0.0
    %2021 = vmatpush.xpose.msra.mxu0 0.0
    %2022 = vmatpush.xpose.msra.mxu0 0.0
    %2023 = vmatpush.xpose.msra.mxu0 %v2013
    %2024 = vmatpush.xpose.msra.mxu0 %v2011
    %2025 = vmatpush.xpose.msra.mxu0 %v2009
    %2026 = vmatpush.xpose.msra.mxu0 %v2007
    %2027 = vmatpush.xpose.msra.mxu0 %v2005
    %2028 = vmatpush.xpose.msra.mxu0 %v2003
    %2029 = vmatpush.xpose.msra.mxu0 %v2001
    %2030 = vmatpush.xpose.msra.mxu0 %v1999
    %2031 = vmatmul.f32.gmra.mxu0 %v1994
    %v2032 = vpop.f32.mrf.mxu0
    %v2033 = vadd.f32 0.0, %v2032
    %2034 = vmatmul.f32.gmra.mxu0 %v1997
    %v2035 = vpop.f32.mrf.mxu0
    %v2036 = vadd.f32 0.0, %v2035
    %2037 = vdwg.mxu0
    %2046 = vrot.lane.b32.xlu0 %v1209, 96
    %v2047 = vpop.permute.xlu0 %2046
    %2048 = vrot.lane.b32.xlu0 %v1210, 96
    %v2049 = vpop.permute.xlu0 %2048
    %2050 = vrot.lane.b32.xlu0 %v1211, 96
    %v2051 = vpop.permute.xlu0 %2050
    %2052 = vrot.lane.b32.xlu0 %v1212, 96
    %v2053 = vpop.permute.xlu0 %2052
    %2054 = vrot.lane.b32.xlu0 %v1213, 96
    %v2055 = vpop.permute.xlu0 %2054
    %2056 = vrot.lane.b32.xlu0 %v1214, 96
    %v2057 = vpop.permute.xlu0 %2056
    %2058 = vrot.lane.b32.xlu0 %v1215, 96
    %v2059 = vpop.permute.xlu0 %2058
    %2060 = vrot.lane.b32.xlu0 %v1216, 96
    %v2061 = vpop.permute.xlu0 %2060
    %v2063 = vsel %vm98, %v1056, 0
    %v2066 = vsel %vm98, %v1059, 0
    %v2068 = vsel %vm98, %v2047, 0
    %v2070 = vsel %vm98, %v2049, 0
    %v2072 = vsel %vm98, %v2051, 0
    %v2074 = vsel %vm98, %v2053, 0
    %v2076 = vsel %vm98, %v2055, 0
    %v2078 = vsel %vm98, %v2057, 0
    %v2080 = vsel %vm98, %v2059, 0
    %v2082 = vsel %vm98, %v2061, 0
    %2084 = vmatpush.xpose.msra.mxu0 0.0
    %2085 = vmatpush.xpose.msra.mxu0 0.0
    %2086 = vmatpush.xpose.msra.mxu0 0.0
    %2087 = vmatpush.xpose.msra.mxu0 0.0
    %2088 = vmatpush.xpose.msra.mxu0 0.0
    %2089 = vmatpush.xpose.msra.mxu0 0.0
    %2090 = vmatpush.xpose.msra.mxu0 0.0
    %2091 = vmatpush.xpose.msra.mxu0 0.0
    %2092 = vmatpush.xpose.msra.mxu0 %v2082
    %2093 = vmatpush.xpose.msra.mxu0 %v2080
    %2094 = vmatpush.xpose.msra.mxu0 %v2078
    %2095 = vmatpush.xpose.msra.mxu0 %v2076
    %2096 = vmatpush.xpose.msra.mxu0 %v2074
    %2097 = vmatpush.xpose.msra.mxu0 %v2072
    %2098 = vmatpush.xpose.msra.mxu0 %v2070
    %2099 = vmatpush.xpose.msra.mxu0 %v2068
    %2100 = vmatmul.f32.gmra.mxu0 %v2063
    %v2101 = vpop.f32.mrf.mxu0
    %v2102 = vadd.f32 0.0, %v2101
    %2103 = vmatmul.f32.gmra.mxu0 %v2066
    %v2104 = vpop.f32.mrf.mxu0
    %v2105 = vadd.f32 0.0, %v2104
    %2106 = vdwg.mxu0
    %2115 = vrot.lane.b32.xlu0 %v1217, 96
    %v2116 = vpop.permute.xlu0 %2115
    %2117 = vrot.lane.b32.xlu0 %v1218, 96
    %v2118 = vpop.permute.xlu0 %2117
    %2119 = vrot.lane.b32.xlu0 %v1219, 96
    %v2120 = vpop.permute.xlu0 %2119
    %2121 = vrot.lane.b32.xlu0 %v1220, 96
    %v2122 = vpop.permute.xlu0 %2121
    %2123 = vrot.lane.b32.xlu0 %v1221, 96
    %v2124 = vpop.permute.xlu0 %2123
    %2125 = vrot.lane.b32.xlu0 %v1222, 96
    %v2126 = vpop.permute.xlu0 %2125
    %2127 = vrot.lane.b32.xlu0 %v1223, 96
    %v2128 = vpop.permute.xlu0 %2127
    %2129 = vrot.lane.b32.xlu0 %v1224, 96
    %v2130 = vpop.permute.xlu0 %2129
    %v2132 = vsel %vm98, %v1062, 0
    %v2135 = vsel %vm98, %v1065, 0
    %v2137 = vsel %vm98, %v2116, 0
    %v2139 = vsel %vm98, %v2118, 0
    %v2141 = vsel %vm98, %v2120, 0
    %v2143 = vsel %vm98, %v2122, 0
    %v2145 = vsel %vm98, %v2124, 0
    %v2147 = vsel %vm98, %v2126, 0
    %v2149 = vsel %vm98, %v2128, 0
    %v2151 = vsel %vm98, %v2130, 0
    %2153 = vmatpush.xpose.msra.mxu0 0.0
    %2154 = vmatpush.xpose.msra.mxu0 0.0
    %2155 = vmatpush.xpose.msra.mxu0 0.0
    %2156 = vmatpush.xpose.msra.mxu0 0.0
    %2157 = vmatpush.xpose.msra.mxu0 0.0
    %2158 = vmatpush.xpose.msra.mxu0 0.0
    %2159 = vmatpush.xpose.msra.mxu0 0.0
    %2160 = vmatpush.xpose.msra.mxu0 0.0
    %2161 = vmatpush.xpose.msra.mxu0 %v2151
    %2162 = vmatpush.xpose.msra.mxu0 %v2149
    %2163 = vmatpush.xpose.msra.mxu0 %v2147
    %2164 = vmatpush.xpose.msra.mxu0 %v2145
    %2165 = vmatpush.xpose.msra.mxu0 %v2143
    %2166 = vmatpush.xpose.msra.mxu0 %v2141
    %2167 = vmatpush.xpose.msra.mxu0 %v2139
    %2168 = vmatpush.xpose.msra.mxu0 %v2137
    %2169 = vmatmul.f32.gmra.mxu0 %v2132
    %v2170 = vpop.f32.mrf.mxu0
    %v2171 = vadd.f32 0.0, %v2170
    %2172 = vmatmul.f32.gmra.mxu0 %v2135
    %v2173 = vpop.f32.mrf.mxu0
    %v2174 = vadd.f32 0.0, %v2173
    %2175 = vdwg.mxu0
    %2184 = vrot.lane.b32.xlu0 %v1225, 96
    %v2185 = vpop.permute.xlu0 %2184
    %2186 = vrot.lane.b32.xlu0 %v1226, 96
    %v2187 = vpop.permute.xlu0 %2186
    %2188 = vrot.lane.b32.xlu0 %v1227, 96
    %v2189 = vpop.permute.xlu0 %2188
    %2190 = vrot.lane.b32.xlu0 %v1228, 96
    %v2191 = vpop.permute.xlu0 %2190
    %2192 = vrot.lane.b32.xlu0 %v1229, 96
    %v2193 = vpop.permute.xlu0 %2192
    %2194 = vrot.lane.b32.xlu0 %v1230, 96
    %v2195 = vpop.permute.xlu0 %2194
    %2196 = vrot.lane.b32.xlu0 %v1231, 96
    %v2197 = vpop.permute.xlu0 %2196
    %2198 = vrot.lane.b32.xlu0 %v1232, 96
    %v2199 = vpop.permute.xlu0 %2198
    %v2201 = vsel %vm98, %v1068, 0
    %v2204 = vsel %vm98, %v1071, 0
    %v2206 = vsel %vm98, %v2185, 0
    %v2208 = vsel %vm98, %v2187, 0
    %v2210 = vsel %vm98, %v2189, 0
    %v2212 = vsel %vm98, %v2191, 0
    %v2214 = vsel %vm98, %v2193, 0
    %v2216 = vsel %vm98, %v2195, 0
    %v2218 = vsel %vm98, %v2197, 0
    %v2220 = vsel %vm98, %v2199, 0
    %2222 = vmatpush.xpose.msra.mxu0 0.0
    %2223 = vmatpush.xpose.msra.mxu0 0.0
    %2224 = vmatpush.xpose.msra.mxu0 0.0
    %2225 = vmatpush.xpose.msra.mxu0 0.0
    %2226 = vmatpush.xpose.msra.mxu0 0.0
    %2227 = vmatpush.xpose.msra.mxu0 0.0
    %2228 = vmatpush.xpose.msra.mxu0 0.0
    %2229 = vmatpush.xpose.msra.mxu0 0.0
    %2230 = vmatpush.xpose.msra.mxu0 %v2220
    %2231 = vmatpush.xpose.msra.mxu0 %v2218
    %2232 = vmatpush.xpose.msra.mxu0 %v2216
    %2233 = vmatpush.xpose.msra.mxu0 %v2214
    %2234 = vmatpush.xpose.msra.mxu0 %v2212
    %2235 = vmatpush.xpose.msra.mxu0 %v2210
    %2236 = vmatpush.xpose.msra.mxu0 %v2208
    %2237 = vmatpush.xpose.msra.mxu0 %v2206
    %2238 = vmatmul.f32.gmra.mxu0 %v2201
    %v2239 = vpop.f32.mrf.mxu0
    %v2240 = vadd.f32 0.0, %v2239
    %2241 = vmatmul.f32.gmra.mxu0 %v2204
    %v2242 = vpop.f32.mrf.mxu0
    %v2243 = vadd.f32 0.0, %v2242
    %2244 = vdwg.mxu0
    %2253 = vrot.lane.b32.xlu0 %v1233, 96
    %v2254 = vpop.permute.xlu0 %2253
    %2255 = vrot.lane.b32.xlu0 %v1234, 96
    %v2256 = vpop.permute.xlu0 %2255
    %2257 = vrot.lane.b32.xlu0 %v1235, 96
    %v2258 = vpop.permute.xlu0 %2257
    %2259 = vrot.lane.b32.xlu0 %v1236, 96
    %v2260 = vpop.permute.xlu0 %2259
    %2261 = vrot.lane.b32.xlu0 %v1237, 96
    %v2262 = vpop.permute.xlu0 %2261
    %2263 = vrot.lane.b32.xlu0 %v1238, 96
    %v2264 = vpop.permute.xlu0 %2263
    %2265 = vrot.lane.b32.xlu0 %v1239, 96
    %v2266 = vpop.permute.xlu0 %2265
    %2267 = vrot.lane.b32.xlu0 %v1240, 96
    %v2268 = vpop.permute.xlu0 %2267
    %v2270 = vsel %vm98, %v1074, 0
    %v2273 = vsel %vm98, %v1077, 0
    %v2275 = vsel %vm98, %v2254, 0
    %v2277 = vsel %vm98, %v2256, 0
    %v2279 = vsel %vm98, %v2258, 0
    %v2281 = vsel %vm98, %v2260, 0
    %v2283 = vsel %vm98, %v2262, 0
    %v2285 = vsel %vm98, %v2264, 0
    %v2287 = vsel %vm98, %v2266, 0
    %v2289 = vsel %vm98, %v2268, 0
    %2291 = vmatpush.xpose.msra.mxu0 0.0
    %2292 = vmatpush.xpose.msra.mxu0 0.0
    %2293 = vmatpush.xpose.msra.mxu0 0.0
    %2294 = vmatpush.xpose.msra.mxu0 0.0
    %2295 = vmatpush.xpose.msra.mxu0 0.0
    %2296 = vmatpush.xpose.msra.mxu0 0.0
    %2297 = vmatpush.xpose.msra.mxu0 0.0
    %2298 = vmatpush.xpose.msra.mxu0 0.0
    %2299 = vmatpush.xpose.msra.mxu0 %v2289
    %2300 = vmatpush.xpose.msra.mxu0 %v2287
    %2301 = vmatpush.xpose.msra.mxu0 %v2285
    %2302 = vmatpush.xpose.msra.mxu0 %v2283
    %2303 = vmatpush.xpose.msra.mxu0 %v2281
    %2304 = vmatpush.xpose.msra.mxu0 %v2279
    %2305 = vmatpush.xpose.msra.mxu0 %v2277
    %2306 = vmatpush.xpose.msra.mxu0 %v2275
    %2307 = vmatmul.f32.gmra.mxu0 %v2270
    %v2308 = vpop.f32.mrf.mxu0
    %v2309 = vadd.f32 0.0, %v2308
    %2310 = vmatmul.f32.gmra.mxu0 %v2273
    %v2311 = vpop.f32.mrf.mxu0
    %v2312 = vadd.f32 0.0, %v2311
    %2313 = vdwg.mxu0
    %2322 = vrot.lane.b32.xlu0 %v1241, 96
    %v2323 = vpop.permute.xlu0 %2322
    %2324 = vrot.lane.b32.xlu0 %v1242, 96
    %v2325 = vpop.permute.xlu0 %2324
    %2326 = vrot.lane.b32.xlu0 %v1243, 96
    %v2327 = vpop.permute.xlu0 %2326
    %2328 = vrot.lane.b32.xlu0 %v1244, 96
    %v2329 = vpop.permute.xlu0 %2328
    %2330 = vrot.lane.b32.xlu0 %v1245, 96
    %v2331 = vpop.permute.xlu0 %2330
    %2332 = vrot.lane.b32.xlu0 %v1246, 96
    %v2333 = vpop.permute.xlu0 %2332
    %2334 = vrot.lane.b32.xlu0 %v1247, 96
    %v2335 = vpop.permute.xlu0 %2334
    %2336 = vrot.lane.b32.xlu0 %v1248, 96
    %v2337 = vpop.permute.xlu0 %2336
    %v2339 = vsel %vm98, %v1080, 0
    %v2342 = vsel %vm98, %v1083, 0
    %v2344 = vsel %vm98, %v2323, 0
    %v2346 = vsel %vm98, %v2325, 0
    %v2348 = vsel %vm98, %v2327, 0
    %v2350 = vsel %vm98, %v2329, 0
    %v2352 = vsel %vm98, %v2331, 0
    %v2354 = vsel %vm98, %v2333, 0
    %v2356 = vsel %vm98, %v2335, 0
    %v2358 = vsel %vm98, %v2337, 0
    %2360 = vmatpush.xpose.msra.mxu0 0.0
    %2361 = vmatpush.xpose.msra.mxu0 0.0
    %2362 = vmatpush.xpose.msra.mxu0 0.0
    %2363 = vmatpush.xpose.msra.mxu0 0.0
    %2364 = vmatpush.xpose.msra.mxu0 0.0
    %2365 = vmatpush.xpose.msra.mxu0 0.0
    %2366 = vmatpush.xpose.msra.mxu0 0.0
    %2367 = vmatpush.xpose.msra.mxu0 0.0
    %2368 = vmatpush.xpose.msra.mxu0 %v2358
    %2369 = vmatpush.xpose.msra.mxu0 %v2356
    %2370 = vmatpush.xpose.msra.mxu0 %v2354
    %2371 = vmatpush.xpose.msra.mxu0 %v2352
    %2372 = vmatpush.xpose.msra.mxu0 %v2350
    %2373 = vmatpush.xpose.msra.mxu0 %v2348
    %2374 = vmatpush.xpose.msra.mxu0 %v2346
    %2375 = vmatpush.xpose.msra.mxu0 %v2344
    %2376 = vmatmul.f32.gmra.mxu0 %v2339
    %v2377 = vpop.f32.mrf.mxu0
    %v2378 = vadd.f32 0.0, %v2377
    %2379 = vmatmul.f32.gmra.mxu0 %v2342
    %v2380 = vpop.f32.mrf.mxu0
    %v2381 = vadd.f32 0.0, %v2380
    %2382 = vdwg.mxu0
    %2391 = vrot.lane.b32.xlu0 %v1249, 96
    %v2392 = vpop.permute.xlu0 %2391
    %2393 = vrot.lane.b32.xlu0 %v1250, 96
    %v2394 = vpop.permute.xlu0 %2393
    %2395 = vrot.lane.b32.xlu0 %v1251, 96
    %v2396 = vpop.permute.xlu0 %2395
    %2397 = vrot.lane.b32.xlu0 %v1252, 96
    %v2398 = vpop.permute.xlu0 %2397
    %2399 = vrot.lane.b32.xlu0 %v1253, 96
    %v2400 = vpop.permute.xlu0 %2399
    %2401 = vrot.lane.b32.xlu0 %v1254, 96
    %v2402 = vpop.permute.xlu0 %2401
    %2403 = vrot.lane.b32.xlu0 %v1255, 96
    %v2404 = vpop.permute.xlu0 %2403
    %2405 = vrot.lane.b32.xlu0 %v1256, 96
    %v2406 = vpop.permute.xlu0 %2405
    %v2408 = vsel %vm98, %v1086, 0
    %v2411 = vsel %vm98, %v1089, 0
    %v2413 = vsel %vm98, %v2392, 0
    %v2415 = vsel %vm98, %v2394, 0
    %v2417 = vsel %vm98, %v2396, 0
    %v2419 = vsel %vm98, %v2398, 0
    %v2421 = vsel %vm98, %v2400, 0
    %v2423 = vsel %vm98, %v2402, 0
    %v2425 = vsel %vm98, %v2404, 0
    %v2427 = vsel %vm98, %v2406, 0
    %2429 = vmatpush.xpose.msra.mxu0 0.0
    %2430 = vmatpush.xpose.msra.mxu0 0.0
    %2431 = vmatpush.xpose.msra.mxu0 0.0
    %2432 = vmatpush.xpose.msra.mxu0 0.0
    %2433 = vmatpush.xpose.msra.mxu0 0.0
    %2434 = vmatpush.xpose.msra.mxu0 0.0
    %2435 = vmatpush.xpose.msra.mxu0 0.0
    %2436 = vmatpush.xpose.msra.mxu0 0.0
    %2437 = vmatpush.xpose.msra.mxu0 %v2427
    %2438 = vmatpush.xpose.msra.mxu0 %v2425
    %2439 = vmatpush.xpose.msra.mxu0 %v2423
    %2440 = vmatpush.xpose.msra.mxu0 %v2421
    %2441 = vmatpush.xpose.msra.mxu0 %v2419
    %2442 = vmatpush.xpose.msra.mxu0 %v2417
    %2443 = vmatpush.xpose.msra.mxu0 %v2415
    %2444 = vmatpush.xpose.msra.mxu0 %v2413
    %2445 = vmatmul.f32.gmra.mxu0 %v2408
    %v2446 = vpop.f32.mrf.mxu0
    %v2447 = vadd.f32 0.0, %v2446
    %2448 = vmatmul.f32.gmra.mxu0 %v2411
    %v2449 = vpop.f32.mrf.mxu0
    %v2450 = vadd.f32 0.0, %v2449
    %2451 = vdwg.mxu0
    %2460 = vrot.lane.b32.xlu0 %v1257, 96
    %v2461 = vpop.permute.xlu0 %2460
    %2462 = vrot.lane.b32.xlu0 %v1258, 96
    %v2463 = vpop.permute.xlu0 %2462
    %2464 = vrot.lane.b32.xlu0 %v1259, 96
    %v2465 = vpop.permute.xlu0 %2464
    %2466 = vrot.lane.b32.xlu0 %v1260, 96
    %v2467 = vpop.permute.xlu0 %2466
    %2468 = vrot.lane.b32.xlu0 %v1261, 96
    %v2469 = vpop.permute.xlu0 %2468
    %2470 = vrot.lane.b32.xlu0 %v1262, 96
    %v2471 = vpop.permute.xlu0 %2470
    %2472 = vrot.lane.b32.xlu0 %v1263, 96
    %v2473 = vpop.permute.xlu0 %2472
    %2474 = vrot.lane.b32.xlu0 %v1264, 96
    %v2475 = vpop.permute.xlu0 %2474
    %v2477 = vsel %vm98, %v1092, 0
    %v2480 = vsel %vm98, %v1095, 0
    %v2482 = vsel %vm98, %v2461, 0
    %v2484 = vsel %vm98, %v2463, 0
    %v2486 = vsel %vm98, %v2465, 0
    %v2488 = vsel %vm98, %v2467, 0
    %v2490 = vsel %vm98, %v2469, 0
    %v2492 = vsel %vm98, %v2471, 0
    %v2494 = vsel %vm98, %v2473, 0
    %v2496 = vsel %vm98, %v2475, 0
    %2498 = vmatpush.xpose.msra.mxu0 0.0
    %2499 = vmatpush.xpose.msra.mxu0 0.0
    %2500 = vmatpush.xpose.msra.mxu0 0.0
    %2501 = vmatpush.xpose.msra.mxu0 0.0
    %2502 = vmatpush.xpose.msra.mxu0 0.0
    %2503 = vmatpush.xpose.msra.mxu0 0.0
    %2504 = vmatpush.xpose.msra.mxu0 0.0
    %2505 = vmatpush.xpose.msra.mxu0 0.0
    %2506 = vmatpush.xpose.msra.mxu0 %v2496
    %2507 = vmatpush.xpose.msra.mxu0 %v2494
    %2508 = vmatpush.xpose.msra.mxu0 %v2492
    %2509 = vmatpush.xpose.msra.mxu0 %v2490
    %2510 = vmatpush.xpose.msra.mxu0 %v2488
    %2511 = vmatpush.xpose.msra.mxu0 %v2486
    %2512 = vmatpush.xpose.msra.mxu0 %v2484
    %2513 = vmatpush.xpose.msra.mxu0 %v2482
    %2514 = vmatmul.f32.gmra.mxu0 %v2477
    %v2515 = vpop.f32.mrf.mxu0
    %v2516 = vadd.f32 0.0, %v2515
    %2517 = vmatmul.f32.gmra.mxu0 %v2480
    %v2518 = vpop.f32.mrf.mxu0
    %v2519 = vadd.f32 0.0, %v2518
    %2520 = vdwg.mxu0
    %vm2521 = vcmask 523264
    %v2522 = vsel %vm2521, %v1481, -inf
    %2523 = vmax.xlane.f32.xlu0 %v2522
    %v2524 = vpop.xlane.xlu0 %2523
    %v2525 = vsel %vm2521, %v1484, -inf
    %2526 = vmax.xlane.f32.xlu0 %v2525
    %v2527 = vpop.xlane.xlu0 %2526
    %v2528 = vsel %vm2521, %v1550, -inf
    %2529 = vmax.xlane.f32.xlu0 %v2528
    %v2530 = vpop.xlane.xlu0 %2529
    %v2531 = vsel %vm2521, %v1553, -inf
    %2532 = vmax.xlane.f32.xlu0 %v2531
    %v2533 = vpop.xlane.xlu0 %2532
    %v2534 = vsel %vm2521, %v1619, -inf
    %2535 = vmax.xlane.f32.xlu0 %v2534
    %v2536 = vpop.xlane.xlu0 %2535
    %v2537 = vsel %vm2521, %v1622, -inf
    %2538 = vmax.xlane.f32.xlu0 %v2537
    %v2539 = vpop.xlane.xlu0 %2538
    %v2540 = vsel %vm2521, %v1688, -inf
    %2541 = vmax.xlane.f32.xlu0 %v2540
    %v2542 = vpop.xlane.xlu0 %2541
    %v2543 = vsel %vm2521, %v1691, -inf
    %2544 = vmax.xlane.f32.xlu0 %v2543
    %v2545 = vpop.xlane.xlu0 %2544
    %v2546 = vsel %vm2521, %v1757, -inf
    %2547 = vmax.xlane.f32.xlu0 %v2546
    %v2548 = vpop.xlane.xlu0 %2547
    %v2549 = vsel %vm2521, %v1760, -inf
    %2550 = vmax.xlane.f32.xlu0 %v2549
    %v2551 = vpop.xlane.xlu0 %2550
    %v2552 = vsel %vm2521, %v1826, -inf
    %2553 = vmax.xlane.f32.xlu0 %v2552
    %v2554 = vpop.xlane.xlu0 %2553
    %v2555 = vsel %vm2521, %v1829, -inf
    %2556 = vmax.xlane.f32.xlu0 %v2555
    %v2557 = vpop.xlane.xlu0 %2556
    %v2558 = vsel %vm2521, %v1895, -inf
    %2559 = vmax.xlane.f32.xlu0 %v2558
    %v2560 = vpop.xlane.xlu0 %2559
    %v2561 = vsel %vm2521, %v1898, -inf
    %2562 = vmax.xlane.f32.xlu0 %v2561
    %v2563 = vpop.xlane.xlu0 %2562
    %v2564 = vsel %vm2521, %v1964, -inf
    %2565 = vmax.xlane.f32.xlu0 %v2564
    %v2566 = vpop.xlane.xlu0 %2565
    %v2567 = vsel %vm2521, %v1967, -inf
    %2568 = vmax.xlane.f32.xlu0 %v2567
    %v2569 = vpop.xlane.xlu0 %2568
    %v2570 = vsel %vm2521, %v2033, -inf
    %2571 = vmax.xlane.f32.xlu0 %v2570
    %v2572 = vpop.xlane.xlu0 %2571
    %v2573 = vsel %vm2521, %v2036, -inf
    %2574 = vmax.xlane.f32.xlu0 %v2573
    %v2575 = vpop.xlane.xlu0 %2574
    %v2576 = vsel %vm2521, %v2102, -inf
    %2577 = vmax.xlane.f32.xlu0 %v2576
    %v2578 = vpop.xlane.xlu0 %2577
    %v2579 = vsel %vm2521, %v2105, -inf
    %2580 = vmax.xlane.f32.xlu0 %v2579
    %v2581 = vpop.xlane.xlu0 %2580
    %v2582 = vsel %vm2521, %v2171, -inf
    %2583 = vmax.xlane.f32.xlu0 %v2582
    %v2584 = vpop.xlane.xlu0 %2583
    %v2585 = vsel %vm2521, %v2174, -inf
    %2586 = vmax.xlane.f32.xlu0 %v2585
    %v2587 = vpop.xlane.xlu0 %2586
    %v2588 = vsel %vm2521, %v2240, -inf
    %2589 = vmax.xlane.f32.xlu0 %v2588
    %v2590 = vpop.xlane.xlu0 %2589
    %v2591 = vsel %vm2521, %v2243, -inf
    %2592 = vmax.xlane.f32.xlu0 %v2591
    %v2593 = vpop.xlane.xlu0 %2592
    %v2594 = vsel %vm2521, %v2309, -inf
    %2595 = vmax.xlane.f32.xlu0 %v2594
    %v2596 = vpop.xlane.xlu0 %2595
    %v2597 = vsel %vm2521, %v2312, -inf
    %2598 = vmax.xlane.f32.xlu0 %v2597
    %v2599 = vpop.xlane.xlu0 %2598
    %v2600 = vsel %vm2521, %v2378, -inf
    %2601 = vmax.xlane.f32.xlu0 %v2600
    %v2602 = vpop.xlane.xlu0 %2601
    %v2603 = vsel %vm2521, %v2381, -inf
    %2604 = vmax.xlane.f32.xlu0 %v2603
    %v2605 = vpop.xlane.xlu0 %2604
    %v2606 = vsel %vm2521, %v2447, -inf
    %2607 = vmax.xlane.f32.xlu0 %v2606
    %v2608 = vpop.xlane.xlu0 %2607
    %v2609 = vsel %vm2521, %v2450, -inf
    %2610 = vmax.xlane.f32.xlu0 %v2609
    %v2611 = vpop.xlane.xlu0 %2610
    %v2612 = vsel %vm2521, %v2516, -inf
    %2613 = vmax.xlane.f32.xlu0 %v2612
    %v2614 = vpop.xlane.xlu0 %2613
    %v2615 = vsel %vm2521, %v2519, -inf
    %2616 = vmax.xlane.f32.xlu0 %v2615
    %v2617 = vpop.xlane.xlu0 %2616
    %v2618 = vsub.f32 %v1481, %v2524
    %v2619 = vsub.f32 %v1484, %v2527
    %v2620 = vsub.f32 %v1550, %v2530
    %v2621 = vsub.f32 %v1553, %v2533
    %v2622 = vsub.f32 %v1619, %v2536
    %v2623 = vsub.f32 %v1622, %v2539
    %v2624 = vsub.f32 %v1688, %v2542
    %v2625 = vsub.f32 %v1691, %v2545
    %v2626 = vsub.f32 %v1757, %v2548
    %v2627 = vsub.f32 %v1760, %v2551
    %v2628 = vsub.f32 %v1826, %v2554
    %v2629 = vsub.f32 %v1829, %v2557
    %v2630 = vsub.f32 %v1895, %v2560
    %v2631 = vsub.f32 %v1898, %v2563
    %v2632 = vsub.f32 %v1964, %v2566
    %v2633 = vsub.f32 %v1967, %v2569
    %v2634 = vsub.f32 %v2033, %v2572
    %v2635 = vsub.f32 %v2036, %v2575
    %v2636 = vsub.f32 %v2102, %v2578
    %v2637 = vsub.f32 %v2105, %v2581
    %v2638 = vsub.f32 %v2171, %v2584
    %v2639 = vsub.f32 %v2174, %v2587
    %v2640 = vsub.f32 %v2240, %v2590
    %v2641 = vsub.f32 %v2243, %v2593
    %v2642 = vsub.f32 %v2309, %v2596
    %v2643 = vsub.f32 %v2312, %v2599
    %v2644 = vsub.f32 %v2378, %v2602
    %v2645 = vsub.f32 %v2381, %v2605
    %v2646 = vsub.f32 %v2447, %v2608
    %v2647 = vsub.f32 %v2450, %v2611
    %v2648 = vsub.f32 %v2516, %v2614
    %v2649 = vsub.f32 %v2519, %v2617
    %v2650 = vmul.f32 %v2618, 1.442695
    %v2651 = vpow.pop %v2650
    %v2652 = vmul.f32 %v2619, 1.442695
    %v2653 = vpow.pop %v2652
    %v2654 = vmul.f32 %v2620, 1.442695
    %v2655 = vpow.pop %v2654
    %v2656 = vmul.f32 %v2621, 1.442695
    %v2657 = vpow.pop %v2656
    %v2658 = vmul.f32 %v2622, 1.442695
    %v2659 = vpow.pop %v2658
    %v2660 = vmul.f32 %v2623, 1.442695
    %v2661 = vpow.pop %v2660
    %v2662 = vmul.f32 %v2624, 1.442695
    %v2663 = vpow.pop %v2662
    %v2664 = vmul.f32 %v2625, 1.442695
    %v2665 = vpow.pop %v2664
    %v2666 = vmul.f32 %v2626, 1.442695
    %v2667 = vpow.pop %v2666
    %v2668 = vmul.f32 %v2627, 1.442695
    %v2669 = vpow.pop %v2668
    %v2670 = vmul.f32 %v2628, 1.442695
    %v2671 = vpow.pop %v2670
    %v2672 = vmul.f32 %v2629, 1.442695
    %v2673 = vpow.pop %v2672
    %v2674 = vmul.f32 %v2630, 1.442695
    %v2675 = vpow.pop %v2674
    %v2676 = vmul.f32 %v2631, 1.442695
    %v2677 = vpow.pop %v2676
    %v2678 = vmul.f32 %v2632, 1.442695
    %v2679 = vpow.pop %v2678
    %v2680 = vmul.f32 %v2633, 1.442695
    %v2681 = vpow.pop %v2680
    %v2682 = vmul.f32 %v2634, 1.442695
    %v2683 = vpow.pop %v2682
    %v2684 = vmul.f32 %v2635, 1.442695
    %v2685 = vpow.pop %v2684
    %v2686 = vmul.f32 %v2636, 1.442695
    %v2687 = vpow.pop %v2686
    %v2688 = vmul.f32 %v2637, 1.442695
    %v2689 = vpow.pop %v2688
    %v2690 = vmul.f32 %v2638, 1.442695
    %v2691 = vpow.pop %v2690
    %v2692 = vmul.f32 %v2639, 1.442695
    %v2693 = vpow.pop %v2692
    %v2694 = vmul.f32 %v2640, 1.442695
    %v2695 = vpow.pop %v2694
    %v2696 = vmul.f32 %v2641, 1.442695
    %v2697 = vpow.pop %v2696
    %v2698 = vmul.f32 %v2642, 1.442695
    %v2699 = vpow.pop %v2698
    %v2700 = vmul.f32 %v2643, 1.442695
    %v2701 = vpow.pop %v2700
    %v2702 = vmul.f32 %v2644, 1.442695
    %v2703 = vpow.pop %v2702
    %v2704 = vmul.f32 %v2645, 1.442695
    %v2705 = vpow.pop %v2704
    %v2706 = vmul.f32 %v2646, 1.442695
    %v2707 = vpow.pop %v2706
    %v2708 = vmul.f32 %v2647, 1.442695
    %v2709 = vpow.pop %v2708
    %v2710 = vmul.f32 %v2648, 1.442695
    %v2711 = vpow.pop %v2710
    %v2712 = vmul.f32 %v2649, 1.442695
    %v2713 = vpow.pop %v2712
    %2722 = vrot.lane.b32.xlu0 %v1289, 64
    %v2723 = vpop.permute.xlu0 %2722
    %2724 = vrot.lane.b32.xlu0 %v1290, 64
    %v2725 = vpop.permute.xlu0 %2724
    %2726 = vrot.lane.b32.xlu0 %v1291, 64
    %v2727 = vpop.permute.xlu0 %2726
    %2728 = vrot.lane.b32.xlu0 %v1292, 64
    %v2729 = vpop.permute.xlu0 %2728
    %2730 = vrot.lane.b32.xlu0 %v1293, 64
    %v2731 = vpop.permute.xlu0 %2730
    %2732 = vrot.lane.b32.xlu0 %v1294, 64
    %v2733 = vpop.permute.xlu0 %2732
    %2734 = vrot.lane.b32.xlu0 %v1295, 64
    %v2735 = vpop.permute.xlu0 %2734
    %2736 = vrot.lane.b32.xlu0 %v1296, 64
    %v2737 = vpop.permute.xlu0 %2736
    %v2747 = vsel %vm2521, %v2651, 0
    %v2750 = vsel %vm2521, %v2653, 0
    %2752 = vmatpush.msra.mxu0 0.0
    %2753 = vmatpush.msra.mxu0 0.0
    %2754 = vmatpush.msra.mxu0 0.0
    %2755 = vmatpush.msra.mxu0 0.0
    %2756 = vmatpush.msra.mxu0 0.0
    %2757 = vmatpush.msra.mxu0 0.0
    %2758 = vmatpush.msra.mxu0 0.0
    %2759 = vmatpush.msra.mxu0 0.0
    %2760 = vmatpush.msra.mxu0 %v2737
    %2761 = vmatpush.msra.mxu0 %v2735
    %2762 = vmatpush.msra.mxu0 %v2733
    %2763 = vmatpush.msra.mxu0 %v2731
    %2764 = vmatpush.msra.mxu0 %v2729
    %2765 = vmatpush.msra.mxu0 %v2727
    %2766 = vmatpush.msra.mxu0 %v2725
    %2767 = vmatpush.msra.mxu0 %v2723
    %2768 = vmatmul.f32.gmra.mxu0 %v2747
    %v2769 = vpop.f32.mrf.mxu0
    %v2770 = vadd.f32 0.0, %v2769
    %2771 = vmatmul.f32.gmra.mxu0 %v2750
    %v2772 = vpop.f32.mrf.mxu0
    %v2773 = vadd.f32 0.0, %v2772
    %2774 = vdwg.mxu0
    %2783 = vrot.lane.b32.xlu0 %v1297, 64
    %v2784 = vpop.permute.xlu0 %2783
    %2785 = vrot.lane.b32.xlu0 %v1298, 64
    %v2786 = vpop.permute.xlu0 %2785
    %2787 = vrot.lane.b32.xlu0 %v1299, 64
    %v2788 = vpop.permute.xlu0 %2787
    %2789 = vrot.lane.b32.xlu0 %v1300, 64
    %v2790 = vpop.permute.xlu0 %2789
    %2791 = vrot.lane.b32.xlu0 %v1301, 64
    %v2792 = vpop.permute.xlu0 %2791
    %2793 = vrot.lane.b32.xlu0 %v1302, 64
    %v2794 = vpop.permute.xlu0 %2793
    %2795 = vrot.lane.b32.xlu0 %v1303, 64
    %v2796 = vpop.permute.xlu0 %2795
    %2797 = vrot.lane.b32.xlu0 %v1304, 64
    %v2798 = vpop.permute.xlu0 %2797
    %v2808 = vsel %vm2521, %v2655, 0
    %v2811 = vsel %vm2521, %v2657, 0
    %2813 = vmatpush.msra.mxu0 0.0
    %2814 = vmatpush.msra.mxu0 0.0
    %2815 = vmatpush.msra.mxu0 0.0
    %2816 = vmatpush.msra.mxu0 0.0
    %2817 = vmatpush.msra.mxu0 0.0
    %2818 = vmatpush.msra.mxu0 0.0
    %2819 = vmatpush.msra.mxu0 0.0
    %2820 = vmatpush.msra.mxu0 0.0
    %2821 = vmatpush.msra.mxu0 %v2798
    %2822 = vmatpush.msra.mxu0 %v2796
    %2823 = vmatpush.msra.mxu0 %v2794
    %2824 = vmatpush.msra.mxu0 %v2792
    %2825 = vmatpush.msra.mxu0 %v2790
    %2826 = vmatpush.msra.mxu0 %v2788
    %2827 = vmatpush.msra.mxu0 %v2786
    %2828 = vmatpush.msra.mxu0 %v2784
    %2829 = vmatmul.f32.gmra.mxu0 %v2808
    %v2830 = vpop.f32.mrf.mxu0
    %v2831 = vadd.f32 0.0, %v2830
    %2832 = vmatmul.f32.gmra.mxu0 %v2811
    %v2833 = vpop.f32.mrf.mxu0
    %v2834 = vadd.f32 0.0, %v2833
    %2835 = vdwg.mxu0
    %2844 = vrot.lane.b32.xlu0 %v1305, 64
    %v2845 = vpop.permute.xlu0 %2844
    %2846 = vrot.lane.b32.xlu0 %v1306, 64
    %v2847 = vpop.permute.xlu0 %2846
    %2848 = vrot.lane.b32.xlu0 %v1307, 64
    %v2849 = vpop.permute.xlu0 %2848
    %2850 = vrot.lane.b32.xlu0 %v1308, 64
    %v2851 = vpop.permute.xlu0 %2850
    %2852 = vrot.lane.b32.xlu0 %v1309, 64
    %v2853 = vpop.permute.xlu0 %2852
    %2854 = vrot.lane.b32.xlu0 %v1310, 64
    %v2855 = vpop.permute.xlu0 %2854
    %2856 = vrot.lane.b32.xlu0 %v1311, 64
    %v2857 = vpop.permute.xlu0 %2856
    %2858 = vrot.lane.b32.xlu0 %v1312, 64
    %v2859 = vpop.permute.xlu0 %2858
    %v2869 = vsel %vm2521, %v2659, 0
    %v2872 = vsel %vm2521, %v2661, 0
    %2874 = vmatpush.msra.mxu0 0.0
    %2875 = vmatpush.msra.mxu0 0.0
    %2876 = vmatpush.msra.mxu0 0.0
    %2877 = vmatpush.msra.mxu0 0.0
    %2878 = vmatpush.msra.mxu0 0.0
    %2879 = vmatpush.msra.mxu0 0.0
    %2880 = vmatpush.msra.mxu0 0.0
    %2881 = vmatpush.msra.mxu0 0.0
    %2882 = vmatpush.msra.mxu0 %v2859
    %2883 = vmatpush.msra.mxu0 %v2857
    %2884 = vmatpush.msra.mxu0 %v2855
    %2885 = vmatpush.msra.mxu0 %v2853
    %2886 = vmatpush.msra.mxu0 %v2851
    %2887 = vmatpush.msra.mxu0 %v2849
    %2888 = vmatpush.msra.mxu0 %v2847
    %2889 = vmatpush.msra.mxu0 %v2845
    %2890 = vmatmul.f32.gmra.mxu0 %v2869
    %v2891 = vpop.f32.mrf.mxu0
    %v2892 = vadd.f32 0.0, %v2891
    %2893 = vmatmul.f32.gmra.mxu0 %v2872
    %v2894 = vpop.f32.mrf.mxu0
    %v2895 = vadd.f32 0.0, %v2894
    %2896 = vdwg.mxu0
    %2905 = vrot.lane.b32.xlu0 %v1313, 64
    %v2906 = vpop.permute.xlu0 %2905
    %2907 = vrot.lane.b32.xlu0 %v1314, 64
    %v2908 = vpop.permute.xlu0 %2907
    %2909 = vrot.lane.b32.xlu0 %v1315, 64
    %v2910 = vpop.permute.xlu0 %2909
    %2911 = vrot.lane.b32.xlu0 %v1316, 64
    %v2912 = vpop.permute.xlu0 %2911
    %2913 = vrot.lane.b32.xlu0 %v1317, 64
    %v2914 = vpop.permute.xlu0 %2913
    %2915 = vrot.lane.b32.xlu0 %v1318, 64
    %v2916 = vpop.permute.xlu0 %2915
    %2917 = vrot.lane.b32.xlu0 %v1319, 64
    %v2918 = vpop.permute.xlu0 %2917
    %2919 = vrot.lane.b32.xlu0 %v1320, 64
    %v2920 = vpop.permute.xlu0 %2919
    %v2930 = vsel %vm2521, %v2663, 0
    %v2933 = vsel %vm2521, %v2665, 0
    %2935 = vmatpush.msra.mxu0 0.0
    %2936 = vmatpush.msra.mxu0 0.0
    %2937 = vmatpush.msra.mxu0 0.0
    %2938 = vmatpush.msra.mxu0 0.0
    %2939 = vmatpush.msra.mxu0 0.0
    %2940 = vmatpush.msra.mxu0 0.0
    %2941 = vmatpush.msra.mxu0 0.0
    %2942 = vmatpush.msra.mxu0 0.0
    %2943 = vmatpush.msra.mxu0 %v2920
    %2944 = vmatpush.msra.mxu0 %v2918
    %2945 = vmatpush.msra.mxu0 %v2916
    %2946 = vmatpush.msra.mxu0 %v2914
    %2947 = vmatpush.msra.mxu0 %v2912
    %2948 = vmatpush.msra.mxu0 %v2910
    %2949 = vmatpush.msra.mxu0 %v2908
    %2950 = vmatpush.msra.mxu0 %v2906
    %2951 = vmatmul.f32.gmra.mxu0 %v2930
    %v2952 = vpop.f32.mrf.mxu0
    %v2953 = vadd.f32 0.0, %v2952
    %2954 = vmatmul.f32.gmra.mxu0 %v2933
    %v2955 = vpop.f32.mrf.mxu0
    %v2956 = vadd.f32 0.0, %v2955
    %2957 = vdwg.mxu0
    %2966 = vrot.lane.b32.xlu0 %v1321, 64
    %v2967 = vpop.permute.xlu0 %2966
    %2968 = vrot.lane.b32.xlu0 %v1322, 64
    %v2969 = vpop.permute.xlu0 %2968
    %2970 = vrot.lane.b32.xlu0 %v1323, 64
    %v2971 = vpop.permute.xlu0 %2970
    %2972 = vrot.lane.b32.xlu0 %v1324, 64
    %v2973 = vpop.permute.xlu0 %2972
    %2974 = vrot.lane.b32.xlu0 %v1325, 64
    %v2975 = vpop.permute.xlu0 %2974
    %2976 = vrot.lane.b32.xlu0 %v1326, 64
    %v2977 = vpop.permute.xlu0 %2976
    %2978 = vrot.lane.b32.xlu0 %v1327, 64
    %v2979 = vpop.permute.xlu0 %2978
    %2980 = vrot.lane.b32.xlu0 %v1328, 64
    %v2981 = vpop.permute.xlu0 %2980
    %v2991 = vsel %vm2521, %v2667, 0
    %v2994 = vsel %vm2521, %v2669, 0
    %2996 = vmatpush.msra.mxu0 0.0
    %2997 = vmatpush.msra.mxu0 0.0
    %2998 = vmatpush.msra.mxu0 0.0
    %2999 = vmatpush.msra.mxu0 0.0
    %3000 = vmatpush.msra.mxu0 0.0
    %3001 = vmatpush.msra.mxu0 0.0
    %3002 = vmatpush.msra.mxu0 0.0
    %3003 = vmatpush.msra.mxu0 0.0
    %3004 = vmatpush.msra.mxu0 %v2981
    %3005 = vmatpush.msra.mxu0 %v2979
    %3006 = vmatpush.msra.mxu0 %v2977
    %3007 = vmatpush.msra.mxu0 %v2975
    %3008 = vmatpush.msra.mxu0 %v2973
    %3009 = vmatpush.msra.mxu0 %v2971
    %3010 = vmatpush.msra.mxu0 %v2969
    %3011 = vmatpush.msra.mxu0 %v2967
    %3012 = vmatmul.f32.gmra.mxu0 %v2991
    %v3013 = vpop.f32.mrf.mxu0
    %v3014 = vadd.f32 0.0, %v3013
    %3015 = vmatmul.f32.gmra.mxu0 %v2994
    %v3016 = vpop.f32.mrf.mxu0
    %v3017 = vadd.f32 0.0, %v3016
    %3018 = vdwg.mxu0
    %3027 = vrot.lane.b32.xlu0 %v1329, 64
    %v3028 = vpop.permute.xlu0 %3027
    %3029 = vrot.lane.b32.xlu0 %v1330, 64
    %v3030 = vpop.permute.xlu0 %3029
    %3031 = vrot.lane.b32.xlu0 %v1331, 64
    %v3032 = vpop.permute.xlu0 %3031
    %3033 = vrot.lane.b32.xlu0 %v1332, 64
    %v3034 = vpop.permute.xlu0 %3033
    %3035 = vrot.lane.b32.xlu0 %v1333, 64
    %v3036 = vpop.permute.xlu0 %3035
    %3037 = vrot.lane.b32.xlu0 %v1334, 64
    %v3038 = vpop.permute.xlu0 %3037
    %3039 = vrot.lane.b32.xlu0 %v1335, 64
    %v3040 = vpop.permute.xlu0 %3039
    %3041 = vrot.lane.b32.xlu0 %v1336, 64
    %v3042 = vpop.permute.xlu0 %3041
    %v3052 = vsel %vm2521, %v2671, 0
    %v3055 = vsel %vm2521, %v2673, 0
    %3057 = vmatpush.msra.mxu0 0.0
    %3058 = vmatpush.msra.mxu0 0.0
    %3059 = vmatpush.msra.mxu0 0.0
    %3060 = vmatpush.msra.mxu0 0.0
    %3061 = vmatpush.msra.mxu0 0.0
    %3062 = vmatpush.msra.mxu0 0.0
    %3063 = vmatpush.msra.mxu0 0.0
    %3064 = vmatpush.msra.mxu0 0.0
    %3065 = vmatpush.msra.mxu0 %v3042
    %3066 = vmatpush.msra.mxu0 %v3040
    %3067 = vmatpush.msra.mxu0 %v3038
    %3068 = vmatpush.msra.mxu0 %v3036
    %3069 = vmatpush.msra.mxu0 %v3034
    %3070 = vmatpush.msra.mxu0 %v3032
    %3071 = vmatpush.msra.mxu0 %v3030
    %3072 = vmatpush.msra.mxu0 %v3028
    %3073 = vmatmul.f32.gmra.mxu0 %v3052
    %v3074 = vpop.f32.mrf.mxu0
    %v3075 = vadd.f32 0.0, %v3074
    %3076 = vmatmul.f32.gmra.mxu0 %v3055
    %v3077 = vpop.f32.mrf.mxu0
    %v3078 = vadd.f32 0.0, %v3077
    %3079 = vdwg.mxu0
    %3088 = vrot.lane.b32.xlu0 %v1337, 64
    %v3089 = vpop.permute.xlu0 %3088
    %3090 = vrot.lane.b32.xlu0 %v1338, 64
    %v3091 = vpop.permute.xlu0 %3090
    %3092 = vrot.lane.b32.xlu0 %v1339, 64
    %v3093 = vpop.permute.xlu0 %3092
    %3094 = vrot.lane.b32.xlu0 %v1340, 64
    %v3095 = vpop.permute.xlu0 %3094
    %3096 = vrot.lane.b32.xlu0 %v1341, 64
    %v3097 = vpop.permute.xlu0 %3096
    %3098 = vrot.lane.b32.xlu0 %v1342, 64
    %v3099 = vpop.permute.xlu0 %3098
    %3100 = vrot.lane.b32.xlu0 %v1343, 64
    %v3101 = vpop.permute.xlu0 %3100
    %3102 = vrot.lane.b32.xlu0 %v1344, 64
    %v3103 = vpop.permute.xlu0 %3102
    %v3113 = vsel %vm2521, %v2675, 0
    %v3116 = vsel %vm2521, %v2677, 0
    %3118 = vmatpush.msra.mxu0 0.0
    %3119 = vmatpush.msra.mxu0 0.0
    %3120 = vmatpush.msra.mxu0 0.0
    %3121 = vmatpush.msra.mxu0 0.0
    %3122 = vmatpush.msra.mxu0 0.0
    %3123 = vmatpush.msra.mxu0 0.0
    %3124 = vmatpush.msra.mxu0 0.0
    %3125 = vmatpush.msra.mxu0 0.0
    %3126 = vmatpush.msra.mxu0 %v3103
    %3127 = vmatpush.msra.mxu0 %v3101
    %3128 = vmatpush.msra.mxu0 %v3099
    %3129 = vmatpush.msra.mxu0 %v3097
    %3130 = vmatpush.msra.mxu0 %v3095
    %3131 = vmatpush.msra.mxu0 %v3093
    %3132 = vmatpush.msra.mxu0 %v3091
    %3133 = vmatpush.msra.mxu0 %v3089
    %3134 = vmatmul.f32.gmra.mxu0 %v3113
    %v3135 = vpop.f32.mrf.mxu0
    %v3136 = vadd.f32 0.0, %v3135
    %3137 = vmatmul.f32.gmra.mxu0 %v3116
    %v3138 = vpop.f32.mrf.mxu0
    %v3139 = vadd.f32 0.0, %v3138
    %3140 = vdwg.mxu0
    %3149 = vrot.lane.b32.xlu0 %v1345, 64
    %v3150 = vpop.permute.xlu0 %3149
    %3151 = vrot.lane.b32.xlu0 %v1346, 64
    %v3152 = vpop.permute.xlu0 %3151
    %3153 = vrot.lane.b32.xlu0 %v1347, 64
    %v3154 = vpop.permute.xlu0 %3153
    %3155 = vrot.lane.b32.xlu0 %v1348, 64
    %v3156 = vpop.permute.xlu0 %3155
    %3157 = vrot.lane.b32.xlu0 %v1349, 64
    %v3158 = vpop.permute.xlu0 %3157
    %3159 = vrot.lane.b32.xlu0 %v1350, 64
    %v3160 = vpop.permute.xlu0 %3159
    %3161 = vrot.lane.b32.xlu0 %v1351, 64
    %v3162 = vpop.permute.xlu0 %3161
    %3163 = vrot.lane.b32.xlu0 %v1352, 64
    %v3164 = vpop.permute.xlu0 %3163
    %v3174 = vsel %vm2521, %v2679, 0
    %v3177 = vsel %vm2521, %v2681, 0
    %3179 = vmatpush.msra.mxu0 0.0
    %3180 = vmatpush.msra.mxu0 0.0
    %3181 = vmatpush.msra.mxu0 0.0
    %3182 = vmatpush.msra.mxu0 0.0
    %3183 = vmatpush.msra.mxu0 0.0
    %3184 = vmatpush.msra.mxu0 0.0
    %3185 = vmatpush.msra.mxu0 0.0
    %3186 = vmatpush.msra.mxu0 0.0
    %3187 = vmatpush.msra.mxu0 %v3164
    %3188 = vmatpush.msra.mxu0 %v3162
    %3189 = vmatpush.msra.mxu0 %v3160
    %3190 = vmatpush.msra.mxu0 %v3158
    %3191 = vmatpush.msra.mxu0 %v3156
    %3192 = vmatpush.msra.mxu0 %v3154
    %3193 = vmatpush.msra.mxu0 %v3152
    %3194 = vmatpush.msra.mxu0 %v3150
    %3195 = vmatmul.f32.gmra.mxu0 %v3174
    %v3196 = vpop.f32.mrf.mxu0
    %v3197 = vadd.f32 0.0, %v3196
    %3198 = vmatmul.f32.gmra.mxu0 %v3177
    %v3199 = vpop.f32.mrf.mxu0
    %v3200 = vadd.f32 0.0, %v3199
    %3201 = vdwg.mxu0
    %3210 = vrot.lane.b32.xlu0 %v1353, 64
    %v3211 = vpop.permute.xlu0 %3210
    %3212 = vrot.lane.b32.xlu0 %v1354, 64
    %v3213 = vpop.permute.xlu0 %3212
    %3214 = vrot.lane.b32.xlu0 %v1355, 64
    %v3215 = vpop.permute.xlu0 %3214
    %3216 = vrot.lane.b32.xlu0 %v1356, 64
    %v3217 = vpop.permute.xlu0 %3216
    %3218 = vrot.lane.b32.xlu0 %v1357, 64
    %v3219 = vpop.permute.xlu0 %3218
    %3220 = vrot.lane.b32.xlu0 %v1358, 64
    %v3221 = vpop.permute.xlu0 %3220
    %3222 = vrot.lane.b32.xlu0 %v1359, 64
    %v3223 = vpop.permute.xlu0 %3222
    %3224 = vrot.lane.b32.xlu0 %v1360, 64
    %v3225 = vpop.permute.xlu0 %3224
    %v3235 = vsel %vm2521, %v2683, 0
    %v3238 = vsel %vm2521, %v2685, 0
    %3240 = vmatpush.msra.mxu0 0.0
    %3241 = vmatpush.msra.mxu0 0.0
    %3242 = vmatpush.msra.mxu0 0.0
    %3243 = vmatpush.msra.mxu0 0.0
    %3244 = vmatpush.msra.mxu0 0.0
    %3245 = vmatpush.msra.mxu0 0.0
    %3246 = vmatpush.msra.mxu0 0.0
    %3247 = vmatpush.msra.mxu0 0.0
    %3248 = vmatpush.msra.mxu0 %v3225
    %3249 = vmatpush.msra.mxu0 %v3223
    %3250 = vmatpush.msra.mxu0 %v3221
    %3251 = vmatpush.msra.mxu0 %v3219
    %3252 = vmatpush.msra.mxu0 %v3217
    %3253 = vmatpush.msra.mxu0 %v3215
    %3254 = vmatpush.msra.mxu0 %v3213
    %3255 = vmatpush.msra.mxu0 %v3211
    %3256 = vmatmul.f32.gmra.mxu0 %v3235
    %v3257 = vpop.f32.mrf.mxu0
    %v3258 = vadd.f32 0.0, %v3257
    %3259 = vmatmul.f32.gmra.mxu0 %v3238
    %v3260 = vpop.f32.mrf.mxu0
    %v3261 = vadd.f32 0.0, %v3260
    %3262 = vdwg.mxu0
    %3271 = vrot.lane.b32.xlu0 %v1361, 64
    %v3272 = vpop.permute.xlu0 %3271
    %3273 = vrot.lane.b32.xlu0 %v1362, 64
    %v3274 = vpop.permute.xlu0 %3273
    %3275 = vrot.lane.b32.xlu0 %v1363, 64
    %v3276 = vpop.permute.xlu0 %3275
    %3277 = vrot.lane.b32.xlu0 %v1364, 64
    %v3278 = vpop.permute.xlu0 %3277
    %3279 = vrot.lane.b32.xlu0 %v1365, 64
    %v3280 = vpop.permute.xlu0 %3279
    %3281 = vrot.lane.b32.xlu0 %v1366, 64
    %v3282 = vpop.permute.xlu0 %3281
    %3283 = vrot.lane.b32.xlu0 %v1367, 64
    %v3284 = vpop.permute.xlu0 %3283
    %3285 = vrot.lane.b32.xlu0 %v1368, 64
    %v3286 = vpop.permute.xlu0 %3285
    %v3296 = vsel %vm2521, %v2687, 0
    %v3299 = vsel %vm2521, %v2689, 0
    %3301 = vmatpush.msra.mxu0 0.0
    %3302 = vmatpush.msra.mxu0 0.0
    %3303 = vmatpush.msra.mxu0 0.0
    %3304 = vmatpush.msra.mxu0 0.0
    %3305 = vmatpush.msra.mxu0 0.0
    %3306 = vmatpush.msra.mxu0 0.0
    %3307 = vmatpush.msra.mxu0 0.0
    %3308 = vmatpush.msra.mxu0 0.0
    %3309 = vmatpush.msra.mxu0 %v3286
    %3310 = vmatpush.msra.mxu0 %v3284
    %3311 = vmatpush.msra.mxu0 %v3282
    %3312 = vmatpush.msra.mxu0 %v3280
    %3313 = vmatpush.msra.mxu0 %v3278
    %3314 = vmatpush.msra.mxu0 %v3276
    %3315 = vmatpush.msra.mxu0 %v3274
    %3316 = vmatpush.msra.mxu0 %v3272
    %3317 = vmatmul.f32.gmra.mxu0 %v3296
    %v3318 = vpop.f32.mrf.mxu0
    %v3319 = vadd.f32 0.0, %v3318
    %3320 = vmatmul.f32.gmra.mxu0 %v3299
    %v3321 = vpop.f32.mrf.mxu0
    %v3322 = vadd.f32 0.0, %v3321
    %3323 = vdwg.mxu0
    %3332 = vrot.lane.b32.xlu0 %v1369, 64
    %v3333 = vpop.permute.xlu0 %3332
    %3334 = vrot.lane.b32.xlu0 %v1370, 64
    %v3335 = vpop.permute.xlu0 %3334
    %3336 = vrot.lane.b32.xlu0 %v1371, 64
    %v3337 = vpop.permute.xlu0 %3336
    %3338 = vrot.lane.b32.xlu0 %v1372, 64
    %v3339 = vpop.permute.xlu0 %3338
    %3340 = vrot.lane.b32.xlu0 %v1373, 64
    %v3341 = vpop.permute.xlu0 %3340
    %3342 = vrot.lane.b32.xlu0 %v1374, 64
    %v3343 = vpop.permute.xlu0 %3342
    %3344 = vrot.lane.b32.xlu0 %v1375, 64
    %v3345 = vpop.permute.xlu0 %3344
    %3346 = vrot.lane.b32.xlu0 %v1376, 64
    %v3347 = vpop.permute.xlu0 %3346
    %v3357 = vsel %vm2521, %v2691, 0
    %v3360 = vsel %vm2521, %v2693, 0
    %3362 = vmatpush.msra.mxu0 0.0
    %3363 = vmatpush.msra.mxu0 0.0
    %3364 = vmatpush.msra.mxu0 0.0
    %3365 = vmatpush.msra.mxu0 0.0
    %3366 = vmatpush.msra.mxu0 0.0
    %3367 = vmatpush.msra.mxu0 0.0
    %3368 = vmatpush.msra.mxu0 0.0
    %3369 = vmatpush.msra.mxu0 0.0
    %3370 = vmatpush.msra.mxu0 %v3347
    %3371 = vmatpush.msra.mxu0 %v3345
    %3372 = vmatpush.msra.mxu0 %v3343
    %3373 = vmatpush.msra.mxu0 %v3341
    %3374 = vmatpush.msra.mxu0 %v3339
    %3375 = vmatpush.msra.mxu0 %v3337
    %3376 = vmatpush.msra.mxu0 %v3335
    %3377 = vmatpush.msra.mxu0 %v3333
    %3378 = vmatmul.f32.gmra.mxu0 %v3357
    %v3379 = vpop.f32.mrf.mxu0
    %v3380 = vadd.f32 0.0, %v3379
    %3381 = vmatmul.f32.gmra.mxu0 %v3360
    %v3382 = vpop.f32.mrf.mxu0
    %v3383 = vadd.f32 0.0, %v3382
    %3384 = vdwg.mxu0
    %3393 = vrot.lane.b32.xlu0 %v1377, 64
    %v3394 = vpop.permute.xlu0 %3393
    %3395 = vrot.lane.b32.xlu0 %v1378, 64
    %v3396 = vpop.permute.xlu0 %3395
    %3397 = vrot.lane.b32.xlu0 %v1379, 64
    %v3398 = vpop.permute.xlu0 %3397
    %3399 = vrot.lane.b32.xlu0 %v1380, 64
    %v3400 = vpop.permute.xlu0 %3399
    %3401 = vrot.lane.b32.xlu0 %v1381, 64
    %v3402 = vpop.permute.xlu0 %3401
    %3403 = vrot.lane.b32.xlu0 %v1382, 64
    %v3404 = vpop.permute.xlu0 %3403
    %3405 = vrot.lane.b32.xlu0 %v1383, 64
    %v3406 = vpop.permute.xlu0 %3405
    %3407 = vrot.lane.b32.xlu0 %v1384, 64
    %v3408 = vpop.permute.xlu0 %3407
    %v3418 = vsel %vm2521, %v2695, 0
    %v3421 = vsel %vm2521, %v2697, 0
    %3423 = vmatpush.msra.mxu0 0.0
    %3424 = vmatpush.msra.mxu0 0.0
    %3425 = vmatpush.msra.mxu0 0.0
    %3426 = vmatpush.msra.mxu0 0.0
    %3427 = vmatpush.msra.mxu0 0.0
    %3428 = vmatpush.msra.mxu0 0.0
    %3429 = vmatpush.msra.mxu0 0.0
    %3430 = vmatpush.msra.mxu0 0.0
    %3431 = vmatpush.msra.mxu0 %v3408
    %3432 = vmatpush.msra.mxu0 %v3406
    %3433 = vmatpush.msra.mxu0 %v3404
    %3434 = vmatpush.msra.mxu0 %v3402
    %3435 = vmatpush.msra.mxu0 %v3400
    %3436 = vmatpush.msra.mxu0 %v3398
    %3437 = vmatpush.msra.mxu0 %v3396
    %3438 = vmatpush.msra.mxu0 %v3394
    %3439 = vmatmul.f32.gmra.mxu0 %v3418
    %v3440 = vpop.f32.mrf.mxu0
    %v3441 = vadd.f32 0.0, %v3440
    %3442 = vmatmul.f32.gmra.mxu0 %v3421
    %v3443 = vpop.f32.mrf.mxu0
    %v3444 = vadd.f32 0.0, %v3443
    %3445 = vdwg.mxu0
    %3454 = vrot.lane.b32.xlu0 %v1385, 64
    %v3455 = vpop.permute.xlu0 %3454
    %3456 = vrot.lane.b32.xlu0 %v1386, 64
    %v3457 = vpop.permute.xlu0 %3456
    %3458 = vrot.lane.b32.xlu0 %v1387, 64
    %v3459 = vpop.permute.xlu0 %3458
    %3460 = vrot.lane.b32.xlu0 %v1388, 64
    %v3461 = vpop.permute.xlu0 %3460
    %3462 = vrot.lane.b32.xlu0 %v1389, 64
    %v3463 = vpop.permute.xlu0 %3462
    %3464 = vrot.lane.b32.xlu0 %v1390, 64
    %v3465 = vpop.permute.xlu0 %3464
    %3466 = vrot.lane.b32.xlu0 %v1391, 64
    %v3467 = vpop.permute.xlu0 %3466
    %3468 = vrot.lane.b32.xlu0 %v1392, 64
    %v3469 = vpop.permute.xlu0 %3468
    %v3479 = vsel %vm2521, %v2699, 0
    %v3482 = vsel %vm2521, %v2701, 0
    %3484 = vmatpush.msra.mxu0 0.0
    %3485 = vmatpush.msra.mxu0 0.0
    %3486 = vmatpush.msra.mxu0 0.0
    %3487 = vmatpush.msra.mxu0 0.0
    %3488 = vmatpush.msra.mxu0 0.0
    %3489 = vmatpush.msra.mxu0 0.0
    %3490 = vmatpush.msra.mxu0 0.0
    %3491 = vmatpush.msra.mxu0 0.0
    %3492 = vmatpush.msra.mxu0 %v3469
    %3493 = vmatpush.msra.mxu0 %v3467
    %3494 = vmatpush.msra.mxu0 %v3465
    %3495 = vmatpush.msra.mxu0 %v3463
    %3496 = vmatpush.msra.mxu0 %v3461
    %3497 = vmatpush.msra.mxu0 %v3459
    %3498 = vmatpush.msra.mxu0 %v3457
    %3499 = vmatpush.msra.mxu0 %v3455
    %3500 = vmatmul.f32.gmra.mxu0 %v3479
    %v3501 = vpop.f32.mrf.mxu0
    %v3502 = vadd.f32 0.0, %v3501
    %3503 = vmatmul.f32.gmra.mxu0 %v3482
    %v3504 = vpop.f32.mrf.mxu0
    %v3505 = vadd.f32 0.0, %v3504
    %3506 = vdwg.mxu0
    %3515 = vrot.lane.b32.xlu0 %v1393, 64
    %v3516 = vpop.permute.xlu0 %3515
    %3517 = vrot.lane.b32.xlu0 %v1394, 64
    %v3518 = vpop.permute.xlu0 %3517
    %3519 = vrot.lane.b32.xlu0 %v1395, 64
    %v3520 = vpop.permute.xlu0 %3519
    %3521 = vrot.lane.b32.xlu0 %v1396, 64
    %v3522 = vpop.permute.xlu0 %3521
    %3523 = vrot.lane.b32.xlu0 %v1397, 64
    %v3524 = vpop.permute.xlu0 %3523
    %3525 = vrot.lane.b32.xlu0 %v1398, 64
    %v3526 = vpop.permute.xlu0 %3525
    %3527 = vrot.lane.b32.xlu0 %v1399, 64
    %v3528 = vpop.permute.xlu0 %3527
    %3529 = vrot.lane.b32.xlu0 %v1400, 64
    %v3530 = vpop.permute.xlu0 %3529
    %v3540 = vsel %vm2521, %v2703, 0
    %v3543 = vsel %vm2521, %v2705, 0
    %3545 = vmatpush.msra.mxu0 0.0
    %3546 = vmatpush.msra.mxu0 0.0
    %3547 = vmatpush.msra.mxu0 0.0
    %3548 = vmatpush.msra.mxu0 0.0
    %3549 = vmatpush.msra.mxu0 0.0
    %3550 = vmatpush.msra.mxu0 0.0
    %3551 = vmatpush.msra.mxu0 0.0
    %3552 = vmatpush.msra.mxu0 0.0
    %3553 = vmatpush.msra.mxu0 %v3530
    %3554 = vmatpush.msra.mxu0 %v3528
    %3555 = vmatpush.msra.mxu0 %v3526
    %3556 = vmatpush.msra.mxu0 %v3524
    %3557 = vmatpush.msra.mxu0 %v3522
    %3558 = vmatpush.msra.mxu0 %v3520
    %3559 = vmatpush.msra.mxu0 %v3518
    %3560 = vmatpush.msra.mxu0 %v3516
    %3561 = vmatmul.f32.gmra.mxu0 %v3540
    %v3562 = vpop.f32.mrf.mxu0
    %v3563 = vadd.f32 0.0, %v3562
    %3564 = vmatmul.f32.gmra.mxu0 %v3543
    %v3565 = vpop.f32.mrf.mxu0
    %v3566 = vadd.f32 0.0, %v3565
    %3567 = vdwg.mxu0
    %3576 = vrot.lane.b32.xlu0 %v1401, 64
    %v3577 = vpop.permute.xlu0 %3576
    %3578 = vrot.lane.b32.xlu0 %v1402, 64
    %v3579 = vpop.permute.xlu0 %3578
    %3580 = vrot.lane.b32.xlu0 %v1403, 64
    %v3581 = vpop.permute.xlu0 %3580
    %3582 = vrot.lane.b32.xlu0 %v1404, 64
    %v3583 = vpop.permute.xlu0 %3582
    %3584 = vrot.lane.b32.xlu0 %v1405, 64
    %v3585 = vpop.permute.xlu0 %3584
    %3586 = vrot.lane.b32.xlu0 %v1406, 64
    %v3587 = vpop.permute.xlu0 %3586
    %3588 = vrot.lane.b32.xlu0 %v1407, 64
    %v3589 = vpop.permute.xlu0 %3588
    %3590 = vrot.lane.b32.xlu0 %v1408, 64
    %v3591 = vpop.permute.xlu0 %3590
    %v3601 = vsel %vm2521, %v2707, 0
    %v3604 = vsel %vm2521, %v2709, 0
    %3606 = vmatpush.msra.mxu0 0.0
    %3607 = vmatpush.msra.mxu0 0.0
    %3608 = vmatpush.msra.mxu0 0.0
    %3609 = vmatpush.msra.mxu0 0.0
    %3610 = vmatpush.msra.mxu0 0.0
    %3611 = vmatpush.msra.mxu0 0.0
    %3612 = vmatpush.msra.mxu0 0.0
    %3613 = vmatpush.msra.mxu0 0.0
    %3614 = vmatpush.msra.mxu0 %v3591
    %3615 = vmatpush.msra.mxu0 %v3589
    %3616 = vmatpush.msra.mxu0 %v3587
    %3617 = vmatpush.msra.mxu0 %v3585
    %3618 = vmatpush.msra.mxu0 %v3583
    %3619 = vmatpush.msra.mxu0 %v3581
    %3620 = vmatpush.msra.mxu0 %v3579
    %3621 = vmatpush.msra.mxu0 %v3577
    %3622 = vmatmul.f32.gmra.mxu0 %v3601
    %v3623 = vpop.f32.mrf.mxu0
    %v3624 = vadd.f32 0.0, %v3623
    %3625 = vmatmul.f32.gmra.mxu0 %v3604
    %v3626 = vpop.f32.mrf.mxu0
    %v3627 = vadd.f32 0.0, %v3626
    %3628 = vdwg.mxu0
    %3637 = vrot.lane.b32.xlu0 %v1409, 64
    %v3638 = vpop.permute.xlu0 %3637
    %3639 = vrot.lane.b32.xlu0 %v1410, 64
    %v3640 = vpop.permute.xlu0 %3639
    %3641 = vrot.lane.b32.xlu0 %v1411, 64
    %v3642 = vpop.permute.xlu0 %3641
    %3643 = vrot.lane.b32.xlu0 %v1412, 64
    %v3644 = vpop.permute.xlu0 %3643
    %3645 = vrot.lane.b32.xlu0 %v1413, 64
    %v3646 = vpop.permute.xlu0 %3645
    %3647 = vrot.lane.b32.xlu0 %v1414, 64
    %v3648 = vpop.permute.xlu0 %3647
    %3649 = vrot.lane.b32.xlu0 %v1415, 64
    %v3650 = vpop.permute.xlu0 %3649
    %3651 = vrot.lane.b32.xlu0 %v1416, 64
    %v3652 = vpop.permute.xlu0 %3651
    %v3662 = vsel %vm2521, %v2711, 0
    %v3665 = vsel %vm2521, %v2713, 0
    %3667 = vmatpush.msra.mxu0 0.0
    %3668 = vmatpush.msra.mxu0 0.0
    %3669 = vmatpush.msra.mxu0 0.0
    %3670 = vmatpush.msra.mxu0 0.0
    %3671 = vmatpush.msra.mxu0 0.0
    %3672 = vmatpush.msra.mxu0 0.0
    %3673 = vmatpush.msra.mxu0 0.0
    %3674 = vmatpush.msra.mxu0 0.0
    %3675 = vmatpush.msra.mxu0 %v3652
    %3676 = vmatpush.msra.mxu0 %v3650
    %3677 = vmatpush.msra.mxu0 %v3648
    %3678 = vmatpush.msra.mxu0 %v3646
    %3679 = vmatpush.msra.mxu0 %v3644
    %3680 = vmatpush.msra.mxu0 %v3642
    %3681 = vmatpush.msra.mxu0 %v3640
    %3682 = vmatpush.msra.mxu0 %v3638
    %3683 = vmatmul.f32.gmra.mxu0 %v3662
    %v3684 = vpop.f32.mrf.mxu0
    %v3685 = vadd.f32 0.0, %v3684
    %3686 = vmatmul.f32.gmra.mxu0 %v3665
    %v3687 = vpop.f32.mrf.mxu0
    %v3688 = vadd.f32 0.0, %v3687
    %3689 = vdwg.mxu0
    %3690 = vmatpush.msra.mxu0 0.0
    %3691 = vmatpush.msra.mxu0 0.0
    %3692 = vmatpush.msra.mxu0 0.0
    %3693 = vmatpush.msra.mxu0 0.0
    %3694 = vmatpush.msra.mxu0 0.0
    %3695 = vmatpush.msra.mxu0 0.0
    %3696 = vmatpush.msra.mxu0 0.0
    %3697 = vmatpush.msra.mxu0 0.0
    %3698 = vmatpush.msra.mxu0 %v1104
    %3699 = vmatpush.msra.mxu0 %v1103
    %3700 = vmatpush.msra.mxu0 %v1102
    %3701 = vmatpush.msra.mxu0 %v1101
    %3702 = vmatpush.msra.mxu0 %v1100
    %3703 = vmatpush.msra.mxu0 %v1099
    %3704 = vmatpush.msra.mxu0 %v1098
    %3705 = vmatpush.msra.mxu0 %v1097
    %3706 = vmatmul.f32.gmra.mxu0 %v2747
    %v3707 = vpop.f32.mrf.mxu0
    %v3708 = vadd.f32 0.0, %v3707
    %3709 = vmatmul.f32.gmra.mxu0 %v2750
    %v3710 = vpop.f32.mrf.mxu0
    %v3711 = vadd.f32 0.0, %v3710
    %3712 = vmatmul.f32.gmra.mxu0 %v2808
    %v3713 = vpop.f32.mrf.mxu0
    %v3714 = vadd.f32 0.0, %v3713
    %3715 = vmatmul.f32.gmra.mxu0 %v2811
    %v3716 = vpop.f32.mrf.mxu0
    %v3717 = vadd.f32 0.0, %v3716
    %3718 = vmatmul.f32.gmra.mxu0 %v2869
    %v3719 = vpop.f32.mrf.mxu0
    %v3720 = vadd.f32 0.0, %v3719
    %3721 = vmatmul.f32.gmra.mxu0 %v2872
    %v3722 = vpop.f32.mrf.mxu0
    %v3723 = vadd.f32 0.0, %v3722
    %3724 = vmatmul.f32.gmra.mxu0 %v2930
    %v3725 = vpop.f32.mrf.mxu0
    %v3726 = vadd.f32 0.0, %v3725
    %3727 = vmatmul.f32.gmra.mxu0 %v2933
    %v3728 = vpop.f32.mrf.mxu0
    %v3729 = vadd.f32 0.0, %v3728
    %3730 = vmatmul.f32.gmra.mxu0 %v2991
    %v3731 = vpop.f32.mrf.mxu0
    %v3732 = vadd.f32 0.0, %v3731
    %3733 = vmatmul.f32.gmra.mxu0 %v2994
    %v3734 = vpop.f32.mrf.mxu0
    %v3735 = vadd.f32 0.0, %v3734
    %3736 = vmatmul.f32.gmra.mxu0 %v3052
    %v3737 = vpop.f32.mrf.mxu0
    %v3738 = vadd.f32 0.0, %v3737
    %3739 = vmatmul.f32.gmra.mxu0 %v3055
    %v3740 = vpop.f32.mrf.mxu0
    %v3741 = vadd.f32 0.0, %v3740
    %3742 = vmatmul.f32.gmra.mxu0 %v3113
    %v3743 = vpop.f32.mrf.mxu0
    %v3744 = vadd.f32 0.0, %v3743
    %3745 = vmatmul.f32.gmra.mxu0 %v3116
    %v3746 = vpop.f32.mrf.mxu0
    %v3747 = vadd.f32 0.0, %v3746
    %3748 = vmatmul.f32.gmra.mxu0 %v3174
    %v3749 = vpop.f32.mrf.mxu0
    %v3750 = vadd.f32 0.0, %v3749
    %3751 = vmatmul.f32.gmra.mxu0 %v3177
    %v3752 = vpop.f32.mrf.mxu0
    %v3753 = vadd.f32 0.0, %v3752
    %3754 = vmatmul.f32.gmra.mxu0 %v3235
    %v3755 = vpop.f32.mrf.mxu0
    %v3756 = vadd.f32 0.0, %v3755
    %3757 = vmatmul.f32.gmra.mxu0 %v3238
    %v3758 = vpop.f32.mrf.mxu0
    %v3759 = vadd.f32 0.0, %v3758
    %3760 = vmatmul.f32.gmra.mxu0 %v3296
    %v3761 = vpop.f32.mrf.mxu0
    %v3762 = vadd.f32 0.0, %v3761
    %3763 = vmatmul.f32.gmra.mxu0 %v3299
    %v3764 = vpop.f32.mrf.mxu0
    %v3765 = vadd.f32 0.0, %v3764
    %3766 = vmatmul.f32.gmra.mxu0 %v3357
    %v3767 = vpop.f32.mrf.mxu0
    %v3768 = vadd.f32 0.0, %v3767
    %3769 = vmatmul.f32.gmra.mxu0 %v3360
    %v3770 = vpop.f32.mrf.mxu0
    %v3771 = vadd.f32 0.0, %v3770
    %3772 = vmatmul.f32.gmra.mxu0 %v3418
    %v3773 = vpop.f32.mrf.mxu0
    %v3774 = vadd.f32 0.0, %v3773
    %3775 = vmatmul.f32.gmra.mxu0 %v3421
    %v3776 = vpop.f32.mrf.mxu0
    %v3777 = vadd.f32 0.0, %v3776
    %3778 = vmatmul.f32.gmra.mxu0 %v3479
    %v3779 = vpop.f32.mrf.mxu0
    %v3780 = vadd.f32 0.0, %v3779
    %3781 = vmatmul.f32.gmra.mxu0 %v3482
    %v3782 = vpop.f32.mrf.mxu0
    %v3783 = vadd.f32 0.0, %v3782
    %3784 = vmatmul.f32.gmra.mxu0 %v3540
    %v3785 = vpop.f32.mrf.mxu0
    %v3786 = vadd.f32 0.0, %v3785
    %3787 = vmatmul.f32.gmra.mxu0 %v3543
    %v3788 = vpop.f32.mrf.mxu0
    %v3789 = vadd.f32 0.0, %v3788
    %3790 = vmatmul.f32.gmra.mxu0 %v3601
    %v3791 = vpop.f32.mrf.mxu0
    %v3792 = vadd.f32 0.0, %v3791
    %3793 = vmatmul.f32.gmra.mxu0 %v3604
    %v3794 = vpop.f32.mrf.mxu0
    %v3795 = vadd.f32 0.0, %v3794
    %3796 = vmatmul.f32.gmra.mxu0 %v3662
    %v3797 = vpop.f32.mrf.mxu0
    %v3798 = vadd.f32 0.0, %v3797
    %3799 = vmatmul.f32.gmra.mxu0 %v3665
    %v3800 = vpop.f32.mrf.mxu0
    %v3801 = vadd.f32 0.0, %v3800
    %3802 = vdwg.mxu0
    %v3803 = vrcp.pop %v3708
    %v3804 = vmul.f32 %v3708, %v3803
    %v3805 = vsub.f32 1.0, %v3804
    %v3806 = vmul.f32 %v3803, %v3805
    %v3807 = vadd.f32 %v3803, %v3806
    %vm3808 = vweird.f32 %v3708
    %vm3809 = vweird.f32 %v3803
    %vm3810 = vmor %vm3808, %vm3809
    %v3811 = vsel %vm3810, %v3803, %v3807
    %v3812 = vand.u32 2147483647, %v3708
    %vm3813 = vcmp.eq.f32.partialorder %v3812, 8.507059e+37
    %v3814 = vand.u32 %v3708, 2147483648
    %v3815 = vor.u32 1.1754944e-38, %v3814
    %v3816 = vsel %vm3813, %v3815, %v3811
    %v3817 = vrcp.pop %v3711
    %v3818 = vmul.f32 %v3711, %v3817
    %v3819 = vsub.f32 1.0, %v3818
    %v3820 = vmul.f32 %v3817, %v3819
    %v3821 = vadd.f32 %v3817, %v3820
    %vm3822 = vweird.f32 %v3711
    %vm3823 = vweird.f32 %v3817
    %vm3824 = vmor %vm3822, %vm3823
    %v3825 = vsel %vm3824, %v3817, %v3821
    %v3826 = vand.u32 2147483647, %v3711
    %vm3827 = vcmp.eq.f32.partialorder %v3826, 8.507059e+37
    %v3828 = vand.u32 %v3711, 2147483648
    %v3829 = vor.u32 1.1754944e-38, %v3828
    %v3830 = vsel %vm3827, %v3829, %v3825
    %v3831 = vrcp.pop %v3714
    %v3832 = vmul.f32 %v3714, %v3831
    %v3833 = vsub.f32 1.0, %v3832
    %v3834 = vmul.f32 %v3831, %v3833
    %v3835 = vadd.f32 %v3831, %v3834
    %vm3836 = vweird.f32 %v3714
    %vm3837 = vweird.f32 %v3831
    %vm3838 = vmor %vm3836, %vm3837
    %v3839 = vsel %vm3838, %v3831, %v3835
    %v3840 = vand.u32 2147483647, %v3714
    %vm3841 = vcmp.eq.f32.partialorder %v3840, 8.507059e+37
    %v3842 = vand.u32 %v3714, 2147483648
    %v3843 = vor.u32 1.1754944e-38, %v3842
    %v3844 = vsel %vm3841, %v3843, %v3839
    %v3845 = vrcp.pop %v3717
    %v3846 = vmul.f32 %v3717, %v3845
    %v3847 = vsub.f32 1.0, %v3846
    %v3848 = vmul.f32 %v3845, %v3847
    %v3849 = vadd.f32 %v3845, %v3848
    %vm3850 = vweird.f32 %v3717
    %vm3851 = vweird.f32 %v3845
    %vm3852 = vmor %vm3850, %vm3851
    %v3853 = vsel %vm3852, %v3845, %v3849
    %v3854 = vand.u32 2147483647, %v3717
    %vm3855 = vcmp.eq.f32.partialorder %v3854, 8.507059e+37
    %v3856 = vand.u32 %v3717, 2147483648
    %v3857 = vor.u32 1.1754944e-38, %v3856
    %v3858 = vsel %vm3855, %v3857, %v3853
    %v3859 = vrcp.pop %v3720
    %v3860 = vmul.f32 %v3720, %v3859
    %v3861 = vsub.f32 1.0, %v3860
    %v3862 = vmul.f32 %v3859, %v3861
    %v3863 = vadd.f32 %v3859, %v3862
    %vm3864 = vweird.f32 %v3720
    %vm3865 = vweird.f32 %v3859
    %vm3866 = vmor %vm3864, %vm3865
    %v3867 = vsel %vm3866, %v3859, %v3863
    %v3868 = vand.u32 2147483647, %v3720
    %vm3869 = vcmp.eq.f32.partialorder %v3868, 8.507059e+37
    %v3870 = vand.u32 %v3720, 2147483648
    %v3871 = vor.u32 1.1754944e-38, %v3870
    %v3872 = vsel %vm3869, %v3871, %v3867
    %v3873 = vrcp.pop %v3723
    %v3874 = vmul.f32 %v3723, %v3873
    %v3875 = vsub.f32 1.0, %v3874
    %v3876 = vmul.f32 %v3873, %v3875
    %v3877 = vadd.f32 %v3873, %v3876
    %vm3878 = vweird.f32 %v3723
    %vm3879 = vweird.f32 %v3873
    %vm3880 = vmor %vm3878, %vm3879
    %v3881 = vsel %vm3880, %v3873, %v3877
    %v3882 = vand.u32 2147483647, %v3723
    %vm3883 = vcmp.eq.f32.partialorder %v3882, 8.507059e+37
    %v3884 = vand.u32 %v3723, 2147483648
    %v3885 = vor.u32 1.1754944e-38, %v3884
    %v3886 = vsel %vm3883, %v3885, %v3881
    %v3887 = vrcp.pop %v3726
    %v3888 = vmul.f32 %v3726, %v3887
    %v3889 = vsub.f32 1.0, %v3888
    %v3890 = vmul.f32 %v3887, %v3889
    %v3891 = vadd.f32 %v3887, %v3890
    %vm3892 = vweird.f32 %v3726
    %vm3893 = vweird.f32 %v3887
    %vm3894 = vmor %vm3892, %vm3893
    %v3895 = vsel %vm3894, %v3887, %v3891
    %v3896 = vand.u32 2147483647, %v3726
    %vm3897 = vcmp.eq.f32.partialorder %v3896, 8.507059e+37
    %v3898 = vand.u32 %v3726, 2147483648
    %v3899 = vor.u32 1.1754944e-38, %v3898
    %v3900 = vsel %vm3897, %v3899, %v3895
    %v3901 = vrcp.pop %v3729
    %v3902 = vmul.f32 %v3729, %v3901
    %v3903 = vsub.f32 1.0, %v3902
    %v3904 = vmul.f32 %v3901, %v3903
    %v3905 = vadd.f32 %v3901, %v3904
    %vm3906 = vweird.f32 %v3729
    %vm3907 = vweird.f32 %v3901
    %vm3908 = vmor %vm3906, %vm3907
    %v3909 = vsel %vm3908, %v3901, %v3905
    %v3910 = vand.u32 2147483647, %v3729
    %vm3911 = vcmp.eq.f32.partialorder %v3910, 8.507059e+37
    %v3912 = vand.u32 %v3729, 2147483648
    %v3913 = vor.u32 1.1754944e-38, %v3912
    %v3914 = vsel %vm3911, %v3913, %v3909
    %v3915 = vrcp.pop %v3732
    %v3916 = vmul.f32 %v3732, %v3915
    %v3917 = vsub.f32 1.0, %v3916
    %v3918 = vmul.f32 %v3915, %v3917
    %v3919 = vadd.f32 %v3915, %v3918
    %vm3920 = vweird.f32 %v3732
    %vm3921 = vweird.f32 %v3915
    %vm3922 = vmor %vm3920, %vm3921
    %v3923 = vsel %vm3922, %v3915, %v3919
    %v3924 = vand.u32 2147483647, %v3732
    %vm3925 = vcmp.eq.f32.partialorder %v3924, 8.507059e+37
    %v3926 = vand.u32 %v3732, 2147483648
    %v3927 = vor.u32 1.1754944e-38, %v3926
    %v3928 = vsel %vm3925, %v3927, %v3923
    %v3929 = vrcp.pop %v3735
    %v3930 = vmul.f32 %v3735, %v3929
    %v3931 = vsub.f32 1.0, %v3930
    %v3932 = vmul.f32 %v3929, %v3931
    %v3933 = vadd.f32 %v3929, %v3932
    %vm3934 = vweird.f32 %v3735
    %vm3935 = vweird.f32 %v3929
    %vm3936 = vmor %vm3934, %vm3935
    %v3937 = vsel %vm3936, %v3929, %v3933
    %v3938 = vand.u32 2147483647, %v3735
    %vm3939 = vcmp.eq.f32.partialorder %v3938, 8.507059e+37
    %v3940 = vand.u32 %v3735, 2147483648
    %v3941 = vor.u32 1.1754944e-38, %v3940
    %v3942 = vsel %vm3939, %v3941, %v3937
    %v3943 = vrcp.pop %v3738
    %v3944 = vmul.f32 %v3738, %v3943
    %v3945 = vsub.f32 1.0, %v3944
    %v3946 = vmul.f32 %v3943, %v3945
    %v3947 = vadd.f32 %v3943, %v3946
    %vm3948 = vweird.f32 %v3738
    %vm3949 = vweird.f32 %v3943
    %vm3950 = vmor %vm3948, %vm3949
    %v3951 = vsel %vm3950, %v3943, %v3947
    %v3952 = vand.u32 2147483647, %v3738
    %vm3953 = vcmp.eq.f32.partialorder %v3952, 8.507059e+37
    %v3954 = vand.u32 %v3738, 2147483648
    %v3955 = vor.u32 1.1754944e-38, %v3954
    %v3956 = vsel %vm3953, %v3955, %v3951
    %v3957 = vrcp.pop %v3741
    %v3958 = vmul.f32 %v3741, %v3957
    %v3959 = vsub.f32 1.0, %v3958
    %v3960 = vmul.f32 %v3957, %v3959
    %v3961 = vadd.f32 %v3957, %v3960
    %vm3962 = vweird.f32 %v3741
    %vm3963 = vweird.f32 %v3957
    %vm3964 = vmor %vm3962, %vm3963
    %v3965 = vsel %vm3964, %v3957, %v3961
    %v3966 = vand.u32 2147483647, %v3741
    %vm3967 = vcmp.eq.f32.partialorder %v3966, 8.507059e+37
    %v3968 = vand.u32 %v3741, 2147483648
    %v3969 = vor.u32 1.1754944e-38, %v3968
    %v3970 = vsel %vm3967, %v3969, %v3965
    %v3971 = vrcp.pop %v3744
    %v3972 = vmul.f32 %v3744, %v3971
    %v3973 = vsub.f32 1.0, %v3972
    %v3974 = vmul.f32 %v3971, %v3973
    %v3975 = vadd.f32 %v3971, %v3974
    %vm3976 = vweird.f32 %v3744
    %vm3977 = vweird.f32 %v3971
    %vm3978 = vmor %vm3976, %vm3977
    %v3979 = vsel %vm3978, %v3971, %v3975
    %v3980 = vand.u32 2147483647, %v3744
    %vm3981 = vcmp.eq.f32.partialorder %v3980, 8.507059e+37
    %v3982 = vand.u32 %v3744, 2147483648
    %v3983 = vor.u32 1.1754944e-38, %v3982
    %v3984 = vsel %vm3981, %v3983, %v3979
    %v3985 = vrcp.pop %v3747
    %v3986 = vmul.f32 %v3747, %v3985
    %v3987 = vsub.f32 1.0, %v3986
    %v3988 = vmul.f32 %v3985, %v3987
    %v3989 = vadd.f32 %v3985, %v3988
    %vm3990 = vweird.f32 %v3747
    %vm3991 = vweird.f32 %v3985
    %vm3992 = vmor %vm3990, %vm3991
    %v3993 = vsel %vm3992, %v3985, %v3989
    %v3994 = vand.u32 2147483647, %v3747
    %vm3995 = vcmp.eq.f32.partialorder %v3994, 8.507059e+37
    %v3996 = vand.u32 %v3747, 2147483648
    %v3997 = vor.u32 1.1754944e-38, %v3996
    %v3998 = vsel %vm3995, %v3997, %v3993
    %v3999 = vrcp.pop %v3750
    %v4000 = vmul.f32 %v3750, %v3999
    %v4001 = vsub.f32 1.0, %v4000
    %v4002 = vmul.f32 %v3999, %v4001
    %v4003 = vadd.f32 %v3999, %v4002
    %vm4004 = vweird.f32 %v3750
    %vm4005 = vweird.f32 %v3999
    %vm4006 = vmor %vm4004, %vm4005
    %v4007 = vsel %vm4006, %v3999, %v4003
    %v4008 = vand.u32 2147483647, %v3750
    %vm4009 = vcmp.eq.f32.partialorder %v4008, 8.507059e+37
    %v4010 = vand.u32 %v3750, 2147483648
    %v4011 = vor.u32 1.1754944e-38, %v4010
    %v4012 = vsel %vm4009, %v4011, %v4007
    %v4013 = vrcp.pop %v3753
    %v4014 = vmul.f32 %v3753, %v4013
    %v4015 = vsub.f32 1.0, %v4014
    %v4016 = vmul.f32 %v4013, %v4015
    %v4017 = vadd.f32 %v4013, %v4016
    %vm4018 = vweird.f32 %v3753
    %vm4019 = vweird.f32 %v4013
    %vm4020 = vmor %vm4018, %vm4019
    %v4021 = vsel %vm4020, %v4013, %v4017
    %v4022 = vand.u32 2147483647, %v3753
    %vm4023 = vcmp.eq.f32.partialorder %v4022, 8.507059e+37
    %v4024 = vand.u32 %v3753, 2147483648
    %v4025 = vor.u32 1.1754944e-38, %v4024
    %v4026 = vsel %vm4023, %v4025, %v4021
    %v4027 = vrcp.pop %v3756
    %v4028 = vmul.f32 %v3756, %v4027
    %v4029 = vsub.f32 1.0, %v4028
    %v4030 = vmul.f32 %v4027, %v4029
    %v4031 = vadd.f32 %v4027, %v4030
    %vm4032 = vweird.f32 %v3756
    %vm4033 = vweird.f32 %v4027
    %vm4034 = vmor %vm4032, %vm4033
    %v4035 = vsel %vm4034, %v4027, %v4031
    %v4036 = vand.u32 2147483647, %v3756
    %vm4037 = vcmp.eq.f32.partialorder %v4036, 8.507059e+37
    %v4038 = vand.u32 %v3756, 2147483648
    %v4039 = vor.u32 1.1754944e-38, %v4038
    %v4040 = vsel %vm4037, %v4039, %v4035
    %v4041 = vrcp.pop %v3759
    %v4042 = vmul.f32 %v3759, %v4041
    %v4043 = vsub.f32 1.0, %v4042
    %v4044 = vmul.f32 %v4041, %v4043
    %v4045 = vadd.f32 %v4041, %v4044
    %vm4046 = vweird.f32 %v3759
    %vm4047 = vweird.f32 %v4041
    %vm4048 = vmor %vm4046, %vm4047
    %v4049 = vsel %vm4048, %v4041, %v4045
    %v4050 = vand.u32 2147483647, %v3759
    %vm4051 = vcmp.eq.f32.partialorder %v4050, 8.507059e+37
    %v4052 = vand.u32 %v3759, 2147483648
    %v4053 = vor.u32 1.1754944e-38, %v4052
    %v4054 = vsel %vm4051, %v4053, %v4049
    %v4055 = vrcp.pop %v3762
    %v4056 = vmul.f32 %v3762, %v4055
    %v4057 = vsub.f32 1.0, %v4056
    %v4058 = vmul.f32 %v4055, %v4057
    %v4059 = vadd.f32 %v4055, %v4058
    %vm4060 = vweird.f32 %v3762
    %vm4061 = vweird.f32 %v4055
    %vm4062 = vmor %vm4060, %vm4061
    %v4063 = vsel %vm4062, %v4055, %v4059
    %v4064 = vand.u32 2147483647, %v3762
    %vm4065 = vcmp.eq.f32.partialorder %v4064, 8.507059e+37
    %v4066 = vand.u32 %v3762, 2147483648
    %v4067 = vor.u32 1.1754944e-38, %v4066
    %v4068 = vsel %vm4065, %v4067, %v4063
    %v4069 = vrcp.pop %v3765
    %v4070 = vmul.f32 %v3765, %v4069
    %v4071 = vsub.f32 1.0, %v4070
    %v4072 = vmul.f32 %v4069, %v4071
    %v4073 = vadd.f32 %v4069, %v4072
    %vm4074 = vweird.f32 %v3765
    %vm4075 = vweird.f32 %v4069
    %vm4076 = vmor %vm4074, %vm4075
    %v4077 = vsel %vm4076, %v4069, %v4073
    %v4078 = vand.u32 2147483647, %v3765
    %vm4079 = vcmp.eq.f32.partialorder %v4078, 8.507059e+37
    %v4080 = vand.u32 %v3765, 2147483648
    %v4081 = vor.u32 1.1754944e-38, %v4080
    %v4082 = vsel %vm4079, %v4081, %v4077
    %v4083 = vrcp.pop %v3768
    %v4084 = vmul.f32 %v3768, %v4083
    %v4085 = vsub.f32 1.0, %v4084
    %v4086 = vmul.f32 %v4083, %v4085
    %v4087 = vadd.f32 %v4083, %v4086
    %vm4088 = vweird.f32 %v3768
    %vm4089 = vweird.f32 %v4083
    %vm4090 = vmor %vm4088, %vm4089
    %v4091 = vsel %vm4090, %v4083, %v4087
    %v4092 = vand.u32 2147483647, %v3768
    %vm4093 = vcmp.eq.f32.partialorder %v4092, 8.507059e+37
    %v4094 = vand.u32 %v3768, 2147483648
    %v4095 = vor.u32 1.1754944e-38, %v4094
    %v4096 = vsel %vm4093, %v4095, %v4091
    %v4097 = vrcp.pop %v3771
    %v4098 = vmul.f32 %v3771, %v4097
    %v4099 = vsub.f32 1.0, %v4098
    %v4100 = vmul.f32 %v4097, %v4099
    %v4101 = vadd.f32 %v4097, %v4100
    %vm4102 = vweird.f32 %v3771
    %vm4103 = vweird.f32 %v4097
    %vm4104 = vmor %vm4102, %vm4103
    %v4105 = vsel %vm4104, %v4097, %v4101
    %v4106 = vand.u32 2147483647, %v3771
    %vm4107 = vcmp.eq.f32.partialorder %v4106, 8.507059e+37
    %v4108 = vand.u32 %v3771, 2147483648
    %v4109 = vor.u32 1.1754944e-38, %v4108
    %v4110 = vsel %vm4107, %v4109, %v4105
    %v4111 = vrcp.pop %v3774
    %v4112 = vmul.f32 %v3774, %v4111
    %v4113 = vsub.f32 1.0, %v4112
    %v4114 = vmul.f32 %v4111, %v4113
    %v4115 = vadd.f32 %v4111, %v4114
    %vm4116 = vweird.f32 %v3774
    %vm4117 = vweird.f32 %v4111
    %vm4118 = vmor %vm4116, %vm4117
    %v4119 = vsel %vm4118, %v4111, %v4115
    %v4120 = vand.u32 2147483647, %v3774
    %vm4121 = vcmp.eq.f32.partialorder %v4120, 8.507059e+37
    %v4122 = vand.u32 %v3774, 2147483648
    %v4123 = vor.u32 1.1754944e-38, %v4122
    %v4124 = vsel %vm4121, %v4123, %v4119
    %v4125 = vrcp.pop %v3777
    %v4126 = vmul.f32 %v3777, %v4125
    %v4127 = vsub.f32 1.0, %v4126
    %v4128 = vmul.f32 %v4125, %v4127
    %v4129 = vadd.f32 %v4125, %v4128
    %vm4130 = vweird.f32 %v3777
    %vm4131 = vweird.f32 %v4125
    %vm4132 = vmor %vm4130, %vm4131
    %v4133 = vsel %vm4132, %v4125, %v4129
    %v4134 = vand.u32 2147483647, %v3777
    %vm4135 = vcmp.eq.f32.partialorder %v4134, 8.507059e+37
    %v4136 = vand.u32 %v3777, 2147483648
    %v4137 = vor.u32 1.1754944e-38, %v4136
    %v4138 = vsel %vm4135, %v4137, %v4133
    %v4139 = vrcp.pop %v3780
    %v4140 = vmul.f32 %v3780, %v4139
    %v4141 = vsub.f32 1.0, %v4140
    %v4142 = vmul.f32 %v4139, %v4141
    %v4143 = vadd.f32 %v4139, %v4142
    %vm4144 = vweird.f32 %v3780
    %vm4145 = vweird.f32 %v4139
    %vm4146 = vmor %vm4144, %vm4145
    %v4147 = vsel %vm4146, %v4139, %v4143
    %v4148 = vand.u32 2147483647, %v3780
    %vm4149 = vcmp.eq.f32.partialorder %v4148, 8.507059e+37
    %v4150 = vand.u32 %v3780, 2147483648
    %v4151 = vor.u32 1.1754944e-38, %v4150
    %v4152 = vsel %vm4149, %v4151, %v4147
    %v4153 = vrcp.pop %v3783
    %v4154 = vmul.f32 %v3783, %v4153
    %v4155 = vsub.f32 1.0, %v4154
    %v4156 = vmul.f32 %v4153, %v4155
    %v4157 = vadd.f32 %v4153, %v4156
    %vm4158 = vweird.f32 %v3783
    %vm4159 = vweird.f32 %v4153
    %vm4160 = vmor %vm4158, %vm4159
    %v4161 = vsel %vm4160, %v4153, %v4157
    %v4162 = vand.u32 2147483647, %v3783
    %vm4163 = vcmp.eq.f32.partialorder %v4162, 8.507059e+37
    %v4164 = vand.u32 %v3783, 2147483648
    %v4165 = vor.u32 1.1754944e-38, %v4164
    %v4166 = vsel %vm4163, %v4165, %v4161
    %v4167 = vrcp.pop %v3786
    %v4168 = vmul.f32 %v3786, %v4167
    %v4169 = vsub.f32 1.0, %v4168
    %v4170 = vmul.f32 %v4167, %v4169
    %v4171 = vadd.f32 %v4167, %v4170
    %vm4172 = vweird.f32 %v3786
    %vm4173 = vweird.f32 %v4167
    %vm4174 = vmor %vm4172, %vm4173
    %v4175 = vsel %vm4174, %v4167, %v4171
    %v4176 = vand.u32 2147483647, %v3786
    %vm4177 = vcmp.eq.f32.partialorder %v4176, 8.507059e+37
    %v4178 = vand.u32 %v3786, 2147483648
    %v4179 = vor.u32 1.1754944e-38, %v4178
    %v4180 = vsel %vm4177, %v4179, %v4175
    %v4181 = vrcp.pop %v3789
    %v4182 = vmul.f32 %v3789, %v4181
    %v4183 = vsub.f32 1.0, %v4182
    %v4184 = vmul.f32 %v4181, %v4183
    %v4185 = vadd.f32 %v4181, %v4184
    %vm4186 = vweird.f32 %v3789
    %vm4187 = vweird.f32 %v4181
    %vm4188 = vmor %vm4186, %vm4187
    %v4189 = vsel %vm4188, %v4181, %v4185
    %v4190 = vand.u32 2147483647, %v3789
    %vm4191 = vcmp.eq.f32.partialorder %v4190, 8.507059e+37
    %v4192 = vand.u32 %v3789, 2147483648
    %v4193 = vor.u32 1.1754944e-38, %v4192
    %v4194 = vsel %vm4191, %v4193, %v4189
    %v4195 = vrcp.pop %v3792
    %v4196 = vmul.f32 %v3792, %v4195
    %v4197 = vsub.f32 1.0, %v4196
    %v4198 = vmul.f32 %v4195, %v4197
    %v4199 = vadd.f32 %v4195, %v4198
    %vm4200 = vweird.f32 %v3792
    %vm4201 = vweird.f32 %v4195
    %vm4202 = vmor %vm4200, %vm4201
    %v4203 = vsel %vm4202, %v4195, %v4199
    %v4204 = vand.u32 2147483647, %v3792
    %vm4205 = vcmp.eq.f32.partialorder %v4204, 8.507059e+37
    %v4206 = vand.u32 %v3792, 2147483648
    %v4207 = vor.u32 1.1754944e-38, %v4206
    %v4208 = vsel %vm4205, %v4207, %v4203
    %v4209 = vrcp.pop %v3795
    %v4210 = vmul.f32 %v3795, %v4209
    %v4211 = vsub.f32 1.0, %v4210
    %v4212 = vmul.f32 %v4209, %v4211
    %v4213 = vadd.f32 %v4209, %v4212
    %vm4214 = vweird.f32 %v3795
    %vm4215 = vweird.f32 %v4209
    %vm4216 = vmor %vm4214, %vm4215
    %v4217 = vsel %vm4216, %v4209, %v4213
    %v4218 = vand.u32 2147483647, %v3795
    %vm4219 = vcmp.eq.f32.partialorder %v4218, 8.507059e+37
    %v4220 = vand.u32 %v3795, 2147483648
    %v4221 = vor.u32 1.1754944e-38, %v4220
    %v4222 = vsel %vm4219, %v4221, %v4217
    %v4223 = vrcp.pop %v3798
    %v4224 = vmul.f32 %v3798, %v4223
    %v4225 = vsub.f32 1.0, %v4224
    %v4226 = vmul.f32 %v4223, %v4225
    %v4227 = vadd.f32 %v4223, %v4226
    %vm4228 = vweird.f32 %v3798
    %vm4229 = vweird.f32 %v4223
    %vm4230 = vmor %vm4228, %vm4229
    %v4231 = vsel %vm4230, %v4223, %v4227
    %v4232 = vand.u32 2147483647, %v3798
    %vm4233 = vcmp.eq.f32.partialorder %v4232, 8.507059e+37
    %v4234 = vand.u32 %v3798, 2147483648
    %v4235 = vor.u32 1.1754944e-38, %v4234
    %v4236 = vsel %vm4233, %v4235, %v4231
    %v4237 = vrcp.pop %v3801
    %v4238 = vmul.f32 %v3801, %v4237
    %v4239 = vsub.f32 1.0, %v4238
    %v4240 = vmul.f32 %v4237, %v4239
    %v4241 = vadd.f32 %v4237, %v4240
    %vm4242 = vweird.f32 %v3801
    %vm4243 = vweird.f32 %v4237
    %vm4244 = vmor %vm4242, %vm4243
    %v4245 = vsel %vm4244, %v4237, %v4241
    %v4246 = vand.u32 2147483647, %v3801
    %vm4247 = vcmp.eq.f32.partialorder %v4246, 8.507059e+37
    %v4248 = vand.u32 %v3801, 2147483648
    %v4249 = vor.u32 1.1754944e-38, %v4248
    %v4250 = vsel %vm4247, %v4249, %v4245
    %v4251 = vmul.f32 %v2770, %v3816
    %v4252 = vmul.f32 %v2773, %v3830
    %v4253 = vmul.f32 %v2831, %v3844
    %v4254 = vmul.f32 %v2834, %v3858
    %v4255 = vmul.f32 %v2892, %v3872
    %v4256 = vmul.f32 %v2895, %v3886
    %v4257 = vmul.f32 %v2953, %v3900
    %v4258 = vmul.f32 %v2956, %v3914
    %v4259 = vmul.f32 %v3014, %v3928
    %v4260 = vmul.f32 %v3017, %v3942
    %v4261 = vmul.f32 %v3075, %v3956
    %v4262 = vmul.f32 %v3078, %v3970
    %v4263 = vmul.f32 %v3136, %v3984
    %v4264 = vmul.f32 %v3139, %v3998
    %v4265 = vmul.f32 %v3197, %v4012
    %v4266 = vmul.f32 %v3200, %v4026
    %v4267 = vmul.f32 %v3258, %v4040
    %v4268 = vmul.f32 %v3261, %v4054
    %v4269 = vmul.f32 %v3319, %v4068
    %v4270 = vmul.f32 %v3322, %v4082
    %v4271 = vmul.f32 %v3380, %v4096
    %v4272 = vmul.f32 %v3383, %v4110
    %v4273 = vmul.f32 %v3441, %v4124
    %v4274 = vmul.f32 %v3444, %v4138
    %v4275 = vmul.f32 %v3502, %v4152
    %v4276 = vmul.f32 %v3505, %v4166
    %v4277 = vmul.f32 %v3563, %v4180
    %v4278 = vmul.f32 %v3566, %v4194
    %v4279 = vmul.f32 %v3624, %v4208
    %v4280 = vmul.f32 %v3627, %v4222
    %v4281 = vmul.f32 %v3685, %v4236
    %v4282 = vmul.f32 %v3688, %v4250
    %v4283 = vld [vmem:[%s5] sm:$0xff]
    %v4284 = vld [vmem:[%s5 + $0x8] sm:$0xff]
    %v4285 = vld [vmem:[%s5 + $0x10] sm:$0xff]
    %v4286 = vld [vmem:[%s5 + $0x18] sm:$0xff]
    %v4287 = vld [vmem:[%s6] sm:$0x1]
    %v4289 = vperm.slane %v4287, 0
    %v4292 = vsel %vm98, %v4251, 0
    %v4295 = vsel %vm98, %v4252, 0
    %v4298 = vsel %vm98, %v4253, 0
    %v4301 = vsel %vm98, %v4254, 0
    %v4304 = vsel %vm98, %v4255, 0
    %v4307 = vsel %vm98, %v4256, 0
    %v4310 = vsel %vm98, %v4257, 0
    %v4313 = vsel %vm98, %v4258, 0
    %v4316 = vsel %vm98, %v4259, 0
    %v4319 = vsel %vm98, %v4260, 0
    %v4322 = vsel %vm98, %v4261, 0
    %v4325 = vsel %vm98, %v4262, 0
    %v4328 = vsel %vm98, %v4263, 0
    %v4331 = vsel %vm98, %v4264, 0
    %v4334 = vsel %vm98, %v4265, 0
    %v4337 = vsel %vm98, %v4266, 0
    %v4340 = vsel %vm98, %v4267, 0
    %v4343 = vsel %vm98, %v4268, 0
    %v4346 = vsel %vm98, %v4269, 0
    %v4349 = vsel %vm98, %v4270, 0
    %v4352 = vsel %vm98, %v4271, 0
    %v4355 = vsel %vm98, %v4272, 0
    %v4358 = vsel %vm98, %v4273, 0
    %v4361 = vsel %vm98, %v4274, 0
    %v4364 = vsel %vm98, %v4275, 0
    %v4367 = vsel %vm98, %v4276, 0
    %v4370 = vsel %vm98, %v4277, 0
    %v4373 = vsel %vm98, %v4278, 0
    %v4376 = vsel %vm98, %v4279, 0
    %v4379 = vsel %vm98, %v4280, 0
    %v4382 = vsel %vm98, %v4281, 0
    %v4385 = vsel %vm98, %v4282, 0
    %4387 = vmatpush.msra.mxu0 0.0
    %4388 = vmatpush.msra.mxu0 0.0
    %4389 = vmatpush.msra.mxu0 0.0
    %4390 = vmatpush.msra.mxu0 0.0
    %4391 = vmatpush.msra.mxu0 0.0
    %4392 = vmatpush.msra.mxu0 0.0
    %4393 = vmatpush.msra.mxu0 0.0
    %4394 = vmatpush.msra.mxu0 0.0
    %4395 = vmatpush.msra.mxu0 0.0
    %4396 = vmatpush.msra.mxu0 0.0
    %4397 = vmatpush.msra.mxu0 0.0
    %4398 = vmatpush.msra.mxu0 0.0
    %4399 = vmatpush.msra.mxu0 %v4286
    %4400 = vmatpush.msra.mxu0 %v4285
    %4401 = vmatpush.msra.mxu0 %v4284
    %4402 = vmatpush.msra.mxu0 %v4283
    %4403 = vmatmul.f32.gmra.mxu0 %v4292
    %v4404 = vpop.f32.mrf.mxu0
    %v4405 = vadd.f32 %v4289, %v4404
    %4406 = vmatmul.f32.gmra.mxu0 %v4295
    %v4407 = vpop.f32.mrf.mxu0
    %v4408 = vadd.f32 %v4289, %v4407
    %4409 = vmatmul.f32.gmra.mxu0 %v4298
    %v4410 = vpop.f32.mrf.mxu0
    %v4411 = vadd.f32 %v4289, %v4410
    %4412 = vmatmul.f32.gmra.mxu0 %v4301
    %v4413 = vpop.f32.mrf.mxu0
    %v4414 = vadd.f32 %v4289, %v4413
    %4415 = vmatmul.f32.gmra.mxu0 %v4304
    %v4416 = vpop.f32.mrf.mxu0
    %v4417 = vadd.f32 %v4289, %v4416
    %4418 = vmatmul.f32.gmra.mxu0 %v4307
    %v4419 = vpop.f32.mrf.mxu0
    %v4420 = vadd.f32 %v4289, %v4419
    %4421 = vmatmul.f32.gmra.mxu0 %v4310
    %v4422 = vpop.f32.mrf.mxu0
    %v4423 = vadd.f32 %v4289, %v4422
    %4424 = vmatmul.f32.gmra.mxu0 %v4313
    %v4425 = vpop.f32.mrf.mxu0
    %v4426 = vadd.f32 %v4289, %v4425
    %4427 = vmatmul.f32.gmra.mxu0 %v4316
    %v4428 = vpop.f32.mrf.mxu0
    %v4429 = vadd.f32 %v4289, %v4428
    %4430 = vmatmul.f32.gmra.mxu0 %v4319
    %v4431 = vpop.f32.mrf.mxu0
    %v4432 = vadd.f32 %v4289, %v4431
    %4433 = vmatmul.f32.gmra.mxu0 %v4322
    %v4434 = vpop.f32.mrf.mxu0
    %v4435 = vadd.f32 %v4289, %v4434
    %4436 = vmatmul.f32.gmra.mxu0 %v4325
    %v4437 = vpop.f32.mrf.mxu0
    %v4438 = vadd.f32 %v4289, %v4437
    %4439 = vmatmul.f32.gmra.mxu0 %v4328
    %v4440 = vpop.f32.mrf.mxu0
    %v4441 = vadd.f32 %v4289, %v4440
    %4442 = vmatmul.f32.gmra.mxu0 %v4331
    %v4443 = vpop.f32.mrf.mxu0
    %v4444 = vadd.f32 %v4289, %v4443
    %4445 = vmatmul.f32.gmra.mxu0 %v4334
    %v4446 = vpop.f32.mrf.mxu0
    %v4447 = vadd.f32 %v4289, %v4446
    %4448 = vmatmul.f32.gmra.mxu0 %v4337
    %v4449 = vpop.f32.mrf.mxu0
    %v4450 = vadd.f32 %v4289, %v4449
    %4451 = vmatmul.f32.gmra.mxu0 %v4340
    %v4452 = vpop.f32.mrf.mxu0
    %v4453 = vadd.f32 %v4289, %v4452
    %4454 = vmatmul.f32.gmra.mxu0 %v4343
    %v4455 = vpop.f32.mrf.mxu0
    %v4456 = vadd.f32 %v4289, %v4455
    %4457 = vmatmul.f32.gmra.mxu0 %v4346
    %v4458 = vpop.f32.mrf.mxu0
    %v4459 = vadd.f32 %v4289, %v4458
    %4460 = vmatmul.f32.gmra.mxu0 %v4349
    %v4461 = vpop.f32.mrf.mxu0
    %v4462 = vadd.f32 %v4289, %v4461
    %4463 = vmatmul.f32.gmra.mxu0 %v4352
    %v4464 = vpop.f32.mrf.mxu0
    %v4465 = vadd.f32 %v4289, %v4464
    %4466 = vmatmul.f32.gmra.mxu0 %v4355
    %v4467 = vpop.f32.mrf.mxu0
    %v4468 = vadd.f32 %v4289, %v4467
    %4469 = vmatmul.f32.gmra.mxu0 %v4358
    %v4470 = vpop.f32.mrf.mxu0
    %v4471 = vadd.f32 %v4289, %v4470
    %4472 = vmatmul.f32.gmra.mxu0 %v4361
    %v4473 = vpop.f32.mrf.mxu0
    %v4474 = vadd.f32 %v4289, %v4473
    %4475 = vmatmul.f32.gmra.mxu0 %v4364
    %v4476 = vpop.f32.mrf.mxu0
    %v4477 = vadd.f32 %v4289, %v4476
    %4478 = vmatmul.f32.gmra.mxu0 %v4367
    %v4479 = vpop.f32.mrf.mxu0
    %v4480 = vadd.f32 %v4289, %v4479
    %4481 = vmatmul.f32.gmra.mxu0 %v4370
    %v4482 = vpop.f32.mrf.mxu0
    %v4483 = vadd.f32 %v4289, %v4482
    %4484 = vmatmul.f32.gmra.mxu0 %v4373
    %v4485 = vpop.f32.mrf.mxu0
    %v4486 = vadd.f32 %v4289, %v4485
    %4487 = vmatmul.f32.gmra.mxu0 %v4376
    %v4488 = vpop.f32.mrf.mxu0
    %v4489 = vadd.f32 %v4289, %v4488
    %4490 = vmatmul.f32.gmra.mxu0 %v4379
    %v4491 = vpop.f32.mrf.mxu0
    %v4492 = vadd.f32 %v4289, %v4491
    %4493 = vmatmul.f32.gmra.mxu0 %v4382
    %v4494 = vpop.f32.mrf.mxu0
    %v4495 = vadd.f32 %v4289, %v4494
    %4496 = vmatmul.f32.gmra.mxu0 %v4385
    %v4497 = vpop.f32.mrf.mxu0
    %v4498 = vadd.f32 %v4289, %v4497
    %4499 = vdwg.mxu0
    %v4500 = vmax.f32 %v4405, -5.0
    %v4501 = vmax.f32 %v4408, -5.0
    %v4502 = vmax.f32 %v4411, -5.0
    %v4503 = vmax.f32 %v4414, -5.0
    %v4504 = vmax.f32 %v4417, -5.0
    %v4505 = vmax.f32 %v4420, -5.0
    %v4506 = vmax.f32 %v4423, -5.0
    %v4507 = vmax.f32 %v4426, -5.0
    %v4508 = vmax.f32 %v4429, -5.0
    %v4509 = vmax.f32 %v4432, -5.0
    %v4510 = vmax.f32 %v4435, -5.0
    %v4511 = vmax.f32 %v4438, -5.0
    %v4512 = vmax.f32 %v4441, -5.0
    %v4513 = vmax.f32 %v4444, -5.0
    %v4514 = vmax.f32 %v4447, -5.0
    %v4515 = vmax.f32 %v4450, -5.0
    %v4516 = vmax.f32 %v4453, -5.0
    %v4517 = vmax.f32 %v4456, -5.0
    %v4518 = vmax.f32 %v4459, -5.0
    %v4519 = vmax.f32 %v4462, -5.0
    %v4520 = vmax.f32 %v4465, -5.0
    %v4521 = vmax.f32 %v4468, -5.0
    %v4522 = vmax.f32 %v4471, -5.0
    %v4523 = vmax.f32 %v4474, -5.0
    %v4524 = vmax.f32 %v4477, -5.0
    %v4525 = vmax.f32 %v4480, -5.0
    %v4526 = vmax.f32 %v4483, -5.0
    %v4527 = vmax.f32 %v4486, -5.0
    %v4528 = vmax.f32 %v4489, -5.0
    %v4529 = vmax.f32 %v4492, -5.0
    %v4530 = vmax.f32 %v4495, -5.0
    %v4531 = vmax.f32 %v4498, -5.0
    %v4532 = vmin.f32 %v4500, 5.0
    %v4533 = vmin.f32 %v4501, 5.0
    %v4534 = vmin.f32 %v4502, 5.0
    %v4535 = vmin.f32 %v4503, 5.0
    %v4536 = vmin.f32 %v4504, 5.0
    %v4537 = vmin.f32 %v4505, 5.0
    %v4538 = vmin.f32 %v4506, 5.0
    %v4539 = vmin.f32 %v4507, 5.0
    %v4540 = vmin.f32 %v4508, 5.0
    %v4541 = vmin.f32 %v4509, 5.0
    %v4542 = vmin.f32 %v4510, 5.0
    %v4543 = vmin.f32 %v4511, 5.0
    %v4544 = vmin.f32 %v4512, 5.0
    %v4545 = vmin.f32 %v4513, 5.0
    %v4546 = vmin.f32 %v4514, 5.0
    %v4547 = vmin.f32 %v4515, 5.0
    %v4548 = vmin.f32 %v4516, 5.0
    %v4549 = vmin.f32 %v4517, 5.0
    %v4550 = vmin.f32 %v4518, 5.0
    %v4551 = vmin.f32 %v4519, 5.0
    %v4552 = vmin.f32 %v4520, 5.0
    %v4553 = vmin.f32 %v4521, 5.0
    %v4554 = vmin.f32 %v4522, 5.0
    %v4555 = vmin.f32 %v4523, 5.0
    %v4556 = vmin.f32 %v4524, 5.0
    %v4557 = vmin.f32 %v4525, 5.0
    %v4558 = vmin.f32 %v4526, 5.0
    %v4559 = vmin.f32 %v4527, 5.0
    %v4560 = vmin.f32 %v4528, 5.0
    %v4561 = vmin.f32 %v4529, 5.0
    %v4562 = vmin.f32 %v4530, 5.0
    %v4563 = vmin.f32 %v4531, 5.0
    %v4564 = vadd.f32 %v64, %v4532
    %v4565 = vadd.f32 %v65, %v4533
    %v4566 = vadd.f32 %v66, %v4534
    %v4567 = vadd.f32 %v67, %v4535
    %v4568 = vadd.f32 %v68, %v4536
    %v4569 = vadd.f32 %v69, %v4537
    %v4570 = vadd.f32 %v70, %v4538
    %v4571 = vadd.f32 %v71, %v4539
    %v4572 = vadd.f32 %v72, %v4540
    %v4573 = vadd.f32 %v73, %v4541
    %v4574 = vadd.f32 %v74, %v4542
    %v4575 = vadd.f32 %v75, %v4543
    %v4576 = vadd.f32 %v76, %v4544
    %v4577 = vadd.f32 %v77, %v4545
    %v4578 = vadd.f32 %v78, %v4546
    %v4579 = vadd.f32 %v79, %v4547
    %v4580 = vadd.f32 %v80, %v4548
    %v4581 = vadd.f32 %v81, %v4549
    %v4582 = vadd.f32 %v82, %v4550
    %v4583 = vadd.f32 %v83, %v4551
    %v4584 = vadd.f32 %v84, %v4552
    %v4585 = vadd.f32 %v85, %v4553
    %v4586 = vadd.f32 %v86, %v4554
    %v4587 = vadd.f32 %v87, %v4555
    %v4588 = vadd.f32 %v88, %v4556
    %v4589 = vadd.f32 %v89, %v4557
    %v4590 = vadd.f32 %v90, %v4558
    %v4591 = vadd.f32 %v91, %v4559
    %v4592 = vadd.f32 %v92, %v4560
    %v4593 = vadd.f32 %v93, %v4561
    %v4594 = vadd.f32 %v94, %v4562
    %v4595 = vadd.f32 %v95, %v4563
    %v4596 = vld [vmem:[%s7] sm:$0x1]
    %v4597 = vld [vmem:[%s8] sm:$0x1]
    %v4598 = vsel %vm98, %v4564, 0.0
    %4599 = vadd.xlane.f32.xlu0 %v4598
    %v4600 = vpop.xlane.xlu0 %4599
    %v4601 = vsel %vm98, %v4565, 0.0
    %4602 = vadd.xlane.f32.xlu0 %v4601
    %v4603 = vpop.xlane.xlu0 %4602
    %v4604 = vsel %vm98, %v4566, 0.0
    %4605 = vadd.xlane.f32.xlu0 %v4604
    %v4606 = vpop.xlane.xlu0 %4605
    %v4607 = vsel %vm98, %v4567, 0.0
    %4608 = vadd.xlane.f32.xlu0 %v4607
    %v4609 = vpop.xlane.xlu0 %4608
    %v4610 = vsel %vm98, %v4568, 0.0
    %4611 = vadd.xlane.f32.xlu0 %v4610
    %v4612 = vpop.xlane.xlu0 %4611
    %v4613 = vsel %vm98, %v4569, 0.0
    %4614 = vadd.xlane.f32.xlu0 %v4613
    %v4615 = vpop.xlane.xlu0 %4614
    %v4616 = vsel %vm98, %v4570, 0.0
    %4617 = vadd.xlane.f32.xlu0 %v4616
    %v4618 = vpop.xlane.xlu0 %4617
    %v4619 = vsel %vm98, %v4571, 0.0
    %4620 = vadd.xlane.f32.xlu0 %v4619
    %v4621 = vpop.xlane.xlu0 %4620
    %v4622 = vsel %vm98, %v4572, 0.0
    %4623 = vadd.xlane.f32.xlu0 %v4622
    %v4624 = vpop.xlane.xlu0 %4623
    %v4625 = vsel %vm98, %v4573, 0.0
    %4626 = vadd.xlane.f32.xlu0 %v4625
    %v4627 = vpop.xlane.xlu0 %4626
    %v4628 = vsel %vm98, %v4574, 0.0
    %4629 = vadd.xlane.f32.xlu0 %v4628
    %v4630 = vpop.xlane.xlu0 %4629
    %v4631 = vsel %vm98, %v4575, 0.0
    %4632 = vadd.xlane.f32.xlu0 %v4631
    %v4633 = vpop.xlane.xlu0 %4632
    %v4634 = vsel %vm98, %v4576, 0.0
    %4635 = vadd.xlane.f32.xlu0 %v4634
    %v4636 = vpop.xlane.xlu0 %4635
    %v4637 = vsel %vm98, %v4577, 0.0
    %4638 = vadd.xlane.f32.xlu0 %v4637
    %v4639 = vpop.xlane.xlu0 %4638
    %v4640 = vsel %vm98, %v4578, 0.0
    %4641 = vadd.xlane.f32.xlu0 %v4640
    %v4642 = vpop.xlane.xlu0 %4641
    %v4643 = vsel %vm98, %v4579, 0.0
    %4644 = vadd.xlane.f32.xlu0 %v4643
    %v4645 = vpop.xlane.xlu0 %4644
    %v4646 = vsel %vm98, %v4580, 0.0
    %4647 = vadd.xlane.f32.xlu0 %v4646
    %v4648 = vpop.xlane.xlu0 %4647
    %v4649 = vsel %vm98, %v4581, 0.0
    %4650 = vadd.xlane.f32.xlu0 %v4649
    %v4651 = vpop.xlane.xlu0 %4650
    %v4652 = vsel %vm98, %v4582, 0.0
    %4653 = vadd.xlane.f32.xlu0 %v4652
    %v4654 = vpop.xlane.xlu0 %4653
    %v4655 = vsel %vm98, %v4583, 0.0
    %4656 = vadd.xlane.f32.xlu0 %v4655
    %v4657 = vpop.xlane.xlu0 %4656
    %v4658 = vsel %vm98, %v4584, 0.0
    %4659 = vadd.xlane.f32.xlu0 %v4658
    %v4660 = vpop.xlane.xlu0 %4659
    %v4661 = vsel %vm98, %v4585, 0.0
    %4662 = vadd.xlane.f32.xlu0 %v4661
    %v4663 = vpop.xlane.xlu0 %4662
    %v4664 = vsel %vm98, %v4586, 0.0
    %4665 = vadd.xlane.f32.xlu0 %v4664
    %v4666 = vpop.xlane.xlu0 %4665
    %v4667 = vsel %vm98, %v4587, 0.0
    %4668 = vadd.xlane.f32.xlu0 %v4667
    %v4669 = vpop.xlane.xlu0 %4668
    %v4670 = vsel %vm98, %v4588, 0.0
    %4671 = vadd.xlane.f32.xlu0 %v4670
    %v4672 = vpop.xlane.xlu0 %4671
    %v4673 = vsel %vm98, %v4589, 0.0
    %4674 = vadd.xlane.f32.xlu0 %v4673
    %v4675 = vpop.xlane.xlu0 %4674
    %v4676 = vsel %vm98, %v4590, 0.0
    %4677 = vadd.xlane.f32.xlu0 %v4676
    %v4678 = vpop.xlane.xlu0 %4677
    %v4679 = vsel %vm98, %v4591, 0.0
    %4680 = vadd.xlane.f32.xlu0 %v4679
    %v4681 = vpop.xlane.xlu0 %4680
    %v4682 = vsel %vm98, %v4592, 0.0
    %4683 = vadd.xlane.f32.xlu0 %v4682
    %v4684 = vpop.xlane.xlu0 %4683
    %v4685 = vsel %vm98, %v4593, 0.0
    %4686 = vadd.xlane.f32.xlu0 %v4685
    %v4687 = vpop.xlane.xlu0 %4686
    %v4688 = vsel %vm98, %v4594, 0.0
    %4689 = vadd.xlane.f32.xlu0 %v4688
    %v4690 = vpop.xlane.xlu0 %4689
    %v4691 = vsel %vm98, %v4595, 0.0
    %4692 = vadd.xlane.f32.xlu0 %v4691
    %v4693 = vpop.xlane.xlu0 %4692
    %v4694 = vmul.f32 %v4600, %v201
    %v4695 = vmul.f32 %v4603, %v201
    %v4696 = vmul.f32 %v4606, %v201
    %v4697 = vmul.f32 %v4609, %v201
    %v4698 = vmul.f32 %v4612, %v201
    %v4699 = vmul.f32 %v4615, %v201
    %v4700 = vmul.f32 %v4618, %v201
    %v4701 = vmul.f32 %v4621, %v201
    %v4702 = vmul.f32 %v4624, %v201
    %v4703 = vmul.f32 %v4627, %v201
    %v4704 = vmul.f32 %v4630, %v201
    %v4705 = vmul.f32 %v4633, %v201
    %v4706 = vmul.f32 %v4636, %v201
    %v4707 = vmul.f32 %v4639, %v201
    %v4708 = vmul.f32 %v4642, %v201
    %v4709 = vmul.f32 %v4645, %v201
    %v4710 = vmul.f32 %v4648, %v201
    %v4711 = vmul.f32 %v4651, %v201
    %v4712 = vmul.f32 %v4654, %v201
    %v4713 = vmul.f32 %v4657, %v201
    %v4714 = vmul.f32 %v4660, %v201
    %v4715 = vmul.f32 %v4663, %v201
    %v4716 = vmul.f32 %v4666, %v201
    %v4717 = vmul.f32 %v4669, %v201
    %v4718 = vmul.f32 %v4672, %v201
    %v4719 = vmul.f32 %v4675, %v201
    %v4720 = vmul.f32 %v4678, %v201
    %v4721 = vmul.f32 %v4681, %v201
    %v4722 = vmul.f32 %v4684, %v201
    %v4723 = vmul.f32 %v4687, %v201
    %v4724 = vmul.f32 %v4690, %v201
    %v4725 = vmul.f32 %v4693, %v201
    %v4726 = vsub.f32 %v4564, %v4694
    %v4727 = vsub.f32 %v4565, %v4695
    %v4728 = vsub.f32 %v4566, %v4696
    %v4729 = vsub.f32 %v4567, %v4697
    %v4730 = vsub.f32 %v4568, %v4698
    %v4731 = vsub.f32 %v4569, %v4699
    %v4732 = vsub.f32 %v4570, %v4700
    %v4733 = vsub.f32 %v4571, %v4701
    %v4734 = vsub.f32 %v4572, %v4702
    %v4735 = vsub.f32 %v4573, %v4703
    %v4736 = vsub.f32 %v4574, %v4704
    %v4737 = vsub.f32 %v4575, %v4705
    %v4738 = vsub.f32 %v4576, %v4706
    %v4739 = vsub.f32 %v4577, %v4707
    %v4740 = vsub.f32 %v4578, %v4708
    %v4741 = vsub.f32 %v4579, %v4709
    %v4742 = vsub.f32 %v4580, %v4710
    %v4743 = vsub.f32 %v4581, %v4711
    %v4744 = vsub.f32 %v4582, %v4712
    %v4745 = vsub.f32 %v4583, %v4713
    %v4746 = vsub.f32 %v4584, %v4714
    %v4747 = vsub.f32 %v4585, %v4715
    %v4748 = vsub.f32 %v4586, %v4716
    %v4749 = vsub.f32 %v4587, %v4717
    %v4750 = vsub.f32 %v4588, %v4718
    %v4751 = vsub.f32 %v4589, %v4719
    %v4752 = vsub.f32 %v4590, %v4720
    %v4753 = vsub.f32 %v4591, %v4721
    %v4754 = vsub.f32 %v4592, %v4722
    %v4755 = vsub.f32 %v4593, %v4723
    %v4756 = vsub.f32 %v4594, %v4724
    %v4757 = vsub.f32 %v4595, %v4725
    %v4758 = vmul.f32 %v4726, %v4726
    %v4759 = vmul.f32 %v4727, %v4727
    %v4760 = vmul.f32 %v4728, %v4728
    %v4761 = vmul.f32 %v4729, %v4729
    %v4762 = vmul.f32 %v4730, %v4730
    %v4763 = vmul.f32 %v4731, %v4731
    %v4764 = vmul.f32 %v4732, %v4732
    %v4765 = vmul.f32 %v4733, %v4733
    %v4766 = vmul.f32 %v4734, %v4734
    %v4767 = vmul.f32 %v4735, %v4735
    %v4768 = vmul.f32 %v4736, %v4736
    %v4769 = vmul.f32 %v4737, %v4737
    %v4770 = vmul.f32 %v4738, %v4738
    %v4771 = vmul.f32 %v4739, %v4739
    %v4772 = vmul.f32 %v4740, %v4740
    %v4773 = vmul.f32 %v4741, %v4741
    %v4774 = vmul.f32 %v4742, %v4742
    %v4775 = vmul.f32 %v4743, %v4743
    %v4776 = vmul.f32 %v4744, %v4744
    %v4777 = vmul.f32 %v4745, %v4745
    %v4778 = vmul.f32 %v4746, %v4746
    %v4779 = vmul.f32 %v4747, %v4747
    %v4780 = vmul.f32 %v4748, %v4748
    %v4781 = vmul.f32 %v4749, %v4749
    %v4782 = vmul.f32 %v4750, %v4750
    %v4783 = vmul.f32 %v4751, %v4751
    %v4784 = vmul.f32 %v4752, %v4752
    %v4785 = vmul.f32 %v4753, %v4753
    %v4786 = vmul.f32 %v4754, %v4754
    %v4787 = vmul.f32 %v4755, %v4755
    %v4788 = vmul.f32 %v4756, %v4756
    %v4789 = vmul.f32 %v4757, %v4757
    %v4790 = vsel %vm98, %v4758, 0.0
    %4791 = vadd.xlane.f32.xlu0 %v4790
    %v4792 = vpop.xlane.xlu0 %4791
    %v4793 = vsel %vm98, %v4759, 0.0
    %4794 = vadd.xlane.f32.xlu0 %v4793
    %v4795 = vpop.xlane.xlu0 %4794
    %v4796 = vsel %vm98, %v4760, 0.0
    %4797 = vadd.xlane.f32.xlu0 %v4796
    %v4798 = vpop.xlane.xlu0 %4797
    %v4799 = vsel %vm98, %v4761, 0.0
    %4800 = vadd.xlane.f32.xlu0 %v4799
    %v4801 = vpop.xlane.xlu0 %4800
    %v4802 = vsel %vm98, %v4762, 0.0
    %4803 = vadd.xlane.f32.xlu0 %v4802
    %v4804 = vpop.xlane.xlu0 %4803
    %v4805 = vsel %vm98, %v4763, 0.0
    %4806 = vadd.xlane.f32.xlu0 %v4805
    %v4807 = vpop.xlane.xlu0 %4806
    %v4808 = vsel %vm98, %v4764, 0.0
    %4809 = vadd.xlane.f32.xlu0 %v4808
    %v4810 = vpop.xlane.xlu0 %4809
    %v4811 = vsel %vm98, %v4765, 0.0
    %4812 = vadd.xlane.f32.xlu0 %v4811
    %v4813 = vpop.xlane.xlu0 %4812
    %v4814 = vsel %vm98, %v4766, 0.0
    %4815 = vadd.xlane.f32.xlu0 %v4814
    %v4816 = vpop.xlane.xlu0 %4815
    %v4817 = vsel %vm98, %v4767, 0.0
    %4818 = vadd.xlane.f32.xlu0 %v4817
    %v4819 = vpop.xlane.xlu0 %4818
    %v4820 = vsel %vm98, %v4768, 0.0
    %4821 = vadd.xlane.f32.xlu0 %v4820
    %v4822 = vpop.xlane.xlu0 %4821
    %v4823 = vsel %vm98, %v4769, 0.0
    %4824 = vadd.xlane.f32.xlu0 %v4823
    %v4825 = vpop.xlane.xlu0 %4824
    %v4826 = vsel %vm98, %v4770, 0.0
    %4827 = vadd.xlane.f32.xlu0 %v4826
    %v4828 = vpop.xlane.xlu0 %4827
    %v4829 = vsel %vm98, %v4771, 0.0
    %4830 = vadd.xlane.f32.xlu0 %v4829
    %v4831 = vpop.xlane.xlu0 %4830
    %v4832 = vsel %vm98, %v4772, 0.0
    %4833 = vadd.xlane.f32.xlu0 %v4832
    %v4834 = vpop.xlane.xlu0 %4833
    %v4835 = vsel %vm98, %v4773, 0.0
    %4836 = vadd.xlane.f32.xlu0 %v4835
    %v4837 = vpop.xlane.xlu0 %4836
    %v4838 = vsel %vm98, %v4774, 0.0
    %4839 = vadd.xlane.f32.xlu0 %v4838
    %v4840 = vpop.xlane.xlu0 %4839
    %v4841 = vsel %vm98, %v4775, 0.0
    %4842 = vadd.xlane.f32.xlu0 %v4841
    %v4843 = vpop.xlane.xlu0 %4842
    %v4844 = vsel %vm98, %v4776, 0.0
    %4845 = vadd.xlane.f32.xlu0 %v4844
    %v4846 = vpop.xlane.xlu0 %4845
    %v4847 = vsel %vm98, %v4777, 0.0
    %4848 = vadd.xlane.f32.xlu0 %v4847
    %v4849 = vpop.xlane.xlu0 %4848
    %v4850 = vsel %vm98, %v4778, 0.0
    %4851 = vadd.xlane.f32.xlu0 %v4850
    %v4852 = vpop.xlane.xlu0 %4851
    %v4853 = vsel %vm98, %v4779, 0.0
    %4854 = vadd.xlane.f32.xlu0 %v4853
    %v4855 = vpop.xlane.xlu0 %4854
    %v4856 = vsel %vm98, %v4780, 0.0
    %4857 = vadd.xlane.f32.xlu0 %v4856
    %v4858 = vpop.xlane.xlu0 %4857
    %v4859 = vsel %vm98, %v4781, 0.0
    %4860 = vadd.xlane.f32.xlu0 %v4859
    %v4861 = vpop.xlane.xlu0 %4860
    %v4862 = vsel %vm98, %v4782, 0.0
    %4863 = vadd.xlane.f32.xlu0 %v4862
    %v4864 = vpop.xlane.xlu0 %4863
    %v4865 = vsel %vm98, %v4783, 0.0
    %4866 = vadd.xlane.f32.xlu0 %v4865
    %v4867 = vpop.xlane.xlu0 %4866
    %v4868 = vsel %vm98, %v4784, 0.0
    %4869 = vadd.xlane.f32.xlu0 %v4868
    %v4870 = vpop.xlane.xlu0 %4869
    %v4871 = vsel %vm98, %v4785, 0.0
    %4872 = vadd.xlane.f32.xlu0 %v4871
    %v4873 = vpop.xlane.xlu0 %4872
    %v4874 = vsel %vm98, %v4786, 0.0
    %4875 = vadd.xlane.f32.xlu0 %v4874
    %v4876 = vpop.xlane.xlu0 %4875
    %v4877 = vsel %vm98, %v4787, 0.0
    %4878 = vadd.xlane.f32.xlu0 %v4877
    %v4879 = vpop.xlane.xlu0 %4878
    %v4880 = vsel %vm98, %v4788, 0.0
    %4881 = vadd.xlane.f32.xlu0 %v4880
    %v4882 = vpop.xlane.xlu0 %4881
    %v4883 = vsel %vm98, %v4789, 0.0
    %4884 = vadd.xlane.f32.xlu0 %v4883
    %v4885 = vpop.xlane.xlu0 %4884
    %v4886 = vmul.f32 %v4792, %v201
    %v4887 = vmul.f32 %v4795, %v201
    %v4888 = vmul.f32 %v4798, %v201
    %v4889 = vmul.f32 %v4801, %v201
    %v4890 = vmul.f32 %v4804, %v201
    %v4891 = vmul.f32 %v4807, %v201
    %v4892 = vmul.f32 %v4810, %v201
    %v4893 = vmul.f32 %v4813, %v201
    %v4894 = vmul.f32 %v4816, %v201
    %v4895 = vmul.f32 %v4819, %v201
    %v4896 = vmul.f32 %v4822, %v201
    %v4897 = vmul.f32 %v4825, %v201
    %v4898 = vmul.f32 %v4828, %v201
    %v4899 = vmul.f32 %v4831, %v201
    %v4900 = vmul.f32 %v4834, %v201
    %v4901 = vmul.f32 %v4837, %v201
    %v4902 = vmul.f32 %v4840, %v201
    %v4903 = vmul.f32 %v4843, %v201
    %v4904 = vmul.f32 %v4846, %v201
    %v4905 = vmul.f32 %v4849, %v201
    %v4906 = vmul.f32 %v4852, %v201
    %v4907 = vmul.f32 %v4855, %v201
    %v4908 = vmul.f32 %v4858, %v201
    %v4909 = vmul.f32 %v4861, %v201
    %v4910 = vmul.f32 %v4864, %v201
    %v4911 = vmul.f32 %v4867, %v201
    %v4912 = vmul.f32 %v4870, %v201
    %v4913 = vmul.f32 %v4873, %v201
    %v4914 = vmul.f32 %v4876, %v201
    %v4915 = vmul.f32 %v4879, %v201
    %v4916 = vmul.f32 %v4882, %v201
    %v4917 = vmul.f32 %v4885, %v201
    %v4918 = vadd.f32 %v4886, 1e-05
    %v4919 = vadd.f32 %v4887, 1e-05
    %v4920 = vadd.f32 %v4888, 1e-05
    %v4921 = vadd.f32 %v4889, 1e-05
    %v4922 = vadd.f32 %v4890, 1e-05
    %v4923 = vadd.f32 %v4891, 1e-05
    %v4924 = vadd.f32 %v4892, 1e-05
    %v4925 = vadd.f32 %v4893, 1e-05
    %v4926 = vadd.f32 %v4894, 1e-05
    %v4927 = vadd.f32 %v4895, 1e-05
    %v4928 = vadd.f32 %v4896, 1e-05
    %v4929 = vadd.f32 %v4897, 1e-05
    %v4930 = vadd.f32 %v4898, 1e-05
    %v4931 = vadd.f32 %v4899, 1e-05
    %v4932 = vadd.f32 %v4900, 1e-05
    %v4933 = vadd.f32 %v4901, 1e-05
    %v4934 = vadd.f32 %v4902, 1e-05
    %v4935 = vadd.f32 %v4903, 1e-05
    %v4936 = vadd.f32 %v4904, 1e-05
    %v4937 = vadd.f32 %v4905, 1e-05
    %v4938 = vadd.f32 %v4906, 1e-05
    %v4939 = vadd.f32 %v4907, 1e-05
    %v4940 = vadd.f32 %v4908, 1e-05
    %v4941 = vadd.f32 %v4909, 1e-05
    %v4942 = vadd.f32 %v4910, 1e-05
    %v4943 = vadd.f32 %v4911, 1e-05
    %v4944 = vadd.f32 %v4912, 1e-05
    %v4945 = vadd.f32 %v4913, 1e-05
    %v4946 = vadd.f32 %v4914, 1e-05
    %v4947 = vadd.f32 %v4915, 1e-05
    %v4948 = vadd.f32 %v4916, 1e-05
    %v4949 = vadd.f32 %v4917, 1e-05
    %v4950 = vrsqrt.pop %v4918
    %v4951 = vmul.f32 %v4950, %v4918
    %v4952 = vmul.f32 %v4951, %v4950
    %v4953 = vmul.f32 0.5, %v4952
    %v4954 = vsub.f32 1.5, %v4953
    %v4955 = vmul.f32 %v4950, %v4954
    %vm4956 = vweird.f32 %v4918
    %vm4957 = vweird.f32 %v4950
    %vm4958 = vmor %vm4956, %vm4957
    %v4959 = vsel %vm4958, %v4950, %v4955
    %v4960 = vrsqrt.pop %v4919
    %v4961 = vmul.f32 %v4960, %v4919
    %v4962 = vmul.f32 %v4961, %v4960
    %v4963 = vmul.f32 0.5, %v4962
    %v4964 = vsub.f32 1.5, %v4963
    %v4965 = vmul.f32 %v4960, %v4964
    %vm4966 = vweird.f32 %v4919
    %vm4967 = vweird.f32 %v4960
    %vm4968 = vmor %vm4966, %vm4967
    %v4969 = vsel %vm4968, %v4960, %v4965
    %v4970 = vrsqrt.pop %v4920
    %v4971 = vmul.f32 %v4970, %v4920
    %v4972 = vmul.f32 %v4971, %v4970
    %v4973 = vmul.f32 0.5, %v4972
    %v4974 = vsub.f32 1.5, %v4973
    %v4975 = vmul.f32 %v4970, %v4974
    %vm4976 = vweird.f32 %v4920
    %vm4977 = vweird.f32 %v4970
    %vm4978 = vmor %vm4976, %vm4977
    %v4979 = vsel %vm4978, %v4970, %v4975
    %v4980 = vrsqrt.pop %v4921
    %v4981 = vmul.f32 %v4980, %v4921
    %v4982 = vmul.f32 %v4981, %v4980
    %v4983 = vmul.f32 0.5, %v4982
    %v4984 = vsub.f32 1.5, %v4983
    %v4985 = vmul.f32 %v4980, %v4984
    %vm4986 = vweird.f32 %v4921
    %vm4987 = vweird.f32 %v4980
    %vm4988 = vmor %vm4986, %vm4987
    %v4989 = vsel %vm4988, %v4980, %v4985
    %v4990 = vrsqrt.pop %v4922
    %v4991 = vmul.f32 %v4990, %v4922
    %v4992 = vmul.f32 %v4991, %v4990
    %v4993 = vmul.f32 0.5, %v4992
    %v4994 = vsub.f32 1.5, %v4993
    %v4995 = vmul.f32 %v4990, %v4994
    %vm4996 = vweird.f32 %v4922
    %vm4997 = vweird.f32 %v4990
    %vm4998 = vmor %vm4996, %vm4997
    %v4999 = vsel %vm4998, %v4990, %v4995
    %v5000 = vrsqrt.pop %v4923
    %v5001 = vmul.f32 %v5000, %v4923
    %v5002 = vmul.f32 %v5001, %v5000
    %v5003 = vmul.f32 0.5, %v5002
    %v5004 = vsub.f32 1.5, %v5003
    %v5005 = vmul.f32 %v5000, %v5004
    %vm5006 = vweird.f32 %v4923
    %vm5007 = vweird.f32 %v5000
    %vm5008 = vmor %vm5006, %vm5007
    %v5009 = vsel %vm5008, %v5000, %v5005
    %v5010 = vrsqrt.pop %v4924
    %v5011 = vmul.f32 %v5010, %v4924
    %v5012 = vmul.f32 %v5011, %v5010
    %v5013 = vmul.f32 0.5, %v5012
    %v5014 = vsub.f32 1.5, %v5013
    %v5015 = vmul.f32 %v5010, %v5014
    %vm5016 = vweird.f32 %v4924
    %vm5017 = vweird.f32 %v5010
    %vm5018 = vmor %vm5016, %vm5017
    %v5019 = vsel %vm5018, %v5010, %v5015
    %v5020 = vrsqrt.pop %v4925
    %v5021 = vmul.f32 %v5020, %v4925
    %v5022 = vmul.f32 %v5021, %v5020
    %v5023 = vmul.f32 0.5, %v5022
    %v5024 = vsub.f32 1.5, %v5023
    %v5025 = vmul.f32 %v5020, %v5024
    %vm5026 = vweird.f32 %v4925
    %vm5027 = vweird.f32 %v5020
    %vm5028 = vmor %vm5026, %vm5027
    %v5029 = vsel %vm5028, %v5020, %v5025
    %v5030 = vrsqrt.pop %v4926
    %v5031 = vmul.f32 %v5030, %v4926
    %v5032 = vmul.f32 %v5031, %v5030
    %v5033 = vmul.f32 0.5, %v5032
    %v5034 = vsub.f32 1.5, %v5033
    %v5035 = vmul.f32 %v5030, %v5034
    %vm5036 = vweird.f32 %v4926
    %vm5037 = vweird.f32 %v5030
    %vm5038 = vmor %vm5036, %vm5037
    %v5039 = vsel %vm5038, %v5030, %v5035
    %v5040 = vrsqrt.pop %v4927
    %v5041 = vmul.f32 %v5040, %v4927
    %v5042 = vmul.f32 %v5041, %v5040
    %v5043 = vmul.f32 0.5, %v5042
    %v5044 = vsub.f32 1.5, %v5043
    %v5045 = vmul.f32 %v5040, %v5044
    %vm5046 = vweird.f32 %v4927
    %vm5047 = vweird.f32 %v5040
    %vm5048 = vmor %vm5046, %vm5047
    %v5049 = vsel %vm5048, %v5040, %v5045
    %v5050 = vrsqrt.pop %v4928
    %v5051 = vmul.f32 %v5050, %v4928
    %v5052 = vmul.f32 %v5051, %v5050
    %v5053 = vmul.f32 0.5, %v5052
    %v5054 = vsub.f32 1.5, %v5053
    %v5055 = vmul.f32 %v5050, %v5054
    %vm5056 = vweird.f32 %v4928
    %vm5057 = vweird.f32 %v5050
    %vm5058 = vmor %vm5056, %vm5057
    %v5059 = vsel %vm5058, %v5050, %v5055
    %v5060 = vrsqrt.pop %v4929
    %v5061 = vmul.f32 %v5060, %v4929
    %v5062 = vmul.f32 %v5061, %v5060
    %v5063 = vmul.f32 0.5, %v5062
    %v5064 = vsub.f32 1.5, %v5063
    %v5065 = vmul.f32 %v5060, %v5064
    %vm5066 = vweird.f32 %v4929
    %vm5067 = vweird.f32 %v5060
    %vm5068 = vmor %vm5066, %vm5067
    %v5069 = vsel %vm5068, %v5060, %v5065
    %v5070 = vrsqrt.pop %v4930
    %v5071 = vmul.f32 %v5070, %v4930
    %v5072 = vmul.f32 %v5071, %v5070
    %v5073 = vmul.f32 0.5, %v5072
    %v5074 = vsub.f32 1.5, %v5073
    %v5075 = vmul.f32 %v5070, %v5074
    %vm5076 = vweird.f32 %v4930
    %vm5077 = vweird.f32 %v5070
    %vm5078 = vmor %vm5076, %vm5077
    %v5079 = vsel %vm5078, %v5070, %v5075
    %v5080 = vrsqrt.pop %v4931
    %v5081 = vmul.f32 %v5080, %v4931
    %v5082 = vmul.f32 %v5081, %v5080
    %v5083 = vmul.f32 0.5, %v5082
    %v5084 = vsub.f32 1.5, %v5083
    %v5085 = vmul.f32 %v5080, %v5084
    %vm5086 = vweird.f32 %v4931
    %vm5087 = vweird.f32 %v5080
    %vm5088 = vmor %vm5086, %vm5087
    %v5089 = vsel %vm5088, %v5080, %v5085
    %v5090 = vrsqrt.pop %v4932
    %v5091 = vmul.f32 %v5090, %v4932
    %v5092 = vmul.f32 %v5091, %v5090
    %v5093 = vmul.f32 0.5, %v5092
    %v5094 = vsub.f32 1.5, %v5093
    %v5095 = vmul.f32 %v5090, %v5094
    %vm5096 = vweird.f32 %v4932
    %vm5097 = vweird.f32 %v5090
    %vm5098 = vmor %vm5096, %vm5097
    %v5099 = vsel %vm5098, %v5090, %v5095
    %v5100 = vrsqrt.pop %v4933
    %v5101 = vmul.f32 %v5100, %v4933
    %v5102 = vmul.f32 %v5101, %v5100
    %v5103 = vmul.f32 0.5, %v5102
    %v5104 = vsub.f32 1.5, %v5103
    %v5105 = vmul.f32 %v5100, %v5104
    %vm5106 = vweird.f32 %v4933
    %vm5107 = vweird.f32 %v5100
    %vm5108 = vmor %vm5106, %vm5107
    %v5109 = vsel %vm5108, %v5100, %v5105
    %v5110 = vrsqrt.pop %v4934
    %v5111 = vmul.f32 %v5110, %v4934
    %v5112 = vmul.f32 %v5111, %v5110
    %v5113 = vmul.f32 0.5, %v5112
    %v5114 = vsub.f32 1.5, %v5113
    %v5115 = vmul.f32 %v5110, %v5114
    %vm5116 = vweird.f32 %v4934
    %vm5117 = vweird.f32 %v5110
    %vm5118 = vmor %vm5116, %vm5117
    %v5119 = vsel %vm5118, %v5110, %v5115
    %v5120 = vrsqrt.pop %v4935
    %v5121 = vmul.f32 %v5120, %v4935
    %v5122 = vmul.f32 %v5121, %v5120
    %v5123 = vmul.f32 0.5, %v5122
    %v5124 = vsub.f32 1.5, %v5123
    %v5125 = vmul.f32 %v5120, %v5124
    %vm5126 = vweird.f32 %v4935
    %vm5127 = vweird.f32 %v5120
    %vm5128 = vmor %vm5126, %vm5127
    %v5129 = vsel %vm5128, %v5120, %v5125
    %v5130 = vrsqrt.pop %v4936
    %v5131 = vmul.f32 %v5130, %v4936
    %v5132 = vmul.f32 %v5131, %v5130
    %v5133 = vmul.f32 0.5, %v5132
    %v5134 = vsub.f32 1.5, %v5133
    %v5135 = vmul.f32 %v5130, %v5134
    %vm5136 = vweird.f32 %v4936
    %vm5137 = vweird.f32 %v5130
    %vm5138 = vmor %vm5136, %vm5137
    %v5139 = vsel %vm5138, %v5130, %v5135
    %v5140 = vrsqrt.pop %v4937
    %v5141 = vmul.f32 %v5140, %v4937
    %v5142 = vmul.f32 %v5141, %v5140
    %v5143 = vmul.f32 0.5, %v5142
    %v5144 = vsub.f32 1.5, %v5143
    %v5145 = vmul.f32 %v5140, %v5144
    %vm5146 = vweird.f32 %v4937
    %vm5147 = vweird.f32 %v5140
    %vm5148 = vmor %vm5146, %vm5147
    %v5149 = vsel %vm5148, %v5140, %v5145
    %v5150 = vrsqrt.pop %v4938
    %v5151 = vmul.f32 %v5150, %v4938
    %v5152 = vmul.f32 %v5151, %v5150
    %v5153 = vmul.f32 0.5, %v5152
    %v5154 = vsub.f32 1.5, %v5153
    %v5155 = vmul.f32 %v5150, %v5154
    %vm5156 = vweird.f32 %v4938
    %vm5157 = vweird.f32 %v5150
    %vm5158 = vmor %vm5156, %vm5157
    %v5159 = vsel %vm5158, %v5150, %v5155
    %v5160 = vrsqrt.pop %v4939
    %v5161 = vmul.f32 %v5160, %v4939
    %v5162 = vmul.f32 %v5161, %v5160
    %v5163 = vmul.f32 0.5, %v5162
    %v5164 = vsub.f32 1.5, %v5163
    %v5165 = vmul.f32 %v5160, %v5164
    %vm5166 = vweird.f32 %v4939
    %vm5167 = vweird.f32 %v5160
    %vm5168 = vmor %vm5166, %vm5167
    %v5169 = vsel %vm5168, %v5160, %v5165
    %v5170 = vrsqrt.pop %v4940
    %v5171 = vmul.f32 %v5170, %v4940
    %v5172 = vmul.f32 %v5171, %v5170
    %v5173 = vmul.f32 0.5, %v5172
    %v5174 = vsub.f32 1.5, %v5173
    %v5175 = vmul.f32 %v5170, %v5174
    %vm5176 = vweird.f32 %v4940
    %vm5177 = vweird.f32 %v5170
    %vm5178 = vmor %vm5176, %vm5177
    %v5179 = vsel %vm5178, %v5170, %v5175
    %v5180 = vrsqrt.pop %v4941
    %v5181 = vmul.f32 %v5180, %v4941
    %v5182 = vmul.f32 %v5181, %v5180
    %v5183 = vmul.f32 0.5, %v5182
    %v5184 = vsub.f32 1.5, %v5183
    %v5185 = vmul.f32 %v5180, %v5184
    %vm5186 = vweird.f32 %v4941
    %vm5187 = vweird.f32 %v5180
    %vm5188 = vmor %vm5186, %vm5187
    %v5189 = vsel %vm5188, %v5180, %v5185
    %v5190 = vrsqrt.pop %v4942
    %v5191 = vmul.f32 %v5190, %v4942
    %v5192 = vmul.f32 %v5191, %v5190
    %v5193 = vmul.f32 0.5, %v5192
    %v5194 = vsub.f32 1.5, %v5193
    %v5195 = vmul.f32 %v5190, %v5194
    %vm5196 = vweird.f32 %v4942
    %vm5197 = vweird.f32 %v5190
    %vm5198 = vmor %vm5196, %vm5197
    %v5199 = vsel %vm5198, %v5190, %v5195
    %v5200 = vrsqrt.pop %v4943
    %v5201 = vmul.f32 %v5200, %v4943
    %v5202 = vmul.f32 %v5201, %v5200
    %v5203 = vmul.f32 0.5, %v5202
    %v5204 = vsub.f32 1.5, %v5203
    %v5205 = vmul.f32 %v5200, %v5204
    %vm5206 = vweird.f32 %v4943
    %vm5207 = vweird.f32 %v5200
    %vm5208 = vmor %vm5206, %vm5207
    %v5209 = vsel %vm5208, %v5200, %v5205
    %v5210 = vrsqrt.pop %v4944
    %v5211 = vmul.f32 %v5210, %v4944
    %v5212 = vmul.f32 %v5211, %v5210
    %v5213 = vmul.f32 0.5, %v5212
    %v5214 = vsub.f32 1.5, %v5213
    %v5215 = vmul.f32 %v5210, %v5214
    %vm5216 = vweird.f32 %v4944
    %vm5217 = vweird.f32 %v5210
    %vm5218 = vmor %vm5216, %vm5217
    %v5219 = vsel %vm5218, %v5210, %v5215
    %v5220 = vrsqrt.pop %v4945
    %v5221 = vmul.f32 %v5220, %v4945
    %v5222 = vmul.f32 %v5221, %v5220
    %v5223 = vmul.f32 0.5, %v5222
    %v5224 = vsub.f32 1.5, %v5223
    %v5225 = vmul.f32 %v5220, %v5224
    %vm5226 = vweird.f32 %v4945
    %vm5227 = vweird.f32 %v5220
    %vm5228 = vmor %vm5226, %vm5227
    %v5229 = vsel %vm5228, %v5220, %v5225
    %v5230 = vrsqrt.pop %v4946
    %v5231 = vmul.f32 %v5230, %v4946
    %v5232 = vmul.f32 %v5231, %v5230
    %v5233 = vmul.f32 0.5, %v5232
    %v5234 = vsub.f32 1.5, %v5233
    %v5235 = vmul.f32 %v5230, %v5234
    %vm5236 = vweird.f32 %v4946
    %vm5237 = vweird.f32 %v5230
    %vm5238 = vmor %vm5236, %vm5237
    %v5239 = vsel %vm5238, %v5230, %v5235
    %v5240 = vrsqrt.pop %v4947
    %v5241 = vmul.f32 %v5240, %v4947
    %v5242 = vmul.f32 %v5241, %v5240
    %v5243 = vmul.f32 0.5, %v5242
    %v5244 = vsub.f32 1.5, %v5243
    %v5245 = vmul.f32 %v5240, %v5244
    %vm5246 = vweird.f32 %v4947
    %vm5247 = vweird.f32 %v5240
    %vm5248 = vmor %vm5246, %vm5247
    %v5249 = vsel %vm5248, %v5240, %v5245
    %v5250 = vrsqrt.pop %v4948
    %v5251 = vmul.f32 %v5250, %v4948
    %v5252 = vmul.f32 %v5251, %v5250
    %v5253 = vmul.f32 0.5, %v5252
    %v5254 = vsub.f32 1.5, %v5253
    %v5255 = vmul.f32 %v5250, %v5254
    %vm5256 = vweird.f32 %v4948
    %vm5257 = vweird.f32 %v5250
    %vm5258 = vmor %vm5256, %vm5257
    %v5259 = vsel %vm5258, %v5250, %v5255
    %v5260 = vrsqrt.pop %v4949
    %v5261 = vmul.f32 %v5260, %v4949
    %v5262 = vmul.f32 %v5261, %v5260
    %v5263 = vmul.f32 0.5, %v5262
    %v5264 = vsub.f32 1.5, %v5263
    %v5265 = vmul.f32 %v5260, %v5264
    %vm5266 = vweird.f32 %v4949
    %vm5267 = vweird.f32 %v5260
    %vm5268 = vmor %vm5266, %vm5267
    %v5269 = vsel %vm5268, %v5260, %v5265
    %v5270 = vmul.f32 %v4726, %v4959
    %v5271 = vmul.f32 %v4727, %v4969
    %v5272 = vmul.f32 %v4728, %v4979
    %v5273 = vmul.f32 %v4729, %v4989
    %v5274 = vmul.f32 %v4730, %v4999
    %v5275 = vmul.f32 %v4731, %v5009
    %v5276 = vmul.f32 %v4732, %v5019
    %v5277 = vmul.f32 %v4733, %v5029
    %v5278 = vmul.f32 %v4734, %v5039
    %v5279 = vmul.f32 %v4735, %v5049
    %v5280 = vmul.f32 %v4736, %v5059
    %v5281 = vmul.f32 %v4737, %v5069
    %v5282 = vmul.f32 %v4738, %v5079
    %v5283 = vmul.f32 %v4739, %v5089
    %v5284 = vmul.f32 %v4740, %v5099
    %v5285 = vmul.f32 %v4741, %v5109
    %v5286 = vmul.f32 %v4742, %v5119
    %v5287 = vmul.f32 %v4743, %v5129
    %v5288 = vmul.f32 %v4744, %v5139
    %v5289 = vmul.f32 %v4745, %v5149
    %v5290 = vmul.f32 %v4746, %v5159
    %v5291 = vmul.f32 %v4747, %v5169
    %v5292 = vmul.f32 %v4748, %v5179
    %v5293 = vmul.f32 %v4749, %v5189
    %v5294 = vmul.f32 %v4750, %v5199
    %v5295 = vmul.f32 %v4751, %v5209
    %v5296 = vmul.f32 %v4752, %v5219
    %v5297 = vmul.f32 %v4753, %v5229
    %v5298 = vmul.f32 %v4754, %v5239
    %v5299 = vmul.f32 %v4755, %v5249
    %v5300 = vmul.f32 %v4756, %v5259
    %v5301 = vmul.f32 %v4757, %v5269
    %v5303 = vperm.slane %v4596, 0
    %v5305 = vmul.f32 %v5270, %v5303
    %v5306 = vmul.f32 %v5271, %v5303
    %v5307 = vmul.f32 %v5272, %v5303
    %v5308 = vmul.f32 %v5273, %v5303
    %v5309 = vmul.f32 %v5274, %v5303
    %v5310 = vmul.f32 %v5275, %v5303
    %v5311 = vmul.f32 %v5276, %v5303
    %v5312 = vmul.f32 %v5277, %v5303
    %v5313 = vmul.f32 %v5278, %v5303
    %v5314 = vmul.f32 %v5279, %v5303
    %v5315 = vmul.f32 %v5280, %v5303
    %v5316 = vmul.f32 %v5281, %v5303
    %v5317 = vmul.f32 %v5282, %v5303
    %v5318 = vmul.f32 %v5283, %v5303
    %v5319 = vmul.f32 %v5284, %v5303
    %v5320 = vmul.f32 %v5285, %v5303
    %v5321 = vmul.f32 %v5286, %v5303
    %v5322 = vmul.f32 %v5287, %v5303
    %v5323 = vmul.f32 %v5288, %v5303
    %v5324 = vmul.f32 %v5289, %v5303
    %v5325 = vmul.f32 %v5290, %v5303
    %v5326 = vmul.f32 %v5291, %v5303
    %v5327 = vmul.f32 %v5292, %v5303
    %v5328 = vmul.f32 %v5293, %v5303
    %v5329 = vmul.f32 %v5294, %v5303
    %v5330 = vmul.f32 %v5295, %v5303
    %v5331 = vmul.f32 %v5296, %v5303
    %v5332 = vmul.f32 %v5297, %v5303
    %v5333 = vmul.f32 %v5298, %v5303
    %v5334 = vmul.f32 %v5299, %v5303
    %v5335 = vmul.f32 %v5300, %v5303
    %v5336 = vmul.f32 %v5301, %v5303
    %v5338 = vperm.slane %v4597, 0
    %v5340 = vadd.f32 %v5305, %v5338
    %v5341 = vadd.f32 %v5306, %v5338
    %v5342 = vadd.f32 %v5307, %v5338
    %v5343 = vadd.f32 %v5308, %v5338
    %v5344 = vadd.f32 %v5309, %v5338
    %v5345 = vadd.f32 %v5310, %v5338
    %v5346 = vadd.f32 %v5311, %v5338
    %v5347 = vadd.f32 %v5312, %v5338
    %v5348 = vadd.f32 %v5313, %v5338
    %v5349 = vadd.f32 %v5314, %v5338
    %v5350 = vadd.f32 %v5315, %v5338
    %v5351 = vadd.f32 %v5316, %v5338
    %v5352 = vadd.f32 %v5317, %v5338
    %v5353 = vadd.f32 %v5318, %v5338
    %v5354 = vadd.f32 %v5319, %v5338
    %v5355 = vadd.f32 %v5320, %v5338
    %v5356 = vadd.f32 %v5321, %v5338
    %v5357 = vadd.f32 %v5322, %v5338
    %v5358 = vadd.f32 %v5323, %v5338
    %v5359 = vadd.f32 %v5324, %v5338
    %v5360 = vadd.f32 %v5325, %v5338
    %v5361 = vadd.f32 %v5326, %v5338
    %v5362 = vadd.f32 %v5327, %v5338
    %v5363 = vadd.f32 %v5328, %v5338
    %v5364 = vadd.f32 %v5329, %v5338
    %v5365 = vadd.f32 %v5330, %v5338
    %v5366 = vadd.f32 %v5331, %v5338
    %v5367 = vadd.f32 %v5332, %v5338
    %v5368 = vadd.f32 %v5333, %v5338
    %v5369 = vadd.f32 %v5334, %v5338
    %v5370 = vadd.f32 %v5335, %v5338
    %v5371 = vadd.f32 %v5336, %v5338
    %v5372 = vld [vmem:[%s9] sm:$0xff]
    %v5373 = vld [vmem:[%s9 + $0x8] sm:$0xff]
    %v5374 = vld [vmem:[%s9 + $0x10] sm:$0xff]
    %v5375 = vld [vmem:[%s9 + $0x18] sm:$0xff]
    %v5376 = vld [vmem:[%s10] sm:$0x1]
    %v5378 = vperm.slane %v5376, 0
    %v5381 = vsel %vm98, %v5340, 0
    %v5384 = vsel %vm98, %v5341, 0
    %v5387 = vsel %vm98, %v5342, 0
    %v5390 = vsel %vm98, %v5343, 0
    %v5393 = vsel %vm98, %v5344, 0
    %v5396 = vsel %vm98, %v5345, 0
    %v5399 = vsel %vm98, %v5346, 0
    %v5402 = vsel %vm98, %v5347, 0
    %v5405 = vsel %vm98, %v5348, 0
    %v5408 = vsel %vm98, %v5349, 0
    %v5411 = vsel %vm98, %v5350, 0
    %v5414 = vsel %vm98, %v5351, 0
    %v5417 = vsel %vm98, %v5352, 0
    %v5420 = vsel %vm98, %v5353, 0
    %v5423 = vsel %vm98, %v5354, 0
    %v5426 = vsel %vm98, %v5355, 0
    %v5429 = vsel %vm98, %v5356, 0
    %v5432 = vsel %vm98, %v5357, 0
    %v5435 = vsel %vm98, %v5358, 0
    %v5438 = vsel %vm98, %v5359, 0
    %v5441 = vsel %vm98, %v5360, 0
    %v5444 = vsel %vm98, %v5361, 0
    %v5447 = vsel %vm98, %v5362, 0
    %v5450 = vsel %vm98, %v5363, 0
    %v5453 = vsel %vm98, %v5364, 0
    %v5456 = vsel %vm98, %v5365, 0
    %v5459 = vsel %vm98, %v5366, 0
    %v5462 = vsel %vm98, %v5367, 0
    %v5465 = vsel %vm98, %v5368, 0
    %v5468 = vsel %vm98, %v5369, 0
    %v5471 = vsel %vm98, %v5370, 0
    %v5474 = vsel %vm98, %v5371, 0
    %5476 = vmatpush.msra.mxu0 0.0
    %5477 = vmatpush.msra.mxu0 0.0
    %5478 = vmatpush.msra.mxu0 0.0
    %5479 = vmatpush.msra.mxu0 0.0
    %5480 = vmatpush.msra.mxu0 0.0
    %5481 = vmatpush.msra.mxu0 0.0
    %5482 = vmatpush.msra.mxu0 0.0
    %5483 = vmatpush.msra.mxu0 0.0
    %5484 = vmatpush.msra.mxu0 0.0
    %5485 = vmatpush.msra.mxu0 0.0
    %5486 = vmatpush.msra.mxu0 0.0
    %5487 = vmatpush.msra.mxu0 0.0
    %5488 = vmatpush.msra.mxu0 %v5375
    %5489 = vmatpush.msra.mxu0 %v5374
    %5490 = vmatpush.msra.mxu0 %v5373
    %5491 = vmatpush.msra.mxu0 %v5372
    %5492 = vmatmul.f32.gmra.mxu0 %v5381
    %v5493 = vpop.f32.mrf.mxu0
    %v5494 = vadd.f32 %v5378, %v5493
    %5495 = vmatmul.f32.gmra.mxu0 %v5384
    %v5496 = vpop.f32.mrf.mxu0
    %v5497 = vadd.f32 %v5378, %v5496
    %5498 = vmatmul.f32.gmra.mxu0 %v5387
    %v5499 = vpop.f32.mrf.mxu0
    %v5500 = vadd.f32 %v5378, %v5499
    %5501 = vmatmul.f32.gmra.mxu0 %v5390
    %v5502 = vpop.f32.mrf.mxu0
    %v5503 = vadd.f32 %v5378, %v5502
    %5504 = vmatmul.f32.gmra.mxu0 %v5393
    %v5505 = vpop.f32.mrf.mxu0
    %v5506 = vadd.f32 %v5378, %v5505
    %5507 = vmatmul.f32.gmra.mxu0 %v5396
    %v5508 = vpop.f32.mrf.mxu0
    %v5509 = vadd.f32 %v5378, %v5508
    %5510 = vmatmul.f32.gmra.mxu0 %v5399
    %v5511 = vpop.f32.mrf.mxu0
    %v5512 = vadd.f32 %v5378, %v5511
    %5513 = vmatmul.f32.gmra.mxu0 %v5402
    %v5514 = vpop.f32.mrf.mxu0
    %v5515 = vadd.f32 %v5378, %v5514
    %5516 = vmatmul.f32.gmra.mxu0 %v5405
    %v5517 = vpop.f32.mrf.mxu0
    %v5518 = vadd.f32 %v5378, %v5517
    %5519 = vmatmul.f32.gmra.mxu0 %v5408
    %v5520 = vpop.f32.mrf.mxu0
    %v5521 = vadd.f32 %v5378, %v5520
    %5522 = vmatmul.f32.gmra.mxu0 %v5411
    %v5523 = vpop.f32.mrf.mxu0
    %v5524 = vadd.f32 %v5378, %v5523
    %5525 = vmatmul.f32.gmra.mxu0 %v5414
    %v5526 = vpop.f32.mrf.mxu0
    %v5527 = vadd.f32 %v5378, %v5526
    %5528 = vmatmul.f32.gmra.mxu0 %v5417
    %v5529 = vpop.f32.mrf.mxu0
    %v5530 = vadd.f32 %v5378, %v5529
    %5531 = vmatmul.f32.gmra.mxu0 %v5420
    %v5532 = vpop.f32.mrf.mxu0
    %v5533 = vadd.f32 %v5378, %v5532
    %5534 = vmatmul.f32.gmra.mxu0 %v5423
    %v5535 = vpop.f32.mrf.mxu0
    %v5536 = vadd.f32 %v5378, %v5535
    %5537 = vmatmul.f32.gmra.mxu0 %v5426
    %v5538 = vpop.f32.mrf.mxu0
    %v5539 = vadd.f32 %v5378, %v5538
    %5540 = vmatmul.f32.gmra.mxu0 %v5429
    %v5541 = vpop.f32.mrf.mxu0
    %v5542 = vadd.f32 %v5378, %v5541
    %5543 = vmatmul.f32.gmra.mxu0 %v5432
    %v5544 = vpop.f32.mrf.mxu0
    %v5545 = vadd.f32 %v5378, %v5544
    %5546 = vmatmul.f32.gmra.mxu0 %v5435
    %v5547 = vpop.f32.mrf.mxu0
    %v5548 = vadd.f32 %v5378, %v5547
    %5549 = vmatmul.f32.gmra.mxu0 %v5438
    %v5550 = vpop.f32.mrf.mxu0
    %v5551 = vadd.f32 %v5378, %v5550
    %5552 = vmatmul.f32.gmra.mxu0 %v5441
    %v5553 = vpop.f32.mrf.mxu0
    %v5554 = vadd.f32 %v5378, %v5553
    %5555 = vmatmul.f32.gmra.mxu0 %v5444
    %v5556 = vpop.f32.mrf.mxu0
    %v5557 = vadd.f32 %v5378, %v5556
    %5558 = vmatmul.f32.gmra.mxu0 %v5447
    %v5559 = vpop.f32.mrf.mxu0
    %v5560 = vadd.f32 %v5378, %v5559
    %5561 = vmatmul.f32.gmra.mxu0 %v5450
    %v5562 = vpop.f32.mrf.mxu0
    %v5563 = vadd.f32 %v5378, %v5562
    %5564 = vmatmul.f32.gmra.mxu0 %v5453
    %v5565 = vpop.f32.mrf.mxu0
    %v5566 = vadd.f32 %v5378, %v5565
    %5567 = vmatmul.f32.gmra.mxu0 %v5456
    %v5568 = vpop.f32.mrf.mxu0
    %v5569 = vadd.f32 %v5378, %v5568
    %5570 = vmatmul.f32.gmra.mxu0 %v5459
    %v5571 = vpop.f32.mrf.mxu0
    %v5572 = vadd.f32 %v5378, %v5571
    %5573 = vmatmul.f32.gmra.mxu0 %v5462
    %v5574 = vpop.f32.mrf.mxu0
    %v5575 = vadd.f32 %v5378, %v5574
    %5576 = vmatmul.f32.gmra.mxu0 %v5465
    %v5577 = vpop.f32.mrf.mxu0
    %v5578 = vadd.f32 %v5378, %v5577
    %5579 = vmatmul.f32.gmra.mxu0 %v5468
    %v5580 = vpop.f32.mrf.mxu0
    %v5581 = vadd.f32 %v5378, %v5580
    %5582 = vmatmul.f32.gmra.mxu0 %v5471
    %v5583 = vpop.f32.mrf.mxu0
    %v5584 = vadd.f32 %v5378, %v5583
    %5585 = vmatmul.f32.gmra.mxu0 %v5474
    %v5586 = vpop.f32.mrf.mxu0
    %v5587 = vadd.f32 %v5378, %v5586
    %5588 = vdwg.mxu0
    %v5589 = vmul.f32 %v5494, 0.5
    %v5590 = vmul.f32 %v5497, 0.5
    %v5591 = vmul.f32 %v5500, 0.5
    %v5592 = vmul.f32 %v5503, 0.5
    %v5593 = vmul.f32 %v5506, 0.5
    %v5594 = vmul.f32 %v5509, 0.5
    %v5595 = vmul.f32 %v5512, 0.5
    %v5596 = vmul.f32 %v5515, 0.5
    %v5597 = vmul.f32 %v5518, 0.5
    %v5598 = vmul.f32 %v5521, 0.5
    %v5599 = vmul.f32 %v5524, 0.5
    %v5600 = vmul.f32 %v5527, 0.5
    %v5601 = vmul.f32 %v5530, 0.5
    %v5602 = vmul.f32 %v5533, 0.5
    %v5603 = vmul.f32 %v5536, 0.5
    %v5604 = vmul.f32 %v5539, 0.5
    %v5605 = vmul.f32 %v5542, 0.5
    %v5606 = vmul.f32 %v5545, 0.5
    %v5607 = vmul.f32 %v5548, 0.5
    %v5608 = vmul.f32 %v5551, 0.5
    %v5609 = vmul.f32 %v5554, 0.5
    %v5610 = vmul.f32 %v5557, 0.5
    %v5611 = vmul.f32 %v5560, 0.5
    %v5612 = vmul.f32 %v5563, 0.5
    %v5613 = vmul.f32 %v5566, 0.5
    %v5614 = vmul.f32 %v5569, 0.5
    %v5615 = vmul.f32 %v5572, 0.5
    %v5616 = vmul.f32 %v5575, 0.5
    %v5617 = vmul.f32 %v5578, 0.5
    %v5618 = vmul.f32 %v5581, 0.5
    %v5619 = vmul.f32 %v5584, 0.5
    %v5620 = vmul.f32 %v5587, 0.5
    %v5621 = vmul.f32 %v5494, 0.70710677
    %v5622 = vmul.f32 %v5497, 0.70710677
    %v5623 = vmul.f32 %v5500, 0.70710677
    %v5624 = vmul.f32 %v5503, 0.70710677
    %v5625 = vmul.f32 %v5506, 0.70710677
    %v5626 = vmul.f32 %v5509, 0.70710677
    %v5627 = vmul.f32 %v5512, 0.70710677
    %v5628 = vmul.f32 %v5515, 0.70710677
    %v5629 = vmul.f32 %v5518, 0.70710677
    %v5630 = vmul.f32 %v5521, 0.70710677
    %v5631 = vmul.f32 %v5524, 0.70710677
    %v5632 = vmul.f32 %v5527, 0.70710677
    %v5633 = vmul.f32 %v5530, 0.70710677
    %v5634 = vmul.f32 %v5533, 0.70710677
    %v5635 = vmul.f32 %v5536, 0.70710677
    %v5636 = vmul.f32 %v5539, 0.70710677
    %v5637 = vmul.f32 %v5542, 0.70710677
    %v5638 = vmul.f32 %v5545, 0.70710677
    %v5639 = vmul.f32 %v5548, 0.70710677
    %v5640 = vmul.f32 %v5551, 0.70710677
    %v5641 = vmul.f32 %v5554, 0.70710677
    %v5642 = vmul.f32 %v5557, 0.70710677
    %v5643 = vmul.f32 %v5560, 0.70710677
    %v5644 = vmul.f32 %v5563, 0.70710677
    %v5645 = vmul.f32 %v5566, 0.70710677
    %v5646 = vmul.f32 %v5569, 0.70710677
    %v5647 = vmul.f32 %v5572, 0.70710677
    %v5648 = vmul.f32 %v5575, 0.70710677
    %v5649 = vmul.f32 %v5578, 0.70710677
    %v5650 = vmul.f32 %v5581, 0.70710677
    %v5651 = vmul.f32 %v5584, 0.70710677
    %v5652 = vmul.f32 %v5587, 0.70710677
    %v5653 = vmul.f32 %v5621, %v5621
    %v5654 = vmin.f32 16.0, %v5653
    %v5655 = vmul.f32 %v5654, 2.1237322e-06
    %v5656 = vadd.f32 %v5655, 0.00028619796
    %v5657 = vmul.f32 %v5654, %v5656
    %v5658 = vadd.f32 %v5657, 0.0036580483
    %v5659 = vmul.f32 %v5654, %v5658
    %v5660 = vadd.f32 %v5659, 0.05243302
    %v5661 = vmul.f32 %v5654, %v5660
    %v5662 = vadd.f32 %v5661, 0.18741608
    %v5663 = vmul.f32 %v5654, %v5662
    %v5664 = vadd.f32 %v5663, 1.1283791
    %v5665 = vmul.f32 %v5621, %v5664
    %v5666 = vmul.f32 %v5654, 3.8918573e-05
    %v5667 = vadd.f32 %v5666, 0.001143296
    %v5668 = vmul.f32 %v5654, %v5667
    %v5669 = vadd.f32 %v5668, 0.014752088
    %v5670 = vmul.f32 %v5654, %v5669
    %v5671 = vadd.f32 %v5670, 0.112945676
    %v5672 = vmul.f32 %v5654, %v5671
    %v5673 = vadd.f32 %v5672, 0.4994258
    %v5674 = vmul.f32 %v5654, %v5673
    %v5675 = vadd.f32 %v5674, 1.0
    %v5676 = vrcp.pop %v5675
    %v5677 = vmul.f32 %v5675, %v5676
    %v5678 = vsub.f32 1.0, %v5677
    %v5679 = vmul.f32 %v5676, %v5678
    %v5680 = vadd.f32 %v5676, %v5679
    %vm5681 = vweird.f32 %v5675
    %vm5682 = vweird.f32 %v5676
    %vm5683 = vmor %vm5681, %vm5682
    %v5684 = vsel %vm5683, %v5676, %v5680
    %v5685 = vand.u32 2147483647, %v5675
    %vm5686 = vcmp.eq.f32.partialorder %v5685, 8.507059e+37
    %v5687 = vand.u32 %v5675, 2147483648
    %v5688 = vor.u32 1.1754944e-38, %v5687
    %v5689 = vsel %vm5686, %v5688, %v5684
    %v5690 = vmul.f32 %v5665, %v5689
    %v5691 = vmin.f32 %v5690, 1.0
    %v5692 = vmax.f32 %v5691, -1.0
    %v5693 = vmul.f32 %v5622, %v5622
    %v5694 = vmin.f32 16.0, %v5693
    %v5695 = vmul.f32 %v5694, 2.1237322e-06
    %v5696 = vadd.f32 %v5695, 0.00028619796
    %v5697 = vmul.f32 %v5694, %v5696
    %v5698 = vadd.f32 %v5697, 0.0036580483
    %v5699 = vmul.f32 %v5694, %v5698
    %v5700 = vadd.f32 %v5699, 0.05243302
    %v5701 = vmul.f32 %v5694, %v5700
    %v5702 = vadd.f32 %v5701, 0.18741608
    %v5703 = vmul.f32 %v5694, %v5702
    %v5704 = vadd.f32 %v5703, 1.1283791
    %v5705 = vmul.f32 %v5622, %v5704
    %v5706 = vmul.f32 %v5694, 3.8918573e-05
    %v5707 = vadd.f32 %v5706, 0.001143296
    %v5708 = vmul.f32 %v5694, %v5707
    %v5709 = vadd.f32 %v5708, 0.014752088
    %v5710 = vmul.f32 %v5694, %v5709
    %v5711 = vadd.f32 %v5710, 0.112945676
    %v5712 = vmul.f32 %v5694, %v5711
    %v5713 = vadd.f32 %v5712, 0.4994258
    %v5714 = vmul.f32 %v5694, %v5713
    %v5715 = vadd.f32 %v5714, 1.0
    %v5716 = vrcp.pop %v5715
    %v5717 = vmul.f32 %v5715, %v5716
    %v5718 = vsub.f32 1.0, %v5717
    %v5719 = vmul.f32 %v5716, %v5718
    %v5720 = vadd.f32 %v5716, %v5719
    %vm5721 = vweird.f32 %v5715
    %vm5722 = vweird.f32 %v5716
    %vm5723 = vmor %vm5721, %vm5722
    %v5724 = vsel %vm5723, %v5716, %v5720
    %v5725 = vand.u32 2147483647, %v5715
    %vm5726 = vcmp.eq.f32.partialorder %v5725, 8.507059e+37
    %v5727 = vand.u32 %v5715, 2147483648
    %v5728 = vor.u32 1.1754944e-38, %v5727
    %v5729 = vsel %vm5726, %v5728, %v5724
    %v5730 = vmul.f32 %v5705, %v5729
    %v5731 = vmin.f32 %v5730, 1.0
    %v5732 = vmax.f32 %v5731, -1.0
    %v5733 = vmul.f32 %v5623, %v5623
    %v5734 = vmin.f32 16.0, %v5733
    %v5735 = vmul.f32 %v5734, 2.1237322e-06
    %v5736 = vadd.f32 %v5735, 0.00028619796
    %v5737 = vmul.f32 %v5734, %v5736
    %v5738 = vadd.f32 %v5737, 0.0036580483
    %v5739 = vmul.f32 %v5734, %v5738
    %v5740 = vadd.f32 %v5739, 0.05243302
    %v5741 = vmul.f32 %v5734, %v5740
    %v5742 = vadd.f32 %v5741, 0.18741608
    %v5743 = vmul.f32 %v5734, %v5742
    %v5744 = vadd.f32 %v5743, 1.1283791
    %v5745 = vmul.f32 %v5623, %v5744
    %v5746 = vmul.f32 %v5734, 3.8918573e-05
    %v5747 = vadd.f32 %v5746, 0.001143296
    %v5748 = vmul.f32 %v5734, %v5747
    %v5749 = vadd.f32 %v5748, 0.014752088
    %v5750 = vmul.f32 %v5734, %v5749
    %v5751 = vadd.f32 %v5750, 0.112945676
    %v5752 = vmul.f32 %v5734, %v5751
    %v5753 = vadd.f32 %v5752, 0.4994258
    %v5754 = vmul.f32 %v5734, %v5753
    %v5755 = vadd.f32 %v5754, 1.0
    %v5756 = vrcp.pop %v5755
    %v5757 = vmul.f32 %v5755, %v5756
    %v5758 = vsub.f32 1.0, %v5757
    %v5759 = vmul.f32 %v5756, %v5758
    %v5760 = vadd.f32 %v5756, %v5759
    %vm5761 = vweird.f32 %v5755
    %vm5762 = vweird.f32 %v5756
    %vm5763 = vmor %vm5761, %vm5762
    %v5764 = vsel %vm5763, %v5756, %v5760
    %v5765 = vand.u32 2147483647, %v5755
    %vm5766 = vcmp.eq.f32.partialorder %v5765, 8.507059e+37
    %v5767 = vand.u32 %v5755, 2147483648
    %v5768 = vor.u32 1.1754944e-38, %v5767
    %v5769 = vsel %vm5766, %v5768, %v5764
    %v5770 = vmul.f32 %v5745, %v5769
    %v5771 = vmin.f32 %v5770, 1.0
    %v5772 = vmax.f32 %v5771, -1.0
    %v5773 = vmul.f32 %v5624, %v5624
    %v5774 = vmin.f32 16.0, %v5773
    %v5775 = vmul.f32 %v5774, 2.1237322e-06
    %v5776 = vadd.f32 %v5775, 0.00028619796
    %v5777 = vmul.f32 %v5774, %v5776
    %v5778 = vadd.f32 %v5777, 0.0036580483
    %v5779 = vmul.f32 %v5774, %v5778
    %v5780 = vadd.f32 %v5779, 0.05243302
    %v5781 = vmul.f32 %v5774, %v5780
    %v5782 = vadd.f32 %v5781, 0.18741608
    %v5783 = vmul.f32 %v5774, %v5782
    %v5784 = vadd.f32 %v5783, 1.1283791
    %v5785 = vmul.f32 %v5624, %v5784
    %v5786 = vmul.f32 %v5774, 3.8918573e-05
    %v5787 = vadd.f32 %v5786, 0.001143296
    %v5788 = vmul.f32 %v5774, %v5787
    %v5789 = vadd.f32 %v5788, 0.014752088
    %v5790 = vmul.f32 %v5774, %v5789
    %v5791 = vadd.f32 %v5790, 0.112945676
    %v5792 = vmul.f32 %v5774, %v5791
    %v5793 = vadd.f32 %v5792, 0.4994258
    %v5794 = vmul.f32 %v5774, %v5793
    %v5795 = vadd.f32 %v5794, 1.0
    %v5796 = vrcp.pop %v5795
    %v5797 = vmul.f32 %v5795, %v5796
    %v5798 = vsub.f32 1.0, %v5797
    %v5799 = vmul.f32 %v5796, %v5798
    %v5800 = vadd.f32 %v5796, %v5799
    %vm5801 = vweird.f32 %v5795
    %vm5802 = vweird.f32 %v5796
    %vm5803 = vmor %vm5801, %vm5802
    %v5804 = vsel %vm5803, %v5796, %v5800
    %v5805 = vand.u32 2147483647, %v5795
    %vm5806 = vcmp.eq.f32.partialorder %v5805, 8.507059e+37
    %v5807 = vand.u32 %v5795, 2147483648
    %v5808 = vor.u32 1.1754944e-38, %v5807
    %v5809 = vsel %vm5806, %v5808, %v5804
    %v5810 = vmul.f32 %v5785, %v5809
    %v5811 = vmin.f32 %v5810, 1.0
    %v5812 = vmax.f32 %v5811, -1.0
    %v5813 = vmul.f32 %v5625, %v5625
    %v5814 = vmin.f32 16.0, %v5813
    %v5815 = vmul.f32 %v5814, 2.1237322e-06
    %v5816 = vadd.f32 %v5815, 0.00028619796
    %v5817 = vmul.f32 %v5814, %v5816
    %v5818 = vadd.f32 %v5817, 0.0036580483
    %v5819 = vmul.f32 %v5814, %v5818
    %v5820 = vadd.f32 %v5819, 0.05243302
    %v5821 = vmul.f32 %v5814, %v5820
    %v5822 = vadd.f32 %v5821, 0.18741608
    %v5823 = vmul.f32 %v5814, %v5822
    %v5824 = vadd.f32 %v5823, 1.1283791
    %v5825 = vmul.f32 %v5625, %v5824
    %v5826 = vmul.f32 %v5814, 3.8918573e-05
    %v5827 = vadd.f32 %v5826, 0.001143296
    %v5828 = vmul.f32 %v5814, %v5827
    %v5829 = vadd.f32 %v5828, 0.014752088
    %v5830 = vmul.f32 %v5814, %v5829
    %v5831 = vadd.f32 %v5830, 0.112945676
    %v5832 = vmul.f32 %v5814, %v5831
    %v5833 = vadd.f32 %v5832, 0.4994258
    %v5834 = vmul.f32 %v5814, %v5833
    %v5835 = vadd.f32 %v5834, 1.0
    %v5836 = vrcp.pop %v5835
    %v5837 = vmul.f32 %v5835, %v5836
    %v5838 = vsub.f32 1.0, %v5837
    %v5839 = vmul.f32 %v5836, %v5838
    %v5840 = vadd.f32 %v5836, %v5839
    %vm5841 = vweird.f32 %v5835
    %vm5842 = vweird.f32 %v5836
    %vm5843 = vmor %vm5841, %vm5842
    %v5844 = vsel %vm5843, %v5836, %v5840
    %v5845 = vand.u32 2147483647, %v5835
    %vm5846 = vcmp.eq.f32.partialorder %v5845, 8.507059e+37
    %v5847 = vand.u32 %v5835, 2147483648
    %v5848 = vor.u32 1.1754944e-38, %v5847
    %v5849 = vsel %vm5846, %v5848, %v5844
    %v5850 = vmul.f32 %v5825, %v5849
    %v5851 = vmin.f32 %v5850, 1.0
    %v5852 = vmax.f32 %v5851, -1.0
    %v5853 = vmul.f32 %v5626, %v5626
    %v5854 = vmin.f32 16.0, %v5853
    %v5855 = vmul.f32 %v5854, 2.1237322e-06
    %v5856 = vadd.f32 %v5855, 0.00028619796
    %v5857 = vmul.f32 %v5854, %v5856
    %v5858 = vadd.f32 %v5857, 0.0036580483
    %v5859 = vmul.f32 %v5854, %v5858
    %v5860 = vadd.f32 %v5859, 0.05243302
    %v5861 = vmul.f32 %v5854, %v5860
    %v5862 = vadd.f32 %v5861, 0.18741608
    %v5863 = vmul.f32 %v5854, %v5862
    %v5864 = vadd.f32 %v5863, 1.1283791
    %v5865 = vmul.f32 %v5626, %v5864
    %v5866 = vmul.f32 %v5854, 3.8918573e-05
    %v5867 = vadd.f32 %v5866, 0.001143296
    %v5868 = vmul.f32 %v5854, %v5867
    %v5869 = vadd.f32 %v5868, 0.014752088
    %v5870 = vmul.f32 %v5854, %v5869
    %v5871 = vadd.f32 %v5870, 0.112945676
    %v5872 = vmul.f32 %v5854, %v5871
    %v5873 = vadd.f32 %v5872, 0.4994258
    %v5874 = vmul.f32 %v5854, %v5873
    %v5875 = vadd.f32 %v5874, 1.0
    %v5876 = vrcp.pop %v5875
    %v5877 = vmul.f32 %v5875, %v5876
    %v5878 = vsub.f32 1.0, %v5877
    %v5879 = vmul.f32 %v5876, %v5878
    %v5880 = vadd.f32 %v5876, %v5879
    %vm5881 = vweird.f32 %v5875
    %vm5882 = vweird.f32 %v5876
    %vm5883 = vmor %vm5881, %vm5882
    %v5884 = vsel %vm5883, %v5876, %v5880
    %v5885 = vand.u32 2147483647, %v5875
    %vm5886 = vcmp.eq.f32.partialorder %v5885, 8.507059e+37
    %v5887 = vand.u32 %v5875, 2147483648
    %v5888 = vor.u32 1.1754944e-38, %v5887
    %v5889 = vsel %vm5886, %v5888, %v5884
    %v5890 = vmul.f32 %v5865, %v5889
    %v5891 = vmin.f32 %v5890, 1.0
    %v5892 = vmax.f32 %v5891, -1.0
    %v5893 = vmul.f32 %v5627, %v5627
    %v5894 = vmin.f32 16.0, %v5893
    %v5895 = vmul.f32 %v5894, 2.1237322e-06
    %v5896 = vadd.f32 %v5895, 0.00028619796
    %v5897 = vmul.f32 %v5894, %v5896
    %v5898 = vadd.f32 %v5897, 0.0036580483
    %v5899 = vmul.f32 %v5894, %v5898
    %v5900 = vadd.f32 %v5899, 0.05243302
    %v5901 = vmul.f32 %v5894, %v5900
    %v5902 = vadd.f32 %v5901, 0.18741608
    %v5903 = vmul.f32 %v5894, %v5902
    %v5904 = vadd.f32 %v5903, 1.1283791
    %v5905 = vmul.f32 %v5627, %v5904
    %v5906 = vmul.f32 %v5894, 3.8918573e-05
    %v5907 = vadd.f32 %v5906, 0.001143296
    %v5908 = vmul.f32 %v5894, %v5907
    %v5909 = vadd.f32 %v5908, 0.014752088
    %v5910 = vmul.f32 %v5894, %v5909
    %v5911 = vadd.f32 %v5910, 0.112945676
    %v5912 = vmul.f32 %v5894, %v5911
    %v5913 = vadd.f32 %v5912, 0.4994258
    %v5914 = vmul.f32 %v5894, %v5913
    %v5915 = vadd.f32 %v5914, 1.0
    %v5916 = vrcp.pop %v5915
    %v5917 = vmul.f32 %v5915, %v5916
    %v5918 = vsub.f32 1.0, %v5917
    %v5919 = vmul.f32 %v5916, %v5918
    %v5920 = vadd.f32 %v5916, %v5919
    %vm5921 = vweird.f32 %v5915
    %vm5922 = vweird.f32 %v5916
    %vm5923 = vmor %vm5921, %vm5922
    %v5924 = vsel %vm5923, %v5916, %v5920
    %v5925 = vand.u32 2147483647, %v5915
    %vm5926 = vcmp.eq.f32.partialorder %v5925, 8.507059e+37
    %v5927 = vand.u32 %v5915, 2147483648
    %v5928 = vor.u32 1.1754944e-38, %v5927
    %v5929 = vsel %vm5926, %v5928, %v5924
    %v5930 = vmul.f32 %v5905, %v5929
    %v5931 = vmin.f32 %v5930, 1.0
    %v5932 = vmax.f32 %v5931, -1.0
    %v5933 = vmul.f32 %v5628, %v5628
    %v5934 = vmin.f32 16.0, %v5933
    %v5935 = vmul.f32 %v5934, 2.1237322e-06
    %v5936 = vadd.f32 %v5935, 0.00028619796
    %v5937 = vmul.f32 %v5934, %v5936
    %v5938 = vadd.f32 %v5937, 0.0036580483
    %v5939 = vmul.f32 %v5934, %v5938
    %v5940 = vadd.f32 %v5939, 0.05243302
    %v5941 = vmul.f32 %v5934, %v5940
    %v5942 = vadd.f32 %v5941, 0.18741608
    %v5943 = vmul.f32 %v5934, %v5942
    %v5944 = vadd.f32 %v5943, 1.1283791
    %v5945 = vmul.f32 %v5628, %v5944
    %v5946 = vmul.f32 %v5934, 3.8918573e-05
    %v5947 = vadd.f32 %v5946, 0.001143296
    %v5948 = vmul.f32 %v5934, %v5947
    %v5949 = vadd.f32 %v5948, 0.014752088
    %v5950 = vmul.f32 %v5934, %v5949
    %v5951 = vadd.f32 %v5950, 0.112945676
    %v5952 = vmul.f32 %v5934, %v5951
    %v5953 = vadd.f32 %v5952, 0.4994258
    %v5954 = vmul.f32 %v5934, %v5953
    %v5955 = vadd.f32 %v5954, 1.0
    %v5956 = vrcp.pop %v5955
    %v5957 = vmul.f32 %v5955, %v5956
    %v5958 = vsub.f32 1.0, %v5957
    %v5959 = vmul.f32 %v5956, %v5958
    %v5960 = vadd.f32 %v5956, %v5959
    %vm5961 = vweird.f32 %v5955
    %vm5962 = vweird.f32 %v5956
    %vm5963 = vmor %vm5961, %vm5962
    %v5964 = vsel %vm5963, %v5956, %v5960
    %v5965 = vand.u32 2147483647, %v5955
    %vm5966 = vcmp.eq.f32.partialorder %v5965, 8.507059e+37
    %v5967 = vand.u32 %v5955, 2147483648
    %v5968 = vor.u32 1.1754944e-38, %v5967
    %v5969 = vsel %vm5966, %v5968, %v5964
    %v5970 = vmul.f32 %v5945, %v5969
    %v5971 = vmin.f32 %v5970, 1.0
    %v5972 = vmax.f32 %v5971, -1.0
    %v5973 = vmul.f32 %v5629, %v5629
    %v5974 = vmin.f32 16.0, %v5973
    %v5975 = vmul.f32 %v5974, 2.1237322e-06
    %v5976 = vadd.f32 %v5975, 0.00028619796
    %v5977 = vmul.f32 %v5974, %v5976
    %v5978 = vadd.f32 %v5977, 0.0036580483
    %v5979 = vmul.f32 %v5974, %v5978
    %v5980 = vadd.f32 %v5979, 0.05243302
    %v5981 = vmul.f32 %v5974, %v5980
    %v5982 = vadd.f32 %v5981, 0.18741608
    %v5983 = vmul.f32 %v5974, %v5982
    %v5984 = vadd.f32 %v5983, 1.1283791
    %v5985 = vmul.f32 %v5629, %v5984
    %v5986 = vmul.f32 %v5974, 3.8918573e-05
    %v5987 = vadd.f32 %v5986, 0.001143296
    %v5988 = vmul.f32 %v5974, %v5987
    %v5989 = vadd.f32 %v5988, 0.014752088
    %v5990 = vmul.f32 %v5974, %v5989
    %v5991 = vadd.f32 %v5990, 0.112945676
    %v5992 = vmul.f32 %v5974, %v5991
    %v5993 = vadd.f32 %v5992, 0.4994258
    %v5994 = vmul.f32 %v5974, %v5993
    %v5995 = vadd.f32 %v5994, 1.0
    %v5996 = vrcp.pop %v5995
    %v5997 = vmul.f32 %v5995, %v5996
    %v5998 = vsub.f32 1.0, %v5997
    %v5999 = vmul.f32 %v5996, %v5998
    %v6000 = vadd.f32 %v5996, %v5999
    %vm6001 = vweird.f32 %v5995
    %vm6002 = vweird.f32 %v5996
    %vm6003 = vmor %vm6001, %vm6002
    %v6004 = vsel %vm6003, %v5996, %v6000
    %v6005 = vand.u32 2147483647, %v5995
    %vm6006 = vcmp.eq.f32.partialorder %v6005, 8.507059e+37
    %v6007 = vand.u32 %v5995, 2147483648
    %v6008 = vor.u32 1.1754944e-38, %v6007
    %v6009 = vsel %vm6006, %v6008, %v6004
    %v6010 = vmul.f32 %v5985, %v6009
    %v6011 = vmin.f32 %v6010, 1.0
    %v6012 = vmax.f32 %v6011, -1.0
    %v6013 = vmul.f32 %v5630, %v5630
    %v6014 = vmin.f32 16.0, %v6013
    %v6015 = vmul.f32 %v6014, 2.1237322e-06
    %v6016 = vadd.f32 %v6015, 0.00028619796
    %v6017 = vmul.f32 %v6014, %v6016
    %v6018 = vadd.f32 %v6017, 0.0036580483
    %v6019 = vmul.f32 %v6014, %v6018
    %v6020 = vadd.f32 %v6019, 0.05243302
    %v6021 = vmul.f32 %v6014, %v6020
    %v6022 = vadd.f32 %v6021, 0.18741608
    %v6023 = vmul.f32 %v6014, %v6022
    %v6024 = vadd.f32 %v6023, 1.1283791
    %v6025 = vmul.f32 %v5630, %v6024
    %v6026 = vmul.f32 %v6014, 3.8918573e-05
    %v6027 = vadd.f32 %v6026, 0.001143296
    %v6028 = vmul.f32 %v6014, %v6027
    %v6029 = vadd.f32 %v6028, 0.014752088
    %v6030 = vmul.f32 %v6014, %v6029
    %v6031 = vadd.f32 %v6030, 0.112945676
    %v6032 = vmul.f32 %v6014, %v6031
    %v6033 = vadd.f32 %v6032, 0.4994258
    %v6034 = vmul.f32 %v6014, %v6033
    %v6035 = vadd.f32 %v6034, 1.0
    %v6036 = vrcp.pop %v6035
    %v6037 = vmul.f32 %v6035, %v6036
    %v6038 = vsub.f32 1.0, %v6037
    %v6039 = vmul.f32 %v6036, %v6038
    %v6040 = vadd.f32 %v6036, %v6039
    %vm6041 = vweird.f32 %v6035
    %vm6042 = vweird.f32 %v6036
    %vm6043 = vmor %vm6041, %vm6042
    %v6044 = vsel %vm6043, %v6036, %v6040
    %v6045 = vand.u32 2147483647, %v6035
    %vm6046 = vcmp.eq.f32.partialorder %v6045, 8.507059e+37
    %v6047 = vand.u32 %v6035, 2147483648
    %v6048 = vor.u32 1.1754944e-38, %v6047
    %v6049 = vsel %vm6046, %v6048, %v6044
    %v6050 = vmul.f32 %v6025, %v6049
    %v6051 = vmin.f32 %v6050, 1.0
    %v6052 = vmax.f32 %v6051, -1.0
    %v6053 = vmul.f32 %v5631, %v5631
    %v6054 = vmin.f32 16.0, %v6053
    %v6055 = vmul.f32 %v6054, 2.1237322e-06
    %v6056 = vadd.f32 %v6055, 0.00028619796
    %v6057 = vmul.f32 %v6054, %v6056
    %v6058 = vadd.f32 %v6057, 0.0036580483
    %v6059 = vmul.f32 %v6054, %v6058
    %v6060 = vadd.f32 %v6059, 0.05243302
    %v6061 = vmul.f32 %v6054, %v6060
    %v6062 = vadd.f32 %v6061, 0.18741608
    %v6063 = vmul.f32 %v6054, %v6062
    %v6064 = vadd.f32 %v6063, 1.1283791
    %v6065 = vmul.f32 %v5631, %v6064
    %v6066 = vmul.f32 %v6054, 3.8918573e-05
    %v6067 = vadd.f32 %v6066, 0.001143296
    %v6068 = vmul.f32 %v6054, %v6067
    %v6069 = vadd.f32 %v6068, 0.014752088
    %v6070 = vmul.f32 %v6054, %v6069
    %v6071 = vadd.f32 %v6070, 0.112945676
    %v6072 = vmul.f32 %v6054, %v6071
    %v6073 = vadd.f32 %v6072, 0.4994258
    %v6074 = vmul.f32 %v6054, %v6073
    %v6075 = vadd.f32 %v6074, 1.0
    %v6076 = vrcp.pop %v6075
    %v6077 = vmul.f32 %v6075, %v6076
    %v6078 = vsub.f32 1.0, %v6077
    %v6079 = vmul.f32 %v6076, %v6078
    %v6080 = vadd.f32 %v6076, %v6079
    %vm6081 = vweird.f32 %v6075
    %vm6082 = vweird.f32 %v6076
    %vm6083 = vmor %vm6081, %vm6082
    %v6084 = vsel %vm6083, %v6076, %v6080
    %v6085 = vand.u32 2147483647, %v6075
    %vm6086 = vcmp.eq.f32.partialorder %v6085, 8.507059e+37
    %v6087 = vand.u32 %v6075, 2147483648
    %v6088 = vor.u32 1.1754944e-38, %v6087
    %v6089 = vsel %vm6086, %v6088, %v6084
    %v6090 = vmul.f32 %v6065, %v6089
    %v6091 = vmin.f32 %v6090, 1.0
    %v6092 = vmax.f32 %v6091, -1.0
    %v6093 = vmul.f32 %v5632, %v5632
    %v6094 = vmin.f32 16.0, %v6093
    %v6095 = vmul.f32 %v6094, 2.1237322e-06
    %v6096 = vadd.f32 %v6095, 0.00028619796
    %v6097 = vmul.f32 %v6094, %v6096
    %v6098 = vadd.f32 %v6097, 0.0036580483
    %v6099 = vmul.f32 %v6094, %v6098
    %v6100 = vadd.f32 %v6099, 0.05243302
    %v6101 = vmul.f32 %v6094, %v6100
    %v6102 = vadd.f32 %v6101, 0.18741608
    %v6103 = vmul.f32 %v6094, %v6102
    %v6104 = vadd.f32 %v6103, 1.1283791
    %v6105 = vmul.f32 %v5632, %v6104
    %v6106 = vmul.f32 %v6094, 3.8918573e-05
    %v6107 = vadd.f32 %v6106, 0.001143296
    %v6108 = vmul.f32 %v6094, %v6107
    %v6109 = vadd.f32 %v6108, 0.014752088
    %v6110 = vmul.f32 %v6094, %v6109
    %v6111 = vadd.f32 %v6110, 0.112945676
    %v6112 = vmul.f32 %v6094, %v6111
    %v6113 = vadd.f32 %v6112, 0.4994258
    %v6114 = vmul.f32 %v6094, %v6113
    %v6115 = vadd.f32 %v6114, 1.0
    %v6116 = vrcp.pop %v6115
    %v6117 = vmul.f32 %v6115, %v6116
    %v6118 = vsub.f32 1.0, %v6117
    %v6119 = vmul.f32 %v6116, %v6118
    %v6120 = vadd.f32 %v6116, %v6119
    %vm6121 = vweird.f32 %v6115
    %vm6122 = vweird.f32 %v6116
    %vm6123 = vmor %vm6121, %vm6122
    %v6124 = vsel %vm6123, %v6116, %v6120
    %v6125 = vand.u32 2147483647, %v6115
    %vm6126 = vcmp.eq.f32.partialorder %v6125, 8.507059e+37
    %v6127 = vand.u32 %v6115, 2147483648
    %v6128 = vor.u32 1.1754944e-38, %v6127
    %v6129 = vsel %vm6126, %v6128, %v6124
    %v6130 = vmul.f32 %v6105, %v6129
    %v6131 = vmin.f32 %v6130, 1.0
    %v6132 = vmax.f32 %v6131, -1.0
    %v6133 = vmul.f32 %v5633, %v5633
    %v6134 = vmin.f32 16.0, %v6133
    %v6135 = vmul.f32 %v6134, 2.1237322e-06
    %v6136 = vadd.f32 %v6135, 0.00028619796
    %v6137 = vmul.f32 %v6134, %v6136
    %v6138 = vadd.f32 %v6137, 0.0036580483
    %v6139 = vmul.f32 %v6134, %v6138
    %v6140 = vadd.f32 %v6139, 0.05243302
    %v6141 = vmul.f32 %v6134, %v6140
    %v6142 = vadd.f32 %v6141, 0.18741608
    %v6143 = vmul.f32 %v6134, %v6142
    %v6144 = vadd.f32 %v6143, 1.1283791
    %v6145 = vmul.f32 %v5633, %v6144
    %v6146 = vmul.f32 %v6134, 3.8918573e-05
    %v6147 = vadd.f32 %v6146, 0.001143296
    %v6148 = vmul.f32 %v6134, %v6147
    %v6149 = vadd.f32 %v6148, 0.014752088
    %v6150 = vmul.f32 %v6134, %v6149
    %v6151 = vadd.f32 %v6150, 0.112945676
    %v6152 = vmul.f32 %v6134, %v6151
    %v6153 = vadd.f32 %v6152, 0.4994258
    %v6154 = vmul.f32 %v6134, %v6153
    %v6155 = vadd.f32 %v6154, 1.0
    %v6156 = vrcp.pop %v6155
    %v6157 = vmul.f32 %v6155, %v6156
    %v6158 = vsub.f32 1.0, %v6157
    %v6159 = vmul.f32 %v6156, %v6158
    %v6160 = vadd.f32 %v6156, %v6159
    %vm6161 = vweird.f32 %v6155
    %vm6162 = vweird.f32 %v6156
    %vm6163 = vmor %vm6161, %vm6162
    %v6164 = vsel %vm6163, %v6156, %v6160
    %v6165 = vand.u32 2147483647, %v6155
    %vm6166 = vcmp.eq.f32.partialorder %v6165, 8.507059e+37
    %v6167 = vand.u32 %v6155, 2147483648
    %v6168 = vor.u32 1.1754944e-38, %v6167
    %v6169 = vsel %vm6166, %v6168, %v6164
    %v6170 = vmul.f32 %v6145, %v6169
    %v6171 = vmin.f32 %v6170, 1.0
    %v6172 = vmax.f32 %v6171, -1.0
    %v6173 = vmul.f32 %v5634, %v5634
    %v6174 = vmin.f32 16.0, %v6173
    %v6175 = vmul.f32 %v6174, 2.1237322e-06
    %v6176 = vadd.f32 %v6175, 0.00028619796
    %v6177 = vmul.f32 %v6174, %v6176
    %v6178 = vadd.f32 %v6177, 0.0036580483
    %v6179 = vmul.f32 %v6174, %v6178
    %v6180 = vadd.f32 %v6179, 0.05243302
    %v6181 = vmul.f32 %v6174, %v6180
    %v6182 = vadd.f32 %v6181, 0.18741608
    %v6183 = vmul.f32 %v6174, %v6182
    %v6184 = vadd.f32 %v6183, 1.1283791
    %v6185 = vmul.f32 %v5634, %v6184
    %v6186 = vmul.f32 %v6174, 3.8918573e-05
    %v6187 = vadd.f32 %v6186, 0.001143296
    %v6188 = vmul.f32 %v6174, %v6187
    %v6189 = vadd.f32 %v6188, 0.014752088
    %v6190 = vmul.f32 %v6174, %v6189
    %v6191 = vadd.f32 %v6190, 0.112945676
    %v6192 = vmul.f32 %v6174, %v6191
    %v6193 = vadd.f32 %v6192, 0.4994258
    %v6194 = vmul.f32 %v6174, %v6193
    %v6195 = vadd.f32 %v6194, 1.0
    %v6196 = vrcp.pop %v6195
    %v6197 = vmul.f32 %v6195, %v6196
    %v6198 = vsub.f32 1.0, %v6197
    %v6199 = vmul.f32 %v6196, %v6198
    %v6200 = vadd.f32 %v6196, %v6199
    %vm6201 = vweird.f32 %v6195
    %vm6202 = vweird.f32 %v6196
    %vm6203 = vmor %vm6201, %vm6202
    %v6204 = vsel %vm6203, %v6196, %v6200
    %v6205 = vand.u32 2147483647, %v6195
    %vm6206 = vcmp.eq.f32.partialorder %v6205, 8.507059e+37
    %v6207 = vand.u32 %v6195, 2147483648
    %v6208 = vor.u32 1.1754944e-38, %v6207
    %v6209 = vsel %vm6206, %v6208, %v6204
    %v6210 = vmul.f32 %v6185, %v6209
    %v6211 = vmin.f32 %v6210, 1.0
    %v6212 = vmax.f32 %v6211, -1.0
    %v6213 = vmul.f32 %v5635, %v5635
    %v6214 = vmin.f32 16.0, %v6213
    %v6215 = vmul.f32 %v6214, 2.1237322e-06
    %v6216 = vadd.f32 %v6215, 0.00028619796
    %v6217 = vmul.f32 %v6214, %v6216
    %v6218 = vadd.f32 %v6217, 0.0036580483
    %v6219 = vmul.f32 %v6214, %v6218
    %v6220 = vadd.f32 %v6219, 0.05243302
    %v6221 = vmul.f32 %v6214, %v6220
    %v6222 = vadd.f32 %v6221, 0.18741608
    %v6223 = vmul.f32 %v6214, %v6222
    %v6224 = vadd.f32 %v6223, 1.1283791
    %v6225 = vmul.f32 %v5635, %v6224
    %v6226 = vmul.f32 %v6214, 3.8918573e-05
    %v6227 = vadd.f32 %v6226, 0.001143296
    %v6228 = vmul.f32 %v6214, %v6227
    %v6229 = vadd.f32 %v6228, 0.014752088
    %v6230 = vmul.f32 %v6214, %v6229
    %v6231 = vadd.f32 %v6230, 0.112945676
    %v6232 = vmul.f32 %v6214, %v6231
    %v6233 = vadd.f32 %v6232, 0.4994258
    %v6234 = vmul.f32 %v6214, %v6233
    %v6235 = vadd.f32 %v6234, 1.0
    %v6236 = vrcp.pop %v6235
    %v6237 = vmul.f32 %v6235, %v6236
    %v6238 = vsub.f32 1.0, %v6237
    %v6239 = vmul.f32 %v6236, %v6238
    %v6240 = vadd.f32 %v6236, %v6239
    %vm6241 = vweird.f32 %v6235
    %vm6242 = vweird.f32 %v6236
    %vm6243 = vmor %vm6241, %vm6242
    %v6244 = vsel %vm6243, %v6236, %v6240
    %v6245 = vand.u32 2147483647, %v6235
    %vm6246 = vcmp.eq.f32.partialorder %v6245, 8.507059e+37
    %v6247 = vand.u32 %v6235, 2147483648
    %v6248 = vor.u32 1.1754944e-38, %v6247
    %v6249 = vsel %vm6246, %v6248, %v6244
    %v6250 = vmul.f32 %v6225, %v6249
    %v6251 = vmin.f32 %v6250, 1.0
    %v6252 = vmax.f32 %v6251, -1.0
    %v6253 = vmul.f32 %v5636, %v5636
    %v6254 = vmin.f32 16.0, %v6253
    %v6255 = vmul.f32 %v6254, 2.1237322e-06
    %v6256 = vadd.f32 %v6255, 0.00028619796
    %v6257 = vmul.f32 %v6254, %v6256
    %v6258 = vadd.f32 %v6257, 0.0036580483
    %v6259 = vmul.f32 %v6254, %v6258
    %v6260 = vadd.f32 %v6259, 0.05243302
    %v6261 = vmul.f32 %v6254, %v6260
    %v6262 = vadd.f32 %v6261, 0.18741608
    %v6263 = vmul.f32 %v6254, %v6262
    %v6264 = vadd.f32 %v6263, 1.1283791
    %v6265 = vmul.f32 %v5636, %v6264
    %v6266 = vmul.f32 %v6254, 3.8918573e-05
    %v6267 = vadd.f32 %v6266, 0.001143296
    %v6268 = vmul.f32 %v6254, %v6267
    %v6269 = vadd.f32 %v6268, 0.014752088
    %v6270 = vmul.f32 %v6254, %v6269
    %v6271 = vadd.f32 %v6270, 0.112945676
    %v6272 = vmul.f32 %v6254, %v6271
    %v6273 = vadd.f32 %v6272, 0.4994258
    %v6274 = vmul.f32 %v6254, %v6273
    %v6275 = vadd.f32 %v6274, 1.0
    %v6276 = vrcp.pop %v6275
    %v6277 = vmul.f32 %v6275, %v6276
    %v6278 = vsub.f32 1.0, %v6277
    %v6279 = vmul.f32 %v6276, %v6278
    %v6280 = vadd.f32 %v6276, %v6279
    %vm6281 = vweird.f32 %v6275
    %vm6282 = vweird.f32 %v6276
    %vm6283 = vmor %vm6281, %vm6282
    %v6284 = vsel %vm6283, %v6276, %v6280
    %v6285 = vand.u32 2147483647, %v6275
    %vm6286 = vcmp.eq.f32.partialorder %v6285, 8.507059e+37
    %v6287 = vand.u32 %v6275, 2147483648
    %v6288 = vor.u32 1.1754944e-38, %v6287
    %v6289 = vsel %vm6286, %v6288, %v6284
    %v6290 = vmul.f32 %v6265, %v6289
    %v6291 = vmin.f32 %v6290, 1.0
    %v6292 = vmax.f32 %v6291, -1.0
    %v6293 = vmul.f32 %v5637, %v5637
    %v6294 = vmin.f32 16.0, %v6293
    %v6295 = vmul.f32 %v6294, 2.1237322e-06
    %v6296 = vadd.f32 %v6295, 0.00028619796
    %v6297 = vmul.f32 %v6294, %v6296
    %v6298 = vadd.f32 %v6297, 0.0036580483
    %v6299 = vmul.f32 %v6294, %v6298
    %v6300 = vadd.f32 %v6299, 0.05243302
    %v6301 = vmul.f32 %v6294, %v6300
    %v6302 = vadd.f32 %v6301, 0.18741608
    %v6303 = vmul.f32 %v6294, %v6302
    %v6304 = vadd.f32 %v6303, 1.1283791
    %v6305 = vmul.f32 %v5637, %v6304
    %v6306 = vmul.f32 %v6294, 3.8918573e-05
    %v6307 = vadd.f32 %v6306, 0.001143296
    %v6308 = vmul.f32 %v6294, %v6307
    %v6309 = vadd.f32 %v6308, 0.014752088
    %v6310 = vmul.f32 %v6294, %v6309
    %v6311 = vadd.f32 %v6310, 0.112945676
    %v6312 = vmul.f32 %v6294, %v6311
    %v6313 = vadd.f32 %v6312, 0.4994258
    %v6314 = vmul.f32 %v6294, %v6313
    %v6315 = vadd.f32 %v6314, 1.0
    %v6316 = vrcp.pop %v6315
    %v6317 = vmul.f32 %v6315, %v6316
    %v6318 = vsub.f32 1.0, %v6317
    %v6319 = vmul.f32 %v6316, %v6318
    %v6320 = vadd.f32 %v6316, %v6319
    %vm6321 = vweird.f32 %v6315
    %vm6322 = vweird.f32 %v6316
    %vm6323 = vmor %vm6321, %vm6322
    %v6324 = vsel %vm6323, %v6316, %v6320
    %v6325 = vand.u32 2147483647, %v6315
    %vm6326 = vcmp.eq.f32.partialorder %v6325, 8.507059e+37
    %v6327 = vand.u32 %v6315, 2147483648
    %v6328 = vor.u32 1.1754944e-38, %v6327
    %v6329 = vsel %vm6326, %v6328, %v6324
    %v6330 = vmul.f32 %v6305, %v6329
    %v6331 = vmin.f32 %v6330, 1.0
    %v6332 = vmax.f32 %v6331, -1.0
    %v6333 = vmul.f32 %v5638, %v5638
    %v6334 = vmin.f32 16.0, %v6333
    %v6335 = vmul.f32 %v6334, 2.1237322e-06
    %v6336 = vadd.f32 %v6335, 0.00028619796
    %v6337 = vmul.f32 %v6334, %v6336
    %v6338 = vadd.f32 %v6337, 0.0036580483
    %v6339 = vmul.f32 %v6334, %v6338
    %v6340 = vadd.f32 %v6339, 0.05243302
    %v6341 = vmul.f32 %v6334, %v6340
    %v6342 = vadd.f32 %v6341, 0.18741608
    %v6343 = vmul.f32 %v6334, %v6342
    %v6344 = vadd.f32 %v6343, 1.1283791
    %v6345 = vmul.f32 %v5638, %v6344
    %v6346 = vmul.f32 %v6334, 3.8918573e-05
    %v6347 = vadd.f32 %v6346, 0.001143296
    %v6348 = vmul.f32 %v6334, %v6347
    %v6349 = vadd.f32 %v6348, 0.014752088
    %v6350 = vmul.f32 %v6334, %v6349
    %v6351 = vadd.f32 %v6350, 0.112945676
    %v6352 = vmul.f32 %v6334, %v6351
    %v6353 = vadd.f32 %v6352, 0.4994258
    %v6354 = vmul.f32 %v6334, %v6353
    %v6355 = vadd.f32 %v6354, 1.0
    %v6356 = vrcp.pop %v6355
    %v6357 = vmul.f32 %v6355, %v6356
    %v6358 = vsub.f32 1.0, %v6357
    %v6359 = vmul.f32 %v6356, %v6358
    %v6360 = vadd.f32 %v6356, %v6359
    %vm6361 = vweird.f32 %v6355
    %vm6362 = vweird.f32 %v6356
    %vm6363 = vmor %vm6361, %vm6362
    %v6364 = vsel %vm6363, %v6356, %v6360
    %v6365 = vand.u32 2147483647, %v6355
    %vm6366 = vcmp.eq.f32.partialorder %v6365, 8.507059e+37
    %v6367 = vand.u32 %v6355, 2147483648
    %v6368 = vor.u32 1.1754944e-38, %v6367
    %v6369 = vsel %vm6366, %v6368, %v6364
    %v6370 = vmul.f32 %v6345, %v6369
    %v6371 = vmin.f32 %v6370, 1.0
    %v6372 = vmax.f32 %v6371, -1.0
    %v6373 = vmul.f32 %v5639, %v5639
    %v6374 = vmin.f32 16.0, %v6373
    %v6375 = vmul.f32 %v6374, 2.1237322e-06
    %v6376 = vadd.f32 %v6375, 0.00028619796
    %v6377 = vmul.f32 %v6374, %v6376
    %v6378 = vadd.f32 %v6377, 0.0036580483
    %v6379 = vmul.f32 %v6374, %v6378
    %v6380 = vadd.f32 %v6379, 0.05243302
    %v6381 = vmul.f32 %v6374, %v6380
    %v6382 = vadd.f32 %v6381, 0.18741608
    %v6383 = vmul.f32 %v6374, %v6382
    %v6384 = vadd.f32 %v6383, 1.1283791
    %v6385 = vmul.f32 %v5639, %v6384
    %v6386 = vmul.f32 %v6374, 3.8918573e-05
    %v6387 = vadd.f32 %v6386, 0.001143296
    %v6388 = vmul.f32 %v6374, %v6387
    %v6389 = vadd.f32 %v6388, 0.014752088
    %v6390 = vmul.f32 %v6374, %v6389
    %v6391 = vadd.f32 %v6390, 0.112945676
    %v6392 = vmul.f32 %v6374, %v6391
    %v6393 = vadd.f32 %v6392, 0.4994258
    %v6394 = vmul.f32 %v6374, %v6393
    %v6395 = vadd.f32 %v6394, 1.0
    %v6396 = vrcp.pop %v6395
    %v6397 = vmul.f32 %v6395, %v6396
    %v6398 = vsub.f32 1.0, %v6397
    %v6399 = vmul.f32 %v6396, %v6398
    %v6400 = vadd.f32 %v6396, %v6399
    %vm6401 = vweird.f32 %v6395
    %vm6402 = vweird.f32 %v6396
    %vm6403 = vmor %vm6401, %vm6402
    %v6404 = vsel %vm6403, %v6396, %v6400
    %v6405 = vand.u32 2147483647, %v6395
    %vm6406 = vcmp.eq.f32.partialorder %v6405, 8.507059e+37
    %v6407 = vand.u32 %v6395, 2147483648
    %v6408 = vor.u32 1.1754944e-38, %v6407
    %v6409 = vsel %vm6406, %v6408, %v6404
    %v6410 = vmul.f32 %v6385, %v6409
    %v6411 = vmin.f32 %v6410, 1.0
    %v6412 = vmax.f32 %v6411, -1.0
    %v6413 = vmul.f32 %v5640, %v5640
    %v6414 = vmin.f32 16.0, %v6413
    %v6415 = vmul.f32 %v6414, 2.1237322e-06
    %v6416 = vadd.f32 %v6415, 0.00028619796
    %v6417 = vmul.f32 %v6414, %v6416
    %v6418 = vadd.f32 %v6417, 0.0036580483
    %v6419 = vmul.f32 %v6414, %v6418
    %v6420 = vadd.f32 %v6419, 0.05243302
    %v6421 = vmul.f32 %v6414, %v6420
    %v6422 = vadd.f32 %v6421, 0.18741608
    %v6423 = vmul.f32 %v6414, %v6422
    %v6424 = vadd.f32 %v6423, 1.1283791
    %v6425 = vmul.f32 %v5640, %v6424
    %v6426 = vmul.f32 %v6414, 3.8918573e-05
    %v6427 = vadd.f32 %v6426, 0.001143296
    %v6428 = vmul.f32 %v6414, %v6427
    %v6429 = vadd.f32 %v6428, 0.014752088
    %v6430 = vmul.f32 %v6414, %v6429
    %v6431 = vadd.f32 %v6430, 0.112945676
    %v6432 = vmul.f32 %v6414, %v6431
    %v6433 = vadd.f32 %v6432, 0.4994258
    %v6434 = vmul.f32 %v6414, %v6433
    %v6435 = vadd.f32 %v6434, 1.0
    %v6436 = vrcp.pop %v6435
    %v6437 = vmul.f32 %v6435, %v6436
    %v6438 = vsub.f32 1.0, %v6437
    %v6439 = vmul.f32 %v6436, %v6438
    %v6440 = vadd.f32 %v6436, %v6439
    %vm6441 = vweird.f32 %v6435
    %vm6442 = vweird.f32 %v6436
    %vm6443 = vmor %vm6441, %vm6442
    %v6444 = vsel %vm6443, %v6436, %v6440
    %v6445 = vand.u32 2147483647, %v6435
    %vm6446 = vcmp.eq.f32.partialorder %v6445, 8.507059e+37
    %v6447 = vand.u32 %v6435, 2147483648
    %v6448 = vor.u32 1.1754944e-38, %v6447
    %v6449 = vsel %vm6446, %v6448, %v6444
    %v6450 = vmul.f32 %v6425, %v6449
    %v6451 = vmin.f32 %v6450, 1.0
    %v6452 = vmax.f32 %v6451, -1.0
    %v6453 = vmul.f32 %v5641, %v5641
    %v6454 = vmin.f32 16.0, %v6453
    %v6455 = vmul.f32 %v6454, 2.1237322e-06
    %v6456 = vadd.f32 %v6455, 0.00028619796
    %v6457 = vmul.f32 %v6454, %v6456
    %v6458 = vadd.f32 %v6457, 0.0036580483
    %v6459 = vmul.f32 %v6454, %v6458
    %v6460 = vadd.f32 %v6459, 0.05243302
    %v6461 = vmul.f32 %v6454, %v6460
    %v6462 = vadd.f32 %v6461, 0.18741608
    %v6463 = vmul.f32 %v6454, %v6462
    %v6464 = vadd.f32 %v6463, 1.1283791
    %v6465 = vmul.f32 %v5641, %v6464
    %v6466 = vmul.f32 %v6454, 3.8918573e-05
    %v6467 = vadd.f32 %v6466, 0.001143296
    %v6468 = vmul.f32 %v6454, %v6467
    %v6469 = vadd.f32 %v6468, 0.014752088
    %v6470 = vmul.f32 %v6454, %v6469
    %v6471 = vadd.f32 %v6470, 0.112945676
    %v6472 = vmul.f32 %v6454, %v6471
    %v6473 = vadd.f32 %v6472, 0.4994258
    %v6474 = vmul.f32 %v6454, %v6473
    %v6475 = vadd.f32 %v6474, 1.0
    %v6476 = vrcp.pop %v6475
    %v6477 = vmul.f32 %v6475, %v6476
    %v6478 = vsub.f32 1.0, %v6477
    %v6479 = vmul.f32 %v6476, %v6478
    %v6480 = vadd.f32 %v6476, %v6479
    %vm6481 = vweird.f32 %v6475
    %vm6482 = vweird.f32 %v6476
    %vm6483 = vmor %vm6481, %vm6482
    %v6484 = vsel %vm6483, %v6476, %v6480
    %v6485 = vand.u32 2147483647, %v6475
    %vm6486 = vcmp.eq.f32.partialorder %v6485, 8.507059e+37
    %v6487 = vand.u32 %v6475, 2147483648
    %v6488 = vor.u32 1.1754944e-38, %v6487
    %v6489 = vsel %vm6486, %v6488, %v6484
    %v6490 = vmul.f32 %v6465, %v6489
    %v6491 = vmin.f32 %v6490, 1.0
    %v6492 = vmax.f32 %v6491, -1.0
    %v6493 = vmul.f32 %v5642, %v5642
    %v6494 = vmin.f32 16.0, %v6493
    %v6495 = vmul.f32 %v6494, 2.1237322e-06
    %v6496 = vadd.f32 %v6495, 0.00028619796
    %v6497 = vmul.f32 %v6494, %v6496
    %v6498 = vadd.f32 %v6497, 0.0036580483
    %v6499 = vmul.f32 %v6494, %v6498
    %v6500 = vadd.f32 %v6499, 0.05243302
    %v6501 = vmul.f32 %v6494, %v6500
    %v6502 = vadd.f32 %v6501, 0.18741608
    %v6503 = vmul.f32 %v6494, %v6502
    %v6504 = vadd.f32 %v6503, 1.1283791
    %v6505 = vmul.f32 %v5642, %v6504
    %v6506 = vmul.f32 %v6494, 3.8918573e-05
    %v6507 = vadd.f32 %v6506, 0.001143296
    %v6508 = vmul.f32 %v6494, %v6507
    %v6509 = vadd.f32 %v6508, 0.014752088
    %v6510 = vmul.f32 %v6494, %v6509
    %v6511 = vadd.f32 %v6510, 0.112945676
    %v6512 = vmul.f32 %v6494, %v6511
    %v6513 = vadd.f32 %v6512, 0.4994258
    %v6514 = vmul.f32 %v6494, %v6513
    %v6515 = vadd.f32 %v6514, 1.0
    %v6516 = vrcp.pop %v6515
    %v6517 = vmul.f32 %v6515, %v6516
    %v6518 = vsub.f32 1.0, %v6517
    %v6519 = vmul.f32 %v6516, %v6518
    %v6520 = vadd.f32 %v6516, %v6519
    %vm6521 = vweird.f32 %v6515
    %vm6522 = vweird.f32 %v6516
    %vm6523 = vmor %vm6521, %vm6522
    %v6524 = vsel %vm6523, %v6516, %v6520
    %v6525 = vand.u32 2147483647, %v6515
    %vm6526 = vcmp.eq.f32.partialorder %v6525, 8.507059e+37
    %v6527 = vand.u32 %v6515, 2147483648
    %v6528 = vor.u32 1.1754944e-38, %v6527
    %v6529 = vsel %vm6526, %v6528, %v6524
    %v6530 = vmul.f32 %v6505, %v6529
    %v6531 = vmin.f32 %v6530, 1.0
    %v6532 = vmax.f32 %v6531, -1.0
    %v6533 = vmul.f32 %v5643, %v5643
    %v6534 = vmin.f32 16.0, %v6533
    %v6535 = vmul.f32 %v6534, 2.1237322e-06
    %v6536 = vadd.f32 %v6535, 0.00028619796
    %v6537 = vmul.f32 %v6534, %v6536
    %v6538 = vadd.f32 %v6537, 0.0036580483
    %v6539 = vmul.f32 %v6534, %v6538
    %v6540 = vadd.f32 %v6539, 0.05243302
    %v6541 = vmul.f32 %v6534, %v6540
    %v6542 = vadd.f32 %v6541, 0.18741608
    %v6543 = vmul.f32 %v6534, %v6542
    %v6544 = vadd.f32 %v6543, 1.1283791
    %v6545 = vmul.f32 %v5643, %v6544
    %v6546 = vmul.f32 %v6534, 3.8918573e-05
    %v6547 = vadd.f32 %v6546, 0.001143296
    %v6548 = vmul.f32 %v6534, %v6547
    %v6549 = vadd.f32 %v6548, 0.014752088
    %v6550 = vmul.f32 %v6534, %v6549
    %v6551 = vadd.f32 %v6550, 0.112945676
    %v6552 = vmul.f32 %v6534, %v6551
    %v6553 = vadd.f32 %v6552, 0.4994258
    %v6554 = vmul.f32 %v6534, %v6553
    %v6555 = vadd.f32 %v6554, 1.0
    %v6556 = vrcp.pop %v6555
    %v6557 = vmul.f32 %v6555, %v6556
    %v6558 = vsub.f32 1.0, %v6557
    %v6559 = vmul.f32 %v6556, %v6558
    %v6560 = vadd.f32 %v6556, %v6559
    %vm6561 = vweird.f32 %v6555
    %vm6562 = vweird.f32 %v6556
    %vm6563 = vmor %vm6561, %vm6562
    %v6564 = vsel %vm6563, %v6556, %v6560
    %v6565 = vand.u32 2147483647, %v6555
    %vm6566 = vcmp.eq.f32.partialorder %v6565, 8.507059e+37
    %v6567 = vand.u32 %v6555, 2147483648
    %v6568 = vor.u32 1.1754944e-38, %v6567
    %v6569 = vsel %vm6566, %v6568, %v6564
    %v6570 = vmul.f32 %v6545, %v6569
    %v6571 = vmin.f32 %v6570, 1.0
    %v6572 = vmax.f32 %v6571, -1.0
    %v6573 = vmul.f32 %v5644, %v5644
    %v6574 = vmin.f32 16.0, %v6573
    %v6575 = vmul.f32 %v6574, 2.1237322e-06
    %v6576 = vadd.f32 %v6575, 0.00028619796
    %v6577 = vmul.f32 %v6574, %v6576
    %v6578 = vadd.f32 %v6577, 0.0036580483
    %v6579 = vmul.f32 %v6574, %v6578
    %v6580 = vadd.f32 %v6579, 0.05243302
    %v6581 = vmul.f32 %v6574, %v6580
    %v6582 = vadd.f32 %v6581, 0.18741608
    %v6583 = vmul.f32 %v6574, %v6582
    %v6584 = vadd.f32 %v6583, 1.1283791
    %v6585 = vmul.f32 %v5644, %v6584
    %v6586 = vmul.f32 %v6574, 3.8918573e-05
    %v6587 = vadd.f32 %v6586, 0.001143296
    %v6588 = vmul.f32 %v6574, %v6587
    %v6589 = vadd.f32 %v6588, 0.014752088
    %v6590 = vmul.f32 %v6574, %v6589
    %v6591 = vadd.f32 %v6590, 0.112945676
    %v6592 = vmul.f32 %v6574, %v6591
    %v6593 = vadd.f32 %v6592, 0.4994258
    %v6594 = vmul.f32 %v6574, %v6593
    %v6595 = vadd.f32 %v6594, 1.0
    %v6596 = vrcp.pop %v6595
    %v6597 = vmul.f32 %v6595, %v6596
    %v6598 = vsub.f32 1.0, %v6597
    %v6599 = vmul.f32 %v6596, %v6598
    %v6600 = vadd.f32 %v6596, %v6599
    %vm6601 = vweird.f32 %v6595
    %vm6602 = vweird.f32 %v6596
    %vm6603 = vmor %vm6601, %vm6602
    %v6604 = vsel %vm6603, %v6596, %v6600
    %v6605 = vand.u32 2147483647, %v6595
    %vm6606 = vcmp.eq.f32.partialorder %v6605, 8.507059e+37
    %v6607 = vand.u32 %v6595, 2147483648
    %v6608 = vor.u32 1.1754944e-38, %v6607
    %v6609 = vsel %vm6606, %v6608, %v6604
    %v6610 = vmul.f32 %v6585, %v6609
    %v6611 = vmin.f32 %v6610, 1.0
    %v6612 = vmax.f32 %v6611, -1.0
    %v6613 = vmul.f32 %v5645, %v5645
    %v6614 = vmin.f32 16.0, %v6613
    %v6615 = vmul.f32 %v6614, 2.1237322e-06
    %v6616 = vadd.f32 %v6615, 0.00028619796
    %v6617 = vmul.f32 %v6614, %v6616
    %v6618 = vadd.f32 %v6617, 0.0036580483
    %v6619 = vmul.f32 %v6614, %v6618
    %v6620 = vadd.f32 %v6619, 0.05243302
    %v6621 = vmul.f32 %v6614, %v6620
    %v6622 = vadd.f32 %v6621, 0.18741608
    %v6623 = vmul.f32 %v6614, %v6622
    %v6624 = vadd.f32 %v6623, 1.1283791
    %v6625 = vmul.f32 %v5645, %v6624
    %v6626 = vmul.f32 %v6614, 3.8918573e-05
    %v6627 = vadd.f32 %v6626, 0.001143296
    %v6628 = vmul.f32 %v6614, %v6627
    %v6629 = vadd.f32 %v6628, 0.014752088
    %v6630 = vmul.f32 %v6614, %v6629
    %v6631 = vadd.f32 %v6630, 0.112945676
    %v6632 = vmul.f32 %v6614, %v6631
    %v6633 = vadd.f32 %v6632, 0.4994258
    %v6634 = vmul.f32 %v6614, %v6633
    %v6635 = vadd.f32 %v6634, 1.0
    %v6636 = vrcp.pop %v6635
    %v6637 = vmul.f32 %v6635, %v6636
    %v6638 = vsub.f32 1.0, %v6637
    %v6639 = vmul.f32 %v6636, %v6638
    %v6640 = vadd.f32 %v6636, %v6639
    %vm6641 = vweird.f32 %v6635
    %vm6642 = vweird.f32 %v6636
    %vm6643 = vmor %vm6641, %vm6642
    %v6644 = vsel %vm6643, %v6636, %v6640
    %v6645 = vand.u32 2147483647, %v6635
    %vm6646 = vcmp.eq.f32.partialorder %v6645, 8.507059e+37
    %v6647 = vand.u32 %v6635, 2147483648
    %v6648 = vor.u32 1.1754944e-38, %v6647
    %v6649 = vsel %vm6646, %v6648, %v6644
    %v6650 = vmul.f32 %v6625, %v6649
    %v6651 = vmin.f32 %v6650, 1.0
    %v6652 = vmax.f32 %v6651, -1.0
    %v6653 = vmul.f32 %v5646, %v5646
    %v6654 = vmin.f32 16.0, %v6653
    %v6655 = vmul.f32 %v6654, 2.1237322e-06
    %v6656 = vadd.f32 %v6655, 0.00028619796
    %v6657 = vmul.f32 %v6654, %v6656
    %v6658 = vadd.f32 %v6657, 0.0036580483
    %v6659 = vmul.f32 %v6654, %v6658
    %v6660 = vadd.f32 %v6659, 0.05243302
    %v6661 = vmul.f32 %v6654, %v6660
    %v6662 = vadd.f32 %v6661, 0.18741608
    %v6663 = vmul.f32 %v6654, %v6662
    %v6664 = vadd.f32 %v6663, 1.1283791
    %v6665 = vmul.f32 %v5646, %v6664
    %v6666 = vmul.f32 %v6654, 3.8918573e-05
    %v6667 = vadd.f32 %v6666, 0.001143296
    %v6668 = vmul.f32 %v6654, %v6667
    %v6669 = vadd.f32 %v6668, 0.014752088
    %v6670 = vmul.f32 %v6654, %v6669
    %v6671 = vadd.f32 %v6670, 0.112945676
    %v6672 = vmul.f32 %v6654, %v6671
    %v6673 = vadd.f32 %v6672, 0.4994258
    %v6674 = vmul.f32 %v6654, %v6673
    %v6675 = vadd.f32 %v6674, 1.0
    %v6676 = vrcp.pop %v6675
    %v6677 = vmul.f32 %v6675, %v6676
    %v6678 = vsub.f32 1.0, %v6677
    %v6679 = vmul.f32 %v6676, %v6678
    %v6680 = vadd.f32 %v6676, %v6679
    %vm6681 = vweird.f32 %v6675
    %vm6682 = vweird.f32 %v6676
    %vm6683 = vmor %vm6681, %vm6682
    %v6684 = vsel %vm6683, %v6676, %v6680
    %v6685 = vand.u32 2147483647, %v6675
    %vm6686 = vcmp.eq.f32.partialorder %v6685, 8.507059e+37
    %v6687 = vand.u32 %v6675, 2147483648
    %v6688 = vor.u32 1.1754944e-38, %v6687
    %v6689 = vsel %vm6686, %v6688, %v6684
    %v6690 = vmul.f32 %v6665, %v6689
    %v6691 = vmin.f32 %v6690, 1.0
    %v6692 = vmax.f32 %v6691, -1.0
    %v6693 = vmul.f32 %v5647, %v5647
    %v6694 = vmin.f32 16.0, %v6693
    %v6695 = vmul.f32 %v6694, 2.1237322e-06
    %v6696 = vadd.f32 %v6695, 0.00028619796
    %v6697 = vmul.f32 %v6694, %v6696
    %v6698 = vadd.f32 %v6697, 0.0036580483
    %v6699 = vmul.f32 %v6694, %v6698
    %v6700 = vadd.f32 %v6699, 0.05243302
    %v6701 = vmul.f32 %v6694, %v6700
    %v6702 = vadd.f32 %v6701, 0.18741608
    %v6703 = vmul.f32 %v6694, %v6702
    %v6704 = vadd.f32 %v6703, 1.1283791
    %v6705 = vmul.f32 %v5647, %v6704
    %v6706 = vmul.f32 %v6694, 3.8918573e-05
    %v6707 = vadd.f32 %v6706, 0.001143296
    %v6708 = vmul.f32 %v6694, %v6707
    %v6709 = vadd.f32 %v6708, 0.014752088
    %v6710 = vmul.f32 %v6694, %v6709
    %v6711 = vadd.f32 %v6710, 0.112945676
    %v6712 = vmul.f32 %v6694, %v6711
    %v6713 = vadd.f32 %v6712, 0.4994258
    %v6714 = vmul.f32 %v6694, %v6713
    %v6715 = vadd.f32 %v6714, 1.0
    %v6716 = vrcp.pop %v6715
    %v6717 = vmul.f32 %v6715, %v6716
    %v6718 = vsub.f32 1.0, %v6717
    %v6719 = vmul.f32 %v6716, %v6718
    %v6720 = vadd.f32 %v6716, %v6719
    %vm6721 = vweird.f32 %v6715
    %vm6722 = vweird.f32 %v6716
    %vm6723 = vmor %vm6721, %vm6722
    %v6724 = vsel %vm6723, %v6716, %v6720
    %v6725 = vand.u32 2147483647, %v6715
    %vm6726 = vcmp.eq.f32.partialorder %v6725, 8.507059e+37
    %v6727 = vand.u32 %v6715, 2147483648
    %v6728 = vor.u32 1.1754944e-38, %v6727
    %v6729 = vsel %vm6726, %v6728, %v6724
    %v6730 = vmul.f32 %v6705, %v6729
    %v6731 = vmin.f32 %v6730, 1.0
    %v6732 = vmax.f32 %v6731, -1.0
    %v6733 = vmul.f32 %v5648, %v5648
    %v6734 = vmin.f32 16.0, %v6733
    %v6735 = vmul.f32 %v6734, 2.1237322e-06
    %v6736 = vadd.f32 %v6735, 0.00028619796
    %v6737 = vmul.f32 %v6734, %v6736
    %v6738 = vadd.f32 %v6737, 0.0036580483
    %v6739 = vmul.f32 %v6734, %v6738
    %v6740 = vadd.f32 %v6739, 0.05243302
    %v6741 = vmul.f32 %v6734, %v6740
    %v6742 = vadd.f32 %v6741, 0.18741608
    %v6743 = vmul.f32 %v6734, %v6742
    %v6744 = vadd.f32 %v6743, 1.1283791
    %v6745 = vmul.f32 %v5648, %v6744
    %v6746 = vmul.f32 %v6734, 3.8918573e-05
    %v6747 = vadd.f32 %v6746, 0.001143296
    %v6748 = vmul.f32 %v6734, %v6747
    %v6749 = vadd.f32 %v6748, 0.014752088
    %v6750 = vmul.f32 %v6734, %v6749
    %v6751 = vadd.f32 %v6750, 0.112945676
    %v6752 = vmul.f32 %v6734, %v6751
    %v6753 = vadd.f32 %v6752, 0.4994258
    %v6754 = vmul.f32 %v6734, %v6753
    %v6755 = vadd.f32 %v6754, 1.0
    %v6756 = vrcp.pop %v6755
    %v6757 = vmul.f32 %v6755, %v6756
    %v6758 = vsub.f32 1.0, %v6757
    %v6759 = vmul.f32 %v6756, %v6758
    %v6760 = vadd.f32 %v6756, %v6759
    %vm6761 = vweird.f32 %v6755
    %vm6762 = vweird.f32 %v6756
    %vm6763 = vmor %vm6761, %vm6762
    %v6764 = vsel %vm6763, %v6756, %v6760
    %v6765 = vand.u32 2147483647, %v6755
    %vm6766 = vcmp.eq.f32.partialorder %v6765, 8.507059e+37
    %v6767 = vand.u32 %v6755, 2147483648
    %v6768 = vor.u32 1.1754944e-38, %v6767
    %v6769 = vsel %vm6766, %v6768, %v6764
    %v6770 = vmul.f32 %v6745, %v6769
    %v6771 = vmin.f32 %v6770, 1.0
    %v6772 = vmax.f32 %v6771, -1.0
    %v6773 = vmul.f32 %v5649, %v5649
    %v6774 = vmin.f32 16.0, %v6773
    %v6775 = vmul.f32 %v6774, 2.1237322e-06
    %v6776 = vadd.f32 %v6775, 0.00028619796
    %v6777 = vmul.f32 %v6774, %v6776
    %v6778 = vadd.f32 %v6777, 0.0036580483
    %v6779 = vmul.f32 %v6774, %v6778
    %v6780 = vadd.f32 %v6779, 0.05243302
    %v6781 = vmul.f32 %v6774, %v6780
    %v6782 = vadd.f32 %v6781, 0.18741608
    %v6783 = vmul.f32 %v6774, %v6782
    %v6784 = vadd.f32 %v6783, 1.1283791
    %v6785 = vmul.f32 %v5649, %v6784
    %v6786 = vmul.f32 %v6774, 3.8918573e-05
    %v6787 = vadd.f32 %v6786, 0.001143296
    %v6788 = vmul.f32 %v6774, %v6787
    %v6789 = vadd.f32 %v6788, 0.014752088
    %v6790 = vmul.f32 %v6774, %v6789
    %v6791 = vadd.f32 %v6790, 0.112945676
    %v6792 = vmul.f32 %v6774, %v6791
    %v6793 = vadd.f32 %v6792, 0.4994258
    %v6794 = vmul.f32 %v6774, %v6793
    %v6795 = vadd.f32 %v6794, 1.0
    %v6796 = vrcp.pop %v6795
    %v6797 = vmul.f32 %v6795, %v6796
    %v6798 = vsub.f32 1.0, %v6797
    %v6799 = vmul.f32 %v6796, %v6798
    %v6800 = vadd.f32 %v6796, %v6799
    %vm6801 = vweird.f32 %v6795
    %vm6802 = vweird.f32 %v6796
    %vm6803 = vmor %vm6801, %vm6802
    %v6804 = vsel %vm6803, %v6796, %v6800
    %v6805 = vand.u32 2147483647, %v6795
    %vm6806 = vcmp.eq.f32.partialorder %v6805, 8.507059e+37
    %v6807 = vand.u32 %v6795, 2147483648
    %v6808 = vor.u32 1.1754944e-38, %v6807
    %v6809 = vsel %vm6806, %v6808, %v6804
    %v6810 = vmul.f32 %v6785, %v6809
    %v6811 = vmin.f32 %v6810, 1.0
    %v6812 = vmax.f32 %v6811, -1.0
    %v6813 = vmul.f32 %v5650, %v5650
    %v6814 = vmin.f32 16.0, %v6813
    %v6815 = vmul.f32 %v6814, 2.1237322e-06
    %v6816 = vadd.f32 %v6815, 0.00028619796
    %v6817 = vmul.f32 %v6814, %v6816
    %v6818 = vadd.f32 %v6817, 0.0036580483
    %v6819 = vmul.f32 %v6814, %v6818
    %v6820 = vadd.f32 %v6819, 0.05243302
    %v6821 = vmul.f32 %v6814, %v6820
    %v6822 = vadd.f32 %v6821, 0.18741608
    %v6823 = vmul.f32 %v6814, %v6822
    %v6824 = vadd.f32 %v6823, 1.1283791
    %v6825 = vmul.f32 %v5650, %v6824
    %v6826 = vmul.f32 %v6814, 3.8918573e-05
    %v6827 = vadd.f32 %v6826, 0.001143296
    %v6828 = vmul.f32 %v6814, %v6827
    %v6829 = vadd.f32 %v6828, 0.014752088
    %v6830 = vmul.f32 %v6814, %v6829
    %v6831 = vadd.f32 %v6830, 0.112945676
    %v6832 = vmul.f32 %v6814, %v6831
    %v6833 = vadd.f32 %v6832, 0.4994258
    %v6834 = vmul.f32 %v6814, %v6833
    %v6835 = vadd.f32 %v6834, 1.0
    %v6836 = vrcp.pop %v6835
    %v6837 = vmul.f32 %v6835, %v6836
    %v6838 = vsub.f32 1.0, %v6837
    %v6839 = vmul.f32 %v6836, %v6838
    %v6840 = vadd.f32 %v6836, %v6839
    %vm6841 = vweird.f32 %v6835
    %vm6842 = vweird.f32 %v6836
    %vm6843 = vmor %vm6841, %vm6842
    %v6844 = vsel %vm6843, %v6836, %v6840
    %v6845 = vand.u32 2147483647, %v6835
    %vm6846 = vcmp.eq.f32.partialorder %v6845, 8.507059e+37
    %v6847 = vand.u32 %v6835, 2147483648
    %v6848 = vor.u32 1.1754944e-38, %v6847
    %v6849 = vsel %vm6846, %v6848, %v6844
    %v6850 = vmul.f32 %v6825, %v6849
    %v6851 = vmin.f32 %v6850, 1.0
    %v6852 = vmax.f32 %v6851, -1.0
    %v6853 = vmul.f32 %v5651, %v5651
    %v6854 = vmin.f32 16.0, %v6853
    %v6855 = vmul.f32 %v6854, 2.1237322e-06
    %v6856 = vadd.f32 %v6855, 0.00028619796
    %v6857 = vmul.f32 %v6854, %v6856
    %v6858 = vadd.f32 %v6857, 0.0036580483
    %v6859 = vmul.f32 %v6854, %v6858
    %v6860 = vadd.f32 %v6859, 0.05243302
    %v6861 = vmul.f32 %v6854, %v6860
    %v6862 = vadd.f32 %v6861, 0.18741608
    %v6863 = vmul.f32 %v6854, %v6862
    %v6864 = vadd.f32 %v6863, 1.1283791
    %v6865 = vmul.f32 %v5651, %v6864
    %v6866 = vmul.f32 %v6854, 3.8918573e-05
    %v6867 = vadd.f32 %v6866, 0.001143296
    %v6868 = vmul.f32 %v6854, %v6867
    %v6869 = vadd.f32 %v6868, 0.014752088
    %v6870 = vmul.f32 %v6854, %v6869
    %v6871 = vadd.f32 %v6870, 0.112945676
    %v6872 = vmul.f32 %v6854, %v6871
    %v6873 = vadd.f32 %v6872, 0.4994258
    %v6874 = vmul.f32 %v6854, %v6873
    %v6875 = vadd.f32 %v6874, 1.0
    %v6876 = vrcp.pop %v6875
    %v6877 = vmul.f32 %v6875, %v6876
    %v6878 = vsub.f32 1.0, %v6877
    %v6879 = vmul.f32 %v6876, %v6878
    %v6880 = vadd.f32 %v6876, %v6879
    %vm6881 = vweird.f32 %v6875
    %vm6882 = vweird.f32 %v6876
    %vm6883 = vmor %vm6881, %vm6882
    %v6884 = vsel %vm6883, %v6876, %v6880
    %v6885 = vand.u32 2147483647, %v6875
    %vm6886 = vcmp.eq.f32.partialorder %v6885, 8.507059e+37
    %v6887 = vand.u32 %v6875, 2147483648
    %v6888 = vor.u32 1.1754944e-38, %v6887
    %v6889 = vsel %vm6886, %v6888, %v6884
    %v6890 = vmul.f32 %v6865, %v6889
    %v6891 = vmin.f32 %v6890, 1.0
    %v6892 = vmax.f32 %v6891, -1.0
    %v6893 = vmul.f32 %v5652, %v5652
    %v6894 = vmin.f32 16.0, %v6893
    %v6895 = vmul.f32 %v6894, 2.1237322e-06
    %v6896 = vadd.f32 %v6895, 0.00028619796
    %v6897 = vmul.f32 %v6894, %v6896
    %v6898 = vadd.f32 %v6897, 0.0036580483
    %v6899 = vmul.f32 %v6894, %v6898
    %v6900 = vadd.f32 %v6899, 0.05243302
    %v6901 = vmul.f32 %v6894, %v6900
    %v6902 = vadd.f32 %v6901, 0.18741608
    %v6903 = vmul.f32 %v6894, %v6902
    %v6904 = vadd.f32 %v6903, 1.1283791
    %v6905 = vmul.f32 %v5652, %v6904
    %v6906 = vmul.f32 %v6894, 3.8918573e-05
    %v6907 = vadd.f32 %v6906, 0.001143296
    %v6908 = vmul.f32 %v6894, %v6907
    %v6909 = vadd.f32 %v6908, 0.014752088
    %v6910 = vmul.f32 %v6894, %v6909
    %v6911 = vadd.f32 %v6910, 0.112945676
    %v6912 = vmul.f32 %v6894, %v6911
    %v6913 = vadd.f32 %v6912, 0.4994258
    %v6914 = vmul.f32 %v6894, %v6913
    %v6915 = vadd.f32 %v6914, 1.0
    %v6916 = vrcp.pop %v6915
    %v6917 = vmul.f32 %v6915, %v6916
    %v6918 = vsub.f32 1.0, %v6917
    %v6919 = vmul.f32 %v6916, %v6918
    %v6920 = vadd.f32 %v6916, %v6919
    %vm6921 = vweird.f32 %v6915
    %vm6922 = vweird.f32 %v6916
    %vm6923 = vmor %vm6921, %vm6922
    %v6924 = vsel %vm6923, %v6916, %v6920
    %v6925 = vand.u32 2147483647, %v6915
    %vm6926 = vcmp.eq.f32.partialorder %v6925, 8.507059e+37
    %v6927 = vand.u32 %v6915, 2147483648
    %v6928 = vor.u32 1.1754944e-38, %v6927
    %v6929 = vsel %vm6926, %v6928, %v6924
    %v6930 = vmul.f32 %v6905, %v6929
    %v6931 = vmin.f32 %v6930, 1.0
    %v6932 = vmax.f32 %v6931, -1.0
    %v6933 = vadd.f32 %v5692, 1.0
    %v6934 = vadd.f32 %v5732, 1.0
    %v6935 = vadd.f32 %v5772, 1.0
    %v6936 = vadd.f32 %v5812, 1.0
    %v6937 = vadd.f32 %v5852, 1.0
    %v6938 = vadd.f32 %v5892, 1.0
    %v6939 = vadd.f32 %v5932, 1.0
    %v6940 = vadd.f32 %v5972, 1.0
    %v6941 = vadd.f32 %v6012, 1.0
    %v6942 = vadd.f32 %v6052, 1.0
    %v6943 = vadd.f32 %v6092, 1.0
    %v6944 = vadd.f32 %v6132, 1.0
    %v6945 = vadd.f32 %v6172, 1.0
    %v6946 = vadd.f32 %v6212, 1.0
    %v6947 = vadd.f32 %v6252, 1.0
    %v6948 = vadd.f32 %v6292, 1.0
    %v6949 = vadd.f32 %v6332, 1.0
    %v6950 = vadd.f32 %v6372, 1.0
    %v6951 = vadd.f32 %v6412, 1.0
    %v6952 = vadd.f32 %v6452, 1.0
    %v6953 = vadd.f32 %v6492, 1.0
    %v6954 = vadd.f32 %v6532, 1.0
    %v6955 = vadd.f32 %v6572, 1.0
    %v6956 = vadd.f32 %v6612, 1.0
    %v6957 = vadd.f32 %v6652, 1.0
    %v6958 = vadd.f32 %v6692, 1.0
    %v6959 = vadd.f32 %v6732, 1.0
    %v6960 = vadd.f32 %v6772, 1.0
    %v6961 = vadd.f32 %v6812, 1.0
    %v6962 = vadd.f32 %v6852, 1.0
    %v6963 = vadd.f32 %v6892, 1.0
    %v6964 = vadd.f32 %v6932, 1.0
    %v6965 = vmul.f32 %v5589, %v6933
    %v6966 = vmul.f32 %v5590, %v6934
    %v6967 = vmul.f32 %v5591, %v6935
    %v6968 = vmul.f32 %v5592, %v6936
    %v6969 = vmul.f32 %v5593, %v6937
    %v6970 = vmul.f32 %v5594, %v6938
    %v6971 = vmul.f32 %v5595, %v6939
    %v6972 = vmul.f32 %v5596, %v6940
    %v6973 = vmul.f32 %v5597, %v6941
    %v6974 = vmul.f32 %v5598, %v6942
    %v6975 = vmul.f32 %v5599, %v6943
    %v6976 = vmul.f32 %v5600, %v6944
    %v6977 = vmul.f32 %v5601, %v6945
    %v6978 = vmul.f32 %v5602, %v6946
    %v6979 = vmul.f32 %v5603, %v6947
    %v6980 = vmul.f32 %v5604, %v6948
    %v6981 = vmul.f32 %v5605, %v6949
    %v6982 = vmul.f32 %v5606, %v6950
    %v6983 = vmul.f32 %v5607, %v6951
    %v6984 = vmul.f32 %v5608, %v6952
    %v6985 = vmul.f32 %v5609, %v6953
    %v6986 = vmul.f32 %v5610, %v6954
    %v6987 = vmul.f32 %v5611, %v6955
    %v6988 = vmul.f32 %v5612, %v6956
    %v6989 = vmul.f32 %v5613, %v6957
    %v6990 = vmul.f32 %v5614, %v6958
    %v6991 = vmul.f32 %v5615, %v6959
    %v6992 = vmul.f32 %v5616, %v6960
    %v6993 = vmul.f32 %v5617, %v6961
    %v6994 = vmul.f32 %v5618, %v6962
    %v6995 = vmul.f32 %v5619, %v6963
    %v6996 = vmul.f32 %v5620, %v6964
    %v6997 = vld [vmem:[%s11] sm:$0xff]
    %v6998 = vld [vmem:[%s11 + $0x8] sm:$0xff]
    %v6999 = vld [vmem:[%s11 + $0x10] sm:$0xff]
    %v7000 = vld [vmem:[%s11 + $0x18] sm:$0xff]
    %v7001 = vld [vmem:[%s11 + $0x20] sm:$0xff]
    %v7002 = vld [vmem:[%s11 + $0x28] sm:$0xff]
    %v7003 = vld [vmem:[%s11 + $0x30] sm:$0xff]
    %v7004 = vld [vmem:[%s11 + $0x38] sm:$0xff]
    %v7005 = vld [vmem:[%s11 + $0x40] sm:$0xff]
    %v7006 = vld [vmem:[%s11 + $0x48] sm:$0xff]
    %v7007 = vld [vmem:[%s11 + $0x50] sm:$0xff]
    %v7008 = vld [vmem:[%s11 + $0x58] sm:$0xff]
    %v7009 = vld [vmem:[%s11 + $0x60] sm:$0xff]
    %v7010 = vld [vmem:[%s11 + $0x68] sm:$0xff]
    %v7011 = vld [vmem:[%s11 + $0x70] sm:$0xff]
    %v7012 = vld [vmem:[%s11 + $0x78] sm:$0xff]
    %v7013 = vld [vmem:[%s12] sm:$0x1]
    %v7015 = vperm.slane %v7013, 0
    %7017 = vmatpush.msra.mxu0 %v7012
    %7018 = vmatpush.msra.mxu0 %v7011
    %7019 = vmatpush.msra.mxu0 %v7010
    %7020 = vmatpush.msra.mxu0 %v7009
    %7021 = vmatpush.msra.mxu0 %v7008
    %7022 = vmatpush.msra.mxu0 %v7007
    %7023 = vmatpush.msra.mxu0 %v7006
    %7024 = vmatpush.msra.mxu0 %v7005
    %7025 = vmatpush.msra.mxu0 %v7004
    %7026 = vmatpush.msra.mxu0 %v7003
    %7027 = vmatpush.msra.mxu0 %v7002
    %7028 = vmatpush.msra.mxu0 %v7001
    %7029 = vmatpush.msra.mxu0 %v7000
    %7030 = vmatpush.msra.mxu0 %v6999
    %7031 = vmatpush.msra.mxu0 %v6998
    %7032 = vmatpush.msra.mxu0 %v6997
    %7033 = vmatmul.f32.gmra.mxu0 %v6965
    %v7034 = vpop.f32.mrf.mxu0
    %v7035 = vadd.f32 %v7015, %v7034
    %7036 = vmatmul.f32.gmra.mxu0 %v6966
    %v7037 = vpop.f32.mrf.mxu0
    %v7038 = vadd.f32 %v7015, %v7037
    %7039 = vmatmul.f32.gmra.mxu0 %v6967
    %v7040 = vpop.f32.mrf.mxu0
    %v7041 = vadd.f32 %v7015, %v7040
    %7042 = vmatmul.f32.gmra.mxu0 %v6968
    %v7043 = vpop.f32.mrf.mxu0
    %v7044 = vadd.f32 %v7015, %v7043
    %7045 = vmatmul.f32.gmra.mxu0 %v6969
    %v7046 = vpop.f32.mrf.mxu0
    %v7047 = vadd.f32 %v7015, %v7046
    %7048 = vmatmul.f32.gmra.mxu0 %v6970
    %v7049 = vpop.f32.mrf.mxu0
    %v7050 = vadd.f32 %v7015, %v7049
    %7051 = vmatmul.f32.gmra.mxu0 %v6971
    %v7052 = vpop.f32.mrf.mxu0
    %v7053 = vadd.f32 %v7015, %v7052
    %7054 = vmatmul.f32.gmra.mxu0 %v6972
    %v7055 = vpop.f32.mrf.mxu0
    %v7056 = vadd.f32 %v7015, %v7055
    %7057 = vmatmul.f32.gmra.mxu0 %v6973
    %v7058 = vpop.f32.mrf.mxu0
    %v7059 = vadd.f32 %v7015, %v7058
    %7060 = vmatmul.f32.gmra.mxu0 %v6974
    %v7061 = vpop.f32.mrf.mxu0
    %v7062 = vadd.f32 %v7015, %v7061
    %7063 = vmatmul.f32.gmra.mxu0 %v6975
    %v7064 = vpop.f32.mrf.mxu0
    %v7065 = vadd.f32 %v7015, %v7064
    %7066 = vmatmul.f32.gmra.mxu0 %v6976
    %v7067 = vpop.f32.mrf.mxu0
    %v7068 = vadd.f32 %v7015, %v7067
    %7069 = vmatmul.f32.gmra.mxu0 %v6977
    %v7070 = vpop.f32.mrf.mxu0
    %v7071 = vadd.f32 %v7015, %v7070
    %7072 = vmatmul.f32.gmra.mxu0 %v6978
    %v7073 = vpop.f32.mrf.mxu0
    %v7074 = vadd.f32 %v7015, %v7073
    %7075 = vmatmul.f32.gmra.mxu0 %v6979
    %v7076 = vpop.f32.mrf.mxu0
    %v7077 = vadd.f32 %v7015, %v7076
    %7078 = vmatmul.f32.gmra.mxu0 %v6980
    %v7079 = vpop.f32.mrf.mxu0
    %v7080 = vadd.f32 %v7015, %v7079
    %7081 = vmatmul.f32.gmra.mxu0 %v6981
    %v7082 = vpop.f32.mrf.mxu0
    %v7083 = vadd.f32 %v7015, %v7082
    %7084 = vmatmul.f32.gmra.mxu0 %v6982
    %v7085 = vpop.f32.mrf.mxu0
    %v7086 = vadd.f32 %v7015, %v7085
    %7087 = vmatmul.f32.gmra.mxu0 %v6983
    %v7088 = vpop.f32.mrf.mxu0
    %v7089 = vadd.f32 %v7015, %v7088
    %7090 = vmatmul.f32.gmra.mxu0 %v6984
    %v7091 = vpop.f32.mrf.mxu0
    %v7092 = vadd.f32 %v7015, %v7091
    %7093 = vmatmul.f32.gmra.mxu0 %v6985
    %v7094 = vpop.f32.mrf.mxu0
    %v7095 = vadd.f32 %v7015, %v7094
    %7096 = vmatmul.f32.gmra.mxu0 %v6986
    %v7097 = vpop.f32.mrf.mxu0
    %v7098 = vadd.f32 %v7015, %v7097
    %7099 = vmatmul.f32.gmra.mxu0 %v6987
    %v7100 = vpop.f32.mrf.mxu0
    %v7101 = vadd.f32 %v7015, %v7100
    %7102 = vmatmul.f32.gmra.mxu0 %v6988
    %v7103 = vpop.f32.mrf.mxu0
    %v7104 = vadd.f32 %v7015, %v7103
    %7105 = vmatmul.f32.gmra.mxu0 %v6989
    %v7106 = vpop.f32.mrf.mxu0
    %v7107 = vadd.f32 %v7015, %v7106
    %7108 = vmatmul.f32.gmra.mxu0 %v6990
    %v7109 = vpop.f32.mrf.mxu0
    %v7110 = vadd.f32 %v7015, %v7109
    %7111 = vmatmul.f32.gmra.mxu0 %v6991
    %v7112 = vpop.f32.mrf.mxu0
    %v7113 = vadd.f32 %v7015, %v7112
    %7114 = vmatmul.f32.gmra.mxu0 %v6992
    %v7115 = vpop.f32.mrf.mxu0
    %v7116 = vadd.f32 %v7015, %v7115
    %7117 = vmatmul.f32.gmra.mxu0 %v6993
    %v7118 = vpop.f32.mrf.mxu0
    %v7119 = vadd.f32 %v7015, %v7118
    %7120 = vmatmul.f32.gmra.mxu0 %v6994
    %v7121 = vpop.f32.mrf.mxu0
    %v7122 = vadd.f32 %v7015, %v7121
    %7123 = vmatmul.f32.gmra.mxu0 %v6995
    %v7124 = vpop.f32.mrf.mxu0
    %v7125 = vadd.f32 %v7015, %v7124
    %7126 = vmatmul.f32.gmra.mxu0 %v6996
    %v7127 = vpop.f32.mrf.mxu0
    %v7128 = vadd.f32 %v7015, %v7127
    %7129 = vdwg.mxu0
    %v7130 = vadd.f32 %v4564, %v7035
    %v7131 = vadd.f32 %v4565, %v7038
    %v7132 = vadd.f32 %v4566, %v7041
    %v7133 = vadd.f32 %v4567, %v7044
    %v7134 = vadd.f32 %v4568, %v7047
    %v7135 = vadd.f32 %v4569, %v7050
    %v7136 = vadd.f32 %v4570, %v7053
    %v7137 = vadd.f32 %v4571, %v7056
    %v7138 = vadd.f32 %v4572, %v7059
    %v7139 = vadd.f32 %v4573, %v7062
    %v7140 = vadd.f32 %v4574, %v7065
    %v7141 = vadd.f32 %v4575, %v7068
    %v7142 = vadd.f32 %v4576, %v7071
    %v7143 = vadd.f32 %v4577, %v7074
    %v7144 = vadd.f32 %v4578, %v7077
    %v7145 = vadd.f32 %v4579, %v7080
    %v7146 = vadd.f32 %v4580, %v7083
    %v7147 = vadd.f32 %v4581, %v7086
    %v7148 = vadd.f32 %v4582, %v7089
    %v7149 = vadd.f32 %v4583, %v7092
    %v7150 = vadd.f32 %v4584, %v7095
    %v7151 = vadd.f32 %v4585, %v7098
    %v7152 = vadd.f32 %v4586, %v7101
    %v7153 = vadd.f32 %v4587, %v7104
    %v7154 = vadd.f32 %v4588, %v7107
    %v7155 = vadd.f32 %v4589, %v7110
    %v7156 = vadd.f32 %v4590, %v7113
    %v7157 = vadd.f32 %v4591, %v7116
    %v7158 = vadd.f32 %v4592, %v7119
    %v7159 = vadd.f32 %v4593, %v7122
    %v7160 = vadd.f32 %v4594, %v7125
    %v7161 = vadd.f32 %v4595, %v7128
    %7162 = vst.msk [vmem:[#allocation5] sm:$0xff] %vm98, %v7130
    %7163 = vst.msk [vmem:[#allocation5 + $0x8] sm:$0xff] %vm98, %v7131
    %7164 = vst.msk [vmem:[#allocation5 + $0x10] sm:$0xff] %vm98, %v7132
    %7165 = vst.msk [vmem:[#allocation5 + $0x18] sm:$0xff] %vm98, %v7133
    %7166 = vst.msk [vmem:[#allocation5 + $0x20] sm:$0xff] %vm98, %v7134
    %7167 = vst.msk [vmem:[#allocation5 + $0x28] sm:$0xff] %vm98, %v7135
    %7168 = vst.msk [vmem:[#allocation5 + $0x30] sm:$0xff] %vm98, %v7136
    %7169 = vst.msk [vmem:[#allocation5 + $0x38] sm:$0xff] %vm98, %v7137
    %7170 = vst.msk [vmem:[#allocation5 + $0x40] sm:$0xff] %vm98, %v7138
    %7171 = vst.msk [vmem:[#allocation5 + $0x48] sm:$0xff] %vm98, %v7139
    %7172 = vst.msk [vmem:[#allocation5 + $0x50] sm:$0xff] %vm98, %v7140
    %7173 = vst.msk [vmem:[#allocation5 + $0x58] sm:$0xff] %vm98, %v7141
    %7174 = vst.msk [vmem:[#allocation5 + $0x60] sm:$0xff] %vm98, %v7142
    %7175 = vst.msk [vmem:[#allocation5 + $0x68] sm:$0xff] %vm98, %v7143
    %7176 = vst.msk [vmem:[#allocation5 + $0x70] sm:$0xff] %vm98, %v7144
    %7177 = vst.msk [vmem:[#allocation5 + $0x78] sm:$0xff] %vm98, %v7145
    %7178 = vst.msk [vmem:[#allocation5 + $0x80] sm:$0xff] %vm98, %v7146
    %7179 = vst.msk [vmem:[#allocation5 + $0x88] sm:$0xff] %vm98, %v7147
    %7180 = vst.msk [vmem:[#allocation5 + $0x90] sm:$0xff] %vm98, %v7148
    %7181 = vst.msk [vmem:[#allocation5 + $0x98] sm:$0xff] %vm98, %v7149
    %7182 = vst.msk [vmem:[#allocation5 + $0xa0] sm:$0xff] %vm98, %v7150
    %7183 = vst.msk [vmem:[#allocation5 + $0xa8] sm:$0xff] %vm98, %v7151
    %7184 = vst.msk [vmem:[#allocation5 + $0xb0] sm:$0xff] %vm98, %v7152
    %7185 = vst.msk [vmem:[#allocation5 + $0xb8] sm:$0xff] %vm98, %v7153
    %7186 = vst.msk [vmem:[#allocation5 + $0xc0] sm:$0xff] %vm98, %v7154
    %7187 = vst.msk [vmem:[#allocation5 + $0xc8] sm:$0xff] %vm98, %v7155
    %7188 = vst.msk [vmem:[#allocation5 + $0xd0] sm:$0xff] %vm98, %v7156
    %7189 = vst.msk [vmem:[#allocation5 + $0xd8] sm:$0xff] %vm98, %v7157
    %7190 = vst.msk [vmem:[#allocation5 + $0xe0] sm:$0xff] %vm98, %v7158
    %7191 = vst.msk [vmem:[#allocation5 + $0xe8] sm:$0xff] %vm98, %v7159
    %7192 = vst.msk [vmem:[#allocation5 + $0xf0] sm:$0xff] %vm98, %v7160
    %7193 = vst.msk [vmem:[#allocation5 + $0xf8] sm:$0xff] %vm98, %v7161
    // Predicated region
    $region62: #{tpu_custom_call.1} parent=1 // pred_check
      _
    $region63: #{tpu_custom_call.1} parent=1 // pred_check_branch
      %7195 = sbr.rel (0) target = $region65
    $region64: #{tpu_custom_call.1} parent=1 // pred_region
      %7197 = vsyncadd [#allocation4], 0
      %s7198 = sshll.u32 [#allocation5], 4
      %s7199 = int_to_ptr.vmem [resolvable:$true] %s7198
      %s7200 = sshll.u32 %s14, 4
      %s7201 = int_to_ptr.hbm [resolvable:$true] %s7200
      %7206 = dma.vmem_to_hbm [thread:$0]  %s7199, 4096, %s7201, [#allocation4], 128, 128, 8
    $region65: #{tpu_custom_call.1} parent=1 // pred_fallthru
      _
    // Predicated region
    $region66: #{tpu_custom_call.1} parent=1 // pred_check
      _
    $region67: #{tpu_custom_call.1} parent=1 // pred_check_branch
      %7208 = sbr.rel (0) target = $region69
    $region68: #{tpu_custom_call.1} parent=1 // pred_region
      %7210 = dma.done [#allocation4], 4096
    $region69: #{tpu_custom_call.1} parent=1 // pred_fallthru
      _
    %7211 = vsyncpa [#allocation3], 1
    %7212 = vsyncpa [#allocation4], 1

</llo_original>
